<compile_context>
chip_gen: v5e
topology: v5e:2x2
jax: 0.10.0
libtpu: 0.0.40
codegen_flags: <defaults>
</compile_context>

<pallas_src>
import jax
import jax.numpy as jnp
from jax.experimental import pallas as pl
from jax.experimental.pallas import tpu as pltpu


# ------------------------------------------------------------------
# Fused conv + bias + ReLU + 2x2 max-pool kernel (BN images per grid step)
# ------------------------------------------------------------------
def _make_conv_pool_kernel(BN, K, OHh, OWh):
    """Kernel factory.

    x_ref: (BN, 4, IH/2, IW/2, Cin)  parity planes; plane 2*py+px = x[py::2, px::2, :]
    w_ref: (K*K*Cin, Cout)           rows ordered (kh, kw, cin)
    b_ref: (1, Cout)
    o_ref: (BN, OHh*OWh, Cout)       pooled output, rows in (oh, ow) row-major order
    """

    def kernel(x_ref, w_ref, b_ref, o_ref):
        w = w_ref[...]
        b = b_ref[...]
        for n in range(BN):                     # static unroll over the image tile
            pooled = None
            for dx in range(2):  # output-column parity of the (pre-pool) conv output
                # For each input row-parity, gather the K horizontal taps once
                # (shared by both output-row parities): columns ordered (kw, cin).
                rows = []
                for py in range(2):
                    taps = []
                    for kw in range(K):
                        px = (dx + kw) % 2
                        boff = (dx + kw) // 2
                        taps.append(x_ref[n, 2 * py + px, :, boff:boff + OWh, :])
                    rows.append(jnp.concatenate(taps, axis=-1))   # (IHh, OWh, K*Cin)
                for dy in range(2):  # output-row parity
                    vtaps = []
                    for kh in range(K):
                        py = (dy + kh) % 2
                        aoff = (dy + kh) // 2
                        vtaps.append(rows[py][aoff:aoff + OHh])    # (OHh, OWh, K*Cin)
                    patches = jnp.concatenate(vtaps, axis=-1)      # (OHh, OWh, K*K*Cin)
                    # Flatten (oh, ow) -> matmul rows; contraction dim = K*K*Cin.
                    pmat = jnp.concatenate([patches[i] for i in range(OHh)], axis=0)
                    y = jnp.dot(pmat, w, preferred_element_type=jnp.float32) + b
                    y = jnp.maximum(y, 0.0)                        # ReLU
                    pooled = y if pooled is None else jnp.maximum(pooled, y)  # 2x2 pool
            o_ref[n] = pooled

    return kernel


def conv_pool_relu(x_nhwc, w, b, *, block_images=4):
    """Fused valid conv(KxK) + bias + ReLU + 2x2/2 max-pool.

    x_nhwc: (N, IH, IW, Cin) f32, channel-last (N must be a multiple of the tile size)
    w:      (Cout, Cin, K, K) torch layout
    b:      (Cout,)
    returns (N, OH//2, OW//2, Cout) pooled activation, channel-last.
    """
    N, IH, IW, Cin = x_nhwc.shape
    Cout, Cin2, K, K2 = w.shape
    assert Cin == Cin2 and K == K2
    OH, OW = IH - K + 1, IW - K + 1
    assert IH % 2 == 0 and IW % 2 == 0 and OH % 2 == 0 and OW % 2 == 0
    IHh, IWh, OHh, OWh = IH // 2, IW // 2, OH // 2, OW // 2

    BN = min(N, block_images)
    assert N % BN == 0, "batch must be padded to a multiple of the image tile"
    grid = (N // BN,)

    # Parity-decomposed input planes so all in-kernel tap accesses are unit-stride
    # static slices: plane p = 2*py + px holds x[:, py::2, px::2, :].
    planes = [x_nhwc[:, py::2, px::2, :] for py in range(2) for px in range(2)]
    x_par = jnp.stack(planes, axis=1).astype(jnp.float32)        # (N, 4, IHh, IWh, Cin)

    # (Cout, Cin, kh, kw) -> (kh, kw, cin) row order expected by the kernel.
    w_mat = jnp.transpose(w, (2, 3, 1, 0)).reshape(K * K * Cin, Cout).astype(jnp.float32)
    b_row = b.reshape(1, Cout).astype(jnp.float32)

    out = pl.pallas_call(
        _make_conv_pool_kernel(BN, K, OHh, OWh),
        out_shape=jax.ShapeDtypeStruct((N, OHh * OWh, Cout), jnp.float32),
        grid=grid,
        in_specs=[
            pl.BlockSpec((BN, 4, IHh, IWh, Cin), lambda m: (m, 0, 0, 0, 0)),
            pl.BlockSpec((K * K * Cin, Cout), lambda m: (0, 0)),
            pl.BlockSpec((1, Cout), lambda m: (0, 0)),
        ],
        out_specs=pl.BlockSpec((BN, OHh * OWh, Cout), lambda m: (m, 0, 0)),
        compiler_params=pltpu.CompilerParams(dimension_semantics=("parallel",)),
        cost_estimate=pl.CostEstimate(
            flops=2 * N * OH * OW * K * K * Cin * Cout,
            transcendentals=0,
            bytes_accessed=4 * (N * IH * IW * Cin + K * K * Cin * Cout + Cout
                                + N * OHh * OWh * Cout),
        ),
    )(x_par, w_mat, b_row)
    return out.reshape(N, OHh, OWh, Cout)


# ------------------------------------------------------------------
# Fused FC stack: l1 -> relu -> l2 -> relu -> l3 (all weights VMEM-resident)
# ------------------------------------------------------------------
def _fc_kernel(x_ref, w1_ref, b1_ref, w2_ref, b2_ref, w3_ref, b3_ref, o_ref):
    h = jnp.dot(x_ref[...], w1_ref[...], preferred_element_type=jnp.float32) + b1_ref[...]
    h = jnp.maximum(h, 0.0)
    h = jnp.dot(h, w2_ref[...], preferred_element_type=jnp.float32) + b2_ref[...]
    h = jnp.maximum(h, 0.0)
    o_ref[...] = jnp.dot(h, w3_ref[...], preferred_element_type=jnp.float32) + b3_ref[...]


def fc_stack(feat_hwc, params, pooled_shape):
    """feat_hwc: (N, 320) flattened channel-LAST (h, w, c).  The torch (c, h, w)
    flatten order of .view(-1, 320) is folded into a permutation of the l1 weight."""
    N, F = feat_hwc.shape
    PH, PW, PC = pooled_shape
    d1 = params["l1_w"].shape[0]
    d2 = params["l2_w"].shape[0]
    d3 = params["l3_w"].shape[0]

    # l1_w columns are indexed (c, h, w); reorder to (h, w, c) to match feat_hwc.
    w1 = (params["l1_w"].reshape(d1, PC, PH, PW).transpose(0, 2, 3, 1)
          .reshape(d1, F).T.astype(jnp.float32))                    # (320, 160)
    b1 = params["l1_b"].reshape(1, d1).astype(jnp.float32)
    w2 = params["l2_w"].T.astype(jnp.float32)                       # (160, 80)
    b2 = params["l2_b"].reshape(1, d2).astype(jnp.float32)
    w3 = params["l3_w"].T.astype(jnp.float32)                       # (80, 10)
    b3 = params["l3_b"].reshape(1, d3).astype(jnp.float32)

    BM = N if N <= 512 else 512
    grid = (pl.cdiv(N, BM),)
    return pl.pallas_call(
        _fc_kernel,
        out_shape=jax.ShapeDtypeStruct((N, d3), jnp.float32),
        grid=grid,
        in_specs=[
            pl.BlockSpec((BM, F), lambda m: (m, 0)),
            pl.BlockSpec((F, d1), lambda m: (0, 0)),
            pl.BlockSpec((1, d1), lambda m: (0, 0)),
            pl.BlockSpec((d1, d2), lambda m: (0, 0)),
            pl.BlockSpec((1, d2), lambda m: (0, 0)),
            pl.BlockSpec((d2, d3), lambda m: (0, 0)),
            pl.BlockSpec((1, d3), lambda m: (0, 0)),
        ],
        out_specs=pl.BlockSpec((BM, d3), lambda m: (m, 0)),
        compiler_params=pltpu.CompilerParams(dimension_semantics=("parallel",)),
        cost_estimate=pl.CostEstimate(
            flops=2 * N * (F * d1 + d1 * d2 + d2 * d3),
            transcendentals=0,
            bytes_accessed=4 * (N * F + N * d3 + F * d1 + d1 * d2 + d2 * d3 + d1 + d2 + d3),
        ),
    )(feat_hwc.astype(jnp.float32), w1, b1, w2, b2, w3, b3)


# ------------------------------------------------------------------
# Model: deterministic synthetic parameters (shapes from Net.__init__)
# ------------------------------------------------------------------
def init_params(key):
    ks = jax.random.split(key, 10)
    s = 0.05
    return {
        "conv1_w": jax.random.normal(ks[0], (10, 1, 5, 5), jnp.float32) * s,
        "conv1_b": jax.random.normal(ks[1], (10,), jnp.float32) * s,
        "conv2_w": jax.random.normal(ks[2], (20, 10, 5, 5), jnp.float32) * s,
        "conv2_b": jax.random.normal(ks[3], (20,), jnp.float32) * s,
        "l1_w": jax.random.normal(ks[4], (160, 320), jnp.float32) * s,  # torch (out, in)
        "l1_b": jax.random.normal(ks[5], (160,), jnp.float32) * s,
        "l2_w": jax.random.normal(ks[6], (80, 160), jnp.float32) * s,
        "l2_b": jax.random.normal(ks[7], (80,), jnp.float32) * s,
        "l3_w": jax.random.normal(ks[8], (10, 80), jnp.float32) * s,
        "l3_b": jax.random.normal(ks[9], (10,), jnp.float32) * s,
    }


def net_forward(params, x, *, conv_block=4):
    # x: (N, 1, 28, 28) NCHW; Cin == 1 so NHWC is a pure (free) reshape.
    N, C, H, W = x.shape
    assert C == 1
    x_nhwc = x.reshape(N, H, W, 1).astype(jnp.float32)

    # Pad batch to a multiple of the conv image tile so every conv block is full.
    BN = min(N, conv_block)
    Np = ((N + BN - 1) // BN) * BN
    if Np != N:
        x_nhwc = jnp.pad(x_nhwc, ((0, Np - N), (0, 0), (0, 0), (0, 0)))

    p1 = conv_pool_relu(x_nhwc, params["conv1_w"], params["conv1_b"],
                        block_images=BN)                             # (Np, 12, 12, 10)
    p2 = conv_pool_relu(p1, params["conv2_w"], params["conv2_b"],
                        block_images=BN)                             # (Np, 4, 4, 20)
    feat = p2.reshape(Np, -1)                                        # (Np, 320), (h,w,c)
    out = fc_stack(feat, params, p2.shape[1:])                       # (Np, 10)
    return out[:N]


# ------------------------------------------------------------------
# Pure-JAX reference (torch semantics) for a correctness self-check
# ------------------------------------------------------------------
def _reference_forward(params, x):
    def conv(h, w, b):
        y = jax.lax.conv_general_dilated(
            h, w, window_strides=(1, 1), padding="VALID",
            dimension_numbers=("NCHW", "OIHW", "NCHW"))
        return y + b.reshape(1, -1, 1, 1)

    def pool(y):
        return jnp.maximum(jnp.maximum(y[:, :, 0::2, 0::2], y[:, :, 0::2, 1::2]),
                           jnp.maximum(y[:, :, 1::2, 0::2], y[:, :, 1::2, 1::2]))

    h = pool(jax.nn.relu(conv(x, params["conv1_w"], params["conv1_b"])))
    h = pool(jax.nn.relu(conv(h, params["conv2_w"], params["conv2_b"])))
    h = h.reshape(h.shape[0], -1)                                   # NCHW flatten (c, h, w)
    h = jax.nn.relu(h @ params["l1_w"].T + params["l1_b"])
    h = jax.nn.relu(h @ params["l2_w"].T + params["l2_b"])
    return h @ params["l3_w"].T + params["l3_b"]


if __name__ == "__main__":
    key = jax.random.PRNGKey(0)
    k_param, k_x = jax.random.split(key)
    params = init_params(k_param)
    # Input must be 28x28 so the flatten yields 320 features (as the module implies).
    x = jax.random.normal(k_x, (2, 1, 28, 28), jnp.float32)

    fwd = jax.jit(net_forward)
    out = jax.block_until_ready(fwd(params, x))
    assert out.shape == (2, 10) and out.dtype == jnp.float32

    with jax.default_matmul_precision("highest"):
        ref = jax.block_until_ready(_reference_forward(params, x))
    max_err = float(jnp.max(jnp.abs(out - ref)))
    assert max_err < 1e-3, f"mismatch vs reference: max abs err = {max_err}"

    print("KERNEL_OK")
</pallas_src>

<mosaic_0001>
module attributes {stable_mosaic.version = 11 : i64} {
  func.func @kernel(%arg0: i32, %arg1: memref<2x4x14x14x1xf32, #tpu.memory_space<vmem>>, %arg2: memref<25x10xf32, #tpu.memory_space<vmem>>, %arg3: memref<1x10xf32, #tpu.memory_space<vmem>>, %arg4: memref<2x144x10xf32, #tpu.memory_space<vmem>>) attributes {dimension_semantics = [#tpu.dimension_semantics<parallel>], iteration_bounds = array<i64: 1>, scalar_prefetch = 0 : i64, scratch_operands = 0 : i64, tpu.core_type = #tpu.core_type<tc>, window_params = [{transform_indices = @transform_0, window_bounds = array<i64: 2, 4, 14, 14, 1>}, {pipeline_mode = #tpu.pipeline_mode<synchronous>, transform_indices = @transform_1, window_bounds = array<i64: 25, 10>}, {pipeline_mode = #tpu.pipeline_mode<synchronous>, transform_indices = @transform_2, window_bounds = array<i64: 1, 10>}, {transform_indices = @transform_3, window_bounds = array<i64: 2, 144, 10>}]} {
    %c0 = arith.constant 0 : index
    %c0_0 = arith.constant 0 : index
    %0 = vector.load %arg2[%c0, %c0_0] : memref<25x10xf32, #tpu.memory_space<vmem>>, vector<25x10xf32>
    %c0_1 = arith.constant 0 : index
    %c0_2 = arith.constant 0 : index
    %1 = vector.load %arg3[%c0_1, %c0_2] : memref<1x10xf32, #tpu.memory_space<vmem>>, vector<1x10xf32>
    %c0_3 = arith.constant 0 : index
    %c0_4 = arith.constant 0 : index
    %c0_5 = arith.constant 0 : index
    %c0_6 = arith.constant 0 : index
    %c0_7 = arith.constant 0 : index
    %2 = vector.load %arg1[%c0_3, %c0_4, %c0_5, %c0_6, %c0_7] : memref<2x4x14x14x1xf32, #tpu.memory_space<vmem>>, vector<1x1x14x12x1xf32>
    %3 = vector.shape_cast %2 : vector<1x1x14x12x1xf32> to vector<14x12x1xf32>
    %c0_8 = arith.constant 0 : index
    %c1 = arith.constant 1 : index
    %c0_9 = arith.constant 0 : index
    %c0_10 = arith.constant 0 : index
    %c0_11 = arith.constant 0 : index
    %4 = vector.load %arg1[%c0_8, %c1, %c0_9, %c0_10, %c0_11] : memref<2x4x14x14x1xf32, #tpu.memory_space<vmem>>, vector<1x1x14x12x1xf32>
    %5 = vector.shape_cast %4 : vector<1x1x14x12x1xf32> to vector<14x12x1xf32>
    %c0_12 = arith.constant 0 : index
    %c0_13 = arith.constant 0 : index
    %c0_14 = arith.constant 0 : index
    %c1_15 = arith.constant 1 : index
    %c0_16 = arith.constant 0 : index
    %6 = vector.load %arg1[%c0_12, %c0_13, %c0_14, %c1_15, %c0_16] : memref<2x4x14x14x1xf32, #tpu.memory_space<vmem>>, vector<1x1x14x12x1xf32>
    %7 = vector.shape_cast %6 : vector<1x1x14x12x1xf32> to vector<14x12x1xf32>
    %c0_17 = arith.constant 0 : index
    %c1_18 = arith.constant 1 : index
    %c0_19 = arith.constant 0 : index
    %c1_20 = arith.constant 1 : index
    %c0_21 = arith.constant 0 : index
    %8 = vector.load %arg1[%c0_17, %c1_18, %c0_19, %c1_20, %c0_21] : memref<2x4x14x14x1xf32, #tpu.memory_space<vmem>>, vector<1x1x14x12x1xf32>
    %9 = vector.shape_cast %8 : vector<1x1x14x12x1xf32> to vector<14x12x1xf32>
    %c0_22 = arith.constant 0 : index
    %c0_23 = arith.constant 0 : index
    %c0_24 = arith.constant 0 : index
    %c2 = arith.constant 2 : index
    %c0_25 = arith.constant 0 : index
    %10 = vector.load %arg1[%c0_22, %c0_23, %c0_24, %c2, %c0_25] : memref<2x4x14x14x1xf32, #tpu.memory_space<vmem>>, vector<1x1x14x12x1xf32>
    %11 = vector.shape_cast %10 : vector<1x1x14x12x1xf32> to vector<14x12x1xf32>
    %12 = tpu.concatenate %3, %5, %7, %9, %11 in 2 : vector<14x12x1xf32>, vector<14x12x1xf32>, vector<14x12x1xf32>, vector<14x12x1xf32>, vector<14x12x1xf32> -> vector<14x12x5xf32>
    %c0_26 = arith.constant 0 : index
    %c2_27 = arith.constant 2 : index
    %c0_28 = arith.constant 0 : index
    %c0_29 = arith.constant 0 : index
    %c0_30 = arith.constant 0 : index
    %13 = vector.load %arg1[%c0_26, %c2_27, %c0_28, %c0_29, %c0_30] : memref<2x4x14x14x1xf32, #tpu.memory_space<vmem>>, vector<1x1x14x12x1xf32>
    %14 = vector.shape_cast %13 : vector<1x1x14x12x1xf32> to vector<14x12x1xf32>
    %c0_31 = arith.constant 0 : index
    %c3 = arith.constant 3 : index
    %c0_32 = arith.constant 0 : index
    %c0_33 = arith.constant 0 : index
    %c0_34 = arith.constant 0 : index
    %15 = vector.load %arg1[%c0_31, %c3, %c0_32, %c0_33, %c0_34] : memref<2x4x14x14x1xf32, #tpu.memory_space<vmem>>, vector<1x1x14x12x1xf32>
    %16 = vector.shape_cast %15 : vector<1x1x14x12x1xf32> to vector<14x12x1xf32>
    %c0_35 = arith.constant 0 : index
    %c2_36 = arith.constant 2 : index
    %c0_37 = arith.constant 0 : index
    %c1_38 = arith.constant 1 : index
    %c0_39 = arith.constant 0 : index
    %17 = vector.load %arg1[%c0_35, %c2_36, %c0_37, %c1_38, %c0_39] : memref<2x4x14x14x1xf32, #tpu.memory_space<vmem>>, vector<1x1x14x12x1xf32>
    %18 = vector.shape_cast %17 : vector<1x1x14x12x1xf32> to vector<14x12x1xf32>
    %c0_40 = arith.constant 0 : index
    %c3_41 = arith.constant 3 : index
    %c0_42 = arith.constant 0 : index
    %c1_43 = arith.constant 1 : index
    %c0_44 = arith.constant 0 : index
    %19 = vector.load %arg1[%c0_40, %c3_41, %c0_42, %c1_43, %c0_44] : memref<2x4x14x14x1xf32, #tpu.memory_space<vmem>>, vector<1x1x14x12x1xf32>
    %20 = vector.shape_cast %19 : vector<1x1x14x12x1xf32> to vector<14x12x1xf32>
    %c0_45 = arith.constant 0 : index
    %c2_46 = arith.constant 2 : index
    %c0_47 = arith.constant 0 : index
    %c2_48 = arith.constant 2 : index
    %c0_49 = arith.constant 0 : index
    %21 = vector.load %arg1[%c0_45, %c2_46, %c0_47, %c2_48, %c0_49] : memref<2x4x14x14x1xf32, #tpu.memory_space<vmem>>, vector<1x1x14x12x1xf32>
    %22 = vector.shape_cast %21 : vector<1x1x14x12x1xf32> to vector<14x12x1xf32>
    %23 = tpu.concatenate %14, %16, %18, %20, %22 in 2 : vector<14x12x1xf32>, vector<14x12x1xf32>, vector<14x12x1xf32>, vector<14x12x1xf32>, vector<14x12x1xf32> -> vector<14x12x5xf32>
    %24 = vector.extract_strided_slice %12 {offsets = [0, 0, 0], sizes = [12, 12, 5], strides = [1, 1, 1]} : vector<14x12x5xf32> to vector<12x12x5xf32>
    %25 = vector.extract_strided_slice %23 {offsets = [0, 0, 0], sizes = [12, 12, 5], strides = [1, 1, 1]} : vector<14x12x5xf32> to vector<12x12x5xf32>
    %26 = vector.extract_strided_slice %12 {offsets = [1, 0, 0], sizes = [12, 12, 5], strides = [1, 1, 1]} : vector<14x12x5xf32> to vector<12x12x5xf32>
    %27 = vector.extract_strided_slice %23 {offsets = [1, 0, 0], sizes = [12, 12, 5], strides = [1, 1, 1]} : vector<14x12x5xf32> to vector<12x12x5xf32>
    %28 = vector.extract_strided_slice %12 {offsets = [2, 0, 0], sizes = [12, 12, 5], strides = [1, 1, 1]} : vector<14x12x5xf32> to vector<12x12x5xf32>
    %29 = tpu.concatenate %24, %25, %26, %27, %28 in 2 : vector<12x12x5xf32>, vector<12x12x5xf32>, vector<12x12x5xf32>, vector<12x12x5xf32>, vector<12x12x5xf32> -> vector<12x12x25xf32>
    %30 = vector.extract_strided_slice %29 {offsets = [0, 0, 0], sizes = [1, 12, 25], strides = [1, 1, 1]} : vector<12x12x25xf32> to vector<1x12x25xf32>
    %31 = vector.shape_cast %30 : vector<1x12x25xf32> to vector<12x25xf32>
    %32 = vector.extract_strided_slice %29 {offsets = [1, 0, 0], sizes = [1, 12, 25], strides = [1, 1, 1]} : vector<12x12x25xf32> to vector<1x12x25xf32>
    %33 = vector.shape_cast %32 : vector<1x12x25xf32> to vector<12x25xf32>
    %34 = vector.extract_strided_slice %29 {offsets = [2, 0, 0], sizes = [1, 12, 25], strides = [1, 1, 1]} : vector<12x12x25xf32> to vector<1x12x25xf32>
    %35 = vector.shape_cast %34 : vector<1x12x25xf32> to vector<12x25xf32>
    %36 = vector.extract_strided_slice %29 {offsets = [3, 0, 0], sizes = [1, 12, 25], strides = [1, 1, 1]} : vector<12x12x25xf32> to vector<1x12x25xf32>
    %37 = vector.shape_cast %36 : vector<1x12x25xf32> to vector<12x25xf32>
    %38 = vector.extract_strided_slice %29 {offsets = [4, 0, 0], sizes = [1, 12, 25], strides = [1, 1, 1]} : vector<12x12x25xf32> to vector<1x12x25xf32>
    %39 = vector.shape_cast %38 : vector<1x12x25xf32> to vector<12x25xf32>
    %40 = vector.extract_strided_slice %29 {offsets = [5, 0, 0], sizes = [1, 12, 25], strides = [1, 1, 1]} : vector<12x12x25xf32> to vector<1x12x25xf32>
    %41 = vector.shape_cast %40 : vector<1x12x25xf32> to vector<12x25xf32>
    %42 = vector.extract_strided_slice %29 {offsets = [6, 0, 0], sizes = [1, 12, 25], strides = [1, 1, 1]} : vector<12x12x25xf32> to vector<1x12x25xf32>
    %43 = vector.shape_cast %42 : vector<1x12x25xf32> to vector<12x25xf32>
    %44 = vector.extract_strided_slice %29 {offsets = [7, 0, 0], sizes = [1, 12, 25], strides = [1, 1, 1]} : vector<12x12x25xf32> to vector<1x12x25xf32>
    %45 = vector.shape_cast %44 : vector<1x12x25xf32> to vector<12x25xf32>
    %46 = vector.extract_strided_slice %29 {offsets = [8, 0, 0], sizes = [1, 12, 25], strides = [1, 1, 1]} : vector<12x12x25xf32> to vector<1x12x25xf32>
    %47 = vector.shape_cast %46 : vector<1x12x25xf32> to vector<12x25xf32>
    %48 = vector.extract_strided_slice %29 {offsets = [9, 0, 0], sizes = [1, 12, 25], strides = [1, 1, 1]} : vector<12x12x25xf32> to vector<1x12x25xf32>
    %49 = vector.shape_cast %48 : vector<1x12x25xf32> to vector<12x25xf32>
    %50 = vector.extract_strided_slice %29 {offsets = [10, 0, 0], sizes = [1, 12, 25], strides = [1, 1, 1]} : vector<12x12x25xf32> to vector<1x12x25xf32>
    %51 = vector.shape_cast %50 : vector<1x12x25xf32> to vector<12x25xf32>
    %52 = vector.extract_strided_slice %29 {offsets = [11, 0, 0], sizes = [1, 12, 25], strides = [1, 1, 1]} : vector<12x12x25xf32> to vector<1x12x25xf32>
    %53 = vector.shape_cast %52 : vector<1x12x25xf32> to vector<12x25xf32>
    %54 = tpu.concatenate %31, %33, %35, %37, %39, %41, %43, %45, %47, %49, %51, %53 in 0 : vector<12x25xf32>, vector<12x25xf32>, vector<12x25xf32>, vector<12x25xf32>, vector<12x25xf32>, vector<12x25xf32>, vector<12x25xf32>, vector<12x25xf32>, vector<12x25xf32>, vector<12x25xf32>, vector<12x25xf32>, vector<12x25xf32> -> vector<144x25xf32>
    %cst = arith.constant dense<0.000000e+00> : vector<144x10xf32>
    %55 = tpu.matmul %54, %0, %cst {dimension_numbers = #tpu.dot_dimension_numbers<[1], [0], [0], [1], [0, 0, 1, 1], [], []>} : vector<144x25xf32>, vector<25x10xf32>, vector<144x10xf32> -> vector<144x10xf32>
    %56 = vector.broadcast %1 : vector<1x10xf32> to vector<144x10xf32>
    %57 = arith.addf %55, %56 : vector<144x10xf32>
    %cst_50 = arith.constant 0.000000e+00 : f32
    %58 = vector.broadcast %cst_50 : f32 to vector<144x10xf32>
    %59 = arith.maximumf %57, %58 : vector<144x10xf32>
    %60 = vector.extract_strided_slice %23 {offsets = [0, 0, 0], sizes = [12, 12, 5], strides = [1, 1, 1]} : vector<14x12x5xf32> to vector<12x12x5xf32>
    %61 = vector.extract_strided_slice %12 {offsets = [1, 0, 0], sizes = [12, 12, 5], strides = [1, 1, 1]} : vector<14x12x5xf32> to vector<12x12x5xf32>
    %62 = vector.extract_strided_slice %23 {offsets = [1, 0, 0], sizes = [12, 12, 5], strides = [1, 1, 1]} : vector<14x12x5xf32> to vector<12x12x5xf32>
    %63 = vector.extract_strided_slice %12 {offsets = [2, 0, 0], sizes = [12, 12, 5], strides = [1, 1, 1]} : vector<14x12x5xf32> to vector<12x12x5xf32>
    %64 = vector.extract_strided_slice %23 {offsets = [2, 0, 0], sizes = [12, 12, 5], strides = [1, 1, 1]} : vector<14x12x5xf32> to vector<12x12x5xf32>
    %65 = tpu.concatenate %60, %61, %62, %63, %64 in 2 : vector<12x12x5xf32>, vector<12x12x5xf32>, vector<12x12x5xf32>, vector<12x12x5xf32>, vector<12x12x5xf32> -> vector<12x12x25xf32>
    %66 = vector.extract_strided_slice %65 {offsets = [0, 0, 0], sizes = [1, 12, 25], strides = [1, 1, 1]} : vector<12x12x25xf32> to vector<1x12x25xf32>
    %67 = vector.shape_cast %66 : vector<1x12x25xf32> to vector<12x25xf32>
    %68 = vector.extract_strided_slice %65 {offsets = [1, 0, 0], sizes = [1, 12, 25], strides = [1, 1, 1]} : vector<12x12x25xf32> to vector<1x12x25xf32>
    %69 = vector.shape_cast %68 : vector<1x12x25xf32> to vector<12x25xf32>
    %70 = vector.extract_strided_slice %65 {offsets = [2, 0, 0], sizes = [1, 12, 25], strides = [1, 1, 1]} : vector<12x12x25xf32> to vector<1x12x25xf32>
    %71 = vector.shape_cast %70 : vector<1x12x25xf32> to vector<12x25xf32>
    %72 = vector.extract_strided_slice %65 {offsets = [3, 0, 0], sizes = [1, 12, 25], strides = [1, 1, 1]} : vector<12x12x25xf32> to vector<1x12x25xf32>
    %73 = vector.shape_cast %72 : vector<1x12x25xf32> to vector<12x25xf32>
    %74 = vector.extract_strided_slice %65 {offsets = [4, 0, 0], sizes = [1, 12, 25], strides = [1, 1, 1]} : vector<12x12x25xf32> to vector<1x12x25xf32>
    %75 = vector.shape_cast %74 : vector<1x12x25xf32> to vector<12x25xf32>
    %76 = vector.extract_strided_slice %65 {offsets = [5, 0, 0], sizes = [1, 12, 25], strides = [1, 1, 1]} : vector<12x12x25xf32> to vector<1x12x25xf32>
    %77 = vector.shape_cast %76 : vector<1x12x25xf32> to vector<12x25xf32>
    %78 = vector.extract_strided_slice %65 {offsets = [6, 0, 0], sizes = [1, 12, 25], strides = [1, 1, 1]} : vector<12x12x25xf32> to vector<1x12x25xf32>
    %79 = vector.shape_cast %78 : vector<1x12x25xf32> to vector<12x25xf32>
    %80 = vector.extract_strided_slice %65 {offsets = [7, 0, 0], sizes = [1, 12, 25], strides = [1, 1, 1]} : vector<12x12x25xf32> to vector<1x12x25xf32>
    %81 = vector.shape_cast %80 : vector<1x12x25xf32> to vector<12x25xf32>
    %82 = vector.extract_strided_slice %65 {offsets = [8, 0, 0], sizes = [1, 12, 25], strides = [1, 1, 1]} : vector<12x12x25xf32> to vector<1x12x25xf32>
    %83 = vector.shape_cast %82 : vector<1x12x25xf32> to vector<12x25xf32>
    %84 = vector.extract_strided_slice %65 {offsets = [9, 0, 0], sizes = [1, 12, 25], strides = [1, 1, 1]} : vector<12x12x25xf32> to vector<1x12x25xf32>
    %85 = vector.shape_cast %84 : vector<1x12x25xf32> to vector<12x25xf32>
    %86 = vector.extract_strided_slice %65 {offsets = [10, 0, 0], sizes = [1, 12, 25], strides = [1, 1, 1]} : vector<12x12x25xf32> to vector<1x12x25xf32>
    %87 = vector.shape_cast %86 : vector<1x12x25xf32> to vector<12x25xf32>
    %88 = vector.extract_strided_slice %65 {offsets = [11, 0, 0], sizes = [1, 12, 25], strides = [1, 1, 1]} : vector<12x12x25xf32> to vector<1x12x25xf32>
    %89 = vector.shape_cast %88 : vector<1x12x25xf32> to vector<12x25xf32>
    %90 = tpu.concatenate %67, %69, %71, %73, %75, %77, %79, %81, %83, %85, %87, %89 in 0 : vector<12x25xf32>, vector<12x25xf32>, vector<12x25xf32>, vector<12x25xf32>, vector<12x25xf32>, vector<12x25xf32>, vector<12x25xf32>, vector<12x25xf32>, vector<12x25xf32>, vector<12x25xf32>, vector<12x25xf32>, vector<12x25xf32> -> vector<144x25xf32>
    %cst_51 = arith.constant dense<0.000000e+00> : vector<144x10xf32>
    %91 = tpu.matmul %90, %0, %cst_51 {dimension_numbers = #tpu.dot_dimension_numbers<[1], [0], [0], [1], [0, 0, 1, 1], [], []>} : vector<144x25xf32>, vector<25x10xf32>, vector<144x10xf32> -> vector<144x10xf32>
    %92 = vector.broadcast %1 : vector<1x10xf32> to vector<144x10xf32>
    %93 = arith.addf %91, %92 : vector<144x10xf32>
    %cst_52 = arith.constant 0.000000e+00 : f32
    %94 = vector.broadcast %cst_52 : f32 to vector<144x10xf32>
    %95 = arith.maximumf %93, %94 : vector<144x10xf32>
    %96 = arith.maximumf %59, %95 : vector<144x10xf32>
    %c0_53 = arith.constant 0 : index
    %c1_54 = arith.constant 1 : index
    %c0_55 = arith.constant 0 : index
    %c0_56 = arith.constant 0 : index
    %c0_57 = arith.constant 0 : index
    %97 = vector.load %arg1[%c0_53, %c1_54, %c0_55, %c0_56, %c0_57] : memref<2x4x14x14x1xf32, #tpu.memory_space<vmem>>, vector<1x1x14x12x1xf32>
    %98 = vector.shape_cast %97 : vector<1x1x14x12x1xf32> to vector<14x12x1xf32>
    %c0_58 = arith.constant 0 : index
    %c0_59 = arith.constant 0 : index
    %c0_60 = arith.constant 0 : index
    %c1_61 = arith.constant 1 : index
    %c0_62 = arith.constant 0 : index
    %99 = vector.load %arg1[%c0_58, %c0_59, %c0_60, %c1_61, %c0_62] : memref<2x4x14x14x1xf32, #tpu.memory_space<vmem>>, vector<1x1x14x12x1xf32>
    %100 = vector.shape_cast %99 : vector<1x1x14x12x1xf32> to vector<14x12x1xf32>
    %c0_63 = arith.constant 0 : index
    %c1_64 = arith.constant 1 : index
    %c0_65 = arith.constant 0 : index
    %c1_66 = arith.constant 1 : index
    %c0_67 = arith.constant 0 : index
    %101 = vector.load %arg1[%c0_63, %c1_64, %c0_65, %c1_66, %c0_67] : memref<2x4x14x14x1xf32, #tpu.memory_space<vmem>>, vector<1x1x14x12x1xf32>
    %102 = vector.shape_cast %101 : vector<1x1x14x12x1xf32> to vector<14x12x1xf32>
    %c0_68 = arith.constant 0 : index
    %c0_69 = arith.constant 0 : index
    %c0_70 = arith.constant 0 : index
    %c2_71 = arith.constant 2 : index
    %c0_72 = arith.constant 0 : index
    %103 = vector.load %arg1[%c0_68, %c0_69, %c0_70, %c2_71, %c0_72] : memref<2x4x14x14x1xf32, #tpu.memory_space<vmem>>, vector<1x1x14x12x1xf32>
    %104 = vector.shape_cast %103 : vector<1x1x14x12x1xf32> to vector<14x12x1xf32>
    %c0_73 = arith.constant 0 : index
    %c1_74 = arith.constant 1 : index
    %c0_75 = arith.constant 0 : index
    %c2_76 = arith.constant 2 : index
    %c0_77 = arith.constant 0 : index
    %105 = vector.load %arg1[%c0_73, %c1_74, %c0_75, %c2_76, %c0_77] : memref<2x4x14x14x1xf32, #tpu.memory_space<vmem>>, vector<1x1x14x12x1xf32>
    %106 = vector.shape_cast %105 : vector<1x1x14x12x1xf32> to vector<14x12x1xf32>
    %107 = tpu.concatenate %98, %100, %102, %104, %106 in 2 : vector<14x12x1xf32>, vector<14x12x1xf32>, vector<14x12x1xf32>, vector<14x12x1xf32>, vector<14x12x1xf32> -> vector<14x12x5xf32>
    %c0_78 = arith.constant 0 : index
    %c3_79 = arith.constant 3 : index
    %c0_80 = arith.constant 0 : index
    %c0_81 = arith.constant 0 : index
    %c0_82 = arith.constant 0 : index
    %108 = vector.load %arg1[%c0_78, %c3_79, %c0_80, %c0_81, %c0_82] : memref<2x4x14x14x1xf32, #tpu.memory_space<vmem>>, vector<1x1x14x12x1xf32>
    %109 = vector.shape_cast %108 : vector<1x1x14x12x1xf32> to vector<14x12x1xf32>
    %c0_83 = arith.constant 0 : index
    %c2_84 = arith.constant 2 : index
    %c0_85 = arith.constant 0 : index
    %c1_86 = arith.constant 1 : index
    %c0_87 = arith.constant 0 : index
    %110 = vector.load %arg1[%c0_83, %c2_84, %c0_85, %c1_86, %c0_87] : memref<2x4x14x14x1xf32, #tpu.memory_space<vmem>>, vector<1x1x14x12x1xf32>
    %111 = vector.shape_cast %110 : vector<1x1x14x12x1xf32> to vector<14x12x1xf32>
    %c0_88 = arith.constant 0 : index
    %c3_89 = arith.constant 3 : index
    %c0_90 = arith.constant 0 : index
    %c1_91 = arith.constant 1 : index
    %c0_92 = arith.constant 0 : index
    %112 = vector.load %arg1[%c0_88, %c3_89, %c0_90, %c1_91, %c0_92] : memref<2x4x14x14x1xf32, #tpu.memory_space<vmem>>, vector<1x1x14x12x1xf32>
    %113 = vector.shape_cast %112 : vector<1x1x14x12x1xf32> to vector<14x12x1xf32>
    %c0_93 = arith.constant 0 : index
    %c2_94 = arith.constant 2 : index
    %c0_95 = arith.constant 0 : index
    %c2_96 = arith.constant 2 : index
    %c0_97 = arith.constant 0 : index
    %114 = vector.load %arg1[%c0_93, %c2_94, %c0_95, %c2_96, %c0_97] : memref<2x4x14x14x1xf32, #tpu.memory_space<vmem>>, vector<1x1x14x12x1xf32>
    %115 = vector.shape_cast %114 : vector<1x1x14x12x1xf32> to vector<14x12x1xf32>
    %c0_98 = arith.constant 0 : index
    %c3_99 = arith.constant 3 : index
    %c0_100 = arith.constant 0 : index
    %c2_101 = arith.constant 2 : index
    %c0_102 = arith.constant 0 : index
    %116 = vector.load %arg1[%c0_98, %c3_99, %c0_100, %c2_101, %c0_102] : memref<2x4x14x14x1xf32, #tpu.memory_space<vmem>>, vector<1x1x14x12x1xf32>
    %117 = vector.shape_cast %116 : vector<1x1x14x12x1xf32> to vector<14x12x1xf32>
    %118 = tpu.concatenate %109, %111, %113, %115, %117 in 2 : vector<14x12x1xf32>, vector<14x12x1xf32>, vector<14x12x1xf32>, vector<14x12x1xf32>, vector<14x12x1xf32> -> vector<14x12x5xf32>
    %119 = vector.extract_strided_slice %107 {offsets = [0, 0, 0], sizes = [12, 12, 5], strides = [1, 1, 1]} : vector<14x12x5xf32> to vector<12x12x5xf32>
    %120 = vector.extract_strided_slice %118 {offsets = [0, 0, 0], sizes = [12, 12, 5], strides = [1, 1, 1]} : vector<14x12x5xf32> to vector<12x12x5xf32>
    %121 = vector.extract_strided_slice %107 {offsets = [1, 0, 0], sizes = [12, 12, 5], strides = [1, 1, 1]} : vector<14x12x5xf32> to vector<12x12x5xf32>
    %122 = vector.extract_strided_slice %118 {offsets = [1, 0, 0], sizes = [12, 12, 5], strides = [1, 1, 1]} : vector<14x12x5xf32> to vector<12x12x5xf32>
    %123 = vector.extract_strided_slice %107 {offsets = [2, 0, 0], sizes = [12, 12, 5], strides = [1, 1, 1]} : vector<14x12x5xf32> to vector<12x12x5xf32>
    %124 = tpu.concatenate %119, %120, %121, %122, %123 in 2 : vector<12x12x5xf32>, vector<12x12x5xf32>, vector<12x12x5xf32>, vector<12x12x5xf32>, vector<12x12x5xf32> -> vector<12x12x25xf32>
    %125 = vector.extract_strided_slice %124 {offsets = [0, 0, 0], sizes = [1, 12, 25], strides = [1, 1, 1]} : vector<12x12x25xf32> to vector<1x12x25xf32>
    %126 = vector.shape_cast %125 : vector<1x12x25xf32> to vector<12x25xf32>
    %127 = vector.extract_strided_slice %124 {offsets = [1, 0, 0], sizes = [1, 12, 25], strides = [1, 1, 1]} : vector<12x12x25xf32> to vector<1x12x25xf32>
    %128 = vector.shape_cast %127 : vector<1x12x25xf32> to vector<12x25xf32>
    %129 = vector.extract_strided_slice %124 {offsets = [2, 0, 0], sizes = [1, 12, 25], strides = [1, 1, 1]} : vector<12x12x25xf32> to vector<1x12x25xf32>
    %130 = vector.shape_cast %129 : vector<1x12x25xf32> to vector<12x25xf32>
    %131 = vector.extract_strided_slice %124 {offsets = [3, 0, 0], sizes = [1, 12, 25], strides = [1, 1, 1]} : vector<12x12x25xf32> to vector<1x12x25xf32>
    %132 = vector.shape_cast %131 : vector<1x12x25xf32> to vector<12x25xf32>
    %133 = vector.extract_strided_slice %124 {offsets = [4, 0, 0], sizes = [1, 12, 25], strides = [1, 1, 1]} : vector<12x12x25xf32> to vector<1x12x25xf32>
    %134 = vector.shape_cast %133 : vector<1x12x25xf32> to vector<12x25xf32>
    %135 = vector.extract_strided_slice %124 {offsets = [5, 0, 0], sizes = [1, 12, 25], strides = [1, 1, 1]} : vector<12x12x25xf32> to vector<1x12x25xf32>
    %136 = vector.shape_cast %135 : vector<1x12x25xf32> to vector<12x25xf32>
    %137 = vector.extract_strided_slice %124 {offsets = [6, 0, 0], sizes = [1, 12, 25], strides = [1, 1, 1]} : vector<12x12x25xf32> to vector<1x12x25xf32>
    %138 = vector.shape_cast %137 : vector<1x12x25xf32> to vector<12x25xf32>
    %139 = vector.extract_strided_slice %124 {offsets = [7, 0, 0], sizes = [1, 12, 25], strides = [1, 1, 1]} : vector<12x12x25xf32> to vector<1x12x25xf32>
    %140 = vector.shape_cast %139 : vector<1x12x25xf32> to vector<12x25xf32>
    %141 = vector.extract_strided_slice %124 {offsets = [8, 0, 0], sizes = [1, 12, 25], strides = [1, 1, 1]} : vector<12x12x25xf32> to vector<1x12x25xf32>
    %142 = vector.shape_cast %141 : vector<1x12x25xf32> to vector<12x25xf32>
    %143 = vector.extract_strided_slice %124 {offsets = [9, 0, 0], sizes = [1, 12, 25], strides = [1, 1, 1]} : vector<12x12x25xf32> to vector<1x12x25xf32>
    %144 = vector.shape_cast %143 : vector<1x12x25xf32> to vector<12x25xf32>
    %145 = vector.extract_strided_slice %124 {offsets = [10, 0, 0], sizes = [1, 12, 25], strides = [1, 1, 1]} : vector<12x12x25xf32> to vector<1x12x25xf32>
    %146 = vector.shape_cast %145 : vector<1x12x25xf32> to vector<12x25xf32>
    %147 = vector.extract_strided_slice %124 {offsets = [11, 0, 0], sizes = [1, 12, 25], strides = [1, 1, 1]} : vector<12x12x25xf32> to vector<1x12x25xf32>
    %148 = vector.shape_cast %147 : vector<1x12x25xf32> to vector<12x25xf32>
    %149 = tpu.concatenate %126, %128, %130, %132, %134, %136, %138, %140, %142, %144, %146, %148 in 0 : vector<12x25xf32>, vector<12x25xf32>, vector<12x25xf32>, vector<12x25xf32>, vector<12x25xf32>, vector<12x25xf32>, vector<12x25xf32>, vector<12x25xf32>, vector<12x25xf32>, vector<12x25xf32>, vector<12x25xf32>, vector<12x25xf32> -> vector<144x25xf32>
    %cst_103 = arith.constant dense<0.000000e+00> : vector<144x10xf32>
    %150 = tpu.matmul %149, %0, %cst_103 {dimension_numbers = #tpu.dot_dimension_numbers<[1], [0], [0], [1], [0, 0, 1, 1], [], []>} : vector<144x25xf32>, vector<25x10xf32>, vector<144x10xf32> -> vector<144x10xf32>
    %151 = vector.broadcast %1 : vector<1x10xf32> to vector<144x10xf32>
    %152 = arith.addf %150, %151 : vector<144x10xf32>
    %cst_104 = arith.constant 0.000000e+00 : f32
    %153 = vector.broadcast %cst_104 : f32 to vector<144x10xf32>
    %154 = arith.maximumf %152, %153 : vector<144x10xf32>
    %155 = arith.maximumf %96, %154 : vector<144x10xf32>
    %156 = vector.extract_strided_slice %118 {offsets = [0, 0, 0], sizes = [12, 12, 5], strides = [1, 1, 1]} : vector<14x12x5xf32> to vector<12x12x5xf32>
    %157 = vector.extract_strided_slice %107 {offsets = [1, 0, 0], sizes = [12, 12, 5], strides = [1, 1, 1]} : vector<14x12x5xf32> to vector<12x12x5xf32>
    %158 = vector.extract_strided_slice %118 {offsets = [1, 0, 0], sizes = [12, 12, 5], strides = [1, 1, 1]} : vector<14x12x5xf32> to vector<12x12x5xf32>
    %159 = vector.extract_strided_slice %107 {offsets = [2, 0, 0], sizes = [12, 12, 5], strides = [1, 1, 1]} : vector<14x12x5xf32> to vector<12x12x5xf32>
    %160 = vector.extract_strided_slice %118 {offsets = [2, 0, 0], sizes = [12, 12, 5], strides = [1, 1, 1]} : vector<14x12x5xf32> to vector<12x12x5xf32>
    %161 = tpu.concatenate %156, %157, %158, %159, %160 in 2 : vector<12x12x5xf32>, vector<12x12x5xf32>, vector<12x12x5xf32>, vector<12x12x5xf32>, vector<12x12x5xf32> -> vector<12x12x25xf32>
    %162 = vector.extract_strided_slice %161 {offsets = [0, 0, 0], sizes = [1, 12, 25], strides = [1, 1, 1]} : vector<12x12x25xf32> to vector<1x12x25xf32>
    %163 = vector.shape_cast %162 : vector<1x12x25xf32> to vector<12x25xf32>
    %164 = vector.extract_strided_slice %161 {offsets = [1, 0, 0], sizes = [1, 12, 25], strides = [1, 1, 1]} : vector<12x12x25xf32> to vector<1x12x25xf32>
    %165 = vector.shape_cast %164 : vector<1x12x25xf32> to vector<12x25xf32>
    %166 = vector.extract_strided_slice %161 {offsets = [2, 0, 0], sizes = [1, 12, 25], strides = [1, 1, 1]} : vector<12x12x25xf32> to vector<1x12x25xf32>
    %167 = vector.shape_cast %166 : vector<1x12x25xf32> to vector<12x25xf32>
    %168 = vector.extract_strided_slice %161 {offsets = [3, 0, 0], sizes = [1, 12, 25], strides = [1, 1, 1]} : vector<12x12x25xf32> to vector<1x12x25xf32>
    %169 = vector.shape_cast %168 : vector<1x12x25xf32> to vector<12x25xf32>
    %170 = vector.extract_strided_slice %161 {offsets = [4, 0, 0], sizes = [1, 12, 25], strides = [1, 1, 1]} : vector<12x12x25xf32> to vector<1x12x25xf32>
    %171 = vector.shape_cast %170 : vector<1x12x25xf32> to vector<12x25xf32>
    %172 = vector.extract_strided_slice %161 {offsets = [5, 0, 0], sizes = [1, 12, 25], strides = [1, 1, 1]} : vector<12x12x25xf32> to vector<1x12x25xf32>
    %173 = vector.shape_cast %172 : vector<1x12x25xf32> to vector<12x25xf32>
    %174 = vector.extract_strided_slice %161 {offsets = [6, 0, 0], sizes = [1, 12, 25], strides = [1, 1, 1]} : vector<12x12x25xf32> to vector<1x12x25xf32>
    %175 = vector.shape_cast %174 : vector<1x12x25xf32> to vector<12x25xf32>
    %176 = vector.extract_strided_slice %161 {offsets = [7, 0, 0], sizes = [1, 12, 25], strides = [1, 1, 1]} : vector<12x12x25xf32> to vector<1x12x25xf32>
    %177 = vector.shape_cast %176 : vector<1x12x25xf32> to vector<12x25xf32>
    %178 = vector.extract_strided_slice %161 {offsets = [8, 0, 0], sizes = [1, 12, 25], strides = [1, 1, 1]} : vector<12x12x25xf32> to vector<1x12x25xf32>
    %179 = vector.shape_cast %178 : vector<1x12x25xf32> to vector<12x25xf32>
    %180 = vector.extract_strided_slice %161 {offsets = [9, 0, 0], sizes = [1, 12, 25], strides = [1, 1, 1]} : vector<12x12x25xf32> to vector<1x12x25xf32>
    %181 = vector.shape_cast %180 : vector<1x12x25xf32> to vector<12x25xf32>
    %182 = vector.extract_strided_slice %161 {offsets = [10, 0, 0], sizes = [1, 12, 25], strides = [1, 1, 1]} : vector<12x12x25xf32> to vector<1x12x25xf32>
    %183 = vector.shape_cast %182 : vector<1x12x25xf32> to vector<12x25xf32>
    %184 = vector.extract_strided_slice %161 {offsets = [11, 0, 0], sizes = [1, 12, 25], strides = [1, 1, 1]} : vector<12x12x25xf32> to vector<1x12x25xf32>
    %185 = vector.shape_cast %184 : vector<1x12x25xf32> to vector<12x25xf32>
    %186 = tpu.concatenate %163, %165, %167, %169, %171, %173, %175, %177, %179, %181, %183, %185 in 0 : vector<12x25xf32>, vector<12x25xf32>, vector<12x25xf32>, vector<12x25xf32>, vector<12x25xf32>, vector<12x25xf32>, vector<12x25xf32>, vector<12x25xf32>, vector<12x25xf32>, vector<12x25xf32>, vector<12x25xf32>, vector<12x25xf32> -> vector<144x25xf32>
    %cst_105 = arith.constant dense<0.000000e+00> : vector<144x10xf32>
    %187 = tpu.matmul %186, %0, %cst_105 {dimension_numbers = #tpu.dot_dimension_numbers<[1], [0], [0], [1], [0, 0, 1, 1], [], []>} : vector<144x25xf32>, vector<25x10xf32>, vector<144x10xf32> -> vector<144x10xf32>
    %188 = vector.broadcast %1 : vector<1x10xf32> to vector<144x10xf32>
    %189 = arith.addf %187, %188 : vector<144x10xf32>
    %cst_106 = arith.constant 0.000000e+00 : f32
    %190 = vector.broadcast %cst_106 : f32 to vector<144x10xf32>
    %191 = arith.maximumf %189, %190 : vector<144x10xf32>
    %192 = arith.maximumf %155, %191 : vector<144x10xf32>
    %c0_107 = arith.constant 0 : index
    %c0_108 = arith.constant 0 : index
    %c0_109 = arith.constant 0 : index
    %193 = vector.load %arg4[%c0_107, %c0_108, %c0_109] : memref<2x144x10xf32, #tpu.memory_space<vmem>>, vector<1x144x10xf32>
    %194 = vector.shape_cast %193 : vector<1x144x10xf32> to vector<144x10xf32>
    %195 = vector.shape_cast %192 : vector<144x10xf32> to vector<1x144x10xf32>
    tpu.vector_store %arg4[%c0_107, %c0_108, %c0_109], %195 {strides = array<i32>} : memref<2x144x10xf32, #tpu.memory_space<vmem>>, vector<1x144x10xf32>,
    %c1_110 = arith.constant 1 : index
    %c0_111 = arith.constant 0 : index
    %c0_112 = arith.constant 0 : index
    %c0_113 = arith.constant 0 : index
    %c0_114 = arith.constant 0 : index
    %196 = vector.load %arg1[%c1_110, %c0_111, %c0_112, %c0_113, %c0_114] : memref<2x4x14x14x1xf32, #tpu.memory_space<vmem>>, vector<1x1x14x12x1xf32>
    %197 = vector.shape_cast %196 : vector<1x1x14x12x1xf32> to vector<14x12x1xf32>
    %c1_115 = arith.constant 1 : index
    %c1_116 = arith.constant 1 : index
    %c0_117 = arith.constant 0 : index
    %c0_118 = arith.constant 0 : index
    %c0_119 = arith.constant 0 : index
    %198 = vector.load %arg1[%c1_115, %c1_116, %c0_117, %c0_118, %c0_119] : memref<2x4x14x14x1xf32, #tpu.memory_space<vmem>>, vector<1x1x14x12x1xf32>
    %199 = vector.shape_cast %198 : vector<1x1x14x12x1xf32> to vector<14x12x1xf32>
    %c1_120 = arith.constant 1 : index
    %c0_121 = arith.constant 0 : index
    %c0_122 = arith.constant 0 : index
    %c1_123 = arith.constant 1 : index
    %c0_124 = arith.constant 0 : index
    %200 = vector.load %arg1[%c1_120, %c0_121, %c0_122, %c1_123, %c0_124] : memref<2x4x14x14x1xf32, #tpu.memory_space<vmem>>, vector<1x1x14x12x1xf32>
    %201 = vector.shape_cast %200 : vector<1x1x14x12x1xf32> to vector<14x12x1xf32>
    %c1_125 = arith.constant 1 : index
    %c1_126 = arith.constant 1 : index
    %c0_127 = arith.constant 0 : index
    %c1_128 = arith.constant 1 : index
    %c0_129 = arith.constant 0 : index
    %202 = vector.load %arg1[%c1_125, %c1_126, %c0_127, %c1_128, %c0_129] : memref<2x4x14x14x1xf32, #tpu.memory_space<vmem>>, vector<1x1x14x12x1xf32>
    %203 = vector.shape_cast %202 : vector<1x1x14x12x1xf32> to vector<14x12x1xf32>
    %c1_130 = arith.constant 1 : index
    %c0_131 = arith.constant 0 : index
    %c0_132 = arith.constant 0 : index
    %c2_133 = arith.constant 2 : index
    %c0_134 = arith.constant 0 : index
    %204 = vector.load %arg1[%c1_130, %c0_131, %c0_132, %c2_133, %c0_134] : memref<2x4x14x14x1xf32, #tpu.memory_space<vmem>>, vector<1x1x14x12x1xf32>
    %205 = vector.shape_cast %204 : vector<1x1x14x12x1xf32> to vector<14x12x1xf32>
    %206 = tpu.concatenate %197, %199, %201, %203, %205 in 2 : vector<14x12x1xf32>, vector<14x12x1xf32>, vector<14x12x1xf32>, vector<14x12x1xf32>, vector<14x12x1xf32> -> vector<14x12x5xf32>
    %c1_135 = arith.constant 1 : index
    %c2_136 = arith.constant 2 : index
    %c0_137 = arith.constant 0 : index
    %c0_138 = arith.constant 0 : index
    %c0_139 = arith.constant 0 : index
    %207 = vector.load %arg1[%c1_135, %c2_136, %c0_137, %c0_138, %c0_139] : memref<2x4x14x14x1xf32, #tpu.memory_space<vmem>>, vector<1x1x14x12x1xf32>
    %208 = vector.shape_cast %207 : vector<1x1x14x12x1xf32> to vector<14x12x1xf32>
    %c1_140 = arith.constant 1 : index
    %c3_141 = arith.constant 3 : index
    %c0_142 = arith.constant 0 : index
    %c0_143 = arith.constant 0 : index
    %c0_144 = arith.constant 0 : index
    %209 = vector.load %arg1[%c1_140, %c3_141, %c0_142, %c0_143, %c0_144] : memref<2x4x14x14x1xf32, #tpu.memory_space<vmem>>, vector<1x1x14x12x1xf32>
    %210 = vector.shape_cast %209 : vector<1x1x14x12x1xf32> to vector<14x12x1xf32>
    %c1_145 = arith.constant 1 : index
    %c2_146 = arith.constant 2 : index
    %c0_147 = arith.constant 0 : index
    %c1_148 = arith.constant 1 : index
    %c0_149 = arith.constant 0 : index
    %211 = vector.load %arg1[%c1_145, %c2_146, %c0_147, %c1_148, %c0_149] : memref<2x4x14x14x1xf32, #tpu.memory_space<vmem>>, vector<1x1x14x12x1xf32>
    %212 = vector.shape_cast %211 : vector<1x1x14x12x1xf32> to vector<14x12x1xf32>
    %c1_150 = arith.constant 1 : index
    %c3_151 = arith.constant 3 : index
    %c0_152 = arith.constant 0 : index
    %c1_153 = arith.constant 1 : index
    %c0_154 = arith.constant 0 : index
    %213 = vector.load %arg1[%c1_150, %c3_151, %c0_152, %c1_153, %c0_154] : memref<2x4x14x14x1xf32, #tpu.memory_space<vmem>>, vector<1x1x14x12x1xf32>
    %214 = vector.shape_cast %213 : vector<1x1x14x12x1xf32> to vector<14x12x1xf32>
    %c1_155 = arith.constant 1 : index
    %c2_156 = arith.constant 2 : index
    %c0_157 = arith.constant 0 : index
    %c2_158 = arith.constant 2 : index
    %c0_159 = arith.constant 0 : index
    %215 = vector.load %arg1[%c1_155, %c2_156, %c0_157, %c2_158, %c0_159] : memref<2x4x14x14x1xf32, #tpu.memory_space<vmem>>, vector<1x1x14x12x1xf32>
    %216 = vector.shape_cast %215 : vector<1x1x14x12x1xf32> to vector<14x12x1xf32>
    %217 = tpu.concatenate %208, %210, %212, %214, %216 in 2 : vector<14x12x1xf32>, vector<14x12x1xf32>, vector<14x12x1xf32>, vector<14x12x1xf32>, vector<14x12x1xf32> -> vector<14x12x5xf32>
    %218 = vector.extract_strided_slice %206 {offsets = [0, 0, 0], sizes = [12, 12, 5], strides = [1, 1, 1]} : vector<14x12x5xf32> to vector<12x12x5xf32>
    %219 = vector.extract_strided_slice %217 {offsets = [0, 0, 0], sizes = [12, 12, 5], strides = [1, 1, 1]} : vector<14x12x5xf32> to vector<12x12x5xf32>
    %220 = vector.extract_strided_slice %206 {offsets = [1, 0, 0], sizes = [12, 12, 5], strides = [1, 1, 1]} : vector<14x12x5xf32> to vector<12x12x5xf32>
    %221 = vector.extract_strided_slice %217 {offsets = [1, 0, 0], sizes = [12, 12, 5], strides = [1, 1, 1]} : vector<14x12x5xf32> to vector<12x12x5xf32>
    %222 = vector.extract_strided_slice %206 {offsets = [2, 0, 0], sizes = [12, 12, 5], strides = [1, 1, 1]} : vector<14x12x5xf32> to vector<12x12x5xf32>
    %223 = tpu.concatenate %218, %219, %220, %221, %222 in 2 : vector<12x12x5xf32>, vector<12x12x5xf32>, vector<12x12x5xf32>, vector<12x12x5xf32>, vector<12x12x5xf32> -> vector<12x12x25xf32>
    %224 = vector.extract_strided_slice %223 {offsets = [0, 0, 0], sizes = [1, 12, 25], strides = [1, 1, 1]} : vector<12x12x25xf32> to vector<1x12x25xf32>
    %225 = vector.shape_cast %224 : vector<1x12x25xf32> to vector<12x25xf32>
    %226 = vector.extract_strided_slice %223 {offsets = [1, 0, 0], sizes = [1, 12, 25], strides = [1, 1, 1]} : vector<12x12x25xf32> to vector<1x12x25xf32>
    %227 = vector.shape_cast %226 : vector<1x12x25xf32> to vector<12x25xf32>
    %228 = vector.extract_strided_slice %223 {offsets = [2, 0, 0], sizes = [1, 12, 25], strides = [1, 1, 1]} : vector<12x12x25xf32> to vector<1x12x25xf32>
    %229 = vector.shape_cast %228 : vector<1x12x25xf32> to vector<12x25xf32>
    %230 = vector.extract_strided_slice %223 {offsets = [3, 0, 0], sizes = [1, 12, 25], strides = [1, 1, 1]} : vector<12x12x25xf32> to vector<1x12x25xf32>
    %231 = vector.shape_cast %230 : vector<1x12x25xf32> to vector<12x25xf32>
    %232 = vector.extract_strided_slice %223 {offsets = [4, 0, 0], sizes = [1, 12, 25], strides = [1, 1, 1]} : vector<12x12x25xf32> to vector<1x12x25xf32>
    %233 = vector.shape_cast %232 : vector<1x12x25xf32> to vector<12x25xf32>
    %234 = vector.extract_strided_slice %223 {offsets = [5, 0, 0], sizes = [1, 12, 25], strides = [1, 1, 1]} : vector<12x12x25xf32> to vector<1x12x25xf32>
    %235 = vector.shape_cast %234 : vector<1x12x25xf32> to vector<12x25xf32>
    %236 = vector.extract_strided_slice %223 {offsets = [6, 0, 0], sizes = [1, 12, 25], strides = [1, 1, 1]} : vector<12x12x25xf32> to vector<1x12x25xf32>
    %237 = vector.shape_cast %236 : vector<1x12x25xf32> to vector<12x25xf32>
    %238 = vector.extract_strided_slice %223 {offsets = [7, 0, 0], sizes = [1, 12, 25], strides = [1, 1, 1]} : vector<12x12x25xf32> to vector<1x12x25xf32>
    %239 = vector.shape_cast %238 : vector<1x12x25xf32> to vector<12x25xf32>
    %240 = vector.extract_strided_slice %223 {offsets = [8, 0, 0], sizes = [1, 12, 25], strides = [1, 1, 1]} : vector<12x12x25xf32> to vector<1x12x25xf32>
    %241 = vector.shape_cast %240 : vector<1x12x25xf32> to vector<12x25xf32>
    %242 = vector.extract_strided_slice %223 {offsets = [9, 0, 0], sizes = [1, 12, 25], strides = [1, 1, 1]} : vector<12x12x25xf32> to vector<1x12x25xf32>
    %243 = vector.shape_cast %242 : vector<1x12x25xf32> to vector<12x25xf32>
    %244 = vector.extract_strided_slice %223 {offsets = [10, 0, 0], sizes = [1, 12, 25], strides = [1, 1, 1]} : vector<12x12x25xf32> to vector<1x12x25xf32>
    %245 = vector.shape_cast %244 : vector<1x12x25xf32> to vector<12x25xf32>
    %246 = vector.extract_strided_slice %223 {offsets = [11, 0, 0], sizes = [1, 12, 25], strides = [1, 1, 1]} : vector<12x12x25xf32> to vector<1x12x25xf32>
    %247 = vector.shape_cast %246 : vector<1x12x25xf32> to vector<12x25xf32>
    %248 = tpu.concatenate %225, %227, %229, %231, %233, %235, %237, %239, %241, %243, %245, %247 in 0 : vector<12x25xf32>, vector<12x25xf32>, vector<12x25xf32>, vector<12x25xf32>, vector<12x25xf32>, vector<12x25xf32>, vector<12x25xf32>, vector<12x25xf32>, vector<12x25xf32>, vector<12x25xf32>, vector<12x25xf32>, vector<12x25xf32> -> vector<144x25xf32>
    %cst_160 = arith.constant dense<0.000000e+00> : vector<144x10xf32>
    %249 = tpu.matmul %248, %0, %cst_160 {dimension_numbers = #tpu.dot_dimension_numbers<[1], [0], [0], [1], [0, 0, 1, 1], [], []>} : vector<144x25xf32>, vector<25x10xf32>, vector<144x10xf32> -> vector<144x10xf32>
    %250 = vector.broadcast %1 : vector<1x10xf32> to vector<144x10xf32>
    %251 = arith.addf %249, %250 : vector<144x10xf32>
    %cst_161 = arith.constant 0.000000e+00 : f32
    %252 = vector.broadcast %cst_161 : f32 to vector<144x10xf32>
    %253 = arith.maximumf %251, %252 : vector<144x10xf32>
    %254 = vector.extract_strided_slice %217 {offsets = [0, 0, 0], sizes = [12, 12, 5], strides = [1, 1, 1]} : vector<14x12x5xf32> to vector<12x12x5xf32>
    %255 = vector.extract_strided_slice %206 {offsets = [1, 0, 0], sizes = [12, 12, 5], strides = [1, 1, 1]} : vector<14x12x5xf32> to vector<12x12x5xf32>
    %256 = vector.extract_strided_slice %217 {offsets = [1, 0, 0], sizes = [12, 12, 5], strides = [1, 1, 1]} : vector<14x12x5xf32> to vector<12x12x5xf32>
    %257 = vector.extract_strided_slice %206 {offsets = [2, 0, 0], sizes = [12, 12, 5], strides = [1, 1, 1]} : vector<14x12x5xf32> to vector<12x12x5xf32>
    %258 = vector.extract_strided_slice %217 {offsets = [2, 0, 0], sizes = [12, 12, 5], strides = [1, 1, 1]} : vector<14x12x5xf32> to vector<12x12x5xf32>
    %259 = tpu.concatenate %254, %255, %256, %257, %258 in 2 : vector<12x12x5xf32>, vector<12x12x5xf32>, vector<12x12x5xf32>, vector<12x12x5xf32>, vector<12x12x5xf32> -> vector<12x12x25xf32>
    %260 = vector.extract_strided_slice %259 {offsets = [0, 0, 0], sizes = [1, 12, 25], strides = [1, 1, 1]} : vector<12x12x25xf32> to vector<1x12x25xf32>
    %261 = vector.shape_cast %260 : vector<1x12x25xf32> to vector<12x25xf32>
    %262 = vector.extract_strided_slice %259 {offsets = [1, 0, 0], sizes = [1, 12, 25], strides = [1, 1, 1]} : vector<12x12x25xf32> to vector<1x12x25xf32>
    %263 = vector.shape_cast %262 : vector<1x12x25xf32> to vector<12x25xf32>
    %264 = vector.extract_strided_slice %259 {offsets = [2, 0, 0], sizes = [1, 12, 25], strides = [1, 1, 1]} : vector<12x12x25xf32> to vector<1x12x25xf32>
    %265 = vector.shape_cast %264 : vector<1x12x25xf32> to vector<12x25xf32>
    %266 = vector.extract_strided_slice %259 {offsets = [3, 0, 0], sizes = [1, 12, 25], strides = [1, 1, 1]} : vector<12x12x25xf32> to vector<1x12x25xf32>
    %267 = vector.shape_cast %266 : vector<1x12x25xf32> to vector<12x25xf32>
    %268 = vector.extract_strided_slice %259 {offsets = [4, 0, 0], sizes = [1, 12, 25], strides = [1, 1, 1]} : vector<12x12x25xf32> to vector<1x12x25xf32>
    %269 = vector.shape_cast %268 : vector<1x12x25xf32> to vector<12x25xf32>
    %270 = vector.extract_strided_slice %259 {offsets = [5, 0, 0], sizes = [1, 12, 25], strides = [1, 1, 1]} : vector<12x12x25xf32> to vector<1x12x25xf32>
    %271 = vector.shape_cast %270 : vector<1x12x25xf32> to vector<12x25xf32>
    %272 = vector.extract_strided_slice %259 {offsets = [6, 0, 0], sizes = [1, 12, 25], strides = [1, 1, 1]} : vector<12x12x25xf32> to vector<1x12x25xf32>
    %273 = vector.shape_cast %272 : vector<1x12x25xf32> to vector<12x25xf32>
    %274 = vector.extract_strided_slice %259 {offsets = [7, 0, 0], sizes = [1, 12, 25], strides = [1, 1, 1]} : vector<12x12x25xf32> to vector<1x12x25xf32>
    %275 = vector.shape_cast %274 : vector<1x12x25xf32> to vector<12x25xf32>
    %276 = vector.extract_strided_slice %259 {offsets = [8, 0, 0], sizes = [1, 12, 25], strides = [1, 1, 1]} : vector<12x12x25xf32> to vector<1x12x25xf32>
    %277 = vector.shape_cast %276 : vector<1x12x25xf32> to vector<12x25xf32>
    %278 = vector.extract_strided_slice %259 {offsets = [9, 0, 0], sizes = [1, 12, 25], strides = [1, 1, 1]} : vector<12x12x25xf32> to vector<1x12x25xf32>
    %279 = vector.shape_cast %278 : vector<1x12x25xf32> to vector<12x25xf32>
    %280 = vector.extract_strided_slice %259 {offsets = [10, 0, 0], sizes = [1, 12, 25], strides = [1, 1, 1]} : vector<12x12x25xf32> to vector<1x12x25xf32>
    %281 = vector.shape_cast %280 : vector<1x12x25xf32> to vector<12x25xf32>
    %282 = vector.extract_strided_slice %259 {offsets = [11, 0, 0], sizes = [1, 12, 25], strides = [1, 1, 1]} : vector<12x12x25xf32> to vector<1x12x25xf32>
    %283 = vector.shape_cast %282 : vector<1x12x25xf32> to vector<12x25xf32>
    %284 = tpu.concatenate %261, %263, %265, %267, %269, %271, %273, %275, %277, %279, %281, %283 in 0 : vector<12x25xf32>, vector<12x25xf32>, vector<12x25xf32>, vector<12x25xf32>, vector<12x25xf32>, vector<12x25xf32>, vector<12x25xf32>, vector<12x25xf32>, vector<12x25xf32>, vector<12x25xf32>, vector<12x25xf32>, vector<12x25xf32> -> vector<144x25xf32>
    %cst_162 = arith.constant dense<0.000000e+00> : vector<144x10xf32>
    %285 = tpu.matmul %284, %0, %cst_162 {dimension_numbers = #tpu.dot_dimension_numbers<[1], [0], [0], [1], [0, 0, 1, 1], [], []>} : vector<144x25xf32>, vector<25x10xf32>, vector<144x10xf32> -> vector<144x10xf32>
    %286 = vector.broadcast %1 : vector<1x10xf32> to vector<144x10xf32>
    %287 = arith.addf %285, %286 : vector<144x10xf32>
    %cst_163 = arith.constant 0.000000e+00 : f32
    %288 = vector.broadcast %cst_163 : f32 to vector<144x10xf32>
    %289 = arith.maximumf %287, %288 : vector<144x10xf32>
    %290 = arith.maximumf %253, %289 : vector<144x10xf32>
    %c1_164 = arith.constant 1 : index
    %c1_165 = arith.constant 1 : index
    %c0_166 = arith.constant 0 : index
    %c0_167 = arith.constant 0 : index
    %c0_168 = arith.constant 0 : index
    %291 = vector.load %arg1[%c1_164, %c1_165, %c0_166, %c0_167, %c0_168] : memref<2x4x14x14x1xf32, #tpu.memory_space<vmem>>, vector<1x1x14x12x1xf32>
    %292 = vector.shape_cast %291 : vector<1x1x14x12x1xf32> to vector<14x12x1xf32>
    %c1_169 = arith.constant 1 : index
    %c0_170 = arith.constant 0 : index
    %c0_171 = arith.constant 0 : index
    %c1_172 = arith.constant 1 : index
    %c0_173 = arith.constant 0 : index
    %293 = vector.load %arg1[%c1_169, %c0_170, %c0_171, %c1_172, %c0_173] : memref<2x4x14x14x1xf32, #tpu.memory_space<vmem>>, vector<1x1x14x12x1xf32>
    %294 = vector.shape_cast %293 : vector<1x1x14x12x1xf32> to vector<14x12x1xf32>
    %c1_174 = arith.constant 1 : index
    %c1_175 = arith.constant 1 : index
    %c0_176 = arith.constant 0 : index
    %c1_177 = arith.constant 1 : index
    %c0_178 = arith.constant 0 : index
    %295 = vector.load %arg1[%c1_174, %c1_175, %c0_176, %c1_177, %c0_178] : memref<2x4x14x14x1xf32, #tpu.memory_space<vmem>>, vector<1x1x14x12x1xf32>
    %296 = vector.shape_cast %295 : vector<1x1x14x12x1xf32> to vector<14x12x1xf32>
    %c1_179 = arith.constant 1 : index
    %c0_180 = arith.constant 0 : index
    %c0_181 = arith.constant 0 : index
    %c2_182 = arith.constant 2 : index
    %c0_183 = arith.constant 0 : index
    %297 = vector.load %arg1[%c1_179, %c0_180, %c0_181, %c2_182, %c0_183] : memref<2x4x14x14x1xf32, #tpu.memory_space<vmem>>, vector<1x1x14x12x1xf32>
    %298 = vector.shape_cast %297 : vector<1x1x14x12x1xf32> to vector<14x12x1xf32>
    %c1_184 = arith.constant 1 : index
    %c1_185 = arith.constant 1 : index
    %c0_186 = arith.constant 0 : index
    %c2_187 = arith.constant 2 : index
    %c0_188 = arith.constant 0 : index
    %299 = vector.load %arg1[%c1_184, %c1_185, %c0_186, %c2_187, %c0_188] : memref<2x4x14x14x1xf32, #tpu.memory_space<vmem>>, vector<1x1x14x12x1xf32>
    %300 = vector.shape_cast %299 : vector<1x1x14x12x1xf32> to vector<14x12x1xf32>
    %301 = tpu.concatenate %292, %294, %296, %298, %300 in 2 : vector<14x12x1xf32>, vector<14x12x1xf32>, vector<14x12x1xf32>, vector<14x12x1xf32>, vector<14x12x1xf32> -> vector<14x12x5xf32>
    %c1_189 = arith.constant 1 : index
    %c3_190 = arith.constant 3 : index
    %c0_191 = arith.constant 0 : index
    %c0_192 = arith.constant 0 : index
    %c0_193 = arith.constant 0 : index
    %302 = vector.load %arg1[%c1_189, %c3_190, %c0_191, %c0_192, %c0_193] : memref<2x4x14x14x1xf32, #tpu.memory_space<vmem>>, vector<1x1x14x12x1xf32>
    %303 = vector.shape_cast %302 : vector<1x1x14x12x1xf32> to vector<14x12x1xf32>
    %c1_194 = arith.constant 1 : index
    %c2_195 = arith.constant 2 : index
    %c0_196 = arith.constant 0 : index
    %c1_197 = arith.constant 1 : index
    %c0_198 = arith.constant 0 : index
    %304 = vector.load %arg1[%c1_194, %c2_195, %c0_196, %c1_197, %c0_198] : memref<2x4x14x14x1xf32, #tpu.memory_space<vmem>>, vector<1x1x14x12x1xf32>
    %305 = vector.shape_cast %304 : vector<1x1x14x12x1xf32> to vector<14x12x1xf32>
    %c1_199 = arith.constant 1 : index
    %c3_200 = arith.constant 3 : index
    %c0_201 = arith.constant 0 : index
    %c1_202 = arith.constant 1 : index
    %c0_203 = arith.constant 0 : index
    %306 = vector.load %arg1[%c1_199, %c3_200, %c0_201, %c1_202, %c0_203] : memref<2x4x14x14x1xf32, #tpu.memory_space<vmem>>, vector<1x1x14x12x1xf32>
    %307 = vector.shape_cast %306 : vector<1x1x14x12x1xf32> to vector<14x12x1xf32>
    %c1_204 = arith.constant 1 : index
    %c2_205 = arith.constant 2 : index
    %c0_206 = arith.constant 0 : index
    %c2_207 = arith.constant 2 : index
    %c0_208 = arith.constant 0 : index
    %308 = vector.load %arg1[%c1_204, %c2_205, %c0_206, %c2_207, %c0_208] : memref<2x4x14x14x1xf32, #tpu.memory_space<vmem>>, vector<1x1x14x12x1xf32>
    %309 = vector.shape_cast %308 : vector<1x1x14x12x1xf32> to vector<14x12x1xf32>
    %c1_209 = arith.constant 1 : index
    %c3_210 = arith.constant 3 : index
    %c0_211 = arith.constant 0 : index
    %c2_212 = arith.constant 2 : index
    %c0_213 = arith.constant 0 : index
    %310 = vector.load %arg1[%c1_209, %c3_210, %c0_211, %c2_212, %c0_213] : memref<2x4x14x14x1xf32, #tpu.memory_space<vmem>>, vector<1x1x14x12x1xf32>
    %311 = vector.shape_cast %310 : vector<1x1x14x12x1xf32> to vector<14x12x1xf32>
    %312 = tpu.concatenate %303, %305, %307, %309, %311 in 2 : vector<14x12x1xf32>, vector<14x12x1xf32>, vector<14x12x1xf32>, vector<14x12x1xf32>, vector<14x12x1xf32> -> vector<14x12x5xf32>
    %313 = vector.extract_strided_slice %301 {offsets = [0, 0, 0], sizes = [12, 12, 5], strides = [1, 1, 1]} : vector<14x12x5xf32> to vector<12x12x5xf32>
    %314 = vector.extract_strided_slice %312 {offsets = [0, 0, 0], sizes = [12, 12, 5], strides = [1, 1, 1]} : vector<14x12x5xf32> to vector<12x12x5xf32>
    %315 = vector.extract_strided_slice %301 {offsets = [1, 0, 0], sizes = [12, 12, 5], strides = [1, 1, 1]} : vector<14x12x5xf32> to vector<12x12x5xf32>
    %316 = vector.extract_strided_slice %312 {offsets = [1, 0, 0], sizes = [12, 12, 5], strides = [1, 1, 1]} : vector<14x12x5xf32> to vector<12x12x5xf32>
    %317 = vector.extract_strided_slice %301 {offsets = [2, 0, 0], sizes = [12, 12, 5], strides = [1, 1, 1]} : vector<14x12x5xf32> to vector<12x12x5xf32>
    %318 = tpu.concatenate %313, %314, %315, %316, %317 in 2 : vector<12x12x5xf32>, vector<12x12x5xf32>, vector<12x12x5xf32>, vector<12x12x5xf32>, vector<12x12x5xf32> -> vector<12x12x25xf32>
    %319 = vector.extract_strided_slice %318 {offsets = [0, 0, 0], sizes = [1, 12, 25], strides = [1, 1, 1]} : vector<12x12x25xf32> to vector<1x12x25xf32>
    %320 = vector.shape_cast %319 : vector<1x12x25xf32> to vector<12x25xf32>
    %321 = vector.extract_strided_slice %318 {offsets = [1, 0, 0], sizes = [1, 12, 25], strides = [1, 1, 1]} : vector<12x12x25xf32> to vector<1x12x25xf32>
    %322 = vector.shape_cast %321 : vector<1x12x25xf32> to vector<12x25xf32>
    %323 = vector.extract_strided_slice %318 {offsets = [2, 0, 0], sizes = [1, 12, 25], strides = [1, 1, 1]} : vector<12x12x25xf32> to vector<1x12x25xf32>
    %324 = vector.shape_cast %323 : vector<1x12x25xf32> to vector<12x25xf32>
    %325 = vector.extract_strided_slice %318 {offsets = [3, 0, 0], sizes = [1, 12, 25], strides = [1, 1, 1]} : vector<12x12x25xf32> to vector<1x12x25xf32>
    %326 = vector.shape_cast %325 : vector<1x12x25xf32> to vector<12x25xf32>
    %327 = vector.extract_strided_slice %318 {offsets = [4, 0, 0], sizes = [1, 12, 25], strides = [1, 1, 1]} : vector<12x12x25xf32> to vector<1x12x25xf32>
    %328 = vector.shape_cast %327 : vector<1x12x25xf32> to vector<12x25xf32>
    %329 = vector.extract_strided_slice %318 {offsets = [5, 0, 0], sizes = [1, 12, 25], strides = [1, 1, 1]} : vector<12x12x25xf32> to vector<1x12x25xf32>
    %330 = vector.shape_cast %329 : vector<1x12x25xf32> to vector<12x25xf32>
    %331 = vector.extract_strided_slice %318 {offsets = [6, 0, 0], sizes = [1, 12, 25], strides = [1, 1, 1]} : vector<12x12x25xf32> to vector<1x12x25xf32>
    %332 = vector.shape_cast %331 : vector<1x12x25xf32> to vector<12x25xf32>
    %333 = vector.extract_strided_slice %318 {offsets = [7, 0, 0], sizes = [1, 12, 25], strides = [1, 1, 1]} : vector<12x12x25xf32> to vector<1x12x25xf32>
    %334 = vector.shape_cast %333 : vector<1x12x25xf32> to vector<12x25xf32>
    %335 = vector.extract_strided_slice %318 {offsets = [8, 0, 0], sizes = [1, 12, 25], strides = [1, 1, 1]} : vector<12x12x25xf32> to vector<1x12x25xf32>
    %336 = vector.shape_cast %335 : vector<1x12x25xf32> to vector<12x25xf32>
    %337 = vector.extract_strided_slice %318 {offsets = [9, 0, 0], sizes = [1, 12, 25], strides = [1, 1, 1]} : vector<12x12x25xf32> to vector<1x12x25xf32>
    %338 = vector.shape_cast %337 : vector<1x12x25xf32> to vector<12x25xf32>
    %339 = vector.extract_strided_slice %318 {offsets = [10, 0, 0], sizes = [1, 12, 25], strides = [1, 1, 1]} : vector<12x12x25xf32> to vector<1x12x25xf32>
    %340 = vector.shape_cast %339 : vector<1x12x25xf32> to vector<12x25xf32>
    %341 = vector.extract_strided_slice %318 {offsets = [11, 0, 0], sizes = [1, 12, 25], strides = [1, 1, 1]} : vector<12x12x25xf32> to vector<1x12x25xf32>
    %342 = vector.shape_cast %341 : vector<1x12x25xf32> to vector<12x25xf32>
    %343 = tpu.concatenate %320, %322, %324, %326, %328, %330, %332, %334, %336, %338, %340, %342 in 0 : vector<12x25xf32>, vector<12x25xf32>, vector<12x25xf32>, vector<12x25xf32>, vector<12x25xf32>, vector<12x25xf32>, vector<12x25xf32>, vector<12x25xf32>, vector<12x25xf32>, vector<12x25xf32>, vector<12x25xf32>, vector<12x25xf32> -> vector<144x25xf32>
    %cst_214 = arith.constant dense<0.000000e+00> : vector<144x10xf32>
    %344 = tpu.matmul %343, %0, %cst_214 {dimension_numbers = #tpu.dot_dimension_numbers<[1], [0], [0], [1], [0, 0, 1, 1], [], []>} : vector<144x25xf32>, vector<25x10xf32>, vector<144x10xf32> -> vector<144x10xf32>
    %345 = vector.broadcast %1 : vector<1x10xf32> to vector<144x10xf32>
    %346 = arith.addf %344, %345 : vector<144x10xf32>
    %cst_215 = arith.constant 0.000000e+00 : f32
    %347 = vector.broadcast %cst_215 : f32 to vector<144x10xf32>
    %348 = arith.maximumf %346, %347 : vector<144x10xf32>
    %349 = arith.maximumf %290, %348 : vector<144x10xf32>
    %350 = vector.extract_strided_slice %312 {offsets = [0, 0, 0], sizes = [12, 12, 5], strides = [1, 1, 1]} : vector<14x12x5xf32> to vector<12x12x5xf32>
    %351 = vector.extract_strided_slice %301 {offsets = [1, 0, 0], sizes = [12, 12, 5], strides = [1, 1, 1]} : vector<14x12x5xf32> to vector<12x12x5xf32>
    %352 = vector.extract_strided_slice %312 {offsets = [1, 0, 0], sizes = [12, 12, 5], strides = [1, 1, 1]} : vector<14x12x5xf32> to vector<12x12x5xf32>
    %353 = vector.extract_strided_slice %301 {offsets = [2, 0, 0], sizes = [12, 12, 5], strides = [1, 1, 1]} : vector<14x12x5xf32> to vector<12x12x5xf32>
    %354 = vector.extract_strided_slice %312 {offsets = [2, 0, 0], sizes = [12, 12, 5], strides = [1, 1, 1]} : vector<14x12x5xf32> to vector<12x12x5xf32>
    %355 = tpu.concatenate %350, %351, %352, %353, %354 in 2 : vector<12x12x5xf32>, vector<12x12x5xf32>, vector<12x12x5xf32>, vector<12x12x5xf32>, vector<12x12x5xf32> -> vector<12x12x25xf32>
    %356 = vector.extract_strided_slice %355 {offsets = [0, 0, 0], sizes = [1, 12, 25], strides = [1, 1, 1]} : vector<12x12x25xf32> to vector<1x12x25xf32>
    %357 = vector.shape_cast %356 : vector<1x12x25xf32> to vector<12x25xf32>
    %358 = vector.extract_strided_slice %355 {offsets = [1, 0, 0], sizes = [1, 12, 25], strides = [1, 1, 1]} : vector<12x12x25xf32> to vector<1x12x25xf32>
    %359 = vector.shape_cast %358 : vector<1x12x25xf32> to vector<12x25xf32>
    %360 = vector.extract_strided_slice %355 {offsets = [2, 0, 0], sizes = [1, 12, 25], strides = [1, 1, 1]} : vector<12x12x25xf32> to vector<1x12x25xf32>
    %361 = vector.shape_cast %360 : vector<1x12x25xf32> to vector<12x25xf32>
    %362 = vector.extract_strided_slice %355 {offsets = [3, 0, 0], sizes = [1, 12, 25], strides = [1, 1, 1]} : vector<12x12x25xf32> to vector<1x12x25xf32>
    %363 = vector.shape_cast %362 : vector<1x12x25xf32> to vector<12x25xf32>
    %364 = vector.extract_strided_slice %355 {offsets = [4, 0, 0], sizes = [1, 12, 25], strides = [1, 1, 1]} : vector<12x12x25xf32> to vector<1x12x25xf32>
    %365 = vector.shape_cast %364 : vector<1x12x25xf32> to vector<12x25xf32>
    %366 = vector.extract_strided_slice %355 {offsets = [5, 0, 0], sizes = [1, 12, 25], strides = [1, 1, 1]} : vector<12x12x25xf32> to vector<1x12x25xf32>
    %367 = vector.shape_cast %366 : vector<1x12x25xf32> to vector<12x25xf32>
    %368 = vector.extract_strided_slice %355 {offsets = [6, 0, 0], sizes = [1, 12, 25], strides = [1, 1, 1]} : vector<12x12x25xf32> to vector<1x12x25xf32>
    %369 = vector.shape_cast %368 : vector<1x12x25xf32> to vector<12x25xf32>
    %370 = vector.extract_strided_slice %355 {offsets = [7, 0, 0], sizes = [1, 12, 25], strides = [1, 1, 1]} : vector<12x12x25xf32> to vector<1x12x25xf32>
    %371 = vector.shape_cast %370 : vector<1x12x25xf32> to vector<12x25xf32>
    %372 = vector.extract_strided_slice %355 {offsets = [8, 0, 0], sizes = [1, 12, 25], strides = [1, 1, 1]} : vector<12x12x25xf32> to vector<1x12x25xf32>
    %373 = vector.shape_cast %372 : vector<1x12x25xf32> to vector<12x25xf32>
    %374 = vector.extract_strided_slice %355 {offsets = [9, 0, 0], sizes = [1, 12, 25], strides = [1, 1, 1]} : vector<12x12x25xf32> to vector<1x12x25xf32>
    %375 = vector.shape_cast %374 : vector<1x12x25xf32> to vector<12x25xf32>
    %376 = vector.extract_strided_slice %355 {offsets = [10, 0, 0], sizes = [1, 12, 25], strides = [1, 1, 1]} : vector<12x12x25xf32> to vector<1x12x25xf32>
    %377 = vector.shape_cast %376 : vector<1x12x25xf32> to vector<12x25xf32>
    %378 = vector.extract_strided_slice %355 {offsets = [11, 0, 0], sizes = [1, 12, 25], strides = [1, 1, 1]} : vector<12x12x25xf32> to vector<1x12x25xf32>
    %379 = vector.shape_cast %378 : vector<1x12x25xf32> to vector<12x25xf32>
    %380 = tpu.concatenate %357, %359, %361, %363, %365, %367, %369, %371, %373, %375, %377, %379 in 0 : vector<12x25xf32>, vector<12x25xf32>, vector<12x25xf32>, vector<12x25xf32>, vector<12x25xf32>, vector<12x25xf32>, vector<12x25xf32>, vector<12x25xf32>, vector<12x25xf32>, vector<12x25xf32>, vector<12x25xf32>, vector<12x25xf32> -> vector<144x25xf32>
    %cst_216 = arith.constant dense<0.000000e+00> : vector<144x10xf32>
    %381 = tpu.matmul %380, %0, %cst_216 {dimension_numbers = #tpu.dot_dimension_numbers<[1], [0], [0], [1], [0, 0, 1, 1], [], []>} : vector<144x25xf32>, vector<25x10xf32>, vector<144x10xf32> -> vector<144x10xf32>
    %382 = vector.broadcast %1 : vector<1x10xf32> to vector<144x10xf32>
    %383 = arith.addf %381, %382 : vector<144x10xf32>
    %cst_217 = arith.constant 0.000000e+00 : f32
    %384 = vector.broadcast %cst_217 : f32 to vector<144x10xf32>
    %385 = arith.maximumf %383, %384 : vector<144x10xf32>
    %386 = arith.maximumf %349, %385 : vector<144x10xf32>
    %c1_218 = arith.constant 1 : index
    %c0_219 = arith.constant 0 : index
    %c0_220 = arith.constant 0 : index
    %387 = vector.load %arg4[%c1_218, %c0_219, %c0_220] : memref<2x144x10xf32, #tpu.memory_space<vmem>>, vector<1x144x10xf32>
    %388 = vector.shape_cast %387 : vector<1x144x10xf32> to vector<144x10xf32>
    %389 = vector.shape_cast %386 : vector<144x10xf32> to vector<1x144x10xf32>
    tpu.vector_store %arg4[%c1_218, %c0_219, %c0_220], %389 {strides = array<i32>} : memref<2x144x10xf32, #tpu.memory_space<vmem>>, vector<1x144x10xf32>,
    return
  }
  func.func @transform_0(%arg0: i32) -> (i32, i32, i32, i32, i32) {
    %c0_i32 = arith.constant 0 : i32
    %c0_i32_0 = arith.constant 0 : i32
    %c0_i32_1 = arith.constant 0 : i32
    %c0_i32_2 = arith.constant 0 : i32
    %c0_i32_3 = arith.constant 0 : i32
    return %arg0, %c0_i32, %c0_i32_0, %c0_i32_1, %c0_i32_2 : i32, i32, i32, i32, i32
  }
  func.func @transform_1(%arg0: i32) -> (i32, i32) {
    %c0_i32 = arith.constant 0 : i32
    %c0_i32_0 = arith.constant 0 : i32
    %c0_i32_1 = arith.constant 0 : i32
    return %c0_i32, %c0_i32_0 : i32, i32
  }
  func.func @transform_2(%arg0: i32) -> (i32, i32) {
    %c0_i32 = arith.constant 0 : i32
    %c0_i32_0 = arith.constant 0 : i32
    %c0_i32_1 = arith.constant 0 : i32
    return %c0_i32, %c0_i32_0 : i32, i32
  }
  func.func @transform_3(%arg0: i32) -> (i32, i32, i32) {
    %c0_i32 = arith.constant 0 : i32
    %c0_i32_0 = arith.constant 0 : i32
    %c0_i32_1 = arith.constant 0 : i32
    return %arg0, %c0_i32, %c0_i32_0 : i32, i32, i32
  }
}

module attributes {stable_mosaic.version = 11 : i64} {
  func.func @kernel(%arg0: i32, %arg1: memref<2x4x6x6x10xf32, #tpu.memory_space<vmem>>, %arg2: memref<250x20xf32, #tpu.memory_space<vmem>>, %arg3: memref<1x20xf32, #tpu.memory_space<vmem>>, %arg4: memref<2x16x20xf32, #tpu.memory_space<vmem>>) attributes {dimension_semantics = [#tpu.dimension_semantics<parallel>], iteration_bounds = array<i64: 1>, scalar_prefetch = 0 : i64, scratch_operands = 0 : i64, tpu.core_type = #tpu.core_type<tc>, window_params = [{transform_indices = @transform_0, window_bounds = array<i64: 2, 4, 6, 6, 10>}, {pipeline_mode = #tpu.pipeline_mode<synchronous>, transform_indices = @transform_1, window_bounds = array<i64: 250, 20>}, {pipeline_mode = #tpu.pipeline_mode<synchronous>, transform_indices = @transform_2, window_bounds = array<i64: 1, 20>}, {transform_indices = @transform_3, window_bounds = array<i64: 2, 16, 20>}]} {
    %c0 = arith.constant 0 : index
    %c0_0 = arith.constant 0 : index
    %0 = vector.load %arg2[%c0, %c0_0] : memref<250x20xf32, #tpu.memory_space<vmem>>, vector<250x20xf32>
    %c0_1 = arith.constant 0 : index
    %c0_2 = arith.constant 0 : index
    %1 = vector.load %arg3[%c0_1, %c0_2] : memref<1x20xf32, #tpu.memory_space<vmem>>, vector<1x20xf32>
    %c0_3 = arith.constant 0 : index
    %c0_4 = arith.constant 0 : index
    %c0_5 = arith.constant 0 : index
    %c0_6 = arith.constant 0 : index
    %c0_7 = arith.constant 0 : index
    %2 = vector.load %arg1[%c0_3, %c0_4, %c0_5, %c0_6, %c0_7] : memref<2x4x6x6x10xf32, #tpu.memory_space<vmem>>, vector<1x1x6x4x10xf32>
    %3 = vector.shape_cast %2 : vector<1x1x6x4x10xf32> to vector<6x4x10xf32>
    %c0_8 = arith.constant 0 : index
    %c1 = arith.constant 1 : index
    %c0_9 = arith.constant 0 : index
    %c0_10 = arith.constant 0 : index
    %c0_11 = arith.constant 0 : index
    %4 = vector.load %arg1[%c0_8, %c1, %c0_9, %c0_10, %c0_11] : memref<2x4x6x6x10xf32, #tpu.memory_space<vmem>>, vector<1x1x6x4x10xf32>
    %5 = vector.shape_cast %4 : vector<1x1x6x4x10xf32> to vector<6x4x10xf32>
    %c0_12 = arith.constant 0 : index
    %c0_13 = arith.constant 0 : index
    %c0_14 = arith.constant 0 : index
    %c1_15 = arith.constant 1 : index
    %c0_16 = arith.constant 0 : index
    %6 = vector.load %arg1[%c0_12, %c0_13, %c0_14, %c1_15, %c0_16] : memref<2x4x6x6x10xf32, #tpu.memory_space<vmem>>, vector<1x1x6x4x10xf32>
    %7 = vector.shape_cast %6 : vector<1x1x6x4x10xf32> to vector<6x4x10xf32>
    %c0_17 = arith.constant 0 : index
    %c1_18 = arith.constant 1 : index
    %c0_19 = arith.constant 0 : index
    %c1_20 = arith.constant 1 : index
    %c0_21 = arith.constant 0 : index
    %8 = vector.load %arg1[%c0_17, %c1_18, %c0_19, %c1_20, %c0_21] : memref<2x4x6x6x10xf32, #tpu.memory_space<vmem>>, vector<1x1x6x4x10xf32>
    %9 = vector.shape_cast %8 : vector<1x1x6x4x10xf32> to vector<6x4x10xf32>
    %c0_22 = arith.constant 0 : index
    %c0_23 = arith.constant 0 : index
    %c0_24 = arith.constant 0 : index
    %c2 = arith.constant 2 : index
    %c0_25 = arith.constant 0 : index
    %10 = vector.load %arg1[%c0_22, %c0_23, %c0_24, %c2, %c0_25] : memref<2x4x6x6x10xf32, #tpu.memory_space<vmem>>, vector<1x1x6x4x10xf32>
    %11 = vector.shape_cast %10 : vector<1x1x6x4x10xf32> to vector<6x4x10xf32>
    %12 = tpu.concatenate %3, %5, %7, %9, %11 in 2 : vector<6x4x10xf32>, vector<6x4x10xf32>, vector<6x4x10xf32>, vector<6x4x10xf32>, vector<6x4x10xf32> -> vector<6x4x50xf32>
    %c0_26 = arith.constant 0 : index
    %c2_27 = arith.constant 2 : index
    %c0_28 = arith.constant 0 : index
    %c0_29 = arith.constant 0 : index
    %c0_30 = arith.constant 0 : index
    %13 = vector.load %arg1[%c0_26, %c2_27, %c0_28, %c0_29, %c0_30] : memref<2x4x6x6x10xf32, #tpu.memory_space<vmem>>, vector<1x1x6x4x10xf32>
    %14 = vector.shape_cast %13 : vector<1x1x6x4x10xf32> to vector<6x4x10xf32>
    %c0_31 = arith.constant 0 : index
    %c3 = arith.constant 3 : index
    %c0_32 = arith.constant 0 : index
    %c0_33 = arith.constant 0 : index
    %c0_34 = arith.constant 0 : index
    %15 = vector.load %arg1[%c0_31, %c3, %c0_32, %c0_33, %c0_34] : memref<2x4x6x6x10xf32, #tpu.memory_space<vmem>>, vector<1x1x6x4x10xf32>
    %16 = vector.shape_cast %15 : vector<1x1x6x4x10xf32> to vector<6x4x10xf32>
    %c0_35 = arith.constant 0 : index
    %c2_36 = arith.constant 2 : index
    %c0_37 = arith.constant 0 : index
    %c1_38 = arith.constant 1 : index
    %c0_39 = arith.constant 0 : index
    %17 = vector.load %arg1[%c0_35, %c2_36, %c0_37, %c1_38, %c0_39] : memref<2x4x6x6x10xf32, #tpu.memory_space<vmem>>, vector<1x1x6x4x10xf32>
    %18 = vector.shape_cast %17 : vector<1x1x6x4x10xf32> to vector<6x4x10xf32>
    %c0_40 = arith.constant 0 : index
    %c3_41 = arith.constant 3 : index
    %c0_42 = arith.constant 0 : index
    %c1_43 = arith.constant 1 : index
    %c0_44 = arith.constant 0 : index
    %19 = vector.load %arg1[%c0_40, %c3_41, %c0_42, %c1_43, %c0_44] : memref<2x4x6x6x10xf32, #tpu.memory_space<vmem>>, vector<1x1x6x4x10xf32>
    %20 = vector.shape_cast %19 : vector<1x1x6x4x10xf32> to vector<6x4x10xf32>
    %c0_45 = arith.constant 0 : index
    %c2_46 = arith.constant 2 : index
    %c0_47 = arith.constant 0 : index
    %c2_48 = arith.constant 2 : index
    %c0_49 = arith.constant 0 : index
    %21 = vector.load %arg1[%c0_45, %c2_46, %c0_47, %c2_48, %c0_49] : memref<2x4x6x6x10xf32, #tpu.memory_space<vmem>>, vector<1x1x6x4x10xf32>
    %22 = vector.shape_cast %21 : vector<1x1x6x4x10xf32> to vector<6x4x10xf32>
    %23 = tpu.concatenate %14, %16, %18, %20, %22 in 2 : vector<6x4x10xf32>, vector<6x4x10xf32>, vector<6x4x10xf32>, vector<6x4x10xf32>, vector<6x4x10xf32> -> vector<6x4x50xf32>
    %24 = vector.extract_strided_slice %12 {offsets = [0, 0, 0], sizes = [4, 4, 50], strides = [1, 1, 1]} : vector<6x4x50xf32> to vector<4x4x50xf32>
    %25 = vector.extract_strided_slice %23 {offsets = [0, 0, 0], sizes = [4, 4, 50], strides = [1, 1, 1]} : vector<6x4x50xf32> to vector<4x4x50xf32>
    %26 = vector.extract_strided_slice %12 {offsets = [1, 0, 0], sizes = [4, 4, 50], strides = [1, 1, 1]} : vector<6x4x50xf32> to vector<4x4x50xf32>
    %27 = vector.extract_strided_slice %23 {offsets = [1, 0, 0], sizes = [4, 4, 50], strides = [1, 1, 1]} : vector<6x4x50xf32> to vector<4x4x50xf32>
    %28 = vector.extract_strided_slice %12 {offsets = [2, 0, 0], sizes = [4, 4, 50], strides = [1, 1, 1]} : vector<6x4x50xf32> to vector<4x4x50xf32>
    %29 = tpu.concatenate %24, %25, %26, %27, %28 in 2 : vector<4x4x50xf32>, vector<4x4x50xf32>, vector<4x4x50xf32>, vector<4x4x50xf32>, vector<4x4x50xf32> -> vector<4x4x250xf32>
    %30 = vector.extract_strided_slice %29 {offsets = [0, 0, 0], sizes = [1, 4, 250], strides = [1, 1, 1]} : vector<4x4x250xf32> to vector<1x4x250xf32>
    %31 = vector.shape_cast %30 : vector<1x4x250xf32> to vector<4x250xf32>
    %32 = vector.extract_strided_slice %29 {offsets = [1, 0, 0], sizes = [1, 4, 250], strides = [1, 1, 1]} : vector<4x4x250xf32> to vector<1x4x250xf32>
    %33 = vector.shape_cast %32 : vector<1x4x250xf32> to vector<4x250xf32>
    %34 = vector.extract_strided_slice %29 {offsets = [2, 0, 0], sizes = [1, 4, 250], strides = [1, 1, 1]} : vector<4x4x250xf32> to vector<1x4x250xf32>
    %35 = vector.shape_cast %34 : vector<1x4x250xf32> to vector<4x250xf32>
    %36 = vector.extract_strided_slice %29 {offsets = [3, 0, 0], sizes = [1, 4, 250], strides = [1, 1, 1]} : vector<4x4x250xf32> to vector<1x4x250xf32>
    %37 = vector.shape_cast %36 : vector<1x4x250xf32> to vector<4x250xf32>
    %38 = tpu.concatenate %31, %33, %35, %37 in 0 : vector<4x250xf32>, vector<4x250xf32>, vector<4x250xf32>, vector<4x250xf32> -> vector<16x250xf32>
    %cst = arith.constant dense<0.000000e+00> : vector<16x20xf32>
    %39 = tpu.matmul %38, %0, %cst {dimension_numbers = #tpu.dot_dimension_numbers<[1], [0], [0], [1], [0, 0, 1, 1], [], []>} : vector<16x250xf32>, vector<250x20xf32>, vector<16x20xf32> -> vector<16x20xf32>
    %40 = vector.broadcast %1 : vector<1x20xf32> to vector<16x20xf32>
    %41 = arith.addf %39, %40 : vector<16x20xf32>
    %cst_50 = arith.constant 0.000000e+00 : f32
    %42 = vector.broadcast %cst_50 : f32 to vector<16x20xf32>
    %43 = arith.maximumf %41, %42 : vector<16x20xf32>
    %44 = vector.extract_strided_slice %23 {offsets = [0, 0, 0], sizes = [4, 4, 50], strides = [1, 1, 1]} : vector<6x4x50xf32> to vector<4x4x50xf32>
    %45 = vector.extract_strided_slice %12 {offsets = [1, 0, 0], sizes = [4, 4, 50], strides = [1, 1, 1]} : vector<6x4x50xf32> to vector<4x4x50xf32>
    %46 = vector.extract_strided_slice %23 {offsets = [1, 0, 0], sizes = [4, 4, 50], strides = [1, 1, 1]} : vector<6x4x50xf32> to vector<4x4x50xf32>
    %47 = vector.extract_strided_slice %12 {offsets = [2, 0, 0], sizes = [4, 4, 50], strides = [1, 1, 1]} : vector<6x4x50xf32> to vector<4x4x50xf32>
    %48 = vector.extract_strided_slice %23 {offsets = [2, 0, 0], sizes = [4, 4, 50], strides = [1, 1, 1]} : vector<6x4x50xf32> to vector<4x4x50xf32>
    %49 = tpu.concatenate %44, %45, %46, %47, %48 in 2 : vector<4x4x50xf32>, vector<4x4x50xf32>, vector<4x4x50xf32>, vector<4x4x50xf32>, vector<4x4x50xf32> -> vector<4x4x250xf32>
    %50 = vector.extract_strided_slice %49 {offsets = [0, 0, 0], sizes = [1, 4, 250], strides = [1, 1, 1]} : vector<4x4x250xf32> to vector<1x4x250xf32>
    %51 = vector.shape_cast %50 : vector<1x4x250xf32> to vector<4x250xf32>
    %52 = vector.extract_strided_slice %49 {offsets = [1, 0, 0], sizes = [1, 4, 250], strides = [1, 1, 1]} : vector<4x4x250xf32> to vector<1x4x250xf32>
    %53 = vector.shape_cast %52 : vector<1x4x250xf32> to vector<4x250xf32>
    %54 = vector.extract_strided_slice %49 {offsets = [2, 0, 0], sizes = [1, 4, 250], strides = [1, 1, 1]} : vector<4x4x250xf32> to vector<1x4x250xf32>
    %55 = vector.shape_cast %54 : vector<1x4x250xf32> to vector<4x250xf32>
    %56 = vector.extract_strided_slice %49 {offsets = [3, 0, 0], sizes = [1, 4, 250], strides = [1, 1, 1]} : vector<4x4x250xf32> to vector<1x4x250xf32>
    %57 = vector.shape_cast %56 : vector<1x4x250xf32> to vector<4x250xf32>
    %58 = tpu.concatenate %51, %53, %55, %57 in 0 : vector<4x250xf32>, vector<4x250xf32>, vector<4x250xf32>, vector<4x250xf32> -> vector<16x250xf32>
    %cst_51 = arith.constant dense<0.000000e+00> : vector<16x20xf32>
    %59 = tpu.matmul %58, %0, %cst_51 {dimension_numbers = #tpu.dot_dimension_numbers<[1], [0], [0], [1], [0, 0, 1, 1], [], []>} : vector<16x250xf32>, vector<250x20xf32>, vector<16x20xf32> -> vector<16x20xf32>
    %60 = vector.broadcast %1 : vector<1x20xf32> to vector<16x20xf32>
    %61 = arith.addf %59, %60 : vector<16x20xf32>
    %cst_52 = arith.constant 0.000000e+00 : f32
    %62 = vector.broadcast %cst_52 : f32 to vector<16x20xf32>
    %63 = arith.maximumf %61, %62 : vector<16x20xf32>
    %64 = arith.maximumf %43, %63 : vector<16x20xf32>
    %c0_53 = arith.constant 0 : index
    %c1_54 = arith.constant 1 : index
    %c0_55 = arith.constant 0 : index
    %c0_56 = arith.constant 0 : index
    %c0_57 = arith.constant 0 : index
    %65 = vector.load %arg1[%c0_53, %c1_54, %c0_55, %c0_56, %c0_57] : memref<2x4x6x6x10xf32, #tpu.memory_space<vmem>>, vector<1x1x6x4x10xf32>
    %66 = vector.shape_cast %65 : vector<1x1x6x4x10xf32> to vector<6x4x10xf32>
    %c0_58 = arith.constant 0 : index
    %c0_59 = arith.constant 0 : index
    %c0_60 = arith.constant 0 : index
    %c1_61 = arith.constant 1 : index
    %c0_62 = arith.constant 0 : index
    %67 = vector.load %arg1[%c0_58, %c0_59, %c0_60, %c1_61, %c0_62] : memref<2x4x6x6x10xf32, #tpu.memory_space<vmem>>, vector<1x1x6x4x10xf32>
    %68 = vector.shape_cast %67 : vector<1x1x6x4x10xf32> to vector<6x4x10xf32>
    %c0_63 = arith.constant 0 : index
    %c1_64 = arith.constant 1 : index
    %c0_65 = arith.constant 0 : index
    %c1_66 = arith.constant 1 : index
    %c0_67 = arith.constant 0 : index
    %69 = vector.load %arg1[%c0_63, %c1_64, %c0_65, %c1_66, %c0_67] : memref<2x4x6x6x10xf32, #tpu.memory_space<vmem>>, vector<1x1x6x4x10xf32>
    %70 = vector.shape_cast %69 : vector<1x1x6x4x10xf32> to vector<6x4x10xf32>
    %c0_68 = arith.constant 0 : index
    %c0_69 = arith.constant 0 : index
    %c0_70 = arith.constant 0 : index
    %c2_71 = arith.constant 2 : index
    %c0_72 = arith.constant 0 : index
    %71 = vector.load %arg1[%c0_68, %c0_69, %c0_70, %c2_71, %c0_72] : memref<2x4x6x6x10xf32, #tpu.memory_space<vmem>>, vector<1x1x6x4x10xf32>
    %72 = vector.shape_cast %71 : vector<1x1x6x4x10xf32> to vector<6x4x10xf32>
    %c0_73 = arith.constant 0 : index
    %c1_74 = arith.constant 1 : index
    %c0_75 = arith.constant 0 : index
    %c2_76 = arith.constant 2 : index
    %c0_77 = arith.constant 0 : index
    %73 = vector.load %arg1[%c0_73, %c1_74, %c0_75, %c2_76, %c0_77] : memref<2x4x6x6x10xf32, #tpu.memory_space<vmem>>, vector<1x1x6x4x10xf32>
    %74 = vector.shape_cast %73 : vector<1x1x6x4x10xf32> to vector<6x4x10xf32>
    %75 = tpu.concatenate %66, %68, %70, %72, %74 in 2 : vector<6x4x10xf32>, vector<6x4x10xf32>, vector<6x4x10xf32>, vector<6x4x10xf32>, vector<6x4x10xf32> -> vector<6x4x50xf32>
    %c0_78 = arith.constant 0 : index
    %c3_79 = arith.constant 3 : index
    %c0_80 = arith.constant 0 : index
    %c0_81 = arith.constant 0 : index
    %c0_82 = arith.constant 0 : index
    %76 = vector.load %arg1[%c0_78, %c3_79, %c0_80, %c0_81, %c0_82] : memref<2x4x6x6x10xf32, #tpu.memory_space<vmem>>, vector<1x1x6x4x10xf32>
    %77 = vector.shape_cast %76 : vector<1x1x6x4x10xf32> to vector<6x4x10xf32>
    %c0_83 = arith.constant 0 : index
    %c2_84 = arith.constant 2 : index
    %c0_85 = arith.constant 0 : index
    %c1_86 = arith.constant 1 : index
    %c0_87 = arith.constant 0 : index
    %78 = vector.load %arg1[%c0_83, %c2_84, %c0_85, %c1_86, %c0_87] : memref<2x4x6x6x10xf32, #tpu.memory_space<vmem>>, vector<1x1x6x4x10xf32>
    %79 = vector.shape_cast %78 : vector<1x1x6x4x10xf32> to vector<6x4x10xf32>
    %c0_88 = arith.constant 0 : index
    %c3_89 = arith.constant 3 : index
    %c0_90 = arith.constant 0 : index
    %c1_91 = arith.constant 1 : index
    %c0_92 = arith.constant 0 : index
    %80 = vector.load %arg1[%c0_88, %c3_89, %c0_90, %c1_91, %c0_92] : memref<2x4x6x6x10xf32, #tpu.memory_space<vmem>>, vector<1x1x6x4x10xf32>
    %81 = vector.shape_cast %80 : vector<1x1x6x4x10xf32> to vector<6x4x10xf32>
    %c0_93 = arith.constant 0 : index
    %c2_94 = arith.constant 2 : index
    %c0_95 = arith.constant 0 : index
    %c2_96 = arith.constant 2 : index
    %c0_97 = arith.constant 0 : index
    %82 = vector.load %arg1[%c0_93, %c2_94, %c0_95, %c2_96, %c0_97] : memref<2x4x6x6x10xf32, #tpu.memory_space<vmem>>, vector<1x1x6x4x10xf32>
    %83 = vector.shape_cast %82 : vector<1x1x6x4x10xf32> to vector<6x4x10xf32>
    %c0_98 = arith.constant 0 : index
    %c3_99 = arith.constant 3 : index
    %c0_100 = arith.constant 0 : index
    %c2_101 = arith.constant 2 : index
    %c0_102 = arith.constant 0 : index
    %84 = vector.load %arg1[%c0_98, %c3_99, %c0_100, %c2_101, %c0_102] : memref<2x4x6x6x10xf32, #tpu.memory_space<vmem>>, vector<1x1x6x4x10xf32>
    %85 = vector.shape_cast %84 : vector<1x1x6x4x10xf32> to vector<6x4x10xf32>
    %86 = tpu.concatenate %77, %79, %81, %83, %85 in 2 : vector<6x4x10xf32>, vector<6x4x10xf32>, vector<6x4x10xf32>, vector<6x4x10xf32>, vector<6x4x10xf32> -> vector<6x4x50xf32>
    %87 = vector.extract_strided_slice %75 {offsets = [0, 0, 0], sizes = [4, 4, 50], strides = [1, 1, 1]} : vector<6x4x50xf32> to vector<4x4x50xf32>
    %88 = vector.extract_strided_slice %86 {offsets = [0, 0, 0], sizes = [4, 4, 50], strides = [1, 1, 1]} : vector<6x4x50xf32> to vector<4x4x50xf32>
    %89 = vector.extract_strided_slice %75 {offsets = [1, 0, 0], sizes = [4, 4, 50], strides = [1, 1, 1]} : vector<6x4x50xf32> to vector<4x4x50xf32>
    %90 = vector.extract_strided_slice %86 {offsets = [1, 0, 0], sizes = [4, 4, 50], strides = [1, 1, 1]} : vector<6x4x50xf32> to vector<4x4x50xf32>
    %91 = vector.extract_strided_slice %75 {offsets = [2, 0, 0], sizes = [4, 4, 50], strides = [1, 1, 1]} : vector<6x4x50xf32> to vector<4x4x50xf32>
    %92 = tpu.concatenate %87, %88, %89, %90, %91 in 2 : vector<4x4x50xf32>, vector<4x4x50xf32>, vector<4x4x50xf32>, vector<4x4x50xf32>, vector<4x4x50xf32> -> vector<4x4x250xf32>
    %93 = vector.extract_strided_slice %92 {offsets = [0, 0, 0], sizes = [1, 4, 250], strides = [1, 1, 1]} : vector<4x4x250xf32> to vector<1x4x250xf32>
    %94 = vector.shape_cast %93 : vector<1x4x250xf32> to vector<4x250xf32>
    %95 = vector.extract_strided_slice %92 {offsets = [1, 0, 0], sizes = [1, 4, 250], strides = [1, 1, 1]} : vector<4x4x250xf32> to vector<1x4x250xf32>
    %96 = vector.shape_cast %95 : vector<1x4x250xf32> to vector<4x250xf32>
    %97 = vector.extract_strided_slice %92 {offsets = [2, 0, 0], sizes = [1, 4, 250], strides = [1, 1, 1]} : vector<4x4x250xf32> to vector<1x4x250xf32>
    %98 = vector.shape_cast %97 : vector<1x4x250xf32> to vector<4x250xf32>
    %99 = vector.extract_strided_slice %92 {offsets = [3, 0, 0], sizes = [1, 4, 250], strides = [1, 1, 1]} : vector<4x4x250xf32> to vector<1x4x250xf32>
    %100 = vector.shape_cast %99 : vector<1x4x250xf32> to vector<4x250xf32>
    %101 = tpu.concatenate %94, %96, %98, %100 in 0 : vector<4x250xf32>, vector<4x250xf32>, vector<4x250xf32>, vector<4x250xf32> -> vector<16x250xf32>
    %cst_103 = arith.constant dense<0.000000e+00> : vector<16x20xf32>
    %102 = tpu.matmul %101, %0, %cst_103 {dimension_numbers = #tpu.dot_dimension_numbers<[1], [0], [0], [1], [0, 0, 1, 1], [], []>} : vector<16x250xf32>, vector<250x20xf32>, vector<16x20xf32> -> vector<16x20xf32>
    %103 = vector.broadcast %1 : vector<1x20xf32> to vector<16x20xf32>
    %104 = arith.addf %102, %103 : vector<16x20xf32>
    %cst_104 = arith.constant 0.000000e+00 : f32
    %105 = vector.broadcast %cst_104 : f32 to vector<16x20xf32>
    %106 = arith.maximumf %104, %105 : vector<16x20xf32>
    %107 = arith.maximumf %64, %106 : vector<16x20xf32>
    %108 = vector.extract_strided_slice %86 {offsets = [0, 0, 0], sizes = [4, 4, 50], strides = [1, 1, 1]} : vector<6x4x50xf32> to vector<4x4x50xf32>
    %109 = vector.extract_strided_slice %75 {offsets = [1, 0, 0], sizes = [4, 4, 50], strides = [1, 1, 1]} : vector<6x4x50xf32> to vector<4x4x50xf32>
    %110 = vector.extract_strided_slice %86 {offsets = [1, 0, 0], sizes = [4, 4, 50], strides = [1, 1, 1]} : vector<6x4x50xf32> to vector<4x4x50xf32>
    %111 = vector.extract_strided_slice %75 {offsets = [2, 0, 0], sizes = [4, 4, 50], strides = [1, 1, 1]} : vector<6x4x50xf32> to vector<4x4x50xf32>
    %112 = vector.extract_strided_slice %86 {offsets = [2, 0, 0], sizes = [4, 4, 50], strides = [1, 1, 1]} : vector<6x4x50xf32> to vector<4x4x50xf32>
    %113 = tpu.concatenate %108, %109, %110, %111, %112 in 2 : vector<4x4x50xf32>, vector<4x4x50xf32>, vector<4x4x50xf32>, vector<4x4x50xf32>, vector<4x4x50xf32> -> vector<4x4x250xf32>
    %114 = vector.extract_strided_slice %113 {offsets = [0, 0, 0], sizes = [1, 4, 250], strides = [1, 1, 1]} : vector<4x4x250xf32> to vector<1x4x250xf32>
    %115 = vector.shape_cast %114 : vector<1x4x250xf32> to vector<4x250xf32>
    %116 = vector.extract_strided_slice %113 {offsets = [1, 0, 0], sizes = [1, 4, 250], strides = [1, 1, 1]} : vector<4x4x250xf32> to vector<1x4x250xf32>
    %117 = vector.shape_cast %116 : vector<1x4x250xf32> to vector<4x250xf32>
    %118 = vector.extract_strided_slice %113 {offsets = [2, 0, 0], sizes = [1, 4, 250], strides = [1, 1, 1]} : vector<4x4x250xf32> to vector<1x4x250xf32>
    %119 = vector.shape_cast %118 : vector<1x4x250xf32> to vector<4x250xf32>
    %120 = vector.extract_strided_slice %113 {offsets = [3, 0, 0], sizes = [1, 4, 250], strides = [1, 1, 1]} : vector<4x4x250xf32> to vector<1x4x250xf32>
    %121 = vector.shape_cast %120 : vector<1x4x250xf32> to vector<4x250xf32>
    %122 = tpu.concatenate %115, %117, %119, %121 in 0 : vector<4x250xf32>, vector<4x250xf32>, vector<4x250xf32>, vector<4x250xf32> -> vector<16x250xf32>
    %cst_105 = arith.constant dense<0.000000e+00> : vector<16x20xf32>
    %123 = tpu.matmul %122, %0, %cst_105 {dimension_numbers = #tpu.dot_dimension_numbers<[1], [0], [0], [1], [0, 0, 1, 1], [], []>} : vector<16x250xf32>, vector<250x20xf32>, vector<16x20xf32> -> vector<16x20xf32>
    %124 = vector.broadcast %1 : vector<1x20xf32> to vector<16x20xf32>
    %125 = arith.addf %123, %124 : vector<16x20xf32>
    %cst_106 = arith.constant 0.000000e+00 : f32
    %126 = vector.broadcast %cst_106 : f32 to vector<16x20xf32>
    %127 = arith.maximumf %125, %126 : vector<16x20xf32>
    %128 = arith.maximumf %107, %127 : vector<16x20xf32>
    %c0_107 = arith.constant 0 : index
    %c0_108 = arith.constant 0 : index
    %c0_109 = arith.constant 0 : index
    %129 = vector.load %arg4[%c0_107, %c0_108, %c0_109] : memref<2x16x20xf32, #tpu.memory_space<vmem>>, vector<1x16x20xf32>
    %130 = vector.shape_cast %129 : vector<1x16x20xf32> to vector<16x20xf32>
    %131 = vector.shape_cast %128 : vector<16x20xf32> to vector<1x16x20xf32>
    tpu.vector_store %arg4[%c0_107, %c0_108, %c0_109], %131 {strides = array<i32>} : memref<2x16x20xf32, #tpu.memory_space<vmem>>, vector<1x16x20xf32>,
    %c1_110 = arith.constant 1 : index
    %c0_111 = arith.constant 0 : index
    %c0_112 = arith.constant 0 : index
    %c0_113 = arith.constant 0 : index
    %c0_114 = arith.constant 0 : index
    %132 = vector.load %arg1[%c1_110, %c0_111, %c0_112, %c0_113, %c0_114] : memref<2x4x6x6x10xf32, #tpu.memory_space<vmem>>, vector<1x1x6x4x10xf32>
    %133 = vector.shape_cast %132 : vector<1x1x6x4x10xf32> to vector<6x4x10xf32>
    %c1_115 = arith.constant 1 : index
    %c1_116 = arith.constant 1 : index
    %c0_117 = arith.constant 0 : index
    %c0_118 = arith.constant 0 : index
    %c0_119 = arith.constant 0 : index
    %134 = vector.load %arg1[%c1_115, %c1_116, %c0_117, %c0_118, %c0_119] : memref<2x4x6x6x10xf32, #tpu.memory_space<vmem>>, vector<1x1x6x4x10xf32>
    %135 = vector.shape_cast %134 : vector<1x1x6x4x10xf32> to vector<6x4x10xf32>
    %c1_120 = arith.constant 1 : index
    %c0_121 = arith.constant 0 : index
    %c0_122 = arith.constant 0 : index
    %c1_123 = arith.constant 1 : index
    %c0_124 = arith.constant 0 : index
    %136 = vector.load %arg1[%c1_120, %c0_121, %c0_122, %c1_123, %c0_124] : memref<2x4x6x6x10xf32, #tpu.memory_space<vmem>>, vector<1x1x6x4x10xf32>
    %137 = vector.shape_cast %136 : vector<1x1x6x4x10xf32> to vector<6x4x10xf32>
    %c1_125 = arith.constant 1 : index
    %c1_126 = arith.constant 1 : index
    %c0_127 = arith.constant 0 : index
    %c1_128 = arith.constant 1 : index
    %c0_129 = arith.constant 0 : index
    %138 = vector.load %arg1[%c1_125, %c1_126, %c0_127, %c1_128, %c0_129] : memref<2x4x6x6x10xf32, #tpu.memory_space<vmem>>, vector<1x1x6x4x10xf32>
    %139 = vector.shape_cast %138 : vector<1x1x6x4x10xf32> to vector<6x4x10xf32>
    %c1_130 = arith.constant 1 : index
    %c0_131 = arith.constant 0 : index
    %c0_132 = arith.constant 0 : index
    %c2_133 = arith.constant 2 : index
    %c0_134 = arith.constant 0 : index
    %140 = vector.load %arg1[%c1_130, %c0_131, %c0_132, %c2_133, %c0_134] : memref<2x4x6x6x10xf32, #tpu.memory_space<vmem>>, vector<1x1x6x4x10xf32>
    %141 = vector.shape_cast %140 : vector<1x1x6x4x10xf32> to vector<6x4x10xf32>
    %142 = tpu.concatenate %133, %135, %137, %139, %141 in 2 : vector<6x4x10xf32>, vector<6x4x10xf32>, vector<6x4x10xf32>, vector<6x4x10xf32>, vector<6x4x10xf32> -> vector<6x4x50xf32>
    %c1_135 = arith.constant 1 : index
    %c2_136 = arith.constant 2 : index
    %c0_137 = arith.constant 0 : index
    %c0_138 = arith.constant 0 : index
    %c0_139 = arith.constant 0 : index
    %143 = vector.load %arg1[%c1_135, %c2_136, %c0_137, %c0_138, %c0_139] : memref<2x4x6x6x10xf32, #tpu.memory_space<vmem>>, vector<1x1x6x4x10xf32>
    %144 = vector.shape_cast %143 : vector<1x1x6x4x10xf32> to vector<6x4x10xf32>
    %c1_140 = arith.constant 1 : index
    %c3_141 = arith.constant 3 : index
    %c0_142 = arith.constant 0 : index
    %c0_143 = arith.constant 0 : index
    %c0_144 = arith.constant 0 : index
    %145 = vector.load %arg1[%c1_140, %c3_141, %c0_142, %c0_143, %c0_144] : memref<2x4x6x6x10xf32, #tpu.memory_space<vmem>>, vector<1x1x6x4x10xf32>
    %146 = vector.shape_cast %145 : vector<1x1x6x4x10xf32> to vector<6x4x10xf32>
    %c1_145 = arith.constant 1 : index
    %c2_146 = arith.constant 2 : index
    %c0_147 = arith.constant 0 : index
    %c1_148 = arith.constant 1 : index
    %c0_149 = arith.constant 0 : index
    %147 = vector.load %arg1[%c1_145, %c2_146, %c0_147, %c1_148, %c0_149] : memref<2x4x6x6x10xf32, #tpu.memory_space<vmem>>, vector<1x1x6x4x10xf32>
    %148 = vector.shape_cast %147 : vector<1x1x6x4x10xf32> to vector<6x4x10xf32>
    %c1_150 = arith.constant 1 : index
    %c3_151 = arith.constant 3 : index
    %c0_152 = arith.constant 0 : index
    %c1_153 = arith.constant 1 : index
    %c0_154 = arith.constant 0 : index
    %149 = vector.load %arg1[%c1_150, %c3_151, %c0_152, %c1_153, %c0_154] : memref<2x4x6x6x10xf32, #tpu.memory_space<vmem>>, vector<1x1x6x4x10xf32>
    %150 = vector.shape_cast %149 : vector<1x1x6x4x10xf32> to vector<6x4x10xf32>
    %c1_155 = arith.constant 1 : index
    %c2_156 = arith.constant 2 : index
    %c0_157 = arith.constant 0 : index
    %c2_158 = arith.constant 2 : index
    %c0_159 = arith.constant 0 : index
    %151 = vector.load %arg1[%c1_155, %c2_156, %c0_157, %c2_158, %c0_159] : memref<2x4x6x6x10xf32, #tpu.memory_space<vmem>>, vector<1x1x6x4x10xf32>
    %152 = vector.shape_cast %151 : vector<1x1x6x4x10xf32> to vector<6x4x10xf32>
    %153 = tpu.concatenate %144, %146, %148, %150, %152 in 2 : vector<6x4x10xf32>, vector<6x4x10xf32>, vector<6x4x10xf32>, vector<6x4x10xf32>, vector<6x4x10xf32> -> vector<6x4x50xf32>
    %154 = vector.extract_strided_slice %142 {offsets = [0, 0, 0], sizes = [4, 4, 50], strides = [1, 1, 1]} : vector<6x4x50xf32> to vector<4x4x50xf32>
    %155 = vector.extract_strided_slice %153 {offsets = [0, 0, 0], sizes = [4, 4, 50], strides = [1, 1, 1]} : vector<6x4x50xf32> to vector<4x4x50xf32>
    %156 = vector.extract_strided_slice %142 {offsets = [1, 0, 0], sizes = [4, 4, 50], strides = [1, 1, 1]} : vector<6x4x50xf32> to vector<4x4x50xf32>
    %157 = vector.extract_strided_slice %153 {offsets = [1, 0, 0], sizes = [4, 4, 50], strides = [1, 1, 1]} : vector<6x4x50xf32> to vector<4x4x50xf32>
    %158 = vector.extract_strided_slice %142 {offsets = [2, 0, 0], sizes = [4, 4, 50], strides = [1, 1, 1]} : vector<6x4x50xf32> to vector<4x4x50xf32>
    %159 = tpu.concatenate %154, %155, %156, %157, %158 in 2 : vector<4x4x50xf32>, vector<4x4x50xf32>, vector<4x4x50xf32>, vector<4x4x50xf32>, vector<4x4x50xf32> -> vector<4x4x250xf32>
    %160 = vector.extract_strided_slice %159 {offsets = [0, 0, 0], sizes = [1, 4, 250], strides = [1, 1, 1]} : vector<4x4x250xf32> to vector<1x4x250xf32>
    %161 = vector.shape_cast %160 : vector<1x4x250xf32> to vector<4x250xf32>
    %162 = vector.extract_strided_slice %159 {offsets = [1, 0, 0], sizes = [1, 4, 250], strides = [1, 1, 1]} : vector<4x4x250xf32> to vector<1x4x250xf32>
    %163 = vector.shape_cast %162 : vector<1x4x250xf32> to vector<4x250xf32>
    %164 = vector.extract_strided_slice %159 {offsets = [2, 0, 0], sizes = [1, 4, 250], strides = [1, 1, 1]} : vector<4x4x250xf32> to vector<1x4x250xf32>
    %165 = vector.shape_cast %164 : vector<1x4x250xf32> to vector<4x250xf32>
    %166 = vector.extract_strided_slice %159 {offsets = [3, 0, 0], sizes = [1, 4, 250], strides = [1, 1, 1]} : vector<4x4x250xf32> to vector<1x4x250xf32>
    %167 = vector.shape_cast %166 : vector<1x4x250xf32> to vector<4x250xf32>
    %168 = tpu.concatenate %161, %163, %165, %167 in 0 : vector<4x250xf32>, vector<4x250xf32>, vector<4x250xf32>, vector<4x250xf32> -> vector<16x250xf32>
    %cst_160 = arith.constant dense<0.000000e+00> : vector<16x20xf32>
    %169 = tpu.matmul %168, %0, %cst_160 {dimension_numbers = #tpu.dot_dimension_numbers<[1], [0], [0], [1], [0, 0, 1, 1], [], []>} : vector<16x250xf32>, vector<250x20xf32>, vector<16x20xf32> -> vector<16x20xf32>
    %170 = vector.broadcast %1 : vector<1x20xf32> to vector<16x20xf32>
    %171 = arith.addf %169, %170 : vector<16x20xf32>
    %cst_161 = arith.constant 0.000000e+00 : f32
    %172 = vector.broadcast %cst_161 : f32 to vector<16x20xf32>
    %173 = arith.maximumf %171, %172 : vector<16x20xf32>
    %174 = vector.extract_strided_slice %153 {offsets = [0, 0, 0], sizes = [4, 4, 50], strides = [1, 1, 1]} : vector<6x4x50xf32> to vector<4x4x50xf32>
    %175 = vector.extract_strided_slice %142 {offsets = [1, 0, 0], sizes = [4, 4, 50], strides = [1, 1, 1]} : vector<6x4x50xf32> to vector<4x4x50xf32>
    %176 = vector.extract_strided_slice %153 {offsets = [1, 0, 0], sizes = [4, 4, 50], strides = [1, 1, 1]} : vector<6x4x50xf32> to vector<4x4x50xf32>
    %177 = vector.extract_strided_slice %142 {offsets = [2, 0, 0], sizes = [4, 4, 50], strides = [1, 1, 1]} : vector<6x4x50xf32> to vector<4x4x50xf32>
    %178 = vector.extract_strided_slice %153 {offsets = [2, 0, 0], sizes = [4, 4, 50], strides = [1, 1, 1]} : vector<6x4x50xf32> to vector<4x4x50xf32>
    %179 = tpu.concatenate %174, %175, %176, %177, %178 in 2 : vector<4x4x50xf32>, vector<4x4x50xf32>, vector<4x4x50xf32>, vector<4x4x50xf32>, vector<4x4x50xf32> -> vector<4x4x250xf32>
    %180 = vector.extract_strided_slice %179 {offsets = [0, 0, 0], sizes = [1, 4, 250], strides = [1, 1, 1]} : vector<4x4x250xf32> to vector<1x4x250xf32>
    %181 = vector.shape_cast %180 : vector<1x4x250xf32> to vector<4x250xf32>
    %182 = vector.extract_strided_slice %179 {offsets = [1, 0, 0], sizes = [1, 4, 250], strides = [1, 1, 1]} : vector<4x4x250xf32> to vector<1x4x250xf32>
    %183 = vector.shape_cast %182 : vector<1x4x250xf32> to vector<4x250xf32>
    %184 = vector.extract_strided_slice %179 {offsets = [2, 0, 0], sizes = [1, 4, 250], strides = [1, 1, 1]} : vector<4x4x250xf32> to vector<1x4x250xf32>
    %185 = vector.shape_cast %184 : vector<1x4x250xf32> to vector<4x250xf32>
    %186 = vector.extract_strided_slice %179 {offsets = [3, 0, 0], sizes = [1, 4, 250], strides = [1, 1, 1]} : vector<4x4x250xf32> to vector<1x4x250xf32>
    %187 = vector.shape_cast %186 : vector<1x4x250xf32> to vector<4x250xf32>
    %188 = tpu.concatenate %181, %183, %185, %187 in 0 : vector<4x250xf32>, vector<4x250xf32>, vector<4x250xf32>, vector<4x250xf32> -> vector<16x250xf32>
    %cst_162 = arith.constant dense<0.000000e+00> : vector<16x20xf32>
    %189 = tpu.matmul %188, %0, %cst_162 {dimension_numbers = #tpu.dot_dimension_numbers<[1], [0], [0], [1], [0, 0, 1, 1], [], []>} : vector<16x250xf32>, vector<250x20xf32>, vector<16x20xf32> -> vector<16x20xf32>
    %190 = vector.broadcast %1 : vector<1x20xf32> to vector<16x20xf32>
    %191 = arith.addf %189, %190 : vector<16x20xf32>
    %cst_163 = arith.constant 0.000000e+00 : f32
    %192 = vector.broadcast %cst_163 : f32 to vector<16x20xf32>
    %193 = arith.maximumf %191, %192 : vector<16x20xf32>
    %194 = arith.maximumf %173, %193 : vector<16x20xf32>
    %c1_164 = arith.constant 1 : index
    %c1_165 = arith.constant 1 : index
    %c0_166 = arith.constant 0 : index
    %c0_167 = arith.constant 0 : index
    %c0_168 = arith.constant 0 : index
    %195 = vector.load %arg1[%c1_164, %c1_165, %c0_166, %c0_167, %c0_168] : memref<2x4x6x6x10xf32, #tpu.memory_space<vmem>>, vector<1x1x6x4x10xf32>
    %196 = vector.shape_cast %195 : vector<1x1x6x4x10xf32> to vector<6x4x10xf32>
    %c1_169 = arith.constant 1 : index
    %c0_170 = arith.constant 0 : index
    %c0_171 = arith.constant 0 : index
    %c1_172 = arith.constant 1 : index
    %c0_173 = arith.constant 0 : index
    %197 = vector.load %arg1[%c1_169, %c0_170, %c0_171, %c1_172, %c0_173] : memref<2x4x6x6x10xf32, #tpu.memory_space<vmem>>, vector<1x1x6x4x10xf32>
    %198 = vector.shape_cast %197 : vector<1x1x6x4x10xf32> to vector<6x4x10xf32>
    %c1_174 = arith.constant 1 : index
    %c1_175 = arith.constant 1 : index
    %c0_176 = arith.constant 0 : index
    %c1_177 = arith.constant 1 : index
    %c0_178 = arith.constant 0 : index
    %199 = vector.load %arg1[%c1_174, %c1_175, %c0_176, %c1_177, %c0_178] : memref<2x4x6x6x10xf32, #tpu.memory_space<vmem>>, vector<1x1x6x4x10xf32>
    %200 = vector.shape_cast %199 : vector<1x1x6x4x10xf32> to vector<6x4x10xf32>
    %c1_179 = arith.constant 1 : index
    %c0_180 = arith.constant 0 : index
    %c0_181 = arith.constant 0 : index
    %c2_182 = arith.constant 2 : index
    %c0_183 = arith.constant 0 : index
    %201 = vector.load %arg1[%c1_179, %c0_180, %c0_181, %c2_182, %c0_183] : memref<2x4x6x6x10xf32, #tpu.memory_space<vmem>>, vector<1x1x6x4x10xf32>
    %202 = vector.shape_cast %201 : vector<1x1x6x4x10xf32> to vector<6x4x10xf32>
    %c1_184 = arith.constant 1 : index
    %c1_185 = arith.constant 1 : index
    %c0_186 = arith.constant 0 : index
    %c2_187 = arith.constant 2 : index
    %c0_188 = arith.constant 0 : index
    %203 = vector.load %arg1[%c1_184, %c1_185, %c0_186, %c2_187, %c0_188] : memref<2x4x6x6x10xf32, #tpu.memory_space<vmem>>, vector<1x1x6x4x10xf32>
    %204 = vector.shape_cast %203 : vector<1x1x6x4x10xf32> to vector<6x4x10xf32>
    %205 = tpu.concatenate %196, %198, %200, %202, %204 in 2 : vector<6x4x10xf32>, vector<6x4x10xf32>, vector<6x4x10xf32>, vector<6x4x10xf32>, vector<6x4x10xf32> -> vector<6x4x50xf32>
    %c1_189 = arith.constant 1 : index
    %c3_190 = arith.constant 3 : index
    %c0_191 = arith.constant 0 : index
    %c0_192 = arith.constant 0 : index
    %c0_193 = arith.constant 0 : index
    %206 = vector.load %arg1[%c1_189, %c3_190, %c0_191, %c0_192, %c0_193] : memref<2x4x6x6x10xf32, #tpu.memory_space<vmem>>, vector<1x1x6x4x10xf32>
    %207 = vector.shape_cast %206 : vector<1x1x6x4x10xf32> to vector<6x4x10xf32>
    %c1_194 = arith.constant 1 : index
    %c2_195 = arith.constant 2 : index
    %c0_196 = arith.constant 0 : index
    %c1_197 = arith.constant 1 : index
    %c0_198 = arith.constant 0 : index
    %208 = vector.load %arg1[%c1_194, %c2_195, %c0_196, %c1_197, %c0_198] : memref<2x4x6x6x10xf32, #tpu.memory_space<vmem>>, vector<1x1x6x4x10xf32>
    %209 = vector.shape_cast %208 : vector<1x1x6x4x10xf32> to vector<6x4x10xf32>
    %c1_199 = arith.constant 1 : index
    %c3_200 = arith.constant 3 : index
    %c0_201 = arith.constant 0 : index
    %c1_202 = arith.constant 1 : index
    %c0_203 = arith.constant 0 : index
    %210 = vector.load %arg1[%c1_199, %c3_200, %c0_201, %c1_202, %c0_203] : memref<2x4x6x6x10xf32, #tpu.memory_space<vmem>>, vector<1x1x6x4x10xf32>
    %211 = vector.shape_cast %210 : vector<1x1x6x4x10xf32> to vector<6x4x10xf32>
    %c1_204 = arith.constant 1 : index
    %c2_205 = arith.constant 2 : index
    %c0_206 = arith.constant 0 : index
    %c2_207 = arith.constant 2 : index
    %c0_208 = arith.constant 0 : index
    %212 = vector.load %arg1[%c1_204, %c2_205, %c0_206, %c2_207, %c0_208] : memref<2x4x6x6x10xf32, #tpu.memory_space<vmem>>, vector<1x1x6x4x10xf32>
    %213 = vector.shape_cast %212 : vector<1x1x6x4x10xf32> to vector<6x4x10xf32>
    %c1_209 = arith.constant 1 : index
    %c3_210 = arith.constant 3 : index
    %c0_211 = arith.constant 0 : index
    %c2_212 = arith.constant 2 : index
    %c0_213 = arith.constant 0 : index
    %214 = vector.load %arg1[%c1_209, %c3_210, %c0_211, %c2_212, %c0_213] : memref<2x4x6x6x10xf32, #tpu.memory_space<vmem>>, vector<1x1x6x4x10xf32>
    %215 = vector.shape_cast %214 : vector<1x1x6x4x10xf32> to vector<6x4x10xf32>
    %216 = tpu.concatenate %207, %209, %211, %213, %215 in 2 : vector<6x4x10xf32>, vector<6x4x10xf32>, vector<6x4x10xf32>, vector<6x4x10xf32>, vector<6x4x10xf32> -> vector<6x4x50xf32>
    %217 = vector.extract_strided_slice %205 {offsets = [0, 0, 0], sizes = [4, 4, 50], strides = [1, 1, 1]} : vector<6x4x50xf32> to vector<4x4x50xf32>
    %218 = vector.extract_strided_slice %216 {offsets = [0, 0, 0], sizes = [4, 4, 50], strides = [1, 1, 1]} : vector<6x4x50xf32> to vector<4x4x50xf32>
    %219 = vector.extract_strided_slice %205 {offsets = [1, 0, 0], sizes = [4, 4, 50], strides = [1, 1, 1]} : vector<6x4x50xf32> to vector<4x4x50xf32>
    %220 = vector.extract_strided_slice %216 {offsets = [1, 0, 0], sizes = [4, 4, 50], strides = [1, 1, 1]} : vector<6x4x50xf32> to vector<4x4x50xf32>
    %221 = vector.extract_strided_slice %205 {offsets = [2, 0, 0], sizes = [4, 4, 50], strides = [1, 1, 1]} : vector<6x4x50xf32> to vector<4x4x50xf32>
    %222 = tpu.concatenate %217, %218, %219, %220, %221 in 2 : vector<4x4x50xf32>, vector<4x4x50xf32>, vector<4x4x50xf32>, vector<4x4x50xf32>, vector<4x4x50xf32> -> vector<4x4x250xf32>
    %223 = vector.extract_strided_slice %222 {offsets = [0, 0, 0], sizes = [1, 4, 250], strides = [1, 1, 1]} : vector<4x4x250xf32> to vector<1x4x250xf32>
    %224 = vector.shape_cast %223 : vector<1x4x250xf32> to vector<4x250xf32>
    %225 = vector.extract_strided_slice %222 {offsets = [1, 0, 0], sizes = [1, 4, 250], strides = [1, 1, 1]} : vector<4x4x250xf32> to vector<1x4x250xf32>
    %226 = vector.shape_cast %225 : vector<1x4x250xf32> to vector<4x250xf32>
    %227 = vector.extract_strided_slice %222 {offsets = [2, 0, 0], sizes = [1, 4, 250], strides = [1, 1, 1]} : vector<4x4x250xf32> to vector<1x4x250xf32>
    %228 = vector.shape_cast %227 : vector<1x4x250xf32> to vector<4x250xf32>
    %229 = vector.extract_strided_slice %222 {offsets = [3, 0, 0], sizes = [1, 4, 250], strides = [1, 1, 1]} : vector<4x4x250xf32> to vector<1x4x250xf32>
    %230 = vector.shape_cast %229 : vector<1x4x250xf32> to vector<4x250xf32>
    %231 = tpu.concatenate %224, %226, %228, %230 in 0 : vector<4x250xf32>, vector<4x250xf32>, vector<4x250xf32>, vector<4x250xf32> -> vector<16x250xf32>
    %cst_214 = arith.constant dense<0.000000e+00> : vector<16x20xf32>
    %232 = tpu.matmul %231, %0, %cst_214 {dimension_numbers = #tpu.dot_dimension_numbers<[1], [0], [0], [1], [0, 0, 1, 1], [], []>} : vector<16x250xf32>, vector<250x20xf32>, vector<16x20xf32> -> vector<16x20xf32>
    %233 = vector.broadcast %1 : vector<1x20xf32> to vector<16x20xf32>
    %234 = arith.addf %232, %233 : vector<16x20xf32>
    %cst_215 = arith.constant 0.000000e+00 : f32
    %235 = vector.broadcast %cst_215 : f32 to vector<16x20xf32>
    %236 = arith.maximumf %234, %235 : vector<16x20xf32>
    %237 = arith.maximumf %194, %236 : vector<16x20xf32>
    %238 = vector.extract_strided_slice %216 {offsets = [0, 0, 0], sizes = [4, 4, 50], strides = [1, 1, 1]} : vector<6x4x50xf32> to vector<4x4x50xf32>
    %239 = vector.extract_strided_slice %205 {offsets = [1, 0, 0], sizes = [4, 4, 50], strides = [1, 1, 1]} : vector<6x4x50xf32> to vector<4x4x50xf32>
    %240 = vector.extract_strided_slice %216 {offsets = [1, 0, 0], sizes = [4, 4, 50], strides = [1, 1, 1]} : vector<6x4x50xf32> to vector<4x4x50xf32>
    %241 = vector.extract_strided_slice %205 {offsets = [2, 0, 0], sizes = [4, 4, 50], strides = [1, 1, 1]} : vector<6x4x50xf32> to vector<4x4x50xf32>
    %242 = vector.extract_strided_slice %216 {offsets = [2, 0, 0], sizes = [4, 4, 50], strides = [1, 1, 1]} : vector<6x4x50xf32> to vector<4x4x50xf32>
    %243 = tpu.concatenate %238, %239, %240, %241, %242 in 2 : vector<4x4x50xf32>, vector<4x4x50xf32>, vector<4x4x50xf32>, vector<4x4x50xf32>, vector<4x4x50xf32> -> vector<4x4x250xf32>
    %244 = vector.extract_strided_slice %243 {offsets = [0, 0, 0], sizes = [1, 4, 250], strides = [1, 1, 1]} : vector<4x4x250xf32> to vector<1x4x250xf32>
    %245 = vector.shape_cast %244 : vector<1x4x250xf32> to vector<4x250xf32>
    %246 = vector.extract_strided_slice %243 {offsets = [1, 0, 0], sizes = [1, 4, 250], strides = [1, 1, 1]} : vector<4x4x250xf32> to vector<1x4x250xf32>
    %247 = vector.shape_cast %246 : vector<1x4x250xf32> to vector<4x250xf32>
    %248 = vector.extract_strided_slice %243 {offsets = [2, 0, 0], sizes = [1, 4, 250], strides = [1, 1, 1]} : vector<4x4x250xf32> to vector<1x4x250xf32>
    %249 = vector.shape_cast %248 : vector<1x4x250xf32> to vector<4x250xf32>
    %250 = vector.extract_strided_slice %243 {offsets = [3, 0, 0], sizes = [1, 4, 250], strides = [1, 1, 1]} : vector<4x4x250xf32> to vector<1x4x250xf32>
    %251 = vector.shape_cast %250 : vector<1x4x250xf32> to vector<4x250xf32>
    %252 = tpu.concatenate %245, %247, %249, %251 in 0 : vector<4x250xf32>, vector<4x250xf32>, vector<4x250xf32>, vector<4x250xf32> -> vector<16x250xf32>
    %cst_216 = arith.constant dense<0.000000e+00> : vector<16x20xf32>
    %253 = tpu.matmul %252, %0, %cst_216 {dimension_numbers = #tpu.dot_dimension_numbers<[1], [0], [0], [1], [0, 0, 1, 1], [], []>} : vector<16x250xf32>, vector<250x20xf32>, vector<16x20xf32> -> vector<16x20xf32>
    %254 = vector.broadcast %1 : vector<1x20xf32> to vector<16x20xf32>
    %255 = arith.addf %253, %254 : vector<16x20xf32>
    %cst_217 = arith.constant 0.000000e+00 : f32
    %256 = vector.broadcast %cst_217 : f32 to vector<16x20xf32>
    %257 = arith.maximumf %255, %256 : vector<16x20xf32>
    %258 = arith.maximumf %237, %257 : vector<16x20xf32>
    %c1_218 = arith.constant 1 : index
    %c0_219 = arith.constant 0 : index
    %c0_220 = arith.constant 0 : index
    %259 = vector.load %arg4[%c1_218, %c0_219, %c0_220] : memref<2x16x20xf32, #tpu.memory_space<vmem>>, vector<1x16x20xf32>
    %260 = vector.shape_cast %259 : vector<1x16x20xf32> to vector<16x20xf32>
    %261 = vector.shape_cast %258 : vector<16x20xf32> to vector<1x16x20xf32>
    tpu.vector_store %arg4[%c1_218, %c0_219, %c0_220], %261 {strides = array<i32>} : memref<2x16x20xf32, #tpu.memory_space<vmem>>, vector<1x16x20xf32>,
    return
  }
  func.func @transform_0(%arg0: i32) -> (i32, i32, i32, i32, i32) {
    %c0_i32 = arith.constant 0 : i32
    %c0_i32_0 = arith.constant 0 : i32
    %c0_i32_1 = arith.constant 0 : i32
    %c0_i32_2 = arith.constant 0 : i32
    %c0_i32_3 = arith.constant 0 : i32
    return %arg0, %c0_i32, %c0_i32_0, %c0_i32_1, %c0_i32_2 : i32, i32, i32, i32, i32
  }
  func.func @transform_1(%arg0: i32) -> (i32, i32) {
    %c0_i32 = arith.constant 0 : i32
    %c0_i32_0 = arith.constant 0 : i32
    %c0_i32_1 = arith.constant 0 : i32
    return %c0_i32, %c0_i32_0 : i32, i32
  }
  func.func @transform_2(%arg0: i32) -> (i32, i32) {
    %c0_i32 = arith.constant 0 : i32
    %c0_i32_0 = arith.constant 0 : i32
    %c0_i32_1 = arith.constant 0 : i32
    return %c0_i32, %c0_i32_0 : i32, i32
  }
  func.func @transform_3(%arg0: i32) -> (i32, i32, i32) {
    %c0_i32 = arith.constant 0 : i32
    %c0_i32_0 = arith.constant 0 : i32
    %c0_i32_1 = arith.constant 0 : i32
    return %arg0, %c0_i32, %c0_i32_0 : i32, i32, i32
  }
}

module attributes {stable_mosaic.version = 11 : i64} {
  func.func @_fc_kernel(%arg0: i32, %arg1: memref<2x320xf32, #tpu.memory_space<vmem>>, %arg2: memref<320x160xf32, #tpu.memory_space<vmem>>, %arg3: memref<1x160xf32, #tpu.memory_space<vmem>>, %arg4: memref<160x80xf32, #tpu.memory_space<vmem>>, %arg5: memref<1x80xf32, #tpu.memory_space<vmem>>, %arg6: memref<80x10xf32, #tpu.memory_space<vmem>>, %arg7: memref<1x10xf32, #tpu.memory_space<vmem>>, %arg8: memref<2x10xf32, #tpu.memory_space<vmem>>) attributes {dimension_semantics = [#tpu.dimension_semantics<parallel>], iteration_bounds = array<i64: 1>, scalar_prefetch = 0 : i64, scratch_operands = 0 : i64, tpu.core_type = #tpu.core_type<tc>, window_params = [{transform_indices = @transform_0, window_bounds = array<i64: 2, 320>}, {pipeline_mode = #tpu.pipeline_mode<synchronous>, transform_indices = @transform_1, window_bounds = array<i64: 320, 160>}, {pipeline_mode = #tpu.pipeline_mode<synchronous>, transform_indices = @transform_2, window_bounds = array<i64: 1, 160>}, {pipeline_mode = #tpu.pipeline_mode<synchronous>, transform_indices = @transform_3, window_bounds = array<i64: 160, 80>}, {pipeline_mode = #tpu.pipeline_mode<synchronous>, transform_indices = @transform_4, window_bounds = array<i64: 1, 80>}, {pipeline_mode = #tpu.pipeline_mode<synchronous>, transform_indices = @transform_5, window_bounds = array<i64: 80, 10>}, {pipeline_mode = #tpu.pipeline_mode<synchronous>, transform_indices = @transform_6, window_bounds = array<i64: 1, 10>}, {transform_indices = @transform_7, window_bounds = array<i64: 2, 10>}]} {
    %c0 = arith.constant 0 : index
    %c0_0 = arith.constant 0 : index
    %0 = vector.load %arg1[%c0, %c0_0] : memref<2x320xf32, #tpu.memory_space<vmem>>, vector<2x320xf32>
    %c0_1 = arith.constant 0 : index
    %c0_2 = arith.constant 0 : index
    %1 = vector.load %arg2[%c0_1, %c0_2] : memref<320x160xf32, #tpu.memory_space<vmem>>, vector<320x160xf32>
    %cst = arith.constant dense<0.000000e+00> : vector<2x160xf32>
    %2 = tpu.matmul %0, %1, %cst {dimension_numbers = #tpu.dot_dimension_numbers<[1], [0], [0], [1], [0, 0, 1, 1], [], []>} : vector<2x320xf32>, vector<320x160xf32>, vector<2x160xf32> -> vector<2x160xf32>
    %c0_3 = arith.constant 0 : index
    %c0_4 = arith.constant 0 : index
    %3 = vector.load %arg3[%c0_3, %c0_4] : memref<1x160xf32, #tpu.memory_space<vmem>>, vector<1x160xf32>
    %4 = vector.broadcast %3 : vector<1x160xf32> to vector<2x160xf32>
    %5 = arith.addf %2, %4 : vector<2x160xf32>
    %cst_5 = arith.constant 0.000000e+00 : f32
    %6 = vector.broadcast %cst_5 : f32 to vector<2x160xf32>
    %7 = arith.maximumf %5, %6 : vector<2x160xf32>
    %c0_6 = arith.constant 0 : index
    %c0_7 = arith.constant 0 : index
    %8 = vector.load %arg4[%c0_6, %c0_7] : memref<160x80xf32, #tpu.memory_space<vmem>>, vector<160x80xf32>
    %cst_8 = arith.constant dense<0.000000e+00> : vector<2x80xf32>
    %9 = tpu.matmul %7, %8, %cst_8 {dimension_numbers = #tpu.dot_dimension_numbers<[1], [0], [0], [1], [0, 0, 1, 1], [], []>} : vector<2x160xf32>, vector<160x80xf32>, vector<2x80xf32> -> vector<2x80xf32>
    %c0_9 = arith.constant 0 : index
    %c0_10 = arith.constant 0 : index
    %10 = vector.load %arg5[%c0_9, %c0_10] : memref<1x80xf32, #tpu.memory_space<vmem>>, vector<1x80xf32>
    %11 = vector.broadcast %10 : vector<1x80xf32> to vector<2x80xf32>
    %12 = arith.addf %9, %11 : vector<2x80xf32>
    %cst_11 = arith.constant 0.000000e+00 : f32
    %13 = vector.broadcast %cst_11 : f32 to vector<2x80xf32>
    %14 = arith.maximumf %12, %13 : vector<2x80xf32>
    %c0_12 = arith.constant 0 : index
    %c0_13 = arith.constant 0 : index
    %15 = vector.load %arg6[%c0_12, %c0_13] : memref<80x10xf32, #tpu.memory_space<vmem>>, vector<80x10xf32>
    %cst_14 = arith.constant dense<0.000000e+00> : vector<2x10xf32>
    %16 = tpu.matmul %14, %15, %cst_14 {dimension_numbers = #tpu.dot_dimension_numbers<[1], [0], [0], [1], [0, 0, 1, 1], [], []>} : vector<2x80xf32>, vector<80x10xf32>, vector<2x10xf32> -> vector<2x10xf32>
    %c0_15 = arith.constant 0 : index
    %c0_16 = arith.constant 0 : index
    %17 = vector.load %arg7[%c0_15, %c0_16] : memref<1x10xf32, #tpu.memory_space<vmem>>, vector<1x10xf32>
    %18 = vector.broadcast %17 : vector<1x10xf32> to vector<2x10xf32>
    %19 = arith.addf %16, %18 : vector<2x10xf32>
    %c0_17 = arith.constant 0 : index
    %c0_18 = arith.constant 0 : index
    %20 = vector.load %arg8[%c0_17, %c0_18] : memref<2x10xf32, #tpu.memory_space<vmem>>, vector<2x10xf32>
    tpu.vector_store %arg8[%c0_17, %c0_18], %19 {strides = array<i32>} : memref<2x10xf32, #tpu.memory_space<vmem>>, vector<2x10xf32>,
    return
  }
  func.func @transform_0(%arg0: i32) -> (i32, i32) {
    %c0_i32 = arith.constant 0 : i32
    %c0_i32_0 = arith.constant 0 : i32
    return %arg0, %c0_i32 : i32, i32
  }
  func.func @transform_1(%arg0: i32) -> (i32, i32) {
    %c0_i32 = arith.constant 0 : i32
    %c0_i32_0 = arith.constant 0 : i32
    %c0_i32_1 = arith.constant 0 : i32
    return %c0_i32, %c0_i32_0 : i32, i32
  }
  func.func @transform_2(%arg0: i32) -> (i32, i32) {
    %c0_i32 = arith.constant 0 : i32
    %c0_i32_0 = arith.constant 0 : i32
    %c0_i32_1 = arith.constant 0 : i32
    return %c0_i32, %c0_i32_0 : i32, i32
  }
  func.func @transform_3(%arg0: i32) -> (i32, i32) {
    %c0_i32 = arith.constant 0 : i32
    %c0_i32_0 = arith.constant 0 : i32
    %c0_i32_1 = arith.constant 0 : i32
    return %c0_i32, %c0_i32_0 : i32, i32
  }
  func.func @transform_4(%arg0: i32) -> (i32, i32) {
    %c0_i32 = arith.constant 0 : i32
    %c0_i32_0 = arith.constant 0 : i32
    %c0_i32_1 = arith.constant 0 : i32
    return %c0_i32, %c0_i32_0 : i32, i32
  }
  func.func @transform_5(%arg0: i32) -> (i32, i32) {
    %c0_i32 = arith.constant 0 : i32
    %c0_i32_0 = arith.constant 0 : i32
    %c0_i32_1 = arith.constant 0 : i32
    return %c0_i32, %c0_i32_0 : i32, i32
  }
  func.func @transform_6(%arg0: i32) -> (i32, i32) {
    %c0_i32 = arith.constant 0 : i32
    %c0_i32_0 = arith.constant 0 : i32
    %c0_i32_1 = arith.constant 0 : i32
    return %c0_i32, %c0_i32_0 : i32, i32
  }
  func.func @transform_7(%arg0: i32) -> (i32, i32) {
    %c0_i32 = arith.constant 0 : i32
    %c0_i32_0 = arith.constant 0 : i32
    return %arg0, %c0_i32 : i32, i32
  }
}

</mosaic_0001>

<llo_original>
// kernel: net_forward.4
$region0: #{net_forward.4}
  #allocation0 [shape = 'u32[]', space=smem, size = 0x4, offset = 0x4, fixed_abs, tag = 'smem constant byte address 0x4 - core index']
  #allocation1 [shape = 'u32[72,128]{1,0:T(1,128)}', space=vmem, size = 0x9000, scoped, tag = 'internal scratch']
  %s0 = inlined_call_operand.vmem [shape: f32[2,4,6,6,10], index: 0, kind: input, shape index: {}]
  %s1 = inlined_call_operand.vmem [shape: f32[250,20], index: 1, kind: input, shape index: {}]
  %s2 = inlined_call_operand.vmem [shape: f32[1,20], index: 2, kind: input, shape index: {}]
  %s3 = inlined_call_operand.vmem [shape: f32[2,16,20], index: 3, kind: output, shape index: {}]
  %s4 = sld [smem:[#allocation0]]
  $region22: #{net_forward.4} parent=0
    _
  %s6 = ssub.s32 1, %s4
  %s7 = scalar_select 0, %s6, %s4
  // Predicated region
  $region2: #{net_forward.4} parent=0 // pred_check
    _
  $region3: #{net_forward.4} parent=0 // pred_check_branch
    %9 = sbr.rel (0) target = $region5
  $region4: #{net_forward.4} parent=0 // pred_region
    _
  $region5: #{net_forward.4} parent=0 // pred_fallthru
    _
  // Predicated region
  $region6: #{net_forward.4} parent=0 // pred_check
    _
  $region7: #{net_forward.4} parent=0 // pred_check_branch
    %11 = sbr.rel (0) target = $region9
  $region8: #{net_forward.4} parent=0 // pred_region
    _
  $region9: #{net_forward.4} parent=0 // pred_fallthru
    _
  // Predicated region
  $region10: #{net_forward.4} parent=0 // pred_check
    _
  $region11: #{net_forward.4} parent=0 // pred_check_branch
    %13 = sbr.rel (0) target = $region13
  $region12: #{net_forward.4} parent=0 // pred_region
    _
  $region13: #{net_forward.4} parent=0 // pred_fallthru
    _
  %v14 = vld [vmem:[%s1] sm:$0xff]
  %v15 = vld [vmem:[%s1 + $0x8] sm:$0xff]
  %v16 = vld [vmem:[%s1 + $0x10] sm:$0xff]
  %v17 = vld [vmem:[%s1 + $0x18] sm:$0xff]
  %v18 = vld [vmem:[%s1 + $0x20] sm:$0xff]
  %v19 = vld [vmem:[%s1 + $0x28] sm:$0xff]
  %v20 = vld [vmem:[%s1 + $0x30] sm:$0xff]
  %v21 = vld [vmem:[%s1 + $0x38] sm:$0xff]
  %v22 = vld [vmem:[%s1 + $0x40] sm:$0xff]
  %v23 = vld [vmem:[%s1 + $0x48] sm:$0xff]
  %v24 = vld [vmem:[%s1 + $0x50] sm:$0xff]
  %v25 = vld [vmem:[%s1 + $0x58] sm:$0xff]
  %v26 = vld [vmem:[%s1 + $0x60] sm:$0xff]
  %v27 = vld [vmem:[%s1 + $0x68] sm:$0xff]
  %v28 = vld [vmem:[%s1 + $0x70] sm:$0xff]
  %v29 = vld [vmem:[%s1 + $0x78] sm:$0xff]
  %v30 = vld [vmem:[%s1 + $0x80] sm:$0xff]
  %v31 = vld [vmem:[%s1 + $0x88] sm:$0xff]
  %v32 = vld [vmem:[%s1 + $0x90] sm:$0xff]
  %v33 = vld [vmem:[%s1 + $0x98] sm:$0xff]
  %v34 = vld [vmem:[%s1 + $0xa0] sm:$0xff]
  %v35 = vld [vmem:[%s1 + $0xa8] sm:$0xff]
  %v36 = vld [vmem:[%s1 + $0xb0] sm:$0xff]
  %v37 = vld [vmem:[%s1 + $0xb8] sm:$0xff]
  %v38 = vld [vmem:[%s1 + $0xc0] sm:$0xff]
  %v39 = vld [vmem:[%s1 + $0xc8] sm:$0xff]
  %v40 = vld [vmem:[%s1 + $0xd0] sm:$0xff]
  %v41 = vld [vmem:[%s1 + $0xd8] sm:$0xff]
  %v42 = vld [vmem:[%s1 + $0xe0] sm:$0xff]
  %v43 = vld [vmem:[%s1 + $0xe8] sm:$0xff]
  %v44 = vld [vmem:[%s1 + $0xf0] sm:$0xff]
  %v45 = vld [vmem:[%s1 + $0xf8] sm:$0x3]
  %v46 = vld [vmem:[%s2] sm:$0x1]
  %v47 = vld [vmem:[%s0] sm:$0xf]
  %v48 = vld [vmem:[%s0 + $0x8] sm:$0xf]
  %v49 = vld [vmem:[%s0 + $0x10] sm:$0xf]
  %v50 = vld [vmem:[%s0 + $0x18] sm:$0xf]
  %v51 = vld [vmem:[%s0 + $0x20] sm:$0xf]
  %v52 = vld [vmem:[%s0 + $0x28] sm:$0xf]
  %s53 = scalar_lea.vmem %s0, 48
  %v54 = vld [vmem:[%s53] sm:$0xf]
  %v55 = vld [vmem:[%s53 + $0x8] sm:$0xf]
  %v56 = vld [vmem:[%s53 + $0x10] sm:$0xf]
  %v57 = vld [vmem:[%s53 + $0x18] sm:$0xf]
  %v58 = vld [vmem:[%s53 + $0x20] sm:$0xf]
  %v59 = vld [vmem:[%s53 + $0x28] sm:$0xf]
  %v60 = vld [vmem:[%s0 + $0x1] sm:$0xf]
  %v61 = vld [vmem:[%s0 + $0x9] sm:$0xf]
  %v62 = vld [vmem:[%s0 + $0x11] sm:$0xf]
  %v63 = vld [vmem:[%s0 + $0x19] sm:$0xf]
  %v64 = vld [vmem:[%s0 + $0x21] sm:$0xf]
  %v65 = vld [vmem:[%s0 + $0x29] sm:$0xf]
  %v66 = vld [vmem:[%s53 + $0x1] sm:$0xf]
  %v67 = vld [vmem:[%s53 + $0x9] sm:$0xf]
  %v68 = vld [vmem:[%s53 + $0x11] sm:$0xf]
  %v69 = vld [vmem:[%s53 + $0x19] sm:$0xf]
  %v70 = vld [vmem:[%s53 + $0x21] sm:$0xf]
  %v71 = vld [vmem:[%s53 + $0x29] sm:$0xf]
  %v72 = vld [vmem:[%s0 + $0x2] sm:$0xf]
  %v73 = vld [vmem:[%s0 + $0xa] sm:$0xf]
  %v74 = vld [vmem:[%s0 + $0x12] sm:$0xf]
  %v75 = vld [vmem:[%s0 + $0x1a] sm:$0xf]
  %v76 = vld [vmem:[%s0 + $0x22] sm:$0xf]
  %v77 = vld [vmem:[%s0 + $0x2a] sm:$0xf]
  %84 = vrot.lane.b32.xlu0 %v54, 10
  %v85 = vpop.permute.xlu0 %84
  %86 = vrot.lane.b32.xlu0 %v55, 10
  %v87 = vpop.permute.xlu0 %86
  %88 = vrot.lane.b32.xlu0 %v56, 10
  %v89 = vpop.permute.xlu0 %88
  %90 = vrot.lane.b32.xlu0 %v57, 10
  %v91 = vpop.permute.xlu0 %90
  %92 = vrot.lane.b32.xlu0 %v58, 10
  %v93 = vpop.permute.xlu0 %92
  %94 = vrot.lane.b32.xlu0 %v59, 10
  %v95 = vpop.permute.xlu0 %94
  %108 = vrot.lane.b32.xlu0 %v60, 20
  %v109 = vpop.permute.xlu0 %108
  %110 = vrot.lane.b32.xlu0 %v61, 20
  %v111 = vpop.permute.xlu0 %110
  %112 = vrot.lane.b32.xlu0 %v62, 20
  %v113 = vpop.permute.xlu0 %112
  %114 = vrot.lane.b32.xlu0 %v63, 20
  %v115 = vpop.permute.xlu0 %114
  %116 = vrot.lane.b32.xlu0 %v64, 20
  %v117 = vpop.permute.xlu0 %116
  %118 = vrot.lane.b32.xlu0 %v65, 20
  %v119 = vpop.permute.xlu0 %118
  %132 = vrot.lane.b32.xlu0 %v66, 30
  %v133 = vpop.permute.xlu0 %132
  %134 = vrot.lane.b32.xlu0 %v67, 30
  %v135 = vpop.permute.xlu0 %134
  %136 = vrot.lane.b32.xlu0 %v68, 30
  %v137 = vpop.permute.xlu0 %136
  %138 = vrot.lane.b32.xlu0 %v69, 30
  %v139 = vpop.permute.xlu0 %138
  %140 = vrot.lane.b32.xlu0 %v70, 30
  %v141 = vpop.permute.xlu0 %140
  %142 = vrot.lane.b32.xlu0 %v71, 30
  %v143 = vpop.permute.xlu0 %142
  %156 = vrot.lane.b32.xlu0 %v72, 40
  %v157 = vpop.permute.xlu0 %156
  %158 = vrot.lane.b32.xlu0 %v73, 40
  %v159 = vpop.permute.xlu0 %158
  %160 = vrot.lane.b32.xlu0 %v74, 40
  %v161 = vpop.permute.xlu0 %160
  %162 = vrot.lane.b32.xlu0 %v75, 40
  %v163 = vpop.permute.xlu0 %162
  %164 = vrot.lane.b32.xlu0 %v76, 40
  %v165 = vpop.permute.xlu0 %164
  %166 = vrot.lane.b32.xlu0 %v77, 40
  %v167 = vpop.permute.xlu0 %166
  %vm174 = vcmask 80896
  %v175 = vsel %vm174, %v47, %v85
  %v176 = vsel %vm174, %v48, %v87
  %v177 = vsel %vm174, %v49, %v89
  %v178 = vsel %vm174, %v50, %v91
  %v179 = vsel %vm174, %v51, %v93
  %v180 = vsel %vm174, %v52, %v95
  %vm181 = vcmask 162816
  %v182 = vsel %vm181, %v175, %v109
  %v183 = vsel %vm181, %v176, %v111
  %v184 = vsel %vm181, %v177, %v113
  %v185 = vsel %vm181, %v178, %v115
  %v186 = vsel %vm181, %v179, %v117
  %v187 = vsel %vm181, %v180, %v119
  %vm188 = vcmask 244736
  %v189 = vsel %vm188, %v182, %v133
  %v190 = vsel %vm188, %v183, %v135
  %v191 = vsel %vm188, %v184, %v137
  %v192 = vsel %vm188, %v185, %v139
  %v193 = vsel %vm188, %v186, %v141
  %v194 = vsel %vm188, %v187, %v143
  %vm195 = vcmask 326656
  %v196 = vsel %vm195, %v189, %v157
  %v197 = vsel %vm195, %v190, %v159
  %v198 = vsel %vm195, %v191, %v161
  %v199 = vsel %vm195, %v192, %v163
  %v200 = vsel %vm195, %v193, %v165
  %v201 = vsel %vm195, %v194, %v167
  %s202 = scalar_lea.vmem %s0, 96
  %v203 = vld [vmem:[%s202] sm:$0xf]
  %v204 = vld [vmem:[%s202 + $0x8] sm:$0xf]
  %v205 = vld [vmem:[%s202 + $0x10] sm:$0xf]
  %v206 = vld [vmem:[%s202 + $0x18] sm:$0xf]
  %v207 = vld [vmem:[%s202 + $0x20] sm:$0xf]
  %v208 = vld [vmem:[%s202 + $0x28] sm:$0xf]
  %s209 = scalar_lea.vmem %s0, 144
  %v210 = vld [vmem:[%s209] sm:$0xf]
  %v211 = vld [vmem:[%s209 + $0x8] sm:$0xf]
  %v212 = vld [vmem:[%s209 + $0x10] sm:$0xf]
  %v213 = vld [vmem:[%s209 + $0x18] sm:$0xf]
  %v214 = vld [vmem:[%s209 + $0x20] sm:$0xf]
  %v215 = vld [vmem:[%s209 + $0x28] sm:$0xf]
  %v216 = vld [vmem:[%s202 + $0x1] sm:$0xf]
  %v217 = vld [vmem:[%s202 + $0x9] sm:$0xf]
  %v218 = vld [vmem:[%s202 + $0x11] sm:$0xf]
  %v219 = vld [vmem:[%s202 + $0x19] sm:$0xf]
  %v220 = vld [vmem:[%s202 + $0x21] sm:$0xf]
  %v221 = vld [vmem:[%s202 + $0x29] sm:$0xf]
  %v222 = vld [vmem:[%s209 + $0x1] sm:$0xf]
  %v223 = vld [vmem:[%s209 + $0x9] sm:$0xf]
  %v224 = vld [vmem:[%s209 + $0x11] sm:$0xf]
  %v225 = vld [vmem:[%s209 + $0x19] sm:$0xf]
  %v226 = vld [vmem:[%s209 + $0x21] sm:$0xf]
  %v227 = vld [vmem:[%s209 + $0x29] sm:$0xf]
  %v228 = vld [vmem:[%s202 + $0x2] sm:$0xf]
  %v229 = vld [vmem:[%s202 + $0xa] sm:$0xf]
  %v230 = vld [vmem:[%s202 + $0x12] sm:$0xf]
  %v231 = vld [vmem:[%s202 + $0x1a] sm:$0xf]
  %v232 = vld [vmem:[%s202 + $0x22] sm:$0xf]
  %v233 = vld [vmem:[%s202 + $0x2a] sm:$0xf]
  %240 = vrot.lane.b32.xlu0 %v210, 10
  %v241 = vpop.permute.xlu0 %240
  %242 = vrot.lane.b32.xlu0 %v211, 10
  %v243 = vpop.permute.xlu0 %242
  %244 = vrot.lane.b32.xlu0 %v212, 10
  %v245 = vpop.permute.xlu0 %244
  %246 = vrot.lane.b32.xlu0 %v213, 10
  %v247 = vpop.permute.xlu0 %246
  %248 = vrot.lane.b32.xlu0 %v214, 10
  %v249 = vpop.permute.xlu0 %248
  %250 = vrot.lane.b32.xlu0 %v215, 10
  %v251 = vpop.permute.xlu0 %250
  %264 = vrot.lane.b32.xlu0 %v216, 20
  %v265 = vpop.permute.xlu0 %264
  %266 = vrot.lane.b32.xlu0 %v217, 20
  %v267 = vpop.permute.xlu0 %266
  %268 = vrot.lane.b32.xlu0 %v218, 20
  %v269 = vpop.permute.xlu0 %268
  %270 = vrot.lane.b32.xlu0 %v219, 20
  %v271 = vpop.permute.xlu0 %270
  %272 = vrot.lane.b32.xlu0 %v220, 20
  %v273 = vpop.permute.xlu0 %272
  %274 = vrot.lane.b32.xlu0 %v221, 20
  %v275 = vpop.permute.xlu0 %274
  %288 = vrot.lane.b32.xlu0 %v222, 30
  %v289 = vpop.permute.xlu0 %288
  %290 = vrot.lane.b32.xlu0 %v223, 30
  %v291 = vpop.permute.xlu0 %290
  %292 = vrot.lane.b32.xlu0 %v224, 30
  %v293 = vpop.permute.xlu0 %292
  %294 = vrot.lane.b32.xlu0 %v225, 30
  %v295 = vpop.permute.xlu0 %294
  %296 = vrot.lane.b32.xlu0 %v226, 30
  %v297 = vpop.permute.xlu0 %296
  %298 = vrot.lane.b32.xlu0 %v227, 30
  %v299 = vpop.permute.xlu0 %298
  %312 = vrot.lane.b32.xlu0 %v228, 40
  %v313 = vpop.permute.xlu0 %312
  %314 = vrot.lane.b32.xlu0 %v229, 40
  %v315 = vpop.permute.xlu0 %314
  %316 = vrot.lane.b32.xlu0 %v230, 40
  %v317 = vpop.permute.xlu0 %316
  %318 = vrot.lane.b32.xlu0 %v231, 40
  %v319 = vpop.permute.xlu0 %318
  %320 = vrot.lane.b32.xlu0 %v232, 40
  %v321 = vpop.permute.xlu0 %320
  %322 = vrot.lane.b32.xlu0 %v233, 40
  %v323 = vpop.permute.xlu0 %322
  %v330 = vsel %vm174, %v203, %v241
  %v331 = vsel %vm174, %v204, %v243
  %v332 = vsel %vm174, %v205, %v245
  %v333 = vsel %vm174, %v206, %v247
  %v334 = vsel %vm174, %v207, %v249
  %v335 = vsel %vm174, %v208, %v251
  %v336 = vsel %vm181, %v330, %v265
  %v337 = vsel %vm181, %v331, %v267
  %v338 = vsel %vm181, %v332, %v269
  %v339 = vsel %vm181, %v333, %v271
  %v340 = vsel %vm181, %v334, %v273
  %v341 = vsel %vm181, %v335, %v275
  %v342 = vsel %vm188, %v336, %v289
  %v343 = vsel %vm188, %v337, %v291
  %v344 = vsel %vm188, %v338, %v293
  %v345 = vsel %vm188, %v339, %v295
  %v346 = vsel %vm188, %v340, %v297
  %v347 = vsel %vm188, %v341, %v299
  %v348 = vsel %vm195, %v342, %v313
  %v349 = vsel %vm195, %v343, %v315
  %v350 = vsel %vm195, %v344, %v317
  %v351 = vsel %vm195, %v345, %v319
  %v352 = vsel %vm195, %v346, %v321
  %v353 = vsel %vm195, %v347, %v323
  %358 = vrot.lane.b32.xlu0 %v348, 50
  %v359 = vpop.permute.xlu0 %358
  %360 = vrot.lane.b32.xlu0 %v349, 50
  %v361 = vpop.permute.xlu0 %360
  %362 = vrot.lane.b32.xlu0 %v350, 50
  %v363 = vpop.permute.xlu0 %362
  %364 = vrot.lane.b32.xlu0 %v351, 50
  %v365 = vpop.permute.xlu0 %364
  %374 = vrot.lane.b32.xlu0 %v197, 100
  %v375 = vpop.permute.xlu0 %374
  %376 = vrot.lane.b32.xlu0 %v198, 100
  %v377 = vpop.permute.xlu0 %376
  %378 = vrot.lane.b32.xlu0 %v199, 100
  %v379 = vpop.permute.xlu0 %378
  %380 = vrot.lane.b32.xlu0 %v200, 100
  %v381 = vpop.permute.xlu0 %380
  %387 = vrot.lane.b32.xlu0 %v349, 22
  %v388 = vpop.permute.xlu0 %387
  %389 = vrot.lane.b32.xlu0 %v350, 22
  %v390 = vpop.permute.xlu0 %389
  %391 = vrot.lane.b32.xlu0 %v351, 22
  %v392 = vpop.permute.xlu0 %391
  %393 = vrot.lane.b32.xlu0 %v352, 22
  %v394 = vpop.permute.xlu0 %393
  %400 = vrot.lane.b32.xlu0 %v198, 72
  %v401 = vpop.permute.xlu0 %400
  %402 = vrot.lane.b32.xlu0 %v199, 72
  %v403 = vpop.permute.xlu0 %402
  %404 = vrot.lane.b32.xlu0 %v200, 72
  %v405 = vpop.permute.xlu0 %404
  %406 = vrot.lane.b32.xlu0 %v201, 72
  %v407 = vpop.permute.xlu0 %406
  %vm412 = vcmask 408576
  %v413 = vsel %vm412, %v196, %v359
  %v414 = vsel %vm412, %v197, %v361
  %v415 = vsel %vm412, %v198, %v363
  %v416 = vsel %vm412, %v199, %v365
  %vm417 = vcmask 818176
  %v418 = vsel %vm417, %v413, %v375
  %v419 = vsel %vm417, %v414, %v377
  %v420 = vsel %vm417, %v415, %v379
  %v421 = vsel %vm417, %v416, %v381
  %vm422 = vcmask 179200
  %v423 = vsel %vm422, %v375, %v388
  %v424 = vsel %vm422, %v377, %v390
  %v425 = vsel %vm422, %v379, %v392
  %v426 = vsel %vm422, %v381, %v394
  %vm427 = vcmask 588800
  %v428 = vsel %vm427, %v423, %v401
  %v429 = vsel %vm427, %v424, %v403
  %v430 = vsel %vm427, %v425, %v405
  %v431 = vsel %vm427, %v426, %v407
  %v434 = vrot.slane %v419, 4
  %v435 = vrot.slane %v429, 4
  %v440 = vrot.slane %v421, 4
  %v441 = vrot.slane %v431, 4
  %vm444 = vcmask 1043456
  %v445 = vsel %vm444, %v418, %v434
  %v446 = vsel %vm444, %v428, %v435
  %v447 = vsel %vm444, %v420, %v440
  %v448 = vsel %vm444, %v430, %v441
  %v450 = vperm.slane %v46, 0
  %vm452 = vcmask 998400
  %v454 = vsel %vm452, %v446, 0
  %v457 = vsel %vm452, %v448, 0
  %vm459 = vcmask 1041408
  %v461 = vsel %vm459, %v45, 0
  %463 = vmatpush.msra.mxu0 %v29
  %464 = vmatpush.msra.mxu0 %v28
  %465 = vmatpush.msra.mxu0 %v27
  %466 = vmatpush.msra.mxu0 %v26
  %467 = vmatpush.msra.mxu0 %v25
  %468 = vmatpush.msra.mxu0 %v24
  %469 = vmatpush.msra.mxu0 %v23
  %470 = vmatpush.msra.mxu0 %v22
  %471 = vmatpush.msra.mxu0 %v21
  %472 = vmatpush.msra.mxu0 %v20
  %473 = vmatpush.msra.mxu0 %v19
  %474 = vmatpush.msra.mxu0 %v18
  %475 = vmatpush.msra.mxu0 %v17
  %476 = vmatpush.msra.mxu0 %v16
  %477 = vmatpush.msra.mxu0 %v15
  %478 = vmatpush.msra.mxu0 %v14
  %479 = vmatmul.f32.gmra.mxu0 %v445
  %v480 = vpop.f32.mrf.mxu0
  %v481 = vadd.f32 %v450, %v480
  %482 = vmatmul.f32.gmra.mxu0 %v447
  %v483 = vpop.f32.mrf.mxu0
  %v484 = vadd.f32 %v450, %v483
  %485 = vdwg.mxu0
  %486 = vmatpush.msra.mxu0 %v461
  %487 = vmatpush.msra.mxu0 %v44
  %488 = vmatpush.msra.mxu0 %v43
  %489 = vmatpush.msra.mxu0 %v42
  %490 = vmatpush.msra.mxu0 %v41
  %491 = vmatpush.msra.mxu0 %v40
  %492 = vmatpush.msra.mxu0 %v39
  %493 = vmatpush.msra.mxu0 %v38
  %494 = vmatpush.msra.mxu0 %v37
  %495 = vmatpush.msra.mxu0 %v36
  %496 = vmatpush.msra.mxu0 %v35
  %497 = vmatpush.msra.mxu0 %v34
  %498 = vmatpush.msra.mxu0 %v33
  %499 = vmatpush.msra.mxu0 %v32
  %500 = vmatpush.msra.mxu0 %v31
  %501 = vmatpush.msra.mxu0 %v30
  %502 = vmatmul.f32.gmra.mxu0 %v454
  %v503 = vpop.f32.mrf.mxu0
  %v504 = vadd.f32 %v481, %v503
  %505 = vmatmul.f32.gmra.mxu0 %v457
  %v506 = vpop.f32.mrf.mxu0
  %v507 = vadd.f32 %v484, %v506
  %508 = vdwg.mxu0
  %v509 = vmax.f32 %v504, 0.0
  %v510 = vmax.f32 %v507, 0.0
  %511 = vrot.lane.b32.xlu0 %v197, 50
  %v512 = vpop.permute.xlu0 %511
  %513 = vrot.lane.b32.xlu0 %v198, 50
  %v514 = vpop.permute.xlu0 %513
  %515 = vrot.lane.b32.xlu0 %v199, 50
  %v516 = vpop.permute.xlu0 %515
  %517 = vrot.lane.b32.xlu0 %v200, 50
  %v518 = vpop.permute.xlu0 %517
  %523 = vrot.lane.b32.xlu0 %v349, 100
  %v524 = vpop.permute.xlu0 %523
  %525 = vrot.lane.b32.xlu0 %v350, 100
  %v526 = vpop.permute.xlu0 %525
  %527 = vrot.lane.b32.xlu0 %v351, 100
  %v528 = vpop.permute.xlu0 %527
  %529 = vrot.lane.b32.xlu0 %v352, 100
  %v530 = vpop.permute.xlu0 %529
  %535 = vrot.lane.b32.xlu0 %v198, 22
  %v536 = vpop.permute.xlu0 %535
  %537 = vrot.lane.b32.xlu0 %v199, 22
  %v538 = vpop.permute.xlu0 %537
  %539 = vrot.lane.b32.xlu0 %v200, 22
  %v540 = vpop.permute.xlu0 %539
  %541 = vrot.lane.b32.xlu0 %v201, 22
  %v542 = vpop.permute.xlu0 %541
  %548 = vrot.lane.b32.xlu0 %v350, 72
  %v549 = vpop.permute.xlu0 %548
  %550 = vrot.lane.b32.xlu0 %v351, 72
  %v551 = vpop.permute.xlu0 %550
  %552 = vrot.lane.b32.xlu0 %v352, 72
  %v553 = vpop.permute.xlu0 %552
  %554 = vrot.lane.b32.xlu0 %v353, 72
  %v555 = vpop.permute.xlu0 %554
  %v560 = vsel %vm412, %v348, %v512
  %v561 = vsel %vm412, %v349, %v514
  %v562 = vsel %vm412, %v350, %v516
  %v563 = vsel %vm412, %v351, %v518
  %v564 = vsel %vm417, %v560, %v524
  %v565 = vsel %vm417, %v561, %v526
  %v566 = vsel %vm417, %v562, %v528
  %v567 = vsel %vm417, %v563, %v530
  %v568 = vsel %vm422, %v524, %v536
  %v569 = vsel %vm422, %v526, %v538
  %v570 = vsel %vm422, %v528, %v540
  %v571 = vsel %vm422, %v530, %v542
  %v572 = vsel %vm427, %v568, %v549
  %v573 = vsel %vm427, %v569, %v551
  %v574 = vsel %vm427, %v570, %v553
  %v575 = vsel %vm427, %v571, %v555
  %v578 = vrot.slane %v565, 4
  %v579 = vrot.slane %v573, 4
  %v584 = vrot.slane %v567, 4
  %v585 = vrot.slane %v575, 4
  %v588 = vsel %vm444, %v564, %v578
  %v589 = vsel %vm444, %v572, %v579
  %v590 = vsel %vm444, %v566, %v584
  %v591 = vsel %vm444, %v574, %v585
  %v593 = vsel %vm452, %v589, 0
  %v596 = vsel %vm452, %v591, 0
  %598 = vmatpush.msra.mxu0 %v29
  %599 = vmatpush.msra.mxu0 %v28
  %600 = vmatpush.msra.mxu0 %v27
  %601 = vmatpush.msra.mxu0 %v26
  %602 = vmatpush.msra.mxu0 %v25
  %603 = vmatpush.msra.mxu0 %v24
  %604 = vmatpush.msra.mxu0 %v23
  %605 = vmatpush.msra.mxu0 %v22
  %606 = vmatpush.msra.mxu0 %v21
  %607 = vmatpush.msra.mxu0 %v20
  %608 = vmatpush.msra.mxu0 %v19
  %609 = vmatpush.msra.mxu0 %v18
  %610 = vmatpush.msra.mxu0 %v17
  %611 = vmatpush.msra.mxu0 %v16
  %612 = vmatpush.msra.mxu0 %v15
  %613 = vmatpush.msra.mxu0 %v14
  %614 = vmatmul.f32.gmra.mxu0 %v588
  %v615 = vpop.f32.mrf.mxu0
  %v616 = vadd.f32 %v450, %v615
  %617 = vmatmul.f32.gmra.mxu0 %v590
  %v618 = vpop.f32.mrf.mxu0
  %v619 = vadd.f32 %v450, %v618
  %620 = vdwg.mxu0
  %621 = vmatpush.msra.mxu0 %v461
  %622 = vmatpush.msra.mxu0 %v44
  %623 = vmatpush.msra.mxu0 %v43
  %624 = vmatpush.msra.mxu0 %v42
  %625 = vmatpush.msra.mxu0 %v41
  %626 = vmatpush.msra.mxu0 %v40
  %627 = vmatpush.msra.mxu0 %v39
  %628 = vmatpush.msra.mxu0 %v38
  %629 = vmatpush.msra.mxu0 %v37
  %630 = vmatpush.msra.mxu0 %v36
  %631 = vmatpush.msra.mxu0 %v35
  %632 = vmatpush.msra.mxu0 %v34
  %633 = vmatpush.msra.mxu0 %v33
  %634 = vmatpush.msra.mxu0 %v32
  %635 = vmatpush.msra.mxu0 %v31
  %636 = vmatpush.msra.mxu0 %v30
  %637 = vmatmul.f32.gmra.mxu0 %v593
  %v638 = vpop.f32.mrf.mxu0
  %v639 = vadd.f32 %v616, %v638
  %640 = vmatmul.f32.gmra.mxu0 %v596
  %v641 = vpop.f32.mrf.mxu0
  %v642 = vadd.f32 %v619, %v641
  %643 = vdwg.mxu0
  %v644 = vmax.f32 %v639, 0.0
  %v645 = vmax.f32 %v642, 0.0
  %v646 = vmax.f32 %v509, %v644
  %v647 = vmax.f32 %v510, %v645
  %v648 = vld [vmem:[%s53 + $0x2] sm:$0xf]
  %v649 = vld [vmem:[%s53 + $0xa] sm:$0xf]
  %v650 = vld [vmem:[%s53 + $0x12] sm:$0xf]
  %v651 = vld [vmem:[%s53 + $0x1a] sm:$0xf]
  %v652 = vld [vmem:[%s53 + $0x22] sm:$0xf]
  %v653 = vld [vmem:[%s53 + $0x2a] sm:$0xf]
  %654 = vrot.lane.b32.xlu0 %v60, 10
  %v655 = vpop.permute.xlu0 %654
  %656 = vrot.lane.b32.xlu0 %v61, 10
  %v657 = vpop.permute.xlu0 %656
  %658 = vrot.lane.b32.xlu0 %v62, 10
  %v659 = vpop.permute.xlu0 %658
  %660 = vrot.lane.b32.xlu0 %v63, 10
  %v661 = vpop.permute.xlu0 %660
  %662 = vrot.lane.b32.xlu0 %v64, 10
  %v663 = vpop.permute.xlu0 %662
  %664 = vrot.lane.b32.xlu0 %v65, 10
  %v665 = vpop.permute.xlu0 %664
  %672 = vrot.lane.b32.xlu0 %v66, 20
  %v673 = vpop.permute.xlu0 %672
  %674 = vrot.lane.b32.xlu0 %v67, 20
  %v675 = vpop.permute.xlu0 %674
  %676 = vrot.lane.b32.xlu0 %v68, 20
  %v677 = vpop.permute.xlu0 %676
  %678 = vrot.lane.b32.xlu0 %v69, 20
  %v679 = vpop.permute.xlu0 %678
  %680 = vrot.lane.b32.xlu0 %v70, 20
  %v681 = vpop.permute.xlu0 %680
  %682 = vrot.lane.b32.xlu0 %v71, 20
  %v683 = vpop.permute.xlu0 %682
  %690 = vrot.lane.b32.xlu0 %v72, 30
  %v691 = vpop.permute.xlu0 %690
  %692 = vrot.lane.b32.xlu0 %v73, 30
  %v693 = vpop.permute.xlu0 %692
  %694 = vrot.lane.b32.xlu0 %v74, 30
  %v695 = vpop.permute.xlu0 %694
  %696 = vrot.lane.b32.xlu0 %v75, 30
  %v697 = vpop.permute.xlu0 %696
  %698 = vrot.lane.b32.xlu0 %v76, 30
  %v699 = vpop.permute.xlu0 %698
  %700 = vrot.lane.b32.xlu0 %v77, 30
  %v701 = vpop.permute.xlu0 %700
  %714 = vrot.lane.b32.xlu0 %v648, 40
  %v715 = vpop.permute.xlu0 %714
  %716 = vrot.lane.b32.xlu0 %v649, 40
  %v717 = vpop.permute.xlu0 %716
  %718 = vrot.lane.b32.xlu0 %v650, 40
  %v719 = vpop.permute.xlu0 %718
  %720 = vrot.lane.b32.xlu0 %v651, 40
  %v721 = vpop.permute.xlu0 %720
  %722 = vrot.lane.b32.xlu0 %v652, 40
  %v723 = vpop.permute.xlu0 %722
  %724 = vrot.lane.b32.xlu0 %v653, 40
  %v725 = vpop.permute.xlu0 %724
  %v732 = vsel %vm174, %v54, %v655
  %v733 = vsel %vm174, %v55, %v657
  %v734 = vsel %vm174, %v56, %v659
  %v735 = vsel %vm174, %v57, %v661
  %v736 = vsel %vm174, %v58, %v663
  %v737 = vsel %vm174, %v59, %v665
  %v738 = vsel %vm181, %v732, %v673
  %v739 = vsel %vm181, %v733, %v675
  %v740 = vsel %vm181, %v734, %v677
  %v741 = vsel %vm181, %v735, %v679
  %v742 = vsel %vm181, %v736, %v681
  %v743 = vsel %vm181, %v737, %v683
  %v744 = vsel %vm188, %v738, %v691
  %v745 = vsel %vm188, %v739, %v693
  %v746 = vsel %vm188, %v740, %v695
  %v747 = vsel %vm188, %v741, %v697
  %v748 = vsel %vm188, %v742, %v699
  %v749 = vsel %vm188, %v743, %v701
  %v750 = vsel %vm195, %v744, %v715
  %v751 = vsel %vm195, %v745, %v717
  %v752 = vsel %vm195, %v746, %v719
  %v753 = vsel %vm195, %v747, %v721
  %v754 = vsel %vm195, %v748, %v723
  %v755 = vsel %vm195, %v749, %v725
  %v756 = vld [vmem:[%s209 + $0x2] sm:$0xf]
  %v757 = vld [vmem:[%s209 + $0xa] sm:$0xf]
  %v758 = vld [vmem:[%s209 + $0x12] sm:$0xf]
  %v759 = vld [vmem:[%s209 + $0x1a] sm:$0xf]
  %v760 = vld [vmem:[%s209 + $0x22] sm:$0xf]
  %v761 = vld [vmem:[%s209 + $0x2a] sm:$0xf]
  %762 = vrot.lane.b32.xlu0 %v216, 10
  %v763 = vpop.permute.xlu0 %762
  %764 = vrot.lane.b32.xlu0 %v217, 10
  %v765 = vpop.permute.xlu0 %764
  %766 = vrot.lane.b32.xlu0 %v218, 10
  %v767 = vpop.permute.xlu0 %766
  %768 = vrot.lane.b32.xlu0 %v219, 10
  %v769 = vpop.permute.xlu0 %768
  %770 = vrot.lane.b32.xlu0 %v220, 10
  %v771 = vpop.permute.xlu0 %770
  %772 = vrot.lane.b32.xlu0 %v221, 10
  %v773 = vpop.permute.xlu0 %772
  %780 = vrot.lane.b32.xlu0 %v222, 20
  %v781 = vpop.permute.xlu0 %780
  %782 = vrot.lane.b32.xlu0 %v223, 20
  %v783 = vpop.permute.xlu0 %782
  %784 = vrot.lane.b32.xlu0 %v224, 20
  %v785 = vpop.permute.xlu0 %784
  %786 = vrot.lane.b32.xlu0 %v225, 20
  %v787 = vpop.permute.xlu0 %786
  %788 = vrot.lane.b32.xlu0 %v226, 20
  %v789 = vpop.permute.xlu0 %788
  %790 = vrot.lane.b32.xlu0 %v227, 20
  %v791 = vpop.permute.xlu0 %790
  %798 = vrot.lane.b32.xlu0 %v228, 30
  %v799 = vpop.permute.xlu0 %798
  %800 = vrot.lane.b32.xlu0 %v229, 30
  %v801 = vpop.permute.xlu0 %800
  %802 = vrot.lane.b32.xlu0 %v230, 30
  %v803 = vpop.permute.xlu0 %802
  %804 = vrot.lane.b32.xlu0 %v231, 30
  %v805 = vpop.permute.xlu0 %804
  %806 = vrot.lane.b32.xlu0 %v232, 30
  %v807 = vpop.permute.xlu0 %806
  %808 = vrot.lane.b32.xlu0 %v233, 30
  %v809 = vpop.permute.xlu0 %808
  %822 = vrot.lane.b32.xlu0 %v756, 40
  %v823 = vpop.permute.xlu0 %822
  %824 = vrot.lane.b32.xlu0 %v757, 40
  %v825 = vpop.permute.xlu0 %824
  %826 = vrot.lane.b32.xlu0 %v758, 40
  %v827 = vpop.permute.xlu0 %826
  %828 = vrot.lane.b32.xlu0 %v759, 40
  %v829 = vpop.permute.xlu0 %828
  %830 = vrot.lane.b32.xlu0 %v760, 40
  %v831 = vpop.permute.xlu0 %830
  %832 = vrot.lane.b32.xlu0 %v761, 40
  %v833 = vpop.permute.xlu0 %832
  %v840 = vsel %vm174, %v210, %v763
  %v841 = vsel %vm174, %v211, %v765
  %v842 = vsel %vm174, %v212, %v767
  %v843 = vsel %vm174, %v213, %v769
  %v844 = vsel %vm174, %v214, %v771
  %v845 = vsel %vm174, %v215, %v773
  %v846 = vsel %vm181, %v840, %v781
  %v847 = vsel %vm181, %v841, %v783
  %v848 = vsel %vm181, %v842, %v785
  %v849 = vsel %vm181, %v843, %v787
  %v850 = vsel %vm181, %v844, %v789
  %v851 = vsel %vm181, %v845, %v791
  %v852 = vsel %vm188, %v846, %v799
  %v853 = vsel %vm188, %v847, %v801
  %v854 = vsel %vm188, %v848, %v803
  %v855 = vsel %vm188, %v849, %v805
  %v856 = vsel %vm188, %v850, %v807
  %v857 = vsel %vm188, %v851, %v809
  %v858 = vsel %vm195, %v852, %v823
  %v859 = vsel %vm195, %v853, %v825
  %v860 = vsel %vm195, %v854, %v827
  %v861 = vsel %vm195, %v855, %v829
  %v862 = vsel %vm195, %v856, %v831
  %v863 = vsel %vm195, %v857, %v833
  %868 = vrot.lane.b32.xlu0 %v858, 50
  %v869 = vpop.permute.xlu0 %868
  %870 = vrot.lane.b32.xlu0 %v859, 50
  %v871 = vpop.permute.xlu0 %870
  %872 = vrot.lane.b32.xlu0 %v860, 50
  %v873 = vpop.permute.xlu0 %872
  %874 = vrot.lane.b32.xlu0 %v861, 50
  %v875 = vpop.permute.xlu0 %874
  %884 = vrot.lane.b32.xlu0 %v751, 100
  %v885 = vpop.permute.xlu0 %884
  %886 = vrot.lane.b32.xlu0 %v752, 100
  %v887 = vpop.permute.xlu0 %886
  %888 = vrot.lane.b32.xlu0 %v753, 100
  %v889 = vpop.permute.xlu0 %888
  %890 = vrot.lane.b32.xlu0 %v754, 100
  %v891 = vpop.permute.xlu0 %890
  %897 = vrot.lane.b32.xlu0 %v859, 22
  %v898 = vpop.permute.xlu0 %897
  %899 = vrot.lane.b32.xlu0 %v860, 22
  %v900 = vpop.permute.xlu0 %899
  %901 = vrot.lane.b32.xlu0 %v861, 22
  %v902 = vpop.permute.xlu0 %901
  %903 = vrot.lane.b32.xlu0 %v862, 22
  %v904 = vpop.permute.xlu0 %903
  %910 = vrot.lane.b32.xlu0 %v752, 72
  %v911 = vpop.permute.xlu0 %910
  %912 = vrot.lane.b32.xlu0 %v753, 72
  %v913 = vpop.permute.xlu0 %912
  %914 = vrot.lane.b32.xlu0 %v754, 72
  %v915 = vpop.permute.xlu0 %914
  %916 = vrot.lane.b32.xlu0 %v755, 72
  %v917 = vpop.permute.xlu0 %916
  %v922 = vsel %vm412, %v750, %v869
  %v923 = vsel %vm412, %v751, %v871
  %v924 = vsel %vm412, %v752, %v873
  %v925 = vsel %vm412, %v753, %v875
  %v926 = vsel %vm417, %v922, %v885
  %v927 = vsel %vm417, %v923, %v887
  %v928 = vsel %vm417, %v924, %v889
  %v929 = vsel %vm417, %v925, %v891
  %v930 = vsel %vm422, %v885, %v898
  %v931 = vsel %vm422, %v887, %v900
  %v932 = vsel %vm422, %v889, %v902
  %v933 = vsel %vm422, %v891, %v904
  %v934 = vsel %vm427, %v930, %v911
  %v935 = vsel %vm427, %v931, %v913
  %v936 = vsel %vm427, %v932, %v915
  %v937 = vsel %vm427, %v933, %v917
  %v940 = vrot.slane %v927, 4
  %v941 = vrot.slane %v935, 4
  %v946 = vrot.slane %v929, 4
  %v947 = vrot.slane %v937, 4
  %v950 = vsel %vm444, %v926, %v940
  %v951 = vsel %vm444, %v934, %v941
  %v952 = vsel %vm444, %v928, %v946
  %v953 = vsel %vm444, %v936, %v947
  %v955 = vsel %vm452, %v951, 0
  %v958 = vsel %vm452, %v953, 0
  %960 = vmatpush.msra.mxu0 %v29
  %961 = vmatpush.msra.mxu0 %v28
  %962 = vmatpush.msra.mxu0 %v27
  %963 = vmatpush.msra.mxu0 %v26
  %964 = vmatpush.msra.mxu0 %v25
  %965 = vmatpush.msra.mxu0 %v24
  %966 = vmatpush.msra.mxu0 %v23
  %967 = vmatpush.msra.mxu0 %v22
  %968 = vmatpush.msra.mxu0 %v21
  %969 = vmatpush.msra.mxu0 %v20
  %970 = vmatpush.msra.mxu0 %v19
  %971 = vmatpush.msra.mxu0 %v18
  %972 = vmatpush.msra.mxu0 %v17
  %973 = vmatpush.msra.mxu0 %v16
  %974 = vmatpush.msra.mxu0 %v15
  %975 = vmatpush.msra.mxu0 %v14
  %976 = vmatmul.f32.gmra.mxu0 %v950
  %v977 = vpop.f32.mrf.mxu0
  %v978 = vadd.f32 %v450, %v977
  %979 = vmatmul.f32.gmra.mxu0 %v952
  %v980 = vpop.f32.mrf.mxu0
  %v981 = vadd.f32 %v450, %v980
  %982 = vdwg.mxu0
  %983 = vmatpush.msra.mxu0 %v461
  %984 = vmatpush.msra.mxu0 %v44
  %985 = vmatpush.msra.mxu0 %v43
  %986 = vmatpush.msra.mxu0 %v42
  %987 = vmatpush.msra.mxu0 %v41
  %988 = vmatpush.msra.mxu0 %v40
  %989 = vmatpush.msra.mxu0 %v39
  %990 = vmatpush.msra.mxu0 %v38
  %991 = vmatpush.msra.mxu0 %v37
  %992 = vmatpush.msra.mxu0 %v36
  %993 = vmatpush.msra.mxu0 %v35
  %994 = vmatpush.msra.mxu0 %v34
  %995 = vmatpush.msra.mxu0 %v33
  %996 = vmatpush.msra.mxu0 %v32
  %997 = vmatpush.msra.mxu0 %v31
  %998 = vmatpush.msra.mxu0 %v30
  %999 = vmatmul.f32.gmra.mxu0 %v955
  %v1000 = vpop.f32.mrf.mxu0
  %v1001 = vadd.f32 %v978, %v1000
  %1002 = vmatmul.f32.gmra.mxu0 %v958
  %v1003 = vpop.f32.mrf.mxu0
  %v1004 = vadd.f32 %v981, %v1003
  %1005 = vdwg.mxu0
  %v1006 = vmax.f32 %v1001, 0.0
  %v1007 = vmax.f32 %v1004, 0.0
  %v1008 = vmax.f32 %v646, %v1006
  %v1009 = vmax.f32 %v647, %v1007
  %1010 = vrot.lane.b32.xlu0 %v751, 50
  %v1011 = vpop.permute.xlu0 %1010
  %1012 = vrot.lane.b32.xlu0 %v752, 50
  %v1013 = vpop.permute.xlu0 %1012
  %1014 = vrot.lane.b32.xlu0 %v753, 50
  %v1015 = vpop.permute.xlu0 %1014
  %1016 = vrot.lane.b32.xlu0 %v754, 50
  %v1017 = vpop.permute.xlu0 %1016
  %1022 = vrot.lane.b32.xlu0 %v859, 100
  %v1023 = vpop.permute.xlu0 %1022
  %1024 = vrot.lane.b32.xlu0 %v860, 100
  %v1025 = vpop.permute.xlu0 %1024
  %1026 = vrot.lane.b32.xlu0 %v861, 100
  %v1027 = vpop.permute.xlu0 %1026
  %1028 = vrot.lane.b32.xlu0 %v862, 100
  %v1029 = vpop.permute.xlu0 %1028
  %1034 = vrot.lane.b32.xlu0 %v752, 22
  %v1035 = vpop.permute.xlu0 %1034
  %1036 = vrot.lane.b32.xlu0 %v753, 22
  %v1037 = vpop.permute.xlu0 %1036
  %1038 = vrot.lane.b32.xlu0 %v754, 22
  %v1039 = vpop.permute.xlu0 %1038
  %1040 = vrot.lane.b32.xlu0 %v755, 22
  %v1041 = vpop.permute.xlu0 %1040
  %1047 = vrot.lane.b32.xlu0 %v860, 72
  %v1048 = vpop.permute.xlu0 %1047
  %1049 = vrot.lane.b32.xlu0 %v861, 72
  %v1050 = vpop.permute.xlu0 %1049
  %1051 = vrot.lane.b32.xlu0 %v862, 72
  %v1052 = vpop.permute.xlu0 %1051
  %1053 = vrot.lane.b32.xlu0 %v863, 72
  %v1054 = vpop.permute.xlu0 %1053
  %v1059 = vsel %vm412, %v858, %v1011
  %v1060 = vsel %vm412, %v859, %v1013
  %v1061 = vsel %vm412, %v860, %v1015
  %v1062 = vsel %vm412, %v861, %v1017
  %v1063 = vsel %vm417, %v1059, %v1023
  %v1064 = vsel %vm417, %v1060, %v1025
  %v1065 = vsel %vm417, %v1061, %v1027
  %v1066 = vsel %vm417, %v1062, %v1029
  %v1067 = vsel %vm422, %v1023, %v1035
  %v1068 = vsel %vm422, %v1025, %v1037
  %v1069 = vsel %vm422, %v1027, %v1039
  %v1070 = vsel %vm422, %v1029, %v1041
  %v1071 = vsel %vm427, %v1067, %v1048
  %v1072 = vsel %vm427, %v1068, %v1050
  %v1073 = vsel %vm427, %v1069, %v1052
  %v1074 = vsel %vm427, %v1070, %v1054
  %v1077 = vrot.slane %v1064, 4
  %v1078 = vrot.slane %v1072, 4
  %v1083 = vrot.slane %v1066, 4
  %v1084 = vrot.slane %v1074, 4
  %v1087 = vsel %vm444, %v1063, %v1077
  %v1088 = vsel %vm444, %v1071, %v1078
  %v1089 = vsel %vm444, %v1065, %v1083
  %v1090 = vsel %vm444, %v1073, %v1084
  %v1092 = vsel %vm452, %v1088, 0
  %v1095 = vsel %vm452, %v1090, 0
  %1097 = vmatpush.msra.mxu0 %v29
  %1098 = vmatpush.msra.mxu0 %v28
  %1099 = vmatpush.msra.mxu0 %v27
  %1100 = vmatpush.msra.mxu0 %v26
  %1101 = vmatpush.msra.mxu0 %v25
  %1102 = vmatpush.msra.mxu0 %v24
  %1103 = vmatpush.msra.mxu0 %v23
  %1104 = vmatpush.msra.mxu0 %v22
  %1105 = vmatpush.msra.mxu0 %v21
  %1106 = vmatpush.msra.mxu0 %v20
  %1107 = vmatpush.msra.mxu0 %v19
  %1108 = vmatpush.msra.mxu0 %v18
  %1109 = vmatpush.msra.mxu0 %v17
  %1110 = vmatpush.msra.mxu0 %v16
  %1111 = vmatpush.msra.mxu0 %v15
  %1112 = vmatpush.msra.mxu0 %v14
  %1113 = vmatmul.f32.gmra.mxu0 %v1087
  %v1114 = vpop.f32.mrf.mxu0
  %v1115 = vadd.f32 %v450, %v1114
  %1116 = vmatmul.f32.gmra.mxu0 %v1089
  %v1117 = vpop.f32.mrf.mxu0
  %v1118 = vadd.f32 %v450, %v1117
  %1119 = vdwg.mxu0
  %1120 = vmatpush.msra.mxu0 %v461
  %1121 = vmatpush.msra.mxu0 %v44
  %1122 = vmatpush.msra.mxu0 %v43
  %1123 = vmatpush.msra.mxu0 %v42
  %1124 = vmatpush.msra.mxu0 %v41
  %1125 = vmatpush.msra.mxu0 %v40
  %1126 = vmatpush.msra.mxu0 %v39
  %1127 = vmatpush.msra.mxu0 %v38
  %1128 = vmatpush.msra.mxu0 %v37
  %1129 = vmatpush.msra.mxu0 %v36
  %1130 = vmatpush.msra.mxu0 %v35
  %1131 = vmatpush.msra.mxu0 %v34
  %1132 = vmatpush.msra.mxu0 %v33
  %1133 = vmatpush.msra.mxu0 %v32
  %1134 = vmatpush.msra.mxu0 %v31
  %1135 = vmatpush.msra.mxu0 %v30
  %1136 = vmatmul.f32.gmra.mxu0 %v1092
  %v1137 = vpop.f32.mrf.mxu0
  %v1138 = vadd.f32 %v1115, %v1137
  %1139 = vmatmul.f32.gmra.mxu0 %v1095
  %v1140 = vpop.f32.mrf.mxu0
  %v1141 = vadd.f32 %v1118, %v1140
  %1142 = vdwg.mxu0
  %v1143 = vmax.f32 %v1138, 0.0
  %v1144 = vmax.f32 %v1141, 0.0
  %v1145 = vmax.f32 %v1008, %v1143
  %v1146 = vmax.f32 %v1009, %v1144
  %1147 = vst.msk [vmem:[%s3] sm:$0xff] %vm181, %v1145
  %1148 = vst.msk [vmem:[%s3 + $0x8] sm:$0xff] %vm181, %v1146
  %s1149 = scalar_lea.vmem %s0, 192
  %v1150 = vld [vmem:[%s1149] sm:$0xf]
  %v1151 = vld [vmem:[%s1149 + $0x8] sm:$0xf]
  %v1152 = vld [vmem:[%s1149 + $0x10] sm:$0xf]
  %v1153 = vld [vmem:[%s1149 + $0x18] sm:$0xf]
  %v1154 = vld [vmem:[%s1149 + $0x20] sm:$0xf]
  %v1155 = vld [vmem:[%s1149 + $0x28] sm:$0xf]
  %s1156 = scalar_lea.vmem %s0, 240
  %v1157 = vld [vmem:[%s1156] sm:$0xf]
  %v1158 = vld [vmem:[%s1156 + $0x8] sm:$0xf]
  %v1159 = vld [vmem:[%s1156 + $0x10] sm:$0xf]
  %v1160 = vld [vmem:[%s1156 + $0x18] sm:$0xf]
  %v1161 = vld [vmem:[%s1156 + $0x20] sm:$0xf]
  %v1162 = vld [vmem:[%s1156 + $0x28] sm:$0xf]
  %v1163 = vld [vmem:[%s1149 + $0x1] sm:$0xf]
  %v1164 = vld [vmem:[%s1149 + $0x9] sm:$0xf]
  %v1165 = vld [vmem:[%s1149 + $0x11] sm:$0xf]
  %v1166 = vld [vmem:[%s1149 + $0x19] sm:$0xf]
  %v1167 = vld [vmem:[%s1149 + $0x21] sm:$0xf]
  %v1168 = vld [vmem:[%s1149 + $0x29] sm:$0xf]
  %v1169 = vld [vmem:[%s1156 + $0x1] sm:$0xf]
  %v1170 = vld [vmem:[%s1156 + $0x9] sm:$0xf]
  %v1171 = vld [vmem:[%s1156 + $0x11] sm:$0xf]
  %v1172 = vld [vmem:[%s1156 + $0x19] sm:$0xf]
  %v1173 = vld [vmem:[%s1156 + $0x21] sm:$0xf]
  %v1174 = vld [vmem:[%s1156 + $0x29] sm:$0xf]
  %v1175 = vld [vmem:[%s1149 + $0x2] sm:$0xf]
  %v1176 = vld [vmem:[%s1149 + $0xa] sm:$0xf]
  %v1177 = vld [vmem:[%s1149 + $0x12] sm:$0xf]
  %v1178 = vld [vmem:[%s1149 + $0x1a] sm:$0xf]
  %v1179 = vld [vmem:[%s1149 + $0x22] sm:$0xf]
  %v1180 = vld [vmem:[%s1149 + $0x2a] sm:$0xf]
  %1187 = vrot.lane.b32.xlu0 %v1157, 10
  %v1188 = vpop.permute.xlu0 %1187
  %1189 = vrot.lane.b32.xlu0 %v1158, 10
  %v1190 = vpop.permute.xlu0 %1189
  %1191 = vrot.lane.b32.xlu0 %v1159, 10
  %v1192 = vpop.permute.xlu0 %1191
  %1193 = vrot.lane.b32.xlu0 %v1160, 10
  %v1194 = vpop.permute.xlu0 %1193
  %1195 = vrot.lane.b32.xlu0 %v1161, 10
  %v1196 = vpop.permute.xlu0 %1195
  %1197 = vrot.lane.b32.xlu0 %v1162, 10
  %v1198 = vpop.permute.xlu0 %1197
  %1211 = vrot.lane.b32.xlu0 %v1163, 20
  %v1212 = vpop.permute.xlu0 %1211
  %1213 = vrot.lane.b32.xlu0 %v1164, 20
  %v1214 = vpop.permute.xlu0 %1213
  %1215 = vrot.lane.b32.xlu0 %v1165, 20
  %v1216 = vpop.permute.xlu0 %1215
  %1217 = vrot.lane.b32.xlu0 %v1166, 20
  %v1218 = vpop.permute.xlu0 %1217
  %1219 = vrot.lane.b32.xlu0 %v1167, 20
  %v1220 = vpop.permute.xlu0 %1219
  %1221 = vrot.lane.b32.xlu0 %v1168, 20
  %v1222 = vpop.permute.xlu0 %1221
  %1235 = vrot.lane.b32.xlu0 %v1169, 30
  %v1236 = vpop.permute.xlu0 %1235
  %1237 = vrot.lane.b32.xlu0 %v1170, 30
  %v1238 = vpop.permute.xlu0 %1237
  %1239 = vrot.lane.b32.xlu0 %v1171, 30
  %v1240 = vpop.permute.xlu0 %1239
  %1241 = vrot.lane.b32.xlu0 %v1172, 30
  %v1242 = vpop.permute.xlu0 %1241
  %1243 = vrot.lane.b32.xlu0 %v1173, 30
  %v1244 = vpop.permute.xlu0 %1243
  %1245 = vrot.lane.b32.xlu0 %v1174, 30
  %v1246 = vpop.permute.xlu0 %1245
  %1259 = vrot.lane.b32.xlu0 %v1175, 40
  %v1260 = vpop.permute.xlu0 %1259
  %1261 = vrot.lane.b32.xlu0 %v1176, 40
  %v1262 = vpop.permute.xlu0 %1261
  %1263 = vrot.lane.b32.xlu0 %v1177, 40
  %v1264 = vpop.permute.xlu0 %1263
  %1265 = vrot.lane.b32.xlu0 %v1178, 40
  %v1266 = vpop.permute.xlu0 %1265
  %1267 = vrot.lane.b32.xlu0 %v1179, 40
  %v1268 = vpop.permute.xlu0 %1267
  %1269 = vrot.lane.b32.xlu0 %v1180, 40
  %v1270 = vpop.permute.xlu0 %1269
  %v1277 = vsel %vm174, %v1150, %v1188
  %v1278 = vsel %vm174, %v1151, %v1190
  %v1279 = vsel %vm174, %v1152, %v1192
  %v1280 = vsel %vm174, %v1153, %v1194
  %v1281 = vsel %vm174, %v1154, %v1196
  %v1282 = vsel %vm174, %v1155, %v1198
  %v1283 = vsel %vm181, %v1277, %v1212
  %v1284 = vsel %vm181, %v1278, %v1214
  %v1285 = vsel %vm181, %v1279, %v1216
  %v1286 = vsel %vm181, %v1280, %v1218
  %v1287 = vsel %vm181, %v1281, %v1220
  %v1288 = vsel %vm181, %v1282, %v1222
  %v1289 = vsel %vm188, %v1283, %v1236
  %v1290 = vsel %vm188, %v1284, %v1238
  %v1291 = vsel %vm188, %v1285, %v1240
  %v1292 = vsel %vm188, %v1286, %v1242
  %v1293 = vsel %vm188, %v1287, %v1244
  %v1294 = vsel %vm188, %v1288, %v1246
  %v1295 = vsel %vm195, %v1289, %v1260
  %v1296 = vsel %vm195, %v1290, %v1262
  %v1297 = vsel %vm195, %v1291, %v1264
  %v1298 = vsel %vm195, %v1292, %v1266
  %v1299 = vsel %vm195, %v1293, %v1268
  %v1300 = vsel %vm195, %v1294, %v1270
  %s1301 = scalar_lea.vmem %s0, 288
  %v1302 = vld [vmem:[%s1301] sm:$0xf]
  %v1303 = vld [vmem:[%s1301 + $0x8] sm:$0xf]
  %v1304 = vld [vmem:[%s1301 + $0x10] sm:$0xf]
  %v1305 = vld [vmem:[%s1301 + $0x18] sm:$0xf]
  %v1306 = vld [vmem:[%s1301 + $0x20] sm:$0xf]
  %v1307 = vld [vmem:[%s1301 + $0x28] sm:$0xf]
  %s1308 = scalar_lea.vmem %s0, 336
  %v1309 = vld [vmem:[%s1308] sm:$0xf]
  %v1310 = vld [vmem:[%s1308 + $0x8] sm:$0xf]
  %v1311 = vld [vmem:[%s1308 + $0x10] sm:$0xf]
  %v1312 = vld [vmem:[%s1308 + $0x18] sm:$0xf]
  %v1313 = vld [vmem:[%s1308 + $0x20] sm:$0xf]
  %v1314 = vld [vmem:[%s1308 + $0x28] sm:$0xf]
  %v1315 = vld [vmem:[%s1301 + $0x1] sm:$0xf]
  %v1316 = vld [vmem:[%s1301 + $0x9] sm:$0xf]
  %v1317 = vld [vmem:[%s1301 + $0x11] sm:$0xf]
  %v1318 = vld [vmem:[%s1301 + $0x19] sm:$0xf]
  %v1319 = vld [vmem:[%s1301 + $0x21] sm:$0xf]
  %v1320 = vld [vmem:[%s1301 + $0x29] sm:$0xf]
  %v1321 = vld [vmem:[%s1308 + $0x1] sm:$0xf]
  %v1322 = vld [vmem:[%s1308 + $0x9] sm:$0xf]
  %v1323 = vld [vmem:[%s1308 + $0x11] sm:$0xf]
  %v1324 = vld [vmem:[%s1308 + $0x19] sm:$0xf]
  %v1325 = vld [vmem:[%s1308 + $0x21] sm:$0xf]
  %v1326 = vld [vmem:[%s1308 + $0x29] sm:$0xf]
  %v1327 = vld [vmem:[%s1301 + $0x2] sm:$0xf]
  %v1328 = vld [vmem:[%s1301 + $0xa] sm:$0xf]
  %v1329 = vld [vmem:[%s1301 + $0x12] sm:$0xf]
  %v1330 = vld [vmem:[%s1301 + $0x1a] sm:$0xf]
  %v1331 = vld [vmem:[%s1301 + $0x22] sm:$0xf]
  %v1332 = vld [vmem:[%s1301 + $0x2a] sm:$0xf]
  %1339 = vrot.lane.b32.xlu0 %v1309, 10
  %v1340 = vpop.permute.xlu0 %1339
  %1341 = vrot.lane.b32.xlu0 %v1310, 10
  %v1342 = vpop.permute.xlu0 %1341
  %1343 = vrot.lane.b32.xlu0 %v1311, 10
  %v1344 = vpop.permute.xlu0 %1343
  %1345 = vrot.lane.b32.xlu0 %v1312, 10
  %v1346 = vpop.permute.xlu0 %1345
  %1347 = vrot.lane.b32.xlu0 %v1313, 10
  %v1348 = vpop.permute.xlu0 %1347
  %1349 = vrot.lane.b32.xlu0 %v1314, 10
  %v1350 = vpop.permute.xlu0 %1349
  %1363 = vrot.lane.b32.xlu0 %v1315, 20
  %v1364 = vpop.permute.xlu0 %1363
  %1365 = vrot.lane.b32.xlu0 %v1316, 20
  %v1366 = vpop.permute.xlu0 %1365
  %1367 = vrot.lane.b32.xlu0 %v1317, 20
  %v1368 = vpop.permute.xlu0 %1367
  %1369 = vrot.lane.b32.xlu0 %v1318, 20
  %v1370 = vpop.permute.xlu0 %1369
  %1371 = vrot.lane.b32.xlu0 %v1319, 20
  %v1372 = vpop.permute.xlu0 %1371
  %1373 = vrot.lane.b32.xlu0 %v1320, 20
  %v1374 = vpop.permute.xlu0 %1373
  %1387 = vrot.lane.b32.xlu0 %v1321, 30
  %v1388 = vpop.permute.xlu0 %1387
  %1389 = vrot.lane.b32.xlu0 %v1322, 30
  %v1390 = vpop.permute.xlu0 %1389
  %1391 = vrot.lane.b32.xlu0 %v1323, 30
  %v1392 = vpop.permute.xlu0 %1391
  %1393 = vrot.lane.b32.xlu0 %v1324, 30
  %v1394 = vpop.permute.xlu0 %1393
  %1395 = vrot.lane.b32.xlu0 %v1325, 30
  %v1396 = vpop.permute.xlu0 %1395
  %1397 = vrot.lane.b32.xlu0 %v1326, 30
  %v1398 = vpop.permute.xlu0 %1397
  %1411 = vrot.lane.b32.xlu0 %v1327, 40
  %v1412 = vpop.permute.xlu0 %1411
  %1413 = vrot.lane.b32.xlu0 %v1328, 40
  %v1414 = vpop.permute.xlu0 %1413
  %1415 = vrot.lane.b32.xlu0 %v1329, 40
  %v1416 = vpop.permute.xlu0 %1415
  %1417 = vrot.lane.b32.xlu0 %v1330, 40
  %v1418 = vpop.permute.xlu0 %1417
  %1419 = vrot.lane.b32.xlu0 %v1331, 40
  %v1420 = vpop.permute.xlu0 %1419
  %1421 = vrot.lane.b32.xlu0 %v1332, 40
  %v1422 = vpop.permute.xlu0 %1421
  %v1429 = vsel %vm174, %v1302, %v1340
  %v1430 = vsel %vm174, %v1303, %v1342
  %v1431 = vsel %vm174, %v1304, %v1344
  %v1432 = vsel %vm174, %v1305, %v1346
  %v1433 = vsel %vm174, %v1306, %v1348
  %v1434 = vsel %vm174, %v1307, %v1350
  %v1435 = vsel %vm181, %v1429, %v1364
  %v1436 = vsel %vm181, %v1430, %v1366
  %v1437 = vsel %vm181, %v1431, %v1368
  %v1438 = vsel %vm181, %v1432, %v1370
  %v1439 = vsel %vm181, %v1433, %v1372
  %v1440 = vsel %vm181, %v1434, %v1374
  %v1441 = vsel %vm188, %v1435, %v1388
  %v1442 = vsel %vm188, %v1436, %v1390
  %v1443 = vsel %vm188, %v1437, %v1392
  %v1444 = vsel %vm188, %v1438, %v1394
  %v1445 = vsel %vm188, %v1439, %v1396
  %v1446 = vsel %vm188, %v1440, %v1398
  %v1447 = vsel %vm195, %v1441, %v1412
  %v1448 = vsel %vm195, %v1442, %v1414
  %v1449 = vsel %vm195, %v1443, %v1416
  %v1450 = vsel %vm195, %v1444, %v1418
  %v1451 = vsel %vm195, %v1445, %v1420
  %v1452 = vsel %vm195, %v1446, %v1422
  %1457 = vrot.lane.b32.xlu0 %v1447, 50
  %v1458 = vpop.permute.xlu0 %1457
  %1459 = vrot.lane.b32.xlu0 %v1448, 50
  %v1460 = vpop.permute.xlu0 %1459
  %1461 = vrot.lane.b32.xlu0 %v1449, 50
  %v1462 = vpop.permute.xlu0 %1461
  %1463 = vrot.lane.b32.xlu0 %v1450, 50
  %v1464 = vpop.permute.xlu0 %1463
  %1473 = vrot.lane.b32.xlu0 %v1296, 100
  %v1474 = vpop.permute.xlu0 %1473
  %1475 = vrot.lane.b32.xlu0 %v1297, 100
  %v1476 = vpop.permute.xlu0 %1475
  %1477 = vrot.lane.b32.xlu0 %v1298, 100
  %v1478 = vpop.permute.xlu0 %1477
  %1479 = vrot.lane.b32.xlu0 %v1299, 100
  %v1480 = vpop.permute.xlu0 %1479
  %1486 = vrot.lane.b32.xlu0 %v1448, 22
  %v1487 = vpop.permute.xlu0 %1486
  %1488 = vrot.lane.b32.xlu0 %v1449, 22
  %v1489 = vpop.permute.xlu0 %1488
  %1490 = vrot.lane.b32.xlu0 %v1450, 22
  %v1491 = vpop.permute.xlu0 %1490
  %1492 = vrot.lane.b32.xlu0 %v1451, 22
  %v1493 = vpop.permute.xlu0 %1492
  %1499 = vrot.lane.b32.xlu0 %v1297, 72
  %v1500 = vpop.permute.xlu0 %1499
  %1501 = vrot.lane.b32.xlu0 %v1298, 72
  %v1502 = vpop.permute.xlu0 %1501
  %1503 = vrot.lane.b32.xlu0 %v1299, 72
  %v1504 = vpop.permute.xlu0 %1503
  %1505 = vrot.lane.b32.xlu0 %v1300, 72
  %v1506 = vpop.permute.xlu0 %1505
  %v1511 = vsel %vm412, %v1295, %v1458
  %v1512 = vsel %vm412, %v1296, %v1460
  %v1513 = vsel %vm412, %v1297, %v1462
  %v1514 = vsel %vm412, %v1298, %v1464
  %v1515 = vsel %vm417, %v1511, %v1474
  %v1516 = vsel %vm417, %v1512, %v1476
  %v1517 = vsel %vm417, %v1513, %v1478
  %v1518 = vsel %vm417, %v1514, %v1480
  %v1519 = vsel %vm422, %v1474, %v1487
  %v1520 = vsel %vm422, %v1476, %v1489
  %v1521 = vsel %vm422, %v1478, %v1491
  %v1522 = vsel %vm422, %v1480, %v1493
  %v1523 = vsel %vm427, %v1519, %v1500
  %v1524 = vsel %vm427, %v1520, %v1502
  %v1525 = vsel %vm427, %v1521, %v1504
  %v1526 = vsel %vm427, %v1522, %v1506
  %v1529 = vrot.slane %v1516, 4
  %v1530 = vrot.slane %v1524, 4
  %v1535 = vrot.slane %v1518, 4
  %v1536 = vrot.slane %v1526, 4
  %v1539 = vsel %vm444, %v1515, %v1529
  %v1540 = vsel %vm444, %v1523, %v1530
  %v1541 = vsel %vm444, %v1517, %v1535
  %v1542 = vsel %vm444, %v1525, %v1536
  %v1544 = vsel %vm452, %v1540, 0
  %v1547 = vsel %vm452, %v1542, 0
  %1549 = vmatpush.msra.mxu0 %v29
  %1550 = vmatpush.msra.mxu0 %v28
  %1551 = vmatpush.msra.mxu0 %v27
  %1552 = vmatpush.msra.mxu0 %v26
  %1553 = vmatpush.msra.mxu0 %v25
  %1554 = vmatpush.msra.mxu0 %v24
  %1555 = vmatpush.msra.mxu0 %v23
  %1556 = vmatpush.msra.mxu0 %v22
  %1557 = vmatpush.msra.mxu0 %v21
  %1558 = vmatpush.msra.mxu0 %v20
  %1559 = vmatpush.msra.mxu0 %v19
  %1560 = vmatpush.msra.mxu0 %v18
  %1561 = vmatpush.msra.mxu0 %v17
  %1562 = vmatpush.msra.mxu0 %v16
  %1563 = vmatpush.msra.mxu0 %v15
  %1564 = vmatpush.msra.mxu0 %v14
  %1565 = vmatmul.f32.gmra.mxu0 %v1539
  %v1566 = vpop.f32.mrf.mxu0
  %v1567 = vadd.f32 %v450, %v1566
  %1568 = vmatmul.f32.gmra.mxu0 %v1541
  %v1569 = vpop.f32.mrf.mxu0
  %v1570 = vadd.f32 %v450, %v1569
  %1571 = vdwg.mxu0
  %1572 = vmatpush.msra.mxu0 %v461
  %1573 = vmatpush.msra.mxu0 %v44
  %1574 = vmatpush.msra.mxu0 %v43
  %1575 = vmatpush.msra.mxu0 %v42
  %1576 = vmatpush.msra.mxu0 %v41
  %1577 = vmatpush.msra.mxu0 %v40
  %1578 = vmatpush.msra.mxu0 %v39
  %1579 = vmatpush.msra.mxu0 %v38
  %1580 = vmatpush.msra.mxu0 %v37
  %1581 = vmatpush.msra.mxu0 %v36
  %1582 = vmatpush.msra.mxu0 %v35
  %1583 = vmatpush.msra.mxu0 %v34
  %1584 = vmatpush.msra.mxu0 %v33
  %1585 = vmatpush.msra.mxu0 %v32
  %1586 = vmatpush.msra.mxu0 %v31
  %1587 = vmatpush.msra.mxu0 %v30
  %1588 = vmatmul.f32.gmra.mxu0 %v1544
  %v1589 = vpop.f32.mrf.mxu0
  %v1590 = vadd.f32 %v1567, %v1589
  %1591 = vmatmul.f32.gmra.mxu0 %v1547
  %v1592 = vpop.f32.mrf.mxu0
  %v1593 = vadd.f32 %v1570, %v1592
  %1594 = vdwg.mxu0
  %v1595 = vmax.f32 %v1590, 0.0
  %v1596 = vmax.f32 %v1593, 0.0
  %1597 = vrot.lane.b32.xlu0 %v1296, 50
  %v1598 = vpop.permute.xlu0 %1597
  %1599 = vrot.lane.b32.xlu0 %v1297, 50
  %v1600 = vpop.permute.xlu0 %1599
  %1601 = vrot.lane.b32.xlu0 %v1298, 50
  %v1602 = vpop.permute.xlu0 %1601
  %1603 = vrot.lane.b32.xlu0 %v1299, 50
  %v1604 = vpop.permute.xlu0 %1603
  %1609 = vrot.lane.b32.xlu0 %v1448, 100
  %v1610 = vpop.permute.xlu0 %1609
  %1611 = vrot.lane.b32.xlu0 %v1449, 100
  %v1612 = vpop.permute.xlu0 %1611
  %1613 = vrot.lane.b32.xlu0 %v1450, 100
  %v1614 = vpop.permute.xlu0 %1613
  %1615 = vrot.lane.b32.xlu0 %v1451, 100
  %v1616 = vpop.permute.xlu0 %1615
  %1621 = vrot.lane.b32.xlu0 %v1297, 22
  %v1622 = vpop.permute.xlu0 %1621
  %1623 = vrot.lane.b32.xlu0 %v1298, 22
  %v1624 = vpop.permute.xlu0 %1623
  %1625 = vrot.lane.b32.xlu0 %v1299, 22
  %v1626 = vpop.permute.xlu0 %1625
  %1627 = vrot.lane.b32.xlu0 %v1300, 22
  %v1628 = vpop.permute.xlu0 %1627
  %1634 = vrot.lane.b32.xlu0 %v1449, 72
  %v1635 = vpop.permute.xlu0 %1634
  %1636 = vrot.lane.b32.xlu0 %v1450, 72
  %v1637 = vpop.permute.xlu0 %1636
  %1638 = vrot.lane.b32.xlu0 %v1451, 72
  %v1639 = vpop.permute.xlu0 %1638
  %1640 = vrot.lane.b32.xlu0 %v1452, 72
  %v1641 = vpop.permute.xlu0 %1640
  %v1646 = vsel %vm412, %v1447, %v1598
  %v1647 = vsel %vm412, %v1448, %v1600
  %v1648 = vsel %vm412, %v1449, %v1602
  %v1649 = vsel %vm412, %v1450, %v1604
  %v1650 = vsel %vm417, %v1646, %v1610
  %v1651 = vsel %vm417, %v1647, %v1612
  %v1652 = vsel %vm417, %v1648, %v1614
  %v1653 = vsel %vm417, %v1649, %v1616
  %v1654 = vsel %vm422, %v1610, %v1622
  %v1655 = vsel %vm422, %v1612, %v1624
  %v1656 = vsel %vm422, %v1614, %v1626
  %v1657 = vsel %vm422, %v1616, %v1628
  %v1658 = vsel %vm427, %v1654, %v1635
  %v1659 = vsel %vm427, %v1655, %v1637
  %v1660 = vsel %vm427, %v1656, %v1639
  %v1661 = vsel %vm427, %v1657, %v1641
  %v1664 = vrot.slane %v1651, 4
  %v1665 = vrot.slane %v1659, 4
  %v1670 = vrot.slane %v1653, 4
  %v1671 = vrot.slane %v1661, 4
  %v1674 = vsel %vm444, %v1650, %v1664
  %v1675 = vsel %vm444, %v1658, %v1665
  %v1676 = vsel %vm444, %v1652, %v1670
  %v1677 = vsel %vm444, %v1660, %v1671
  %v1679 = vsel %vm452, %v1675, 0
  %v1682 = vsel %vm452, %v1677, 0
  %1684 = vmatpush.msra.mxu0 %v29
  %1685 = vmatpush.msra.mxu0 %v28
  %1686 = vmatpush.msra.mxu0 %v27
  %1687 = vmatpush.msra.mxu0 %v26
  %1688 = vmatpush.msra.mxu0 %v25
  %1689 = vmatpush.msra.mxu0 %v24
  %1690 = vmatpush.msra.mxu0 %v23
  %1691 = vmatpush.msra.mxu0 %v22
  %1692 = vmatpush.msra.mxu0 %v21
  %1693 = vmatpush.msra.mxu0 %v20
  %1694 = vmatpush.msra.mxu0 %v19
  %1695 = vmatpush.msra.mxu0 %v18
  %1696 = vmatpush.msra.mxu0 %v17
  %1697 = vmatpush.msra.mxu0 %v16
  %1698 = vmatpush.msra.mxu0 %v15
  %1699 = vmatpush.msra.mxu0 %v14
  %1700 = vmatmul.f32.gmra.mxu0 %v1674
  %v1701 = vpop.f32.mrf.mxu0
  %v1702 = vadd.f32 %v450, %v1701
  %1703 = vmatmul.f32.gmra.mxu0 %v1676
  %v1704 = vpop.f32.mrf.mxu0
  %v1705 = vadd.f32 %v450, %v1704
  %1706 = vdwg.mxu0
  %1707 = vmatpush.msra.mxu0 %v461
  %1708 = vmatpush.msra.mxu0 %v44
  %1709 = vmatpush.msra.mxu0 %v43
  %1710 = vmatpush.msra.mxu0 %v42
  %1711 = vmatpush.msra.mxu0 %v41
  %1712 = vmatpush.msra.mxu0 %v40
  %1713 = vmatpush.msra.mxu0 %v39
  %1714 = vmatpush.msra.mxu0 %v38
  %1715 = vmatpush.msra.mxu0 %v37
  %1716 = vmatpush.msra.mxu0 %v36
  %1717 = vmatpush.msra.mxu0 %v35
  %1718 = vmatpush.msra.mxu0 %v34
  %1719 = vmatpush.msra.mxu0 %v33
  %1720 = vmatpush.msra.mxu0 %v32
  %1721 = vmatpush.msra.mxu0 %v31
  %1722 = vmatpush.msra.mxu0 %v30
  %1723 = vmatmul.f32.gmra.mxu0 %v1679
  %v1724 = vpop.f32.mrf.mxu0
  %v1725 = vadd.f32 %v1702, %v1724
  %1726 = vmatmul.f32.gmra.mxu0 %v1682
  %v1727 = vpop.f32.mrf.mxu0
  %v1728 = vadd.f32 %v1705, %v1727
  %1729 = vdwg.mxu0
  %v1730 = vmax.f32 %v1725, 0.0
  %v1731 = vmax.f32 %v1728, 0.0
  %v1732 = vmax.f32 %v1595, %v1730
  %v1733 = vmax.f32 %v1596, %v1731
  %v1734 = vld [vmem:[%s1156 + $0x2] sm:$0xf]
  %v1735 = vld [vmem:[%s1156 + $0xa] sm:$0xf]
  %v1736 = vld [vmem:[%s1156 + $0x12] sm:$0xf]
  %v1737 = vld [vmem:[%s1156 + $0x1a] sm:$0xf]
  %v1738 = vld [vmem:[%s1156 + $0x22] sm:$0xf]
  %v1739 = vld [vmem:[%s1156 + $0x2a] sm:$0xf]
  %1740 = vrot.lane.b32.xlu0 %v1163, 10
  %v1741 = vpop.permute.xlu0 %1740
  %1742 = vrot.lane.b32.xlu0 %v1164, 10
  %v1743 = vpop.permute.xlu0 %1742
  %1744 = vrot.lane.b32.xlu0 %v1165, 10
  %v1745 = vpop.permute.xlu0 %1744
  %1746 = vrot.lane.b32.xlu0 %v1166, 10
  %v1747 = vpop.permute.xlu0 %1746
  %1748 = vrot.lane.b32.xlu0 %v1167, 10
  %v1749 = vpop.permute.xlu0 %1748
  %1750 = vrot.lane.b32.xlu0 %v1168, 10
  %v1751 = vpop.permute.xlu0 %1750
  %1758 = vrot.lane.b32.xlu0 %v1169, 20
  %v1759 = vpop.permute.xlu0 %1758
  %1760 = vrot.lane.b32.xlu0 %v1170, 20
  %v1761 = vpop.permute.xlu0 %1760
  %1762 = vrot.lane.b32.xlu0 %v1171, 20
  %v1763 = vpop.permute.xlu0 %1762
  %1764 = vrot.lane.b32.xlu0 %v1172, 20
  %v1765 = vpop.permute.xlu0 %1764
  %1766 = vrot.lane.b32.xlu0 %v1173, 20
  %v1767 = vpop.permute.xlu0 %1766
  %1768 = vrot.lane.b32.xlu0 %v1174, 20
  %v1769 = vpop.permute.xlu0 %1768
  %1776 = vrot.lane.b32.xlu0 %v1175, 30
  %v1777 = vpop.permute.xlu0 %1776
  %1778 = vrot.lane.b32.xlu0 %v1176, 30
  %v1779 = vpop.permute.xlu0 %1778
  %1780 = vrot.lane.b32.xlu0 %v1177, 30
  %v1781 = vpop.permute.xlu0 %1780
  %1782 = vrot.lane.b32.xlu0 %v1178, 30
  %v1783 = vpop.permute.xlu0 %1782
  %1784 = vrot.lane.b32.xlu0 %v1179, 30
  %v1785 = vpop.permute.xlu0 %1784
  %1786 = vrot.lane.b32.xlu0 %v1180, 30
  %v1787 = vpop.permute.xlu0 %1786
  %1800 = vrot.lane.b32.xlu0 %v1734, 40
  %v1801 = vpop.permute.xlu0 %1800
  %1802 = vrot.lane.b32.xlu0 %v1735, 40
  %v1803 = vpop.permute.xlu0 %1802
  %1804 = vrot.lane.b32.xlu0 %v1736, 40
  %v1805 = vpop.permute.xlu0 %1804
  %1806 = vrot.lane.b32.xlu0 %v1737, 40
  %v1807 = vpop.permute.xlu0 %1806
  %1808 = vrot.lane.b32.xlu0 %v1738, 40
  %v1809 = vpop.permute.xlu0 %1808
  %1810 = vrot.lane.b32.xlu0 %v1739, 40
  %v1811 = vpop.permute.xlu0 %1810
  %v1818 = vsel %vm174, %v1157, %v1741
  %v1819 = vsel %vm174, %v1158, %v1743
  %v1820 = vsel %vm174, %v1159, %v1745
  %v1821 = vsel %vm174, %v1160, %v1747
  %v1822 = vsel %vm174, %v1161, %v1749
  %v1823 = vsel %vm174, %v1162, %v1751
  %v1824 = vsel %vm181, %v1818, %v1759
  %v1825 = vsel %vm181, %v1819, %v1761
  %v1826 = vsel %vm181, %v1820, %v1763
  %v1827 = vsel %vm181, %v1821, %v1765
  %v1828 = vsel %vm181, %v1822, %v1767
  %v1829 = vsel %vm181, %v1823, %v1769
  %v1830 = vsel %vm188, %v1824, %v1777
  %v1831 = vsel %vm188, %v1825, %v1779
  %v1832 = vsel %vm188, %v1826, %v1781
  %v1833 = vsel %vm188, %v1827, %v1783
  %v1834 = vsel %vm188, %v1828, %v1785
  %v1835 = vsel %vm188, %v1829, %v1787
  %v1836 = vsel %vm195, %v1830, %v1801
  %v1837 = vsel %vm195, %v1831, %v1803
  %v1838 = vsel %vm195, %v1832, %v1805
  %v1839 = vsel %vm195, %v1833, %v1807
  %v1840 = vsel %vm195, %v1834, %v1809
  %v1841 = vsel %vm195, %v1835, %v1811
  %v1842 = vld [vmem:[%s1308 + $0x2] sm:$0xf]
  %v1843 = vld [vmem:[%s1308 + $0xa] sm:$0xf]
  %v1844 = vld [vmem:[%s1308 + $0x12] sm:$0xf]
  %v1845 = vld [vmem:[%s1308 + $0x1a] sm:$0xf]
  %v1846 = vld [vmem:[%s1308 + $0x22] sm:$0xf]
  %v1847 = vld [vmem:[%s1308 + $0x2a] sm:$0xf]
  %1848 = vrot.lane.b32.xlu0 %v1315, 10
  %v1849 = vpop.permute.xlu0 %1848
  %1850 = vrot.lane.b32.xlu0 %v1316, 10
  %v1851 = vpop.permute.xlu0 %1850
  %1852 = vrot.lane.b32.xlu0 %v1317, 10
  %v1853 = vpop.permute.xlu0 %1852
  %1854 = vrot.lane.b32.xlu0 %v1318, 10
  %v1855 = vpop.permute.xlu0 %1854
  %1856 = vrot.lane.b32.xlu0 %v1319, 10
  %v1857 = vpop.permute.xlu0 %1856
  %1858 = vrot.lane.b32.xlu0 %v1320, 10
  %v1859 = vpop.permute.xlu0 %1858
  %1866 = vrot.lane.b32.xlu0 %v1321, 20
  %v1867 = vpop.permute.xlu0 %1866
  %1868 = vrot.lane.b32.xlu0 %v1322, 20
  %v1869 = vpop.permute.xlu0 %1868
  %1870 = vrot.lane.b32.xlu0 %v1323, 20
  %v1871 = vpop.permute.xlu0 %1870
  %1872 = vrot.lane.b32.xlu0 %v1324, 20
  %v1873 = vpop.permute.xlu0 %1872
  %1874 = vrot.lane.b32.xlu0 %v1325, 20
  %v1875 = vpop.permute.xlu0 %1874
  %1876 = vrot.lane.b32.xlu0 %v1326, 20
  %v1877 = vpop.permute.xlu0 %1876
  %1884 = vrot.lane.b32.xlu0 %v1327, 30
  %v1885 = vpop.permute.xlu0 %1884
  %1886 = vrot.lane.b32.xlu0 %v1328, 30
  %v1887 = vpop.permute.xlu0 %1886
  %1888 = vrot.lane.b32.xlu0 %v1329, 30
  %v1889 = vpop.permute.xlu0 %1888
  %1890 = vrot.lane.b32.xlu0 %v1330, 30
  %v1891 = vpop.permute.xlu0 %1890
  %1892 = vrot.lane.b32.xlu0 %v1331, 30
  %v1893 = vpop.permute.xlu0 %1892
  %1894 = vrot.lane.b32.xlu0 %v1332, 30
  %v1895 = vpop.permute.xlu0 %1894
  %1908 = vrot.lane.b32.xlu0 %v1842, 40
  %v1909 = vpop.permute.xlu0 %1908
  %1910 = vrot.lane.b32.xlu0 %v1843, 40
  %v1911 = vpop.permute.xlu0 %1910
  %1912 = vrot.lane.b32.xlu0 %v1844, 40
  %v1913 = vpop.permute.xlu0 %1912
  %1914 = vrot.lane.b32.xlu0 %v1845, 40
  %v1915 = vpop.permute.xlu0 %1914
  %1916 = vrot.lane.b32.xlu0 %v1846, 40
  %v1917 = vpop.permute.xlu0 %1916
  %1918 = vrot.lane.b32.xlu0 %v1847, 40
  %v1919 = vpop.permute.xlu0 %1918
  %v1926 = vsel %vm174, %v1309, %v1849
  %v1927 = vsel %vm174, %v1310, %v1851
  %v1928 = vsel %vm174, %v1311, %v1853
  %v1929 = vsel %vm174, %v1312, %v1855
  %v1930 = vsel %vm174, %v1313, %v1857
  %v1931 = vsel %vm174, %v1314, %v1859
  %v1932 = vsel %vm181, %v1926, %v1867
  %v1933 = vsel %vm181, %v1927, %v1869
  %v1934 = vsel %vm181, %v1928, %v1871
  %v1935 = vsel %vm181, %v1929, %v1873
  %v1936 = vsel %vm181, %v1930, %v1875
  %v1937 = vsel %vm181, %v1931, %v1877
  %v1938 = vsel %vm188, %v1932, %v1885
  %v1939 = vsel %vm188, %v1933, %v1887
  %v1940 = vsel %vm188, %v1934, %v1889
  %v1941 = vsel %vm188, %v1935, %v1891
  %v1942 = vsel %vm188, %v1936, %v1893
  %v1943 = vsel %vm188, %v1937, %v1895
  %v1944 = vsel %vm195, %v1938, %v1909
  %v1945 = vsel %vm195, %v1939, %v1911
  %v1946 = vsel %vm195, %v1940, %v1913
  %v1947 = vsel %vm195, %v1941, %v1915
  %v1948 = vsel %vm195, %v1942, %v1917
  %v1949 = vsel %vm195, %v1943, %v1919
  %1954 = vrot.lane.b32.xlu0 %v1944, 50
  %v1955 = vpop.permute.xlu0 %1954
  %1956 = vrot.lane.b32.xlu0 %v1945, 50
  %v1957 = vpop.permute.xlu0 %1956
  %1958 = vrot.lane.b32.xlu0 %v1946, 50
  %v1959 = vpop.permute.xlu0 %1958
  %1960 = vrot.lane.b32.xlu0 %v1947, 50
  %v1961 = vpop.permute.xlu0 %1960
  %1970 = vrot.lane.b32.xlu0 %v1837, 100
  %v1971 = vpop.permute.xlu0 %1970
  %1972 = vrot.lane.b32.xlu0 %v1838, 100
  %v1973 = vpop.permute.xlu0 %1972
  %1974 = vrot.lane.b32.xlu0 %v1839, 100
  %v1975 = vpop.permute.xlu0 %1974
  %1976 = vrot.lane.b32.xlu0 %v1840, 100
  %v1977 = vpop.permute.xlu0 %1976
  %1983 = vrot.lane.b32.xlu0 %v1945, 22
  %v1984 = vpop.permute.xlu0 %1983
  %1985 = vrot.lane.b32.xlu0 %v1946, 22
  %v1986 = vpop.permute.xlu0 %1985
  %1987 = vrot.lane.b32.xlu0 %v1947, 22
  %v1988 = vpop.permute.xlu0 %1987
  %1989 = vrot.lane.b32.xlu0 %v1948, 22
  %v1990 = vpop.permute.xlu0 %1989
  %1996 = vrot.lane.b32.xlu0 %v1838, 72
  %v1997 = vpop.permute.xlu0 %1996
  %1998 = vrot.lane.b32.xlu0 %v1839, 72
  %v1999 = vpop.permute.xlu0 %1998
  %2000 = vrot.lane.b32.xlu0 %v1840, 72
  %v2001 = vpop.permute.xlu0 %2000
  %2002 = vrot.lane.b32.xlu0 %v1841, 72
  %v2003 = vpop.permute.xlu0 %2002
  %v2008 = vsel %vm412, %v1836, %v1955
  %v2009 = vsel %vm412, %v1837, %v1957
  %v2010 = vsel %vm412, %v1838, %v1959
  %v2011 = vsel %vm412, %v1839, %v1961
  %v2012 = vsel %vm417, %v2008, %v1971
  %v2013 = vsel %vm417, %v2009, %v1973
  %v2014 = vsel %vm417, %v2010, %v1975
  %v2015 = vsel %vm417, %v2011, %v1977
  %v2016 = vsel %vm422, %v1971, %v1984
  %v2017 = vsel %vm422, %v1973, %v1986
  %v2018 = vsel %vm422, %v1975, %v1988
  %v2019 = vsel %vm422, %v1977, %v1990
  %v2020 = vsel %vm427, %v2016, %v1997
  %v2021 = vsel %vm427, %v2017, %v1999
  %v2022 = vsel %vm427, %v2018, %v2001
  %v2023 = vsel %vm427, %v2019, %v2003
  %v2026 = vrot.slane %v2013, 4
  %v2027 = vrot.slane %v2021, 4
  %v2032 = vrot.slane %v2015, 4
  %v2033 = vrot.slane %v2023, 4
  %v2036 = vsel %vm444, %v2012, %v2026
  %v2037 = vsel %vm444, %v2020, %v2027
  %v2038 = vsel %vm444, %v2014, %v2032
  %v2039 = vsel %vm444, %v2022, %v2033
  %v2041 = vsel %vm452, %v2037, 0
  %v2044 = vsel %vm452, %v2039, 0
  %2046 = vmatpush.msra.mxu0 %v29
  %2047 = vmatpush.msra.mxu0 %v28
  %2048 = vmatpush.msra.mxu0 %v27
  %2049 = vmatpush.msra.mxu0 %v26
  %2050 = vmatpush.msra.mxu0 %v25
  %2051 = vmatpush.msra.mxu0 %v24
  %2052 = vmatpush.msra.mxu0 %v23
  %2053 = vmatpush.msra.mxu0 %v22
  %2054 = vmatpush.msra.mxu0 %v21
  %2055 = vmatpush.msra.mxu0 %v20
  %2056 = vmatpush.msra.mxu0 %v19
  %2057 = vmatpush.msra.mxu0 %v18
  %2058 = vmatpush.msra.mxu0 %v17
  %2059 = vmatpush.msra.mxu0 %v16
  %2060 = vmatpush.msra.mxu0 %v15
  %2061 = vmatpush.msra.mxu0 %v14
  %2062 = vmatmul.f32.gmra.mxu0 %v2036
  %v2063 = vpop.f32.mrf.mxu0
  %v2064 = vadd.f32 %v450, %v2063
  %2065 = vmatmul.f32.gmra.mxu0 %v2038
  %v2066 = vpop.f32.mrf.mxu0
  %v2067 = vadd.f32 %v450, %v2066
  %2068 = vdwg.mxu0
  %2069 = vmatpush.msra.mxu0 %v461
  %2070 = vmatpush.msra.mxu0 %v44
  %2071 = vmatpush.msra.mxu0 %v43
  %2072 = vmatpush.msra.mxu0 %v42
  %2073 = vmatpush.msra.mxu0 %v41
  %2074 = vmatpush.msra.mxu0 %v40
  %2075 = vmatpush.msra.mxu0 %v39
  %2076 = vmatpush.msra.mxu0 %v38
  %2077 = vmatpush.msra.mxu0 %v37
  %2078 = vmatpush.msra.mxu0 %v36
  %2079 = vmatpush.msra.mxu0 %v35
  %2080 = vmatpush.msra.mxu0 %v34
  %2081 = vmatpush.msra.mxu0 %v33
  %2082 = vmatpush.msra.mxu0 %v32
  %2083 = vmatpush.msra.mxu0 %v31
  %2084 = vmatpush.msra.mxu0 %v30
  %2085 = vmatmul.f32.gmra.mxu0 %v2041
  %v2086 = vpop.f32.mrf.mxu0
  %v2087 = vadd.f32 %v2064, %v2086
  %2088 = vmatmul.f32.gmra.mxu0 %v2044
  %v2089 = vpop.f32.mrf.mxu0
  %v2090 = vadd.f32 %v2067, %v2089
  %2091 = vdwg.mxu0
  %v2092 = vmax.f32 %v2087, 0.0
  %v2093 = vmax.f32 %v2090, 0.0
  %v2094 = vmax.f32 %v1732, %v2092
  %v2095 = vmax.f32 %v1733, %v2093
  %2096 = vrot.lane.b32.xlu0 %v1837, 50
  %v2097 = vpop.permute.xlu0 %2096
  %2098 = vrot.lane.b32.xlu0 %v1838, 50
  %v2099 = vpop.permute.xlu0 %2098
  %2100 = vrot.lane.b32.xlu0 %v1839, 50
  %v2101 = vpop.permute.xlu0 %2100
  %2102 = vrot.lane.b32.xlu0 %v1840, 50
  %v2103 = vpop.permute.xlu0 %2102
  %2108 = vrot.lane.b32.xlu0 %v1945, 100
  %v2109 = vpop.permute.xlu0 %2108
  %2110 = vrot.lane.b32.xlu0 %v1946, 100
  %v2111 = vpop.permute.xlu0 %2110
  %2112 = vrot.lane.b32.xlu0 %v1947, 100
  %v2113 = vpop.permute.xlu0 %2112
  %2114 = vrot.lane.b32.xlu0 %v1948, 100
  %v2115 = vpop.permute.xlu0 %2114
  %2120 = vrot.lane.b32.xlu0 %v1838, 22
  %v2121 = vpop.permute.xlu0 %2120
  %2122 = vrot.lane.b32.xlu0 %v1839, 22
  %v2123 = vpop.permute.xlu0 %2122
  %2124 = vrot.lane.b32.xlu0 %v1840, 22
  %v2125 = vpop.permute.xlu0 %2124
  %2126 = vrot.lane.b32.xlu0 %v1841, 22
  %v2127 = vpop.permute.xlu0 %2126
  %2133 = vrot.lane.b32.xlu0 %v1946, 72
  %v2134 = vpop.permute.xlu0 %2133
  %2135 = vrot.lane.b32.xlu0 %v1947, 72
  %v2136 = vpop.permute.xlu0 %2135
  %2137 = vrot.lane.b32.xlu0 %v1948, 72
  %v2138 = vpop.permute.xlu0 %2137
  %2139 = vrot.lane.b32.xlu0 %v1949, 72
  %v2140 = vpop.permute.xlu0 %2139
  %v2145 = vsel %vm412, %v1944, %v2097
  %v2146 = vsel %vm412, %v1945, %v2099
  %v2147 = vsel %vm412, %v1946, %v2101
  %v2148 = vsel %vm412, %v1947, %v2103
  %v2149 = vsel %vm417, %v2145, %v2109
  %v2150 = vsel %vm417, %v2146, %v2111
  %v2151 = vsel %vm417, %v2147, %v2113
  %v2152 = vsel %vm417, %v2148, %v2115
  %v2153 = vsel %vm422, %v2109, %v2121
  %v2154 = vsel %vm422, %v2111, %v2123
  %v2155 = vsel %vm422, %v2113, %v2125
  %v2156 = vsel %vm422, %v2115, %v2127
  %v2157 = vsel %vm427, %v2153, %v2134
  %v2158 = vsel %vm427, %v2154, %v2136
  %v2159 = vsel %vm427, %v2155, %v2138
  %v2160 = vsel %vm427, %v2156, %v2140
  %v2163 = vrot.slane %v2150, 4
  %v2164 = vrot.slane %v2158, 4
  %v2169 = vrot.slane %v2152, 4
  %v2170 = vrot.slane %v2160, 4
  %v2173 = vsel %vm444, %v2149, %v2163
  %v2174 = vsel %vm444, %v2157, %v2164
  %v2175 = vsel %vm444, %v2151, %v2169
  %v2176 = vsel %vm444, %v2159, %v2170
  %v2178 = vsel %vm452, %v2174, 0
  %v2181 = vsel %vm452, %v2176, 0
  %2183 = vmatpush.msra.mxu0 %v29
  %2184 = vmatpush.msra.mxu0 %v28
  %2185 = vmatpush.msra.mxu0 %v27
  %2186 = vmatpush.msra.mxu0 %v26
  %2187 = vmatpush.msra.mxu0 %v25
  %2188 = vmatpush.msra.mxu0 %v24
  %2189 = vmatpush.msra.mxu0 %v23
  %2190 = vmatpush.msra.mxu0 %v22
  %2191 = vmatpush.msra.mxu0 %v21
  %2192 = vmatpush.msra.mxu0 %v20
  %2193 = vmatpush.msra.mxu0 %v19
  %2194 = vmatpush.msra.mxu0 %v18
  %2195 = vmatpush.msra.mxu0 %v17
  %2196 = vmatpush.msra.mxu0 %v16
  %2197 = vmatpush.msra.mxu0 %v15
  %2198 = vmatpush.msra.mxu0 %v14
  %2199 = vmatmul.f32.gmra.mxu0 %v2173
  %v2200 = vpop.f32.mrf.mxu0
  %v2201 = vadd.f32 %v450, %v2200
  %2202 = vmatmul.f32.gmra.mxu0 %v2175
  %v2203 = vpop.f32.mrf.mxu0
  %v2204 = vadd.f32 %v450, %v2203
  %2205 = vdwg.mxu0
  %2206 = vmatpush.msra.mxu0 %v461
  %2207 = vmatpush.msra.mxu0 %v44
  %2208 = vmatpush.msra.mxu0 %v43
  %2209 = vmatpush.msra.mxu0 %v42
  %2210 = vmatpush.msra.mxu0 %v41
  %2211 = vmatpush.msra.mxu0 %v40
  %2212 = vmatpush.msra.mxu0 %v39
  %2213 = vmatpush.msra.mxu0 %v38
  %2214 = vmatpush.msra.mxu0 %v37
  %2215 = vmatpush.msra.mxu0 %v36
  %2216 = vmatpush.msra.mxu0 %v35
  %2217 = vmatpush.msra.mxu0 %v34
  %2218 = vmatpush.msra.mxu0 %v33
  %2219 = vmatpush.msra.mxu0 %v32
  %2220 = vmatpush.msra.mxu0 %v31
  %2221 = vmatpush.msra.mxu0 %v30
  %2222 = vmatmul.f32.gmra.mxu0 %v2178
  %v2223 = vpop.f32.mrf.mxu0
  %v2224 = vadd.f32 %v2201, %v2223
  %2225 = vmatmul.f32.gmra.mxu0 %v2181
  %v2226 = vpop.f32.mrf.mxu0
  %v2227 = vadd.f32 %v2204, %v2226
  %2228 = vdwg.mxu0
  %v2229 = vmax.f32 %v2224, 0.0
  %v2230 = vmax.f32 %v2227, 0.0
  %v2231 = vmax.f32 %v2094, %v2229
  %v2232 = vmax.f32 %v2095, %v2230
  %s2233 = scalar_lea.vmem %s3, 16
  %2234 = vst.msk [vmem:[%s2233] sm:$0xff] %vm181, %v2231
  %2235 = vst.msk [vmem:[%s2233 + $0x8] sm:$0xff] %vm181, %v2232
  // Predicated region
  $region14: #{net_forward.4} parent=0 // pred_check
    _
  $region15: #{net_forward.4} parent=0 // pred_check_branch
    %2237 = sbr.rel (0) target = $region17
  $region16: #{net_forward.4} parent=0 // pred_region
    _
  $region17: #{net_forward.4} parent=0 // pred_fallthru
    _
  // Predicated region
  $region18: #{net_forward.4} parent=0 // pred_check
    _
  $region19: #{net_forward.4} parent=0 // pred_check_branch
    %2239 = sbr.rel (0) target = $region21
  $region20: #{net_forward.4} parent=0 // pred_region
    _
  $region21: #{net_forward.4} parent=0 // pred_fallthru
    _

// kernel: net_forward.5
$region0: #{net_forward.5}
  #allocation0 [shape = 'u32[]', space=smem, size = 0x4, offset = 0x4, fixed_abs, tag = 'smem constant byte address 0x4 - core index']
  #allocation1 [shape = 'u32[72,128]{1,0:T(1,128)}', space=vmem, size = 0x9000, scoped, tag = 'internal scratch']
  %s0 = inlined_call_operand.vmem [shape: f32[2,320], index: 0, kind: input, shape index: {}]
  %s1 = inlined_call_operand.vmem [shape: f32[320,160], index: 1, kind: input, shape index: {}]
  %s2 = inlined_call_operand.vmem [shape: f32[1,160], index: 2, kind: input, shape index: {}]
  %s3 = inlined_call_operand.vmem [shape: f32[160,80], index: 3, kind: input, shape index: {}]
  %s4 = inlined_call_operand.vmem [shape: f32[1,80], index: 4, kind: input, shape index: {}]
  %s5 = inlined_call_operand.vmem [shape: f32[80,10], index: 5, kind: input, shape index: {}]
  %s6 = inlined_call_operand.vmem [shape: f32[1,10], index: 6, kind: input, shape index: {}]
  %s7 = inlined_call_operand.hbm [shape: f32[2,10], index: 7, kind: output, shape index: {}]
  %s8 = sld [smem:[#allocation0]]
  $region38: #{net_forward.5} parent=0
    _
  %s10 = ssub.s32 1, %s8
  %s11 = scalar_select 0, %s10, %s8
  $region1: #{net_forward.5} parent=0
    #allocation2 [shape = 'u8[1024]{0}', space=vmem, size = 0x400, scoped, tag = 'output window, operand 0, single buffered']
    #allocation3 [shape = 's32[1]{0}', space=sflag, size = 0x4, scoped, tag = 'scoped memory for net_forward.5']
    %12 = vsyncpa [#allocation3], 0
    // Predicated region
    $region2: #{net_forward.5} parent=1 // pred_check
      _
    $region3: #{net_forward.5} parent=1 // pred_check_branch
      %14 = sbr.rel (0) target = $region5
    $region4: #{net_forward.5} parent=1 // pred_region
      _
    $region5: #{net_forward.5} parent=1 // pred_fallthru
      _
    // Predicated region
    $region6: #{net_forward.5} parent=1 // pred_check
      _
    $region7: #{net_forward.5} parent=1 // pred_check_branch
      %16 = sbr.rel (0) target = $region9
    $region8: #{net_forward.5} parent=1 // pred_region
      _
    $region9: #{net_forward.5} parent=1 // pred_fallthru
      _
    // Predicated region
    $region10: #{net_forward.5} parent=1 // pred_check
      _
    $region11: #{net_forward.5} parent=1 // pred_check_branch
      %18 = sbr.rel (0) target = $region13
    $region12: #{net_forward.5} parent=1 // pred_region
      _
    $region13: #{net_forward.5} parent=1 // pred_fallthru
      _
    // Predicated region
    $region14: #{net_forward.5} parent=1 // pred_check
      _
    $region15: #{net_forward.5} parent=1 // pred_check_branch
      %20 = sbr.rel (0) target = $region17
    $region16: #{net_forward.5} parent=1 // pred_region
      _
    $region17: #{net_forward.5} parent=1 // pred_fallthru
      _
    // Predicated region
    $region18: #{net_forward.5} parent=1 // pred_check
      _
    $region19: #{net_forward.5} parent=1 // pred_check_branch
      %22 = sbr.rel (0) target = $region21
    $region20: #{net_forward.5} parent=1 // pred_region
      _
    $region21: #{net_forward.5} parent=1 // pred_fallthru
      _
    // Predicated region
    $region22: #{net_forward.5} parent=1 // pred_check
      _
    $region23: #{net_forward.5} parent=1 // pred_check_branch
      %24 = sbr.rel (0) target = $region25
    $region24: #{net_forward.5} parent=1 // pred_region
      _
    $region25: #{net_forward.5} parent=1 // pred_fallthru
      _
    // Predicated region
    $region26: #{net_forward.5} parent=1 // pred_check
      _
    $region27: #{net_forward.5} parent=1 // pred_check_branch
      %26 = sbr.rel (0) target = $region29
    $region28: #{net_forward.5} parent=1 // pred_region
      _
    $region29: #{net_forward.5} parent=1 // pred_fallthru
      _
    %v27 = vld [vmem:[%s0] sm:$0x3f]
    %v28 = vld [vmem:[%s1] sm:$0xff]
    %v29 = vld [vmem:[%s1 + $0x8] sm:$0xff]
    %v30 = vld [vmem:[%s1 + $0x10] sm:$0xff]
    %v31 = vld [vmem:[%s1 + $0x18] sm:$0xff]
    %v32 = vld [vmem:[%s1 + $0x20] sm:$0xff]
    %v33 = vld [vmem:[%s1 + $0x28] sm:$0xff]
    %v34 = vld [vmem:[%s1 + $0x30] sm:$0xff]
    %v35 = vld [vmem:[%s1 + $0x38] sm:$0xff]
    %v36 = vld [vmem:[%s1 + $0x40] sm:$0xff]
    %v37 = vld [vmem:[%s1 + $0x48] sm:$0xff]
    %v38 = vld [vmem:[%s1 + $0x50] sm:$0xff]
    %v39 = vld [vmem:[%s1 + $0x58] sm:$0xff]
    %v40 = vld [vmem:[%s1 + $0x60] sm:$0xff]
    %v41 = vld [vmem:[%s1 + $0x68] sm:$0xff]
    %v42 = vld [vmem:[%s1 + $0x70] sm:$0xff]
    %v43 = vld [vmem:[%s1 + $0x78] sm:$0xff]
    %v44 = vld [vmem:[%s1 + $0x80] sm:$0xff]
    %v45 = vld [vmem:[%s1 + $0x88] sm:$0xff]
    %v46 = vld [vmem:[%s1 + $0x90] sm:$0xff]
    %v47 = vld [vmem:[%s1 + $0x98] sm:$0xff]
    %v48 = vld [vmem:[%s1 + $0xa0] sm:$0xff]
    %v49 = vld [vmem:[%s1 + $0xa8] sm:$0xff]
    %v50 = vld [vmem:[%s1 + $0xb0] sm:$0xff]
    %v51 = vld [vmem:[%s1 + $0xb8] sm:$0xff]
    %v52 = vld [vmem:[%s1 + $0xc0] sm:$0xff]
    %v53 = vld [vmem:[%s1 + $0xc8] sm:$0xff]
    %v54 = vld [vmem:[%s1 + $0xd0] sm:$0xff]
    %v55 = vld [vmem:[%s1 + $0xd8] sm:$0xff]
    %v56 = vld [vmem:[%s1 + $0xe0] sm:$0xff]
    %v57 = vld [vmem:[%s1 + $0xe8] sm:$0xff]
    %v58 = vld [vmem:[%s1 + $0xf0] sm:$0xff]
    %v59 = vld [vmem:[%s1 + $0xf8] sm:$0xff]
    %v60 = vld [vmem:[%s1 + $0x100] sm:$0xff]
    %v61 = vld [vmem:[%s1 + $0x108] sm:$0xff]
    %v62 = vld [vmem:[%s1 + $0x110] sm:$0xff]
    %v63 = vld [vmem:[%s1 + $0x118] sm:$0xff]
    %v64 = vld [vmem:[%s1 + $0x120] sm:$0xff]
    %v65 = vld [vmem:[%s1 + $0x128] sm:$0xff]
    %v66 = vld [vmem:[%s1 + $0x130] sm:$0xff]
    %v67 = vld [vmem:[%s1 + $0x138] sm:$0xff]
    %v68 = vld [vmem:[%s1 + $0x140] sm:$0xff]
    %v69 = vld [vmem:[%s1 + $0x148] sm:$0xff]
    %v70 = vld [vmem:[%s1 + $0x150] sm:$0xff]
    %v71 = vld [vmem:[%s1 + $0x158] sm:$0xff]
    %v72 = vld [vmem:[%s1 + $0x160] sm:$0xff]
    %v73 = vld [vmem:[%s1 + $0x168] sm:$0xff]
    %v74 = vld [vmem:[%s1 + $0x170] sm:$0xff]
    %v75 = vld [vmem:[%s1 + $0x178] sm:$0xff]
    %v76 = vld [vmem:[%s1 + $0x180] sm:$0xff]
    %v77 = vld [vmem:[%s1 + $0x188] sm:$0xff]
    %v78 = vld [vmem:[%s1 + $0x190] sm:$0xff]
    %v79 = vld [vmem:[%s1 + $0x198] sm:$0xff]
    %v80 = vld [vmem:[%s1 + $0x1a0] sm:$0xff]
    %v81 = vld [vmem:[%s1 + $0x1a8] sm:$0xff]
    %v82 = vld [vmem:[%s1 + $0x1b0] sm:$0xff]
    %v83 = vld [vmem:[%s1 + $0x1b8] sm:$0xff]
    %v84 = vld [vmem:[%s1 + $0x1c0] sm:$0xff]
    %v85 = vld [vmem:[%s1 + $0x1c8] sm:$0xff]
    %v86 = vld [vmem:[%s1 + $0x1d0] sm:$0xff]
    %v87 = vld [vmem:[%s1 + $0x1d8] sm:$0xff]
    %v88 = vld [vmem:[%s1 + $0x1e0] sm:$0xff]
    %v89 = vld [vmem:[%s1 + $0x1e8] sm:$0xff]
    %v90 = vld [vmem:[%s1 + $0x1f0] sm:$0xff]
    %v91 = vld [vmem:[%s1 + $0x1f8] sm:$0xff]
    %v92 = vld [vmem:[%s1 + $0x200] sm:$0xff]
    %v93 = vld [vmem:[%s1 + $0x208] sm:$0xff]
    %v94 = vld [vmem:[%s1 + $0x210] sm:$0xff]
    %v95 = vld [vmem:[%s1 + $0x218] sm:$0xff]
    %v96 = vld [vmem:[%s1 + $0x220] sm:$0xff]
    %v97 = vld [vmem:[%s1 + $0x228] sm:$0xff]
    %v98 = vld [vmem:[%s1 + $0x230] sm:$0xff]
    %v99 = vld [vmem:[%s1 + $0x238] sm:$0xff]
    %v100 = vld [vmem:[%s1 + $0x240] sm:$0xff]
    %v101 = vld [vmem:[%s1 + $0x248] sm:$0xff]
    %v102 = vld [vmem:[%s1 + $0x250] sm:$0xff]
    %v103 = vld [vmem:[%s1 + $0x258] sm:$0xff]
    %v104 = vld [vmem:[%s1 + $0x260] sm:$0xff]
    %v105 = vld [vmem:[%s1 + $0x268] sm:$0xff]
    %v106 = vld [vmem:[%s1 + $0x270] sm:$0xff]
    %v107 = vld [vmem:[%s1 + $0x278] sm:$0xff]
    %v108 = vld [vmem:[%s2] sm:$0x3]
    %v110 = vperm.slane %v108, 0
    %v111 = vperm.slane %v108, 1
    %115 = vst [vmem:[#allocation1] ss:$4 sm:$0xff] %v27
    %v116 = vld.sshfl [vmem:[#allocation1] sm:$0xff pattern:$0x73625140]
    %v117 = vld.sshfl [vmem:[#allocation1 + $0x8] sm:$0xff pattern:$0x73625140]
    %v118 = vld.sshfl [vmem:[#allocation1 + $0x10] sm:$0xff pattern:$0x73625140]
    %vm121 = vcmask 523264
    %v122 = vsel %vm121, %v118, 0
    %124 = vmatpush.msra.mxu0 %v58
    %125 = vmatpush.msra.mxu0 %v56
    %126 = vmatpush.msra.mxu0 %v54
    %127 = vmatpush.msra.mxu0 %v52
    %128 = vmatpush.msra.mxu0 %v50
    %129 = vmatpush.msra.mxu0 %v48
    %130 = vmatpush.msra.mxu0 %v46
    %131 = vmatpush.msra.mxu0 %v44
    %132 = vmatpush.msra.mxu0 %v42
    %133 = vmatpush.msra.mxu0 %v40
    %134 = vmatpush.msra.mxu0 %v38
    %135 = vmatpush.msra.mxu0 %v36
    %136 = vmatpush.msra.mxu0 %v34
    %137 = vmatpush.msra.mxu0 %v32
    %138 = vmatpush.msra.mxu0 %v30
    %139 = vmatpush.msra.mxu0 %v28
    %140 = vmatmul.f32.gmra.mxu0 %v116
    %v141 = vpop.f32.mrf.mxu0
    %v142 = vadd.f32 %v110, %v141
    %143 = vdwg.mxu0
    %144 = vmatpush.msra.mxu0 %v90
    %145 = vmatpush.msra.mxu0 %v88
    %146 = vmatpush.msra.mxu0 %v86
    %147 = vmatpush.msra.mxu0 %v84
    %148 = vmatpush.msra.mxu0 %v82
    %149 = vmatpush.msra.mxu0 %v80
    %150 = vmatpush.msra.mxu0 %v78
    %151 = vmatpush.msra.mxu0 %v76
    %152 = vmatpush.msra.mxu0 %v74
    %153 = vmatpush.msra.mxu0 %v72
    %154 = vmatpush.msra.mxu0 %v70
    %155 = vmatpush.msra.mxu0 %v68
    %156 = vmatpush.msra.mxu0 %v66
    %157 = vmatpush.msra.mxu0 %v64
    %158 = vmatpush.msra.mxu0 %v62
    %159 = vmatpush.msra.mxu0 %v60
    %160 = vmatmul.f32.gmra.mxu0 %v117
    %v161 = vpop.f32.mrf.mxu0
    %v162 = vadd.f32 %v142, %v161
    %163 = vdwg.mxu0
    %164 = vmatpush.msra.mxu0 0.0
    %165 = vmatpush.msra.mxu0 0.0
    %166 = vmatpush.msra.mxu0 0.0
    %167 = vmatpush.msra.mxu0 0.0
    %168 = vmatpush.msra.mxu0 0.0
    %169 = vmatpush.msra.mxu0 0.0
    %170 = vmatpush.msra.mxu0 0.0
    %171 = vmatpush.msra.mxu0 0.0
    %172 = vmatpush.msra.mxu0 %v106
    %173 = vmatpush.msra.mxu0 %v104
    %174 = vmatpush.msra.mxu0 %v102
    %175 = vmatpush.msra.mxu0 %v100
    %176 = vmatpush.msra.mxu0 %v98
    %177 = vmatpush.msra.mxu0 %v96
    %178 = vmatpush.msra.mxu0 %v94
    %179 = vmatpush.msra.mxu0 %v92
    %180 = vmatmul.f32.gmra.mxu0 %v122
    %v181 = vpop.f32.mrf.mxu0
    %v182 = vadd.f32 %v162, %v181
    %183 = vdwg.mxu0
    %184 = vmatpush.msra.mxu0 %v59
    %185 = vmatpush.msra.mxu0 %v57
    %186 = vmatpush.msra.mxu0 %v55
    %187 = vmatpush.msra.mxu0 %v53
    %188 = vmatpush.msra.mxu0 %v51
    %189 = vmatpush.msra.mxu0 %v49
    %190 = vmatpush.msra.mxu0 %v47
    %191 = vmatpush.msra.mxu0 %v45
    %192 = vmatpush.msra.mxu0 %v43
    %193 = vmatpush.msra.mxu0 %v41
    %194 = vmatpush.msra.mxu0 %v39
    %195 = vmatpush.msra.mxu0 %v37
    %196 = vmatpush.msra.mxu0 %v35
    %197 = vmatpush.msra.mxu0 %v33
    %198 = vmatpush.msra.mxu0 %v31
    %199 = vmatpush.msra.mxu0 %v29
    %200 = vmatmul.f32.gmra.mxu0 %v116
    %v201 = vpop.f32.mrf.mxu0
    %v202 = vadd.f32 %v111, %v201
    %203 = vdwg.mxu0
    %204 = vmatpush.msra.mxu0 %v91
    %205 = vmatpush.msra.mxu0 %v89
    %206 = vmatpush.msra.mxu0 %v87
    %207 = vmatpush.msra.mxu0 %v85
    %208 = vmatpush.msra.mxu0 %v83
    %209 = vmatpush.msra.mxu0 %v81
    %210 = vmatpush.msra.mxu0 %v79
    %211 = vmatpush.msra.mxu0 %v77
    %212 = vmatpush.msra.mxu0 %v75
    %213 = vmatpush.msra.mxu0 %v73
    %214 = vmatpush.msra.mxu0 %v71
    %215 = vmatpush.msra.mxu0 %v69
    %216 = vmatpush.msra.mxu0 %v67
    %217 = vmatpush.msra.mxu0 %v65
    %218 = vmatpush.msra.mxu0 %v63
    %219 = vmatpush.msra.mxu0 %v61
    %220 = vmatmul.f32.gmra.mxu0 %v117
    %v221 = vpop.f32.mrf.mxu0
    %v222 = vadd.f32 %v202, %v221
    %223 = vdwg.mxu0
    %224 = vmatpush.msra.mxu0 0.0
    %225 = vmatpush.msra.mxu0 0.0
    %226 = vmatpush.msra.mxu0 0.0
    %227 = vmatpush.msra.mxu0 0.0
    %228 = vmatpush.msra.mxu0 0.0
    %229 = vmatpush.msra.mxu0 0.0
    %230 = vmatpush.msra.mxu0 0.0
    %231 = vmatpush.msra.mxu0 0.0
    %232 = vmatpush.msra.mxu0 %v107
    %233 = vmatpush.msra.mxu0 %v105
    %234 = vmatpush.msra.mxu0 %v103
    %235 = vmatpush.msra.mxu0 %v101
    %236 = vmatpush.msra.mxu0 %v99
    %237 = vmatpush.msra.mxu0 %v97
    %238 = vmatpush.msra.mxu0 %v95
    %239 = vmatpush.msra.mxu0 %v93
    %240 = vmatmul.f32.gmra.mxu0 %v122
    %v241 = vpop.f32.mrf.mxu0
    %v242 = vadd.f32 %v222, %v241
    %243 = vdwg.mxu0
    %v244 = vmax.f32 %v182, 0.0
    %v245 = vmax.f32 %v242, 0.0
    %v246 = vld [vmem:[%s3] sm:$0xff]
    %v247 = vld [vmem:[%s3 + $0x8] sm:$0xff]
    %v248 = vld [vmem:[%s3 + $0x10] sm:$0xff]
    %v249 = vld [vmem:[%s3 + $0x18] sm:$0xff]
    %v250 = vld [vmem:[%s3 + $0x20] sm:$0xff]
    %v251 = vld [vmem:[%s3 + $0x28] sm:$0xff]
    %v252 = vld [vmem:[%s3 + $0x30] sm:$0xff]
    %v253 = vld [vmem:[%s3 + $0x38] sm:$0xff]
    %v254 = vld [vmem:[%s3 + $0x40] sm:$0xff]
    %v255 = vld [vmem:[%s3 + $0x48] sm:$0xff]
    %v256 = vld [vmem:[%s3 + $0x50] sm:$0xff]
    %v257 = vld [vmem:[%s3 + $0x58] sm:$0xff]
    %v258 = vld [vmem:[%s3 + $0x60] sm:$0xff]
    %v259 = vld [vmem:[%s3 + $0x68] sm:$0xff]
    %v260 = vld [vmem:[%s3 + $0x70] sm:$0xff]
    %v261 = vld [vmem:[%s3 + $0x78] sm:$0xff]
    %v262 = vld [vmem:[%s3 + $0x80] sm:$0xff]
    %v263 = vld [vmem:[%s3 + $0x88] sm:$0xff]
    %v264 = vld [vmem:[%s3 + $0x90] sm:$0xff]
    %v265 = vld [vmem:[%s3 + $0x98] sm:$0xff]
    %v266 = vld [vmem:[%s4] sm:$0x1]
    %v268 = vperm.slane %v266, 0
    %vm270 = vcmask 261120
    %v272 = vsel %vm270, %v245, 0
    %274 = vmatpush.msra.mxu0 %v261
    %275 = vmatpush.msra.mxu0 %v260
    %276 = vmatpush.msra.mxu0 %v259
    %277 = vmatpush.msra.mxu0 %v258
    %278 = vmatpush.msra.mxu0 %v257
    %279 = vmatpush.msra.mxu0 %v256
    %280 = vmatpush.msra.mxu0 %v255
    %281 = vmatpush.msra.mxu0 %v254
    %282 = vmatpush.msra.mxu0 %v253
    %283 = vmatpush.msra.mxu0 %v252
    %284 = vmatpush.msra.mxu0 %v251
    %285 = vmatpush.msra.mxu0 %v250
    %286 = vmatpush.msra.mxu0 %v249
    %287 = vmatpush.msra.mxu0 %v248
    %288 = vmatpush.msra.mxu0 %v247
    %289 = vmatpush.msra.mxu0 %v246
    %290 = vmatmul.f32.gmra.mxu0 %v244
    %v291 = vpop.f32.mrf.mxu0
    %v292 = vadd.f32 %v268, %v291
    %293 = vdwg.mxu0
    %294 = vmatpush.msra.mxu0 0.0
    %295 = vmatpush.msra.mxu0 0.0
    %296 = vmatpush.msra.mxu0 0.0
    %297 = vmatpush.msra.mxu0 0.0
    %298 = vmatpush.msra.mxu0 0.0
    %299 = vmatpush.msra.mxu0 0.0
    %300 = vmatpush.msra.mxu0 0.0
    %301 = vmatpush.msra.mxu0 0.0
    %302 = vmatpush.msra.mxu0 0.0
    %303 = vmatpush.msra.mxu0 0.0
    %304 = vmatpush.msra.mxu0 0.0
    %305 = vmatpush.msra.mxu0 0.0
    %306 = vmatpush.msra.mxu0 %v265
    %307 = vmatpush.msra.mxu0 %v264
    %308 = vmatpush.msra.mxu0 %v263
    %309 = vmatpush.msra.mxu0 %v262
    %310 = vmatmul.f32.gmra.mxu0 %v272
    %v311 = vpop.f32.mrf.mxu0
    %v312 = vadd.f32 %v292, %v311
    %313 = vdwg.mxu0
    %v314 = vmax.f32 %v312, 0.0
    %v315 = vld [vmem:[%s5] sm:$0xff]
    %v316 = vld [vmem:[%s5 + $0x8] sm:$0xff]
    %v317 = vld [vmem:[%s5 + $0x10] sm:$0xff]
    %v318 = vld [vmem:[%s5 + $0x18] sm:$0xff]
    %v319 = vld [vmem:[%s5 + $0x20] sm:$0xff]
    %v320 = vld [vmem:[%s5 + $0x28] sm:$0xff]
    %v321 = vld [vmem:[%s5 + $0x30] sm:$0xff]
    %v322 = vld [vmem:[%s5 + $0x38] sm:$0xff]
    %v323 = vld [vmem:[%s5 + $0x40] sm:$0xff]
    %v324 = vld [vmem:[%s5 + $0x48] sm:$0xff]
    %v325 = vld [vmem:[%s6] sm:$0x1]
    %v327 = vperm.slane %v325, 0
    %vm329 = vcmask 654336
    %v331 = vsel %vm329, %v314, 0
    %333 = vmatpush.msra.mxu0 0.0
    %334 = vmatpush.msra.mxu0 0.0
    %335 = vmatpush.msra.mxu0 0.0
    %336 = vmatpush.msra.mxu0 0.0
    %337 = vmatpush.msra.mxu0 0.0
    %338 = vmatpush.msra.mxu0 0.0
    %339 = vmatpush.msra.mxu0 %v324
    %340 = vmatpush.msra.mxu0 %v323
    %341 = vmatpush.msra.mxu0 %v322
    %342 = vmatpush.msra.mxu0 %v321
    %343 = vmatpush.msra.mxu0 %v320
    %344 = vmatpush.msra.mxu0 %v319
    %345 = vmatpush.msra.mxu0 %v318
    %346 = vmatpush.msra.mxu0 %v317
    %347 = vmatpush.msra.mxu0 %v316
    %348 = vmatpush.msra.mxu0 %v315
    %349 = vmatmul.f32.gmra.mxu0 %v331
    %v350 = vpop.f32.mrf.mxu0
    %v351 = vadd.f32 %v327, %v350
    %352 = vdwg.mxu0
    %vm353 = vcmask 74752
    %354 = vst.msk [vmem:[#allocation2] sm:$0x3] %vm353, %v351
    // Predicated region
    $region30: #{net_forward.5} parent=1 // pred_check
      _
    $region31: #{net_forward.5} parent=1 // pred_check_branch
      %356 = sbr.rel (0) target = $region33
    $region32: #{net_forward.5} parent=1 // pred_region
      %358 = vsyncadd [#allocation3], 0
      %s360 = sshll.u32 [#allocation2], 4
      %s361 = int_to_ptr.vmem [resolvable:$true] %s360
      %s362 = sshll.u32 %s7, 4
      %s363 = int_to_ptr.hbm [resolvable:$true] %s362
      %365 = dma.vmem_to_hbm [thread:$0]  %s361, 32, %s363, [#allocation3]
    $region33: #{net_forward.5} parent=1 // pred_fallthru
      _
    // Predicated region
    $region34: #{net_forward.5} parent=1 // pred_check
      _
    $region35: #{net_forward.5} parent=1 // pred_check_branch
      %367 = sbr.rel (0) target = $region37
    $region36: #{net_forward.5} parent=1 // pred_region
      %369 = dma.done [#allocation3], 32
    $region37: #{net_forward.5} parent=1 // pred_fallthru
      _
    %370 = vsyncpa [#allocation3], 1

// kernel: net_forward.3
$region0: #{net_forward.3}
  #allocation0 [shape = 'u32[]', space=smem, size = 0x4, offset = 0x4, fixed_abs, tag = 'smem constant byte address 0x4 - core index']
  #allocation1 [shape = 'u32[72,128]{1,0:T(1,128)}', space=vmem, size = 0x9000, scoped, tag = 'internal scratch']
  %s0 = inlined_call_operand.vmem [shape: f32[2,4,14,14,1], index: 0, kind: input, shape index: {}]
  %s1 = inlined_call_operand.vmem [shape: f32[25,10], index: 1, kind: input, shape index: {}]
  %s2 = inlined_call_operand.vmem [shape: f32[1,10], index: 2, kind: input, shape index: {}]
  %s3 = inlined_call_operand.vmem [shape: f32[2,144,10], index: 3, kind: output, shape index: {}]
  %s4 = sld [smem:[#allocation0]]
  $region22: #{net_forward.3} parent=0
    _
  %s6 = ssub.s32 1, %s4
  %s7 = scalar_select 0, %s6, %s4
  // Predicated region
  $region2: #{net_forward.3} parent=0 // pred_check
    _
  $region3: #{net_forward.3} parent=0 // pred_check_branch
    %9 = sbr.rel (0) target = $region5
  $region4: #{net_forward.3} parent=0 // pred_region
    _
  $region5: #{net_forward.3} parent=0 // pred_fallthru
    _
  // Predicated region
  $region6: #{net_forward.3} parent=0 // pred_check
    _
  $region7: #{net_forward.3} parent=0 // pred_check_branch
    %11 = sbr.rel (0) target = $region9
  $region8: #{net_forward.3} parent=0 // pred_region
    _
  $region9: #{net_forward.3} parent=0 // pred_fallthru
    _
  // Predicated region
  $region10: #{net_forward.3} parent=0 // pred_check
    _
  $region11: #{net_forward.3} parent=0 // pred_check_branch
    %13 = sbr.rel (0) target = $region13
  $region12: #{net_forward.3} parent=0 // pred_region
    _
  $region13: #{net_forward.3} parent=0 // pred_fallthru
    _
  %v14 = vld [vmem:[%s1] sm:$0xff]
  %v15 = vld [vmem:[%s1 + $0x8] sm:$0xff]
  %v16 = vld [vmem:[%s1 + $0x10] sm:$0xff]
  %v17 = vld [vmem:[%s1 + $0x18] sm:$0x1]
  %v18 = vld [vmem:[%s2] sm:$0x1]
  %v19 = vld [vmem:[%s0] sm:$0xff]
  %v20 = vld [vmem:[%s0 + $0x8] sm:$0xf]
  %v21 = vld [vmem:[%s0 + $0x10] sm:$0xff]
  %v22 = vld [vmem:[%s0 + $0x18] sm:$0xf]
  %v23 = vld [vmem:[%s0 + $0x20] sm:$0xff]
  %v24 = vld [vmem:[%s0 + $0x28] sm:$0xf]
  %v25 = vld [vmem:[%s0 + $0x30] sm:$0xff]
  %v26 = vld [vmem:[%s0 + $0x38] sm:$0xf]
  %v27 = vld [vmem:[%s0 + $0x40] sm:$0xff]
  %v28 = vld [vmem:[%s0 + $0x48] sm:$0xf]
  %v29 = vld [vmem:[%s0 + $0x50] sm:$0xff]
  %v30 = vld [vmem:[%s0 + $0x58] sm:$0xf]
  %v31 = vld [vmem:[%s0 + $0x60] sm:$0xff]
  %v32 = vld [vmem:[%s0 + $0x68] sm:$0xf]
  %v33 = vld [vmem:[%s0 + $0x70] sm:$0xff]
  %v34 = vld [vmem:[%s0 + $0x78] sm:$0xf]
  %v35 = vld [vmem:[%s0 + $0x80] sm:$0xff]
  %v36 = vld [vmem:[%s0 + $0x88] sm:$0xf]
  %v37 = vld [vmem:[%s0 + $0x90] sm:$0xff]
  %v38 = vld [vmem:[%s0 + $0x98] sm:$0xf]
  %v39 = vld [vmem:[%s0 + $0xa0] sm:$0xff]
  %v40 = vld [vmem:[%s0 + $0xa8] sm:$0xf]
  %v41 = vld [vmem:[%s0 + $0xb0] sm:$0xff]
  %v42 = vld [vmem:[%s0 + $0xb8] sm:$0xf]
  %v43 = vld [vmem:[%s0 + $0xc0] sm:$0xff]
  %v44 = vld [vmem:[%s0 + $0xc8] sm:$0xf]
  %v45 = vld [vmem:[%s0 + $0xd0] sm:$0xff]
  %v46 = vld [vmem:[%s0 + $0xd8] sm:$0xf]
  %s47 = scalar_lea.vmem %s0, 224
  %v48 = vld [vmem:[%s47] sm:$0xff]
  %v49 = vld [vmem:[%s47 + $0x8] sm:$0xf]
  %v50 = vld [vmem:[%s47 + $0x10] sm:$0xff]
  %v51 = vld [vmem:[%s47 + $0x18] sm:$0xf]
  %v52 = vld [vmem:[%s47 + $0x20] sm:$0xff]
  %v53 = vld [vmem:[%s47 + $0x28] sm:$0xf]
  %v54 = vld [vmem:[%s47 + $0x30] sm:$0xff]
  %v55 = vld [vmem:[%s47 + $0x38] sm:$0xf]
  %v56 = vld [vmem:[%s47 + $0x40] sm:$0xff]
  %v57 = vld [vmem:[%s47 + $0x48] sm:$0xf]
  %v58 = vld [vmem:[%s47 + $0x50] sm:$0xff]
  %v59 = vld [vmem:[%s47 + $0x58] sm:$0xf]
  %v60 = vld [vmem:[%s47 + $0x60] sm:$0xff]
  %v61 = vld [vmem:[%s47 + $0x68] sm:$0xf]
  %v62 = vld [vmem:[%s47 + $0x70] sm:$0xff]
  %v63 = vld [vmem:[%s47 + $0x78] sm:$0xf]
  %v64 = vld [vmem:[%s47 + $0x80] sm:$0xff]
  %v65 = vld [vmem:[%s47 + $0x88] sm:$0xf]
  %v66 = vld [vmem:[%s47 + $0x90] sm:$0xff]
  %v67 = vld [vmem:[%s47 + $0x98] sm:$0xf]
  %v68 = vld [vmem:[%s47 + $0xa0] sm:$0xff]
  %v69 = vld [vmem:[%s47 + $0xa8] sm:$0xf]
  %v70 = vld [vmem:[%s47 + $0xb0] sm:$0xff]
  %v71 = vld [vmem:[%s47 + $0xb8] sm:$0xf]
  %v72 = vld [vmem:[%s47 + $0xc0] sm:$0xff]
  %v73 = vld [vmem:[%s47 + $0xc8] sm:$0xf]
  %v74 = vld [vmem:[%s47 + $0xd0] sm:$0xff]
  %v75 = vld [vmem:[%s47 + $0xd8] sm:$0xf]
  %v76 = vld [vmem:[%s0 + $0x1] sm:$0xff]
  %v77 = vld [vmem:[%s0 + $0x9] sm:$0xf]
  %v78 = vld [vmem:[%s0 + $0x11] sm:$0xff]
  %v79 = vld [vmem:[%s0 + $0x19] sm:$0xf]
  %v80 = vld [vmem:[%s0 + $0x21] sm:$0xff]
  %v81 = vld [vmem:[%s0 + $0x29] sm:$0xf]
  %v82 = vld [vmem:[%s0 + $0x31] sm:$0xff]
  %v83 = vld [vmem:[%s0 + $0x39] sm:$0xf]
  %v84 = vld [vmem:[%s0 + $0x41] sm:$0xff]
  %v85 = vld [vmem:[%s0 + $0x49] sm:$0xf]
  %v86 = vld [vmem:[%s0 + $0x51] sm:$0xff]
  %v87 = vld [vmem:[%s0 + $0x59] sm:$0xf]
  %v88 = vld [vmem:[%s0 + $0x61] sm:$0xff]
  %v89 = vld [vmem:[%s0 + $0x69] sm:$0xf]
  %v90 = vld [vmem:[%s0 + $0x71] sm:$0xff]
  %v91 = vld [vmem:[%s0 + $0x79] sm:$0xf]
  %v92 = vld [vmem:[%s0 + $0x81] sm:$0xff]
  %v93 = vld [vmem:[%s0 + $0x89] sm:$0xf]
  %v94 = vld [vmem:[%s0 + $0x91] sm:$0xff]
  %v95 = vld [vmem:[%s0 + $0x99] sm:$0xf]
  %v96 = vld [vmem:[%s0 + $0xa1] sm:$0xff]
  %v97 = vld [vmem:[%s0 + $0xa9] sm:$0xf]
  %v98 = vld [vmem:[%s0 + $0xb1] sm:$0xff]
  %v99 = vld [vmem:[%s0 + $0xb9] sm:$0xf]
  %v100 = vld [vmem:[%s0 + $0xc1] sm:$0xff]
  %v101 = vld [vmem:[%s0 + $0xc9] sm:$0xf]
  %v102 = vld [vmem:[%s0 + $0xd1] sm:$0xff]
  %v103 = vld [vmem:[%s0 + $0xd9] sm:$0xf]
  %v104 = vld [vmem:[%s47 + $0x1] sm:$0xff]
  %v105 = vld [vmem:[%s47 + $0x9] sm:$0xf]
  %v106 = vld [vmem:[%s47 + $0x11] sm:$0xff]
  %v107 = vld [vmem:[%s47 + $0x19] sm:$0xf]
  %v108 = vld [vmem:[%s47 + $0x21] sm:$0xff]
  %v109 = vld [vmem:[%s47 + $0x29] sm:$0xf]
  %v110 = vld [vmem:[%s47 + $0x31] sm:$0xff]
  %v111 = vld [vmem:[%s47 + $0x39] sm:$0xf]
  %v112 = vld [vmem:[%s47 + $0x41] sm:$0xff]
  %v113 = vld [vmem:[%s47 + $0x49] sm:$0xf]
  %v114 = vld [vmem:[%s47 + $0x51] sm:$0xff]
  %v115 = vld [vmem:[%s47 + $0x59] sm:$0xf]
  %v116 = vld [vmem:[%s47 + $0x61] sm:$0xff]
  %v117 = vld [vmem:[%s47 + $0x69] sm:$0xf]
  %v118 = vld [vmem:[%s47 + $0x71] sm:$0xff]
  %v119 = vld [vmem:[%s47 + $0x79] sm:$0xf]
  %v120 = vld [vmem:[%s47 + $0x81] sm:$0xff]
  %v121 = vld [vmem:[%s47 + $0x89] sm:$0xf]
  %v122 = vld [vmem:[%s47 + $0x91] sm:$0xff]
  %v123 = vld [vmem:[%s47 + $0x99] sm:$0xf]
  %v124 = vld [vmem:[%s47 + $0xa1] sm:$0xff]
  %v125 = vld [vmem:[%s47 + $0xa9] sm:$0xf]
  %v126 = vld [vmem:[%s47 + $0xb1] sm:$0xff]
  %v127 = vld [vmem:[%s47 + $0xb9] sm:$0xf]
  %v128 = vld [vmem:[%s47 + $0xc1] sm:$0xff]
  %v129 = vld [vmem:[%s47 + $0xc9] sm:$0xf]
  %v130 = vld [vmem:[%s47 + $0xd1] sm:$0xff]
  %v131 = vld [vmem:[%s47 + $0xd9] sm:$0xf]
  %v132 = vld [vmem:[%s0 + $0x2] sm:$0xff]
  %v133 = vld [vmem:[%s0 + $0xa] sm:$0xf]
  %v134 = vld [vmem:[%s0 + $0x12] sm:$0xff]
  %v135 = vld [vmem:[%s0 + $0x1a] sm:$0xf]
  %v136 = vld [vmem:[%s0 + $0x22] sm:$0xff]
  %v137 = vld [vmem:[%s0 + $0x2a] sm:$0xf]
  %v138 = vld [vmem:[%s0 + $0x32] sm:$0xff]
  %v139 = vld [vmem:[%s0 + $0x3a] sm:$0xf]
  %v140 = vld [vmem:[%s0 + $0x42] sm:$0xff]
  %v141 = vld [vmem:[%s0 + $0x4a] sm:$0xf]
  %v142 = vld [vmem:[%s0 + $0x52] sm:$0xff]
  %v143 = vld [vmem:[%s0 + $0x5a] sm:$0xf]
  %v144 = vld [vmem:[%s0 + $0x62] sm:$0xff]
  %v145 = vld [vmem:[%s0 + $0x6a] sm:$0xf]
  %v146 = vld [vmem:[%s0 + $0x72] sm:$0xff]
  %v147 = vld [vmem:[%s0 + $0x7a] sm:$0xf]
  %v148 = vld [vmem:[%s0 + $0x82] sm:$0xff]
  %v149 = vld [vmem:[%s0 + $0x8a] sm:$0xf]
  %v150 = vld [vmem:[%s0 + $0x92] sm:$0xff]
  %v151 = vld [vmem:[%s0 + $0x9a] sm:$0xf]
  %v152 = vld [vmem:[%s0 + $0xa2] sm:$0xff]
  %v153 = vld [vmem:[%s0 + $0xaa] sm:$0xf]
  %v154 = vld [vmem:[%s0 + $0xb2] sm:$0xff]
  %v155 = vld [vmem:[%s0 + $0xba] sm:$0xf]
  %v156 = vld [vmem:[%s0 + $0xc2] sm:$0xff]
  %v157 = vld [vmem:[%s0 + $0xca] sm:$0xf]
  %v158 = vld [vmem:[%s0 + $0xd2] sm:$0xff]
  %v159 = vld [vmem:[%s0 + $0xda] sm:$0xf]
  %188 = vrot.lane.b32.xlu0 %v48, 1
  %v189 = vpop.permute.xlu0 %188
  %190 = vrot.lane.b32.xlu0 %v49, 1
  %v191 = vpop.permute.xlu0 %190
  %192 = vrot.lane.b32.xlu0 %v50, 1
  %v193 = vpop.permute.xlu0 %192
  %194 = vrot.lane.b32.xlu0 %v51, 1
  %v195 = vpop.permute.xlu0 %194
  %196 = vrot.lane.b32.xlu0 %v52, 1
  %v197 = vpop.permute.xlu0 %196
  %198 = vrot.lane.b32.xlu0 %v53, 1
  %v199 = vpop.permute.xlu0 %198
  %200 = vrot.lane.b32.xlu0 %v54, 1
  %v201 = vpop.permute.xlu0 %200
  %202 = vrot.lane.b32.xlu0 %v55, 1
  %v203 = vpop.permute.xlu0 %202
  %204 = vrot.lane.b32.xlu0 %v56, 1
  %v205 = vpop.permute.xlu0 %204
  %206 = vrot.lane.b32.xlu0 %v57, 1
  %v207 = vpop.permute.xlu0 %206
  %208 = vrot.lane.b32.xlu0 %v58, 1
  %v209 = vpop.permute.xlu0 %208
  %210 = vrot.lane.b32.xlu0 %v59, 1
  %v211 = vpop.permute.xlu0 %210
  %212 = vrot.lane.b32.xlu0 %v60, 1
  %v213 = vpop.permute.xlu0 %212
  %214 = vrot.lane.b32.xlu0 %v61, 1
  %v215 = vpop.permute.xlu0 %214
  %216 = vrot.lane.b32.xlu0 %v62, 1
  %v217 = vpop.permute.xlu0 %216
  %218 = vrot.lane.b32.xlu0 %v63, 1
  %v219 = vpop.permute.xlu0 %218
  %220 = vrot.lane.b32.xlu0 %v64, 1
  %v221 = vpop.permute.xlu0 %220
  %222 = vrot.lane.b32.xlu0 %v65, 1
  %v223 = vpop.permute.xlu0 %222
  %224 = vrot.lane.b32.xlu0 %v66, 1
  %v225 = vpop.permute.xlu0 %224
  %226 = vrot.lane.b32.xlu0 %v67, 1
  %v227 = vpop.permute.xlu0 %226
  %228 = vrot.lane.b32.xlu0 %v68, 1
  %v229 = vpop.permute.xlu0 %228
  %230 = vrot.lane.b32.xlu0 %v69, 1
  %v231 = vpop.permute.xlu0 %230
  %232 = vrot.lane.b32.xlu0 %v70, 1
  %v233 = vpop.permute.xlu0 %232
  %234 = vrot.lane.b32.xlu0 %v71, 1
  %v235 = vpop.permute.xlu0 %234
  %236 = vrot.lane.b32.xlu0 %v72, 1
  %v237 = vpop.permute.xlu0 %236
  %238 = vrot.lane.b32.xlu0 %v73, 1
  %v239 = vpop.permute.xlu0 %238
  %240 = vrot.lane.b32.xlu0 %v74, 1
  %v241 = vpop.permute.xlu0 %240
  %242 = vrot.lane.b32.xlu0 %v75, 1
  %v243 = vpop.permute.xlu0 %242
  %300 = vrot.lane.b32.xlu0 %v76, 2
  %v301 = vpop.permute.xlu0 %300
  %302 = vrot.lane.b32.xlu0 %v77, 2
  %v303 = vpop.permute.xlu0 %302
  %304 = vrot.lane.b32.xlu0 %v78, 2
  %v305 = vpop.permute.xlu0 %304
  %306 = vrot.lane.b32.xlu0 %v79, 2
  %v307 = vpop.permute.xlu0 %306
  %308 = vrot.lane.b32.xlu0 %v80, 2
  %v309 = vpop.permute.xlu0 %308
  %310 = vrot.lane.b32.xlu0 %v81, 2
  %v311 = vpop.permute.xlu0 %310
  %312 = vrot.lane.b32.xlu0 %v82, 2
  %v313 = vpop.permute.xlu0 %312
  %314 = vrot.lane.b32.xlu0 %v83, 2
  %v315 = vpop.permute.xlu0 %314
  %316 = vrot.lane.b32.xlu0 %v84, 2
  %v317 = vpop.permute.xlu0 %316
  %318 = vrot.lane.b32.xlu0 %v85, 2
  %v319 = vpop.permute.xlu0 %318
  %320 = vrot.lane.b32.xlu0 %v86, 2
  %v321 = vpop.permute.xlu0 %320
  %322 = vrot.lane.b32.xlu0 %v87, 2
  %v323 = vpop.permute.xlu0 %322
  %324 = vrot.lane.b32.xlu0 %v88, 2
  %v325 = vpop.permute.xlu0 %324
  %326 = vrot.lane.b32.xlu0 %v89, 2
  %v327 = vpop.permute.xlu0 %326
  %328 = vrot.lane.b32.xlu0 %v90, 2
  %v329 = vpop.permute.xlu0 %328
  %330 = vrot.lane.b32.xlu0 %v91, 2
  %v331 = vpop.permute.xlu0 %330
  %332 = vrot.lane.b32.xlu0 %v92, 2
  %v333 = vpop.permute.xlu0 %332
  %334 = vrot.lane.b32.xlu0 %v93, 2
  %v335 = vpop.permute.xlu0 %334
  %336 = vrot.lane.b32.xlu0 %v94, 2
  %v337 = vpop.permute.xlu0 %336
  %338 = vrot.lane.b32.xlu0 %v95, 2
  %v339 = vpop.permute.xlu0 %338
  %340 = vrot.lane.b32.xlu0 %v96, 2
  %v341 = vpop.permute.xlu0 %340
  %342 = vrot.lane.b32.xlu0 %v97, 2
  %v343 = vpop.permute.xlu0 %342
  %344 = vrot.lane.b32.xlu0 %v98, 2
  %v345 = vpop.permute.xlu0 %344
  %346 = vrot.lane.b32.xlu0 %v99, 2
  %v347 = vpop.permute.xlu0 %346
  %348 = vrot.lane.b32.xlu0 %v100, 2
  %v349 = vpop.permute.xlu0 %348
  %350 = vrot.lane.b32.xlu0 %v101, 2
  %v351 = vpop.permute.xlu0 %350
  %352 = vrot.lane.b32.xlu0 %v102, 2
  %v353 = vpop.permute.xlu0 %352
  %354 = vrot.lane.b32.xlu0 %v103, 2
  %v355 = vpop.permute.xlu0 %354
  %412 = vrot.lane.b32.xlu0 %v104, 3
  %v413 = vpop.permute.xlu0 %412
  %414 = vrot.lane.b32.xlu0 %v105, 3
  %v415 = vpop.permute.xlu0 %414
  %416 = vrot.lane.b32.xlu0 %v106, 3
  %v417 = vpop.permute.xlu0 %416
  %418 = vrot.lane.b32.xlu0 %v107, 3
  %v419 = vpop.permute.xlu0 %418
  %420 = vrot.lane.b32.xlu0 %v108, 3
  %v421 = vpop.permute.xlu0 %420
  %422 = vrot.lane.b32.xlu0 %v109, 3
  %v423 = vpop.permute.xlu0 %422
  %424 = vrot.lane.b32.xlu0 %v110, 3
  %v425 = vpop.permute.xlu0 %424
  %426 = vrot.lane.b32.xlu0 %v111, 3
  %v427 = vpop.permute.xlu0 %426
  %428 = vrot.lane.b32.xlu0 %v112, 3
  %v429 = vpop.permute.xlu0 %428
  %430 = vrot.lane.b32.xlu0 %v113, 3
  %v431 = vpop.permute.xlu0 %430
  %432 = vrot.lane.b32.xlu0 %v114, 3
  %v433 = vpop.permute.xlu0 %432
  %434 = vrot.lane.b32.xlu0 %v115, 3
  %v435 = vpop.permute.xlu0 %434
  %436 = vrot.lane.b32.xlu0 %v116, 3
  %v437 = vpop.permute.xlu0 %436
  %438 = vrot.lane.b32.xlu0 %v117, 3
  %v439 = vpop.permute.xlu0 %438
  %440 = vrot.lane.b32.xlu0 %v118, 3
  %v441 = vpop.permute.xlu0 %440
  %442 = vrot.lane.b32.xlu0 %v119, 3
  %v443 = vpop.permute.xlu0 %442
  %444 = vrot.lane.b32.xlu0 %v120, 3
  %v445 = vpop.permute.xlu0 %444
  %446 = vrot.lane.b32.xlu0 %v121, 3
  %v447 = vpop.permute.xlu0 %446
  %448 = vrot.lane.b32.xlu0 %v122, 3
  %v449 = vpop.permute.xlu0 %448
  %450 = vrot.lane.b32.xlu0 %v123, 3
  %v451 = vpop.permute.xlu0 %450
  %452 = vrot.lane.b32.xlu0 %v124, 3
  %v453 = vpop.permute.xlu0 %452
  %454 = vrot.lane.b32.xlu0 %v125, 3
  %v455 = vpop.permute.xlu0 %454
  %456 = vrot.lane.b32.xlu0 %v126, 3
  %v457 = vpop.permute.xlu0 %456
  %458 = vrot.lane.b32.xlu0 %v127, 3
  %v459 = vpop.permute.xlu0 %458
  %460 = vrot.lane.b32.xlu0 %v128, 3
  %v461 = vpop.permute.xlu0 %460
  %462 = vrot.lane.b32.xlu0 %v129, 3
  %v463 = vpop.permute.xlu0 %462
  %464 = vrot.lane.b32.xlu0 %v130, 3
  %v465 = vpop.permute.xlu0 %464
  %466 = vrot.lane.b32.xlu0 %v131, 3
  %v467 = vpop.permute.xlu0 %466
  %524 = vrot.lane.b32.xlu0 %v132, 4
  %v525 = vpop.permute.xlu0 %524
  %526 = vrot.lane.b32.xlu0 %v133, 4
  %v527 = vpop.permute.xlu0 %526
  %528 = vrot.lane.b32.xlu0 %v134, 4
  %v529 = vpop.permute.xlu0 %528
  %530 = vrot.lane.b32.xlu0 %v135, 4
  %v531 = vpop.permute.xlu0 %530
  %532 = vrot.lane.b32.xlu0 %v136, 4
  %v533 = vpop.permute.xlu0 %532
  %534 = vrot.lane.b32.xlu0 %v137, 4
  %v535 = vpop.permute.xlu0 %534
  %536 = vrot.lane.b32.xlu0 %v138, 4
  %v537 = vpop.permute.xlu0 %536
  %538 = vrot.lane.b32.xlu0 %v139, 4
  %v539 = vpop.permute.xlu0 %538
  %540 = vrot.lane.b32.xlu0 %v140, 4
  %v541 = vpop.permute.xlu0 %540
  %542 = vrot.lane.b32.xlu0 %v141, 4
  %v543 = vpop.permute.xlu0 %542
  %544 = vrot.lane.b32.xlu0 %v142, 4
  %v545 = vpop.permute.xlu0 %544
  %546 = vrot.lane.b32.xlu0 %v143, 4
  %v547 = vpop.permute.xlu0 %546
  %548 = vrot.lane.b32.xlu0 %v144, 4
  %v549 = vpop.permute.xlu0 %548
  %550 = vrot.lane.b32.xlu0 %v145, 4
  %v551 = vpop.permute.xlu0 %550
  %552 = vrot.lane.b32.xlu0 %v146, 4
  %v553 = vpop.permute.xlu0 %552
  %554 = vrot.lane.b32.xlu0 %v147, 4
  %v555 = vpop.permute.xlu0 %554
  %556 = vrot.lane.b32.xlu0 %v148, 4
  %v557 = vpop.permute.xlu0 %556
  %558 = vrot.lane.b32.xlu0 %v149, 4
  %v559 = vpop.permute.xlu0 %558
  %560 = vrot.lane.b32.xlu0 %v150, 4
  %v561 = vpop.permute.xlu0 %560
  %562 = vrot.lane.b32.xlu0 %v151, 4
  %v563 = vpop.permute.xlu0 %562
  %564 = vrot.lane.b32.xlu0 %v152, 4
  %v565 = vpop.permute.xlu0 %564
  %566 = vrot.lane.b32.xlu0 %v153, 4
  %v567 = vpop.permute.xlu0 %566
  %568 = vrot.lane.b32.xlu0 %v154, 4
  %v569 = vpop.permute.xlu0 %568
  %570 = vrot.lane.b32.xlu0 %v155, 4
  %v571 = vpop.permute.xlu0 %570
  %572 = vrot.lane.b32.xlu0 %v156, 4
  %v573 = vpop.permute.xlu0 %572
  %574 = vrot.lane.b32.xlu0 %v157, 4
  %v575 = vpop.permute.xlu0 %574
  %576 = vrot.lane.b32.xlu0 %v158, 4
  %v577 = vpop.permute.xlu0 %576
  %578 = vrot.lane.b32.xlu0 %v159, 4
  %v579 = vpop.permute.xlu0 %578
  %vm608 = vcmask 7168
  %v609 = vsel %vm608, %v19, %v189
  %v610 = vsel %vm608, %v20, %v191
  %v611 = vsel %vm608, %v21, %v193
  %v612 = vsel %vm608, %v22, %v195
  %v613 = vsel %vm608, %v23, %v197
  %v614 = vsel %vm608, %v24, %v199
  %v615 = vsel %vm608, %v25, %v201
  %v616 = vsel %vm608, %v26, %v203
  %v617 = vsel %vm608, %v27, %v205
  %v618 = vsel %vm608, %v28, %v207
  %v619 = vsel %vm608, %v29, %v209
  %v620 = vsel %vm608, %v30, %v211
  %v621 = vsel %vm608, %v31, %v213
  %v622 = vsel %vm608, %v32, %v215
  %v623 = vsel %vm608, %v33, %v217
  %v624 = vsel %vm608, %v34, %v219
  %v625 = vsel %vm608, %v35, %v221
  %v626 = vsel %vm608, %v36, %v223
  %v627 = vsel %vm608, %v37, %v225
  %v628 = vsel %vm608, %v38, %v227
  %v629 = vsel %vm608, %v39, %v229
  %v630 = vsel %vm608, %v40, %v231
  %v631 = vsel %vm608, %v41, %v233
  %v632 = vsel %vm608, %v42, %v235
  %v633 = vsel %vm608, %v43, %v237
  %v634 = vsel %vm608, %v44, %v239
  %v635 = vsel %vm608, %v45, %v241
  %v636 = vsel %vm608, %v46, %v243
  %vm637 = vcmask 15360
  %v638 = vsel %vm637, %v609, %v301
  %v639 = vsel %vm637, %v610, %v303
  %v640 = vsel %vm637, %v611, %v305
  %v641 = vsel %vm637, %v612, %v307
  %v642 = vsel %vm637, %v613, %v309
  %v643 = vsel %vm637, %v614, %v311
  %v644 = vsel %vm637, %v615, %v313
  %v645 = vsel %vm637, %v616, %v315
  %v646 = vsel %vm637, %v617, %v317
  %v647 = vsel %vm637, %v618, %v319
  %v648 = vsel %vm637, %v619, %v321
  %v649 = vsel %vm637, %v620, %v323
  %v650 = vsel %vm637, %v621, %v325
  %v651 = vsel %vm637, %v622, %v327
  %v652 = vsel %vm637, %v623, %v329
  %v653 = vsel %vm637, %v624, %v331
  %v654 = vsel %vm637, %v625, %v333
  %v655 = vsel %vm637, %v626, %v335
  %v656 = vsel %vm637, %v627, %v337
  %v657 = vsel %vm637, %v628, %v339
  %v658 = vsel %vm637, %v629, %v341
  %v659 = vsel %vm637, %v630, %v343
  %v660 = vsel %vm637, %v631, %v345
  %v661 = vsel %vm637, %v632, %v347
  %v662 = vsel %vm637, %v633, %v349
  %v663 = vsel %vm637, %v634, %v351
  %v664 = vsel %vm637, %v635, %v353
  %v665 = vsel %vm637, %v636, %v355
  %vm666 = vcmask 23552
  %v667 = vsel %vm666, %v638, %v413
  %v668 = vsel %vm666, %v639, %v415
  %v669 = vsel %vm666, %v640, %v417
  %v670 = vsel %vm666, %v641, %v419
  %v671 = vsel %vm666, %v642, %v421
  %v672 = vsel %vm666, %v643, %v423
  %v673 = vsel %vm666, %v644, %v425
  %v674 = vsel %vm666, %v645, %v427
  %v675 = vsel %vm666, %v646, %v429
  %v676 = vsel %vm666, %v647, %v431
  %v677 = vsel %vm666, %v648, %v433
  %v678 = vsel %vm666, %v649, %v435
  %v679 = vsel %vm666, %v650, %v437
  %v680 = vsel %vm666, %v651, %v439
  %v681 = vsel %vm666, %v652, %v441
  %v682 = vsel %vm666, %v653, %v443
  %v683 = vsel %vm666, %v654, %v445
  %v684 = vsel %vm666, %v655, %v447
  %v685 = vsel %vm666, %v656, %v449
  %v686 = vsel %vm666, %v657, %v451
  %v687 = vsel %vm666, %v658, %v453
  %v688 = vsel %vm666, %v659, %v455
  %v689 = vsel %vm666, %v660, %v457
  %v690 = vsel %vm666, %v661, %v459
  %v691 = vsel %vm666, %v662, %v461
  %v692 = vsel %vm666, %v663, %v463
  %v693 = vsel %vm666, %v664, %v465
  %v694 = vsel %vm666, %v665, %v467
  %vm695 = vcmask 31744
  %v696 = vsel %vm695, %v667, %v525
  %v697 = vsel %vm695, %v668, %v527
  %v698 = vsel %vm695, %v669, %v529
  %v699 = vsel %vm695, %v670, %v531
  %v700 = vsel %vm695, %v671, %v533
  %v701 = vsel %vm695, %v672, %v535
  %v702 = vsel %vm695, %v673, %v537
  %v703 = vsel %vm695, %v674, %v539
  %v704 = vsel %vm695, %v675, %v541
  %v705 = vsel %vm695, %v676, %v543
  %v706 = vsel %vm695, %v677, %v545
  %v707 = vsel %vm695, %v678, %v547
  %v708 = vsel %vm695, %v679, %v549
  %v709 = vsel %vm695, %v680, %v551
  %v710 = vsel %vm695, %v681, %v553
  %v711 = vsel %vm695, %v682, %v555
  %v712 = vsel %vm695, %v683, %v557
  %v713 = vsel %vm695, %v684, %v559
  %v714 = vsel %vm695, %v685, %v561
  %v715 = vsel %vm695, %v686, %v563
  %v716 = vsel %vm695, %v687, %v565
  %v717 = vsel %vm695, %v688, %v567
  %v718 = vsel %vm695, %v689, %v569
  %v719 = vsel %vm695, %v690, %v571
  %v720 = vsel %vm695, %v691, %v573
  %v721 = vsel %vm695, %v692, %v575
  %v722 = vsel %vm695, %v693, %v577
  %v723 = vsel %vm695, %v694, %v579
  %s724 = scalar_lea.vmem %s0, 448
  %v725 = vld [vmem:[%s724] sm:$0xff]
  %v726 = vld [vmem:[%s724 + $0x8] sm:$0xf]
  %v727 = vld [vmem:[%s724 + $0x10] sm:$0xff]
  %v728 = vld [vmem:[%s724 + $0x18] sm:$0xf]
  %v729 = vld [vmem:[%s724 + $0x20] sm:$0xff]
  %v730 = vld [vmem:[%s724 + $0x28] sm:$0xf]
  %v731 = vld [vmem:[%s724 + $0x30] sm:$0xff]
  %v732 = vld [vmem:[%s724 + $0x38] sm:$0xf]
  %v733 = vld [vmem:[%s724 + $0x40] sm:$0xff]
  %v734 = vld [vmem:[%s724 + $0x48] sm:$0xf]
  %v735 = vld [vmem:[%s724 + $0x50] sm:$0xff]
  %v736 = vld [vmem:[%s724 + $0x58] sm:$0xf]
  %v737 = vld [vmem:[%s724 + $0x60] sm:$0xff]
  %v738 = vld [vmem:[%s724 + $0x68] sm:$0xf]
  %v739 = vld [vmem:[%s724 + $0x70] sm:$0xff]
  %v740 = vld [vmem:[%s724 + $0x78] sm:$0xf]
  %v741 = vld [vmem:[%s724 + $0x80] sm:$0xff]
  %v742 = vld [vmem:[%s724 + $0x88] sm:$0xf]
  %v743 = vld [vmem:[%s724 + $0x90] sm:$0xff]
  %v744 = vld [vmem:[%s724 + $0x98] sm:$0xf]
  %v745 = vld [vmem:[%s724 + $0xa0] sm:$0xff]
  %v746 = vld [vmem:[%s724 + $0xa8] sm:$0xf]
  %v747 = vld [vmem:[%s724 + $0xb0] sm:$0xff]
  %v748 = vld [vmem:[%s724 + $0xb8] sm:$0xf]
  %v749 = vld [vmem:[%s724 + $0xc0] sm:$0xff]
  %v750 = vld [vmem:[%s724 + $0xc8] sm:$0xf]
  %v751 = vld [vmem:[%s724 + $0xd0] sm:$0xff]
  %v752 = vld [vmem:[%s724 + $0xd8] sm:$0xf]
  %s753 = scalar_lea.vmem %s0, 672
  %v754 = vld [vmem:[%s753] sm:$0xff]
  %v755 = vld [vmem:[%s753 + $0x8] sm:$0xf]
  %v756 = vld [vmem:[%s753 + $0x10] sm:$0xff]
  %v757 = vld [vmem:[%s753 + $0x18] sm:$0xf]
  %v758 = vld [vmem:[%s753 + $0x20] sm:$0xff]
  %v759 = vld [vmem:[%s753 + $0x28] sm:$0xf]
  %v760 = vld [vmem:[%s753 + $0x30] sm:$0xff]
  %v761 = vld [vmem:[%s753 + $0x38] sm:$0xf]
  %v762 = vld [vmem:[%s753 + $0x40] sm:$0xff]
  %v763 = vld [vmem:[%s753 + $0x48] sm:$0xf]
  %v764 = vld [vmem:[%s753 + $0x50] sm:$0xff]
  %v765 = vld [vmem:[%s753 + $0x58] sm:$0xf]
  %v766 = vld [vmem:[%s753 + $0x60] sm:$0xff]
  %v767 = vld [vmem:[%s753 + $0x68] sm:$0xf]
  %v768 = vld [vmem:[%s753 + $0x70] sm:$0xff]
  %v769 = vld [vmem:[%s753 + $0x78] sm:$0xf]
  %v770 = vld [vmem:[%s753 + $0x80] sm:$0xff]
  %v771 = vld [vmem:[%s753 + $0x88] sm:$0xf]
  %v772 = vld [vmem:[%s753 + $0x90] sm:$0xff]
  %v773 = vld [vmem:[%s753 + $0x98] sm:$0xf]
  %v774 = vld [vmem:[%s753 + $0xa0] sm:$0xff]
  %v775 = vld [vmem:[%s753 + $0xa8] sm:$0xf]
  %v776 = vld [vmem:[%s753 + $0xb0] sm:$0xff]
  %v777 = vld [vmem:[%s753 + $0xb8] sm:$0xf]
  %v778 = vld [vmem:[%s753 + $0xc0] sm:$0xff]
  %v779 = vld [vmem:[%s753 + $0xc8] sm:$0xf]
  %v780 = vld [vmem:[%s753 + $0xd0] sm:$0xff]
  %v781 = vld [vmem:[%s753 + $0xd8] sm:$0xf]
  %v782 = vld [vmem:[%s724 + $0x1] sm:$0xff]
  %v783 = vld [vmem:[%s724 + $0x9] sm:$0xf]
  %v784 = vld [vmem:[%s724 + $0x11] sm:$0xff]
  %v785 = vld [vmem:[%s724 + $0x19] sm:$0xf]
  %v786 = vld [vmem:[%s724 + $0x21] sm:$0xff]
  %v787 = vld [vmem:[%s724 + $0x29] sm:$0xf]
  %v788 = vld [vmem:[%s724 + $0x31] sm:$0xff]
  %v789 = vld [vmem:[%s724 + $0x39] sm:$0xf]
  %v790 = vld [vmem:[%s724 + $0x41] sm:$0xff]
  %v791 = vld [vmem:[%s724 + $0x49] sm:$0xf]
  %v792 = vld [vmem:[%s724 + $0x51] sm:$0xff]
  %v793 = vld [vmem:[%s724 + $0x59] sm:$0xf]
  %v794 = vld [vmem:[%s724 + $0x61] sm:$0xff]
  %v795 = vld [vmem:[%s724 + $0x69] sm:$0xf]
  %v796 = vld [vmem:[%s724 + $0x71] sm:$0xff]
  %v797 = vld [vmem:[%s724 + $0x79] sm:$0xf]
  %v798 = vld [vmem:[%s724 + $0x81] sm:$0xff]
  %v799 = vld [vmem:[%s724 + $0x89] sm:$0xf]
  %v800 = vld [vmem:[%s724 + $0x91] sm:$0xff]
  %v801 = vld [vmem:[%s724 + $0x99] sm:$0xf]
  %v802 = vld [vmem:[%s724 + $0xa1] sm:$0xff]
  %v803 = vld [vmem:[%s724 + $0xa9] sm:$0xf]
  %v804 = vld [vmem:[%s724 + $0xb1] sm:$0xff]
  %v805 = vld [vmem:[%s724 + $0xb9] sm:$0xf]
  %v806 = vld [vmem:[%s724 + $0xc1] sm:$0xff]
  %v807 = vld [vmem:[%s724 + $0xc9] sm:$0xf]
  %v808 = vld [vmem:[%s724 + $0xd1] sm:$0xff]
  %v809 = vld [vmem:[%s724 + $0xd9] sm:$0xf]
  %v810 = vld [vmem:[%s753 + $0x1] sm:$0xff]
  %v811 = vld [vmem:[%s753 + $0x9] sm:$0xf]
  %v812 = vld [vmem:[%s753 + $0x11] sm:$0xff]
  %v813 = vld [vmem:[%s753 + $0x19] sm:$0xf]
  %v814 = vld [vmem:[%s753 + $0x21] sm:$0xff]
  %v815 = vld [vmem:[%s753 + $0x29] sm:$0xf]
  %v816 = vld [vmem:[%s753 + $0x31] sm:$0xff]
  %v817 = vld [vmem:[%s753 + $0x39] sm:$0xf]
  %v818 = vld [vmem:[%s753 + $0x41] sm:$0xff]
  %v819 = vld [vmem:[%s753 + $0x49] sm:$0xf]
  %v820 = vld [vmem:[%s753 + $0x51] sm:$0xff]
  %v821 = vld [vmem:[%s753 + $0x59] sm:$0xf]
  %v822 = vld [vmem:[%s753 + $0x61] sm:$0xff]
  %v823 = vld [vmem:[%s753 + $0x69] sm:$0xf]
  %v824 = vld [vmem:[%s753 + $0x71] sm:$0xff]
  %v825 = vld [vmem:[%s753 + $0x79] sm:$0xf]
  %v826 = vld [vmem:[%s753 + $0x81] sm:$0xff]
  %v827 = vld [vmem:[%s753 + $0x89] sm:$0xf]
  %v828 = vld [vmem:[%s753 + $0x91] sm:$0xff]
  %v829 = vld [vmem:[%s753 + $0x99] sm:$0xf]
  %v830 = vld [vmem:[%s753 + $0xa1] sm:$0xff]
  %v831 = vld [vmem:[%s753 + $0xa9] sm:$0xf]
  %v832 = vld [vmem:[%s753 + $0xb1] sm:$0xff]
  %v833 = vld [vmem:[%s753 + $0xb9] sm:$0xf]
  %v834 = vld [vmem:[%s753 + $0xc1] sm:$0xff]
  %v835 = vld [vmem:[%s753 + $0xc9] sm:$0xf]
  %v836 = vld [vmem:[%s753 + $0xd1] sm:$0xff]
  %v837 = vld [vmem:[%s753 + $0xd9] sm:$0xf]
  %v838 = vld [vmem:[%s724 + $0x2] sm:$0xff]
  %v839 = vld [vmem:[%s724 + $0xa] sm:$0xf]
  %v840 = vld [vmem:[%s724 + $0x12] sm:$0xff]
  %v841 = vld [vmem:[%s724 + $0x1a] sm:$0xf]
  %v842 = vld [vmem:[%s724 + $0x22] sm:$0xff]
  %v843 = vld [vmem:[%s724 + $0x2a] sm:$0xf]
  %v844 = vld [vmem:[%s724 + $0x32] sm:$0xff]
  %v845 = vld [vmem:[%s724 + $0x3a] sm:$0xf]
  %v846 = vld [vmem:[%s724 + $0x42] sm:$0xff]
  %v847 = vld [vmem:[%s724 + $0x4a] sm:$0xf]
  %v848 = vld [vmem:[%s724 + $0x52] sm:$0xff]
  %v849 = vld [vmem:[%s724 + $0x5a] sm:$0xf]
  %v850 = vld [vmem:[%s724 + $0x62] sm:$0xff]
  %v851 = vld [vmem:[%s724 + $0x6a] sm:$0xf]
  %v852 = vld [vmem:[%s724 + $0x72] sm:$0xff]
  %v853 = vld [vmem:[%s724 + $0x7a] sm:$0xf]
  %v854 = vld [vmem:[%s724 + $0x82] sm:$0xff]
  %v855 = vld [vmem:[%s724 + $0x8a] sm:$0xf]
  %v856 = vld [vmem:[%s724 + $0x92] sm:$0xff]
  %v857 = vld [vmem:[%s724 + $0x9a] sm:$0xf]
  %v858 = vld [vmem:[%s724 + $0xa2] sm:$0xff]
  %v859 = vld [vmem:[%s724 + $0xaa] sm:$0xf]
  %v860 = vld [vmem:[%s724 + $0xb2] sm:$0xff]
  %v861 = vld [vmem:[%s724 + $0xba] sm:$0xf]
  %v862 = vld [vmem:[%s724 + $0xc2] sm:$0xff]
  %v863 = vld [vmem:[%s724 + $0xca] sm:$0xf]
  %v864 = vld [vmem:[%s724 + $0xd2] sm:$0xff]
  %v865 = vld [vmem:[%s724 + $0xda] sm:$0xf]
  %894 = vrot.lane.b32.xlu0 %v754, 1
  %v895 = vpop.permute.xlu0 %894
  %896 = vrot.lane.b32.xlu0 %v755, 1
  %v897 = vpop.permute.xlu0 %896
  %898 = vrot.lane.b32.xlu0 %v756, 1
  %v899 = vpop.permute.xlu0 %898
  %900 = vrot.lane.b32.xlu0 %v757, 1
  %v901 = vpop.permute.xlu0 %900
  %902 = vrot.lane.b32.xlu0 %v758, 1
  %v903 = vpop.permute.xlu0 %902
  %904 = vrot.lane.b32.xlu0 %v759, 1
  %v905 = vpop.permute.xlu0 %904
  %906 = vrot.lane.b32.xlu0 %v760, 1
  %v907 = vpop.permute.xlu0 %906
  %908 = vrot.lane.b32.xlu0 %v761, 1
  %v909 = vpop.permute.xlu0 %908
  %910 = vrot.lane.b32.xlu0 %v762, 1
  %v911 = vpop.permute.xlu0 %910
  %912 = vrot.lane.b32.xlu0 %v763, 1
  %v913 = vpop.permute.xlu0 %912
  %914 = vrot.lane.b32.xlu0 %v764, 1
  %v915 = vpop.permute.xlu0 %914
  %916 = vrot.lane.b32.xlu0 %v765, 1
  %v917 = vpop.permute.xlu0 %916
  %918 = vrot.lane.b32.xlu0 %v766, 1
  %v919 = vpop.permute.xlu0 %918
  %920 = vrot.lane.b32.xlu0 %v767, 1
  %v921 = vpop.permute.xlu0 %920
  %922 = vrot.lane.b32.xlu0 %v768, 1
  %v923 = vpop.permute.xlu0 %922
  %924 = vrot.lane.b32.xlu0 %v769, 1
  %v925 = vpop.permute.xlu0 %924
  %926 = vrot.lane.b32.xlu0 %v770, 1
  %v927 = vpop.permute.xlu0 %926
  %928 = vrot.lane.b32.xlu0 %v771, 1
  %v929 = vpop.permute.xlu0 %928
  %930 = vrot.lane.b32.xlu0 %v772, 1
  %v931 = vpop.permute.xlu0 %930
  %932 = vrot.lane.b32.xlu0 %v773, 1
  %v933 = vpop.permute.xlu0 %932
  %934 = vrot.lane.b32.xlu0 %v774, 1
  %v935 = vpop.permute.xlu0 %934
  %936 = vrot.lane.b32.xlu0 %v775, 1
  %v937 = vpop.permute.xlu0 %936
  %938 = vrot.lane.b32.xlu0 %v776, 1
  %v939 = vpop.permute.xlu0 %938
  %940 = vrot.lane.b32.xlu0 %v777, 1
  %v941 = vpop.permute.xlu0 %940
  %942 = vrot.lane.b32.xlu0 %v778, 1
  %v943 = vpop.permute.xlu0 %942
  %944 = vrot.lane.b32.xlu0 %v779, 1
  %v945 = vpop.permute.xlu0 %944
  %946 = vrot.lane.b32.xlu0 %v780, 1
  %v947 = vpop.permute.xlu0 %946
  %948 = vrot.lane.b32.xlu0 %v781, 1
  %v949 = vpop.permute.xlu0 %948
  %1006 = vrot.lane.b32.xlu0 %v782, 2
  %v1007 = vpop.permute.xlu0 %1006
  %1008 = vrot.lane.b32.xlu0 %v783, 2
  %v1009 = vpop.permute.xlu0 %1008
  %1010 = vrot.lane.b32.xlu0 %v784, 2
  %v1011 = vpop.permute.xlu0 %1010
  %1012 = vrot.lane.b32.xlu0 %v785, 2
  %v1013 = vpop.permute.xlu0 %1012
  %1014 = vrot.lane.b32.xlu0 %v786, 2
  %v1015 = vpop.permute.xlu0 %1014
  %1016 = vrot.lane.b32.xlu0 %v787, 2
  %v1017 = vpop.permute.xlu0 %1016
  %1018 = vrot.lane.b32.xlu0 %v788, 2
  %v1019 = vpop.permute.xlu0 %1018
  %1020 = vrot.lane.b32.xlu0 %v789, 2
  %v1021 = vpop.permute.xlu0 %1020
  %1022 = vrot.lane.b32.xlu0 %v790, 2
  %v1023 = vpop.permute.xlu0 %1022
  %1024 = vrot.lane.b32.xlu0 %v791, 2
  %v1025 = vpop.permute.xlu0 %1024
  %1026 = vrot.lane.b32.xlu0 %v792, 2
  %v1027 = vpop.permute.xlu0 %1026
  %1028 = vrot.lane.b32.xlu0 %v793, 2
  %v1029 = vpop.permute.xlu0 %1028
  %1030 = vrot.lane.b32.xlu0 %v794, 2
  %v1031 = vpop.permute.xlu0 %1030
  %1032 = vrot.lane.b32.xlu0 %v795, 2
  %v1033 = vpop.permute.xlu0 %1032
  %1034 = vrot.lane.b32.xlu0 %v796, 2
  %v1035 = vpop.permute.xlu0 %1034
  %1036 = vrot.lane.b32.xlu0 %v797, 2
  %v1037 = vpop.permute.xlu0 %1036
  %1038 = vrot.lane.b32.xlu0 %v798, 2
  %v1039 = vpop.permute.xlu0 %1038
  %1040 = vrot.lane.b32.xlu0 %v799, 2
  %v1041 = vpop.permute.xlu0 %1040
  %1042 = vrot.lane.b32.xlu0 %v800, 2
  %v1043 = vpop.permute.xlu0 %1042
  %1044 = vrot.lane.b32.xlu0 %v801, 2
  %v1045 = vpop.permute.xlu0 %1044
  %1046 = vrot.lane.b32.xlu0 %v802, 2
  %v1047 = vpop.permute.xlu0 %1046
  %1048 = vrot.lane.b32.xlu0 %v803, 2
  %v1049 = vpop.permute.xlu0 %1048
  %1050 = vrot.lane.b32.xlu0 %v804, 2
  %v1051 = vpop.permute.xlu0 %1050
  %1052 = vrot.lane.b32.xlu0 %v805, 2
  %v1053 = vpop.permute.xlu0 %1052
  %1054 = vrot.lane.b32.xlu0 %v806, 2
  %v1055 = vpop.permute.xlu0 %1054
  %1056 = vrot.lane.b32.xlu0 %v807, 2
  %v1057 = vpop.permute.xlu0 %1056
  %1058 = vrot.lane.b32.xlu0 %v808, 2
  %v1059 = vpop.permute.xlu0 %1058
  %1060 = vrot.lane.b32.xlu0 %v809, 2
  %v1061 = vpop.permute.xlu0 %1060
  %1118 = vrot.lane.b32.xlu0 %v810, 3
  %v1119 = vpop.permute.xlu0 %1118
  %1120 = vrot.lane.b32.xlu0 %v811, 3
  %v1121 = vpop.permute.xlu0 %1120
  %1122 = vrot.lane.b32.xlu0 %v812, 3
  %v1123 = vpop.permute.xlu0 %1122
  %1124 = vrot.lane.b32.xlu0 %v813, 3
  %v1125 = vpop.permute.xlu0 %1124
  %1126 = vrot.lane.b32.xlu0 %v814, 3
  %v1127 = vpop.permute.xlu0 %1126
  %1128 = vrot.lane.b32.xlu0 %v815, 3
  %v1129 = vpop.permute.xlu0 %1128
  %1130 = vrot.lane.b32.xlu0 %v816, 3
  %v1131 = vpop.permute.xlu0 %1130
  %1132 = vrot.lane.b32.xlu0 %v817, 3
  %v1133 = vpop.permute.xlu0 %1132
  %1134 = vrot.lane.b32.xlu0 %v818, 3
  %v1135 = vpop.permute.xlu0 %1134
  %1136 = vrot.lane.b32.xlu0 %v819, 3
  %v1137 = vpop.permute.xlu0 %1136
  %1138 = vrot.lane.b32.xlu0 %v820, 3
  %v1139 = vpop.permute.xlu0 %1138
  %1140 = vrot.lane.b32.xlu0 %v821, 3
  %v1141 = vpop.permute.xlu0 %1140
  %1142 = vrot.lane.b32.xlu0 %v822, 3
  %v1143 = vpop.permute.xlu0 %1142
  %1144 = vrot.lane.b32.xlu0 %v823, 3
  %v1145 = vpop.permute.xlu0 %1144
  %1146 = vrot.lane.b32.xlu0 %v824, 3
  %v1147 = vpop.permute.xlu0 %1146
  %1148 = vrot.lane.b32.xlu0 %v825, 3
  %v1149 = vpop.permute.xlu0 %1148
  %1150 = vrot.lane.b32.xlu0 %v826, 3
  %v1151 = vpop.permute.xlu0 %1150
  %1152 = vrot.lane.b32.xlu0 %v827, 3
  %v1153 = vpop.permute.xlu0 %1152
  %1154 = vrot.lane.b32.xlu0 %v828, 3
  %v1155 = vpop.permute.xlu0 %1154
  %1156 = vrot.lane.b32.xlu0 %v829, 3
  %v1157 = vpop.permute.xlu0 %1156
  %1158 = vrot.lane.b32.xlu0 %v830, 3
  %v1159 = vpop.permute.xlu0 %1158
  %1160 = vrot.lane.b32.xlu0 %v831, 3
  %v1161 = vpop.permute.xlu0 %1160
  %1162 = vrot.lane.b32.xlu0 %v832, 3
  %v1163 = vpop.permute.xlu0 %1162
  %1164 = vrot.lane.b32.xlu0 %v833, 3
  %v1165 = vpop.permute.xlu0 %1164
  %1166 = vrot.lane.b32.xlu0 %v834, 3
  %v1167 = vpop.permute.xlu0 %1166
  %1168 = vrot.lane.b32.xlu0 %v835, 3
  %v1169 = vpop.permute.xlu0 %1168
  %1170 = vrot.lane.b32.xlu0 %v836, 3
  %v1171 = vpop.permute.xlu0 %1170
  %1172 = vrot.lane.b32.xlu0 %v837, 3
  %v1173 = vpop.permute.xlu0 %1172
  %1230 = vrot.lane.b32.xlu0 %v838, 4
  %v1231 = vpop.permute.xlu0 %1230
  %1232 = vrot.lane.b32.xlu0 %v839, 4
  %v1233 = vpop.permute.xlu0 %1232
  %1234 = vrot.lane.b32.xlu0 %v840, 4
  %v1235 = vpop.permute.xlu0 %1234
  %1236 = vrot.lane.b32.xlu0 %v841, 4
  %v1237 = vpop.permute.xlu0 %1236
  %1238 = vrot.lane.b32.xlu0 %v842, 4
  %v1239 = vpop.permute.xlu0 %1238
  %1240 = vrot.lane.b32.xlu0 %v843, 4
  %v1241 = vpop.permute.xlu0 %1240
  %1242 = vrot.lane.b32.xlu0 %v844, 4
  %v1243 = vpop.permute.xlu0 %1242
  %1244 = vrot.lane.b32.xlu0 %v845, 4
  %v1245 = vpop.permute.xlu0 %1244
  %1246 = vrot.lane.b32.xlu0 %v846, 4
  %v1247 = vpop.permute.xlu0 %1246
  %1248 = vrot.lane.b32.xlu0 %v847, 4
  %v1249 = vpop.permute.xlu0 %1248
  %1250 = vrot.lane.b32.xlu0 %v848, 4
  %v1251 = vpop.permute.xlu0 %1250
  %1252 = vrot.lane.b32.xlu0 %v849, 4
  %v1253 = vpop.permute.xlu0 %1252
  %1254 = vrot.lane.b32.xlu0 %v850, 4
  %v1255 = vpop.permute.xlu0 %1254
  %1256 = vrot.lane.b32.xlu0 %v851, 4
  %v1257 = vpop.permute.xlu0 %1256
  %1258 = vrot.lane.b32.xlu0 %v852, 4
  %v1259 = vpop.permute.xlu0 %1258
  %1260 = vrot.lane.b32.xlu0 %v853, 4
  %v1261 = vpop.permute.xlu0 %1260
  %1262 = vrot.lane.b32.xlu0 %v854, 4
  %v1263 = vpop.permute.xlu0 %1262
  %1264 = vrot.lane.b32.xlu0 %v855, 4
  %v1265 = vpop.permute.xlu0 %1264
  %1266 = vrot.lane.b32.xlu0 %v856, 4
  %v1267 = vpop.permute.xlu0 %1266
  %1268 = vrot.lane.b32.xlu0 %v857, 4
  %v1269 = vpop.permute.xlu0 %1268
  %1270 = vrot.lane.b32.xlu0 %v858, 4
  %v1271 = vpop.permute.xlu0 %1270
  %1272 = vrot.lane.b32.xlu0 %v859, 4
  %v1273 = vpop.permute.xlu0 %1272
  %1274 = vrot.lane.b32.xlu0 %v860, 4
  %v1275 = vpop.permute.xlu0 %1274
  %1276 = vrot.lane.b32.xlu0 %v861, 4
  %v1277 = vpop.permute.xlu0 %1276
  %1278 = vrot.lane.b32.xlu0 %v862, 4
  %v1279 = vpop.permute.xlu0 %1278
  %1280 = vrot.lane.b32.xlu0 %v863, 4
  %v1281 = vpop.permute.xlu0 %1280
  %1282 = vrot.lane.b32.xlu0 %v864, 4
  %v1283 = vpop.permute.xlu0 %1282
  %1284 = vrot.lane.b32.xlu0 %v865, 4
  %v1285 = vpop.permute.xlu0 %1284
  %v1314 = vsel %vm608, %v725, %v895
  %v1315 = vsel %vm608, %v726, %v897
  %v1316 = vsel %vm608, %v727, %v899
  %v1317 = vsel %vm608, %v728, %v901
  %v1318 = vsel %vm608, %v729, %v903
  %v1319 = vsel %vm608, %v730, %v905
  %v1320 = vsel %vm608, %v731, %v907
  %v1321 = vsel %vm608, %v732, %v909
  %v1322 = vsel %vm608, %v733, %v911
  %v1323 = vsel %vm608, %v734, %v913
  %v1324 = vsel %vm608, %v735, %v915
  %v1325 = vsel %vm608, %v736, %v917
  %v1326 = vsel %vm608, %v737, %v919
  %v1327 = vsel %vm608, %v738, %v921
  %v1328 = vsel %vm608, %v739, %v923
  %v1329 = vsel %vm608, %v740, %v925
  %v1330 = vsel %vm608, %v741, %v927
  %v1331 = vsel %vm608, %v742, %v929
  %v1332 = vsel %vm608, %v743, %v931
  %v1333 = vsel %vm608, %v744, %v933
  %v1334 = vsel %vm608, %v745, %v935
  %v1335 = vsel %vm608, %v746, %v937
  %v1336 = vsel %vm608, %v747, %v939
  %v1337 = vsel %vm608, %v748, %v941
  %v1338 = vsel %vm608, %v749, %v943
  %v1339 = vsel %vm608, %v750, %v945
  %v1340 = vsel %vm608, %v751, %v947
  %v1341 = vsel %vm608, %v752, %v949
  %v1342 = vsel %vm637, %v1314, %v1007
  %v1343 = vsel %vm637, %v1315, %v1009
  %v1344 = vsel %vm637, %v1316, %v1011
  %v1345 = vsel %vm637, %v1317, %v1013
  %v1346 = vsel %vm637, %v1318, %v1015
  %v1347 = vsel %vm637, %v1319, %v1017
  %v1348 = vsel %vm637, %v1320, %v1019
  %v1349 = vsel %vm637, %v1321, %v1021
  %v1350 = vsel %vm637, %v1322, %v1023
  %v1351 = vsel %vm637, %v1323, %v1025
  %v1352 = vsel %vm637, %v1324, %v1027
  %v1353 = vsel %vm637, %v1325, %v1029
  %v1354 = vsel %vm637, %v1326, %v1031
  %v1355 = vsel %vm637, %v1327, %v1033
  %v1356 = vsel %vm637, %v1328, %v1035
  %v1357 = vsel %vm637, %v1329, %v1037
  %v1358 = vsel %vm637, %v1330, %v1039
  %v1359 = vsel %vm637, %v1331, %v1041
  %v1360 = vsel %vm637, %v1332, %v1043
  %v1361 = vsel %vm637, %v1333, %v1045
  %v1362 = vsel %vm637, %v1334, %v1047
  %v1363 = vsel %vm637, %v1335, %v1049
  %v1364 = vsel %vm637, %v1336, %v1051
  %v1365 = vsel %vm637, %v1337, %v1053
  %v1366 = vsel %vm637, %v1338, %v1055
  %v1367 = vsel %vm637, %v1339, %v1057
  %v1368 = vsel %vm637, %v1340, %v1059
  %v1369 = vsel %vm637, %v1341, %v1061
  %v1370 = vsel %vm666, %v1342, %v1119
  %v1371 = vsel %vm666, %v1343, %v1121
  %v1372 = vsel %vm666, %v1344, %v1123
  %v1373 = vsel %vm666, %v1345, %v1125
  %v1374 = vsel %vm666, %v1346, %v1127
  %v1375 = vsel %vm666, %v1347, %v1129
  %v1376 = vsel %vm666, %v1348, %v1131
  %v1377 = vsel %vm666, %v1349, %v1133
  %v1378 = vsel %vm666, %v1350, %v1135
  %v1379 = vsel %vm666, %v1351, %v1137
  %v1380 = vsel %vm666, %v1352, %v1139
  %v1381 = vsel %vm666, %v1353, %v1141
  %v1382 = vsel %vm666, %v1354, %v1143
  %v1383 = vsel %vm666, %v1355, %v1145
  %v1384 = vsel %vm666, %v1356, %v1147
  %v1385 = vsel %vm666, %v1357, %v1149
  %v1386 = vsel %vm666, %v1358, %v1151
  %v1387 = vsel %vm666, %v1359, %v1153
  %v1388 = vsel %vm666, %v1360, %v1155
  %v1389 = vsel %vm666, %v1361, %v1157
  %v1390 = vsel %vm666, %v1362, %v1159
  %v1391 = vsel %vm666, %v1363, %v1161
  %v1392 = vsel %vm666, %v1364, %v1163
  %v1393 = vsel %vm666, %v1365, %v1165
  %v1394 = vsel %vm666, %v1366, %v1167
  %v1395 = vsel %vm666, %v1367, %v1169
  %v1396 = vsel %vm666, %v1368, %v1171
  %v1397 = vsel %vm666, %v1369, %v1173
  %v1398 = vsel %vm695, %v1370, %v1231
  %v1399 = vsel %vm695, %v1371, %v1233
  %v1400 = vsel %vm695, %v1372, %v1235
  %v1401 = vsel %vm695, %v1373, %v1237
  %v1402 = vsel %vm695, %v1374, %v1239
  %v1403 = vsel %vm695, %v1375, %v1241
  %v1404 = vsel %vm695, %v1376, %v1243
  %v1405 = vsel %vm695, %v1377, %v1245
  %v1406 = vsel %vm695, %v1378, %v1247
  %v1407 = vsel %vm695, %v1379, %v1249
  %v1408 = vsel %vm695, %v1380, %v1251
  %v1409 = vsel %vm695, %v1381, %v1253
  %v1410 = vsel %vm695, %v1382, %v1255
  %v1411 = vsel %vm695, %v1383, %v1257
  %v1412 = vsel %vm695, %v1384, %v1259
  %v1413 = vsel %vm695, %v1385, %v1261
  %v1414 = vsel %vm695, %v1386, %v1263
  %v1415 = vsel %vm695, %v1387, %v1265
  %v1416 = vsel %vm695, %v1388, %v1267
  %v1417 = vsel %vm695, %v1389, %v1269
  %v1418 = vsel %vm695, %v1390, %v1271
  %v1419 = vsel %vm695, %v1391, %v1273
  %v1420 = vsel %vm695, %v1392, %v1275
  %v1421 = vsel %vm695, %v1393, %v1277
  %v1422 = vsel %vm695, %v1394, %v1279
  %v1423 = vsel %vm695, %v1395, %v1281
  %v1424 = vsel %vm695, %v1396, %v1283
  %v1425 = vsel %vm695, %v1397, %v1285
  %1450 = vrot.lane.b32.xlu0 %v1398, 5
  %v1451 = vpop.permute.xlu0 %1450
  %1452 = vrot.lane.b32.xlu0 %v1399, 5
  %v1453 = vpop.permute.xlu0 %1452
  %1454 = vrot.lane.b32.xlu0 %v1400, 5
  %v1455 = vpop.permute.xlu0 %1454
  %1456 = vrot.lane.b32.xlu0 %v1401, 5
  %v1457 = vpop.permute.xlu0 %1456
  %1458 = vrot.lane.b32.xlu0 %v1402, 5
  %v1459 = vpop.permute.xlu0 %1458
  %1460 = vrot.lane.b32.xlu0 %v1403, 5
  %v1461 = vpop.permute.xlu0 %1460
  %1462 = vrot.lane.b32.xlu0 %v1404, 5
  %v1463 = vpop.permute.xlu0 %1462
  %1464 = vrot.lane.b32.xlu0 %v1405, 5
  %v1465 = vpop.permute.xlu0 %1464
  %1466 = vrot.lane.b32.xlu0 %v1406, 5
  %v1467 = vpop.permute.xlu0 %1466
  %1468 = vrot.lane.b32.xlu0 %v1407, 5
  %v1469 = vpop.permute.xlu0 %1468
  %1470 = vrot.lane.b32.xlu0 %v1408, 5
  %v1471 = vpop.permute.xlu0 %1470
  %1472 = vrot.lane.b32.xlu0 %v1409, 5
  %v1473 = vpop.permute.xlu0 %1472
  %1474 = vrot.lane.b32.xlu0 %v1410, 5
  %v1475 = vpop.permute.xlu0 %1474
  %1476 = vrot.lane.b32.xlu0 %v1411, 5
  %v1477 = vpop.permute.xlu0 %1476
  %1478 = vrot.lane.b32.xlu0 %v1412, 5
  %v1479 = vpop.permute.xlu0 %1478
  %1480 = vrot.lane.b32.xlu0 %v1413, 5
  %v1481 = vpop.permute.xlu0 %1480
  %1482 = vrot.lane.b32.xlu0 %v1414, 5
  %v1483 = vpop.permute.xlu0 %1482
  %1484 = vrot.lane.b32.xlu0 %v1415, 5
  %v1485 = vpop.permute.xlu0 %1484
  %1486 = vrot.lane.b32.xlu0 %v1416, 5
  %v1487 = vpop.permute.xlu0 %1486
  %1488 = vrot.lane.b32.xlu0 %v1417, 5
  %v1489 = vpop.permute.xlu0 %1488
  %1490 = vrot.lane.b32.xlu0 %v1418, 5
  %v1491 = vpop.permute.xlu0 %1490
  %1492 = vrot.lane.b32.xlu0 %v1419, 5
  %v1493 = vpop.permute.xlu0 %1492
  %1494 = vrot.lane.b32.xlu0 %v1420, 5
  %v1495 = vpop.permute.xlu0 %1494
  %1496 = vrot.lane.b32.xlu0 %v1421, 5
  %v1497 = vpop.permute.xlu0 %1496
  %1546 = vrot.lane.b32.xlu0 %v698, 10
  %v1547 = vpop.permute.xlu0 %1546
  %1548 = vrot.lane.b32.xlu0 %v699, 10
  %v1549 = vpop.permute.xlu0 %1548
  %1550 = vrot.lane.b32.xlu0 %v700, 10
  %v1551 = vpop.permute.xlu0 %1550
  %1552 = vrot.lane.b32.xlu0 %v701, 10
  %v1553 = vpop.permute.xlu0 %1552
  %1554 = vrot.lane.b32.xlu0 %v702, 10
  %v1555 = vpop.permute.xlu0 %1554
  %1556 = vrot.lane.b32.xlu0 %v703, 10
  %v1557 = vpop.permute.xlu0 %1556
  %1558 = vrot.lane.b32.xlu0 %v704, 10
  %v1559 = vpop.permute.xlu0 %1558
  %1560 = vrot.lane.b32.xlu0 %v705, 10
  %v1561 = vpop.permute.xlu0 %1560
  %1562 = vrot.lane.b32.xlu0 %v706, 10
  %v1563 = vpop.permute.xlu0 %1562
  %1564 = vrot.lane.b32.xlu0 %v707, 10
  %v1565 = vpop.permute.xlu0 %1564
  %1566 = vrot.lane.b32.xlu0 %v708, 10
  %v1567 = vpop.permute.xlu0 %1566
  %1568 = vrot.lane.b32.xlu0 %v709, 10
  %v1569 = vpop.permute.xlu0 %1568
  %1570 = vrot.lane.b32.xlu0 %v710, 10
  %v1571 = vpop.permute.xlu0 %1570
  %1572 = vrot.lane.b32.xlu0 %v711, 10
  %v1573 = vpop.permute.xlu0 %1572
  %1574 = vrot.lane.b32.xlu0 %v712, 10
  %v1575 = vpop.permute.xlu0 %1574
  %1576 = vrot.lane.b32.xlu0 %v713, 10
  %v1577 = vpop.permute.xlu0 %1576
  %1578 = vrot.lane.b32.xlu0 %v714, 10
  %v1579 = vpop.permute.xlu0 %1578
  %1580 = vrot.lane.b32.xlu0 %v715, 10
  %v1581 = vpop.permute.xlu0 %1580
  %1582 = vrot.lane.b32.xlu0 %v716, 10
  %v1583 = vpop.permute.xlu0 %1582
  %1584 = vrot.lane.b32.xlu0 %v717, 10
  %v1585 = vpop.permute.xlu0 %1584
  %1586 = vrot.lane.b32.xlu0 %v718, 10
  %v1587 = vpop.permute.xlu0 %1586
  %1588 = vrot.lane.b32.xlu0 %v719, 10
  %v1589 = vpop.permute.xlu0 %1588
  %1590 = vrot.lane.b32.xlu0 %v720, 10
  %v1591 = vpop.permute.xlu0 %1590
  %1592 = vrot.lane.b32.xlu0 %v721, 10
  %v1593 = vpop.permute.xlu0 %1592
  %1620 = vrot.lane.b32.xlu0 %v1400, 15
  %v1621 = vpop.permute.xlu0 %1620
  %1622 = vrot.lane.b32.xlu0 %v1401, 15
  %v1623 = vpop.permute.xlu0 %1622
  %1624 = vrot.lane.b32.xlu0 %v1402, 15
  %v1625 = vpop.permute.xlu0 %1624
  %1626 = vrot.lane.b32.xlu0 %v1403, 15
  %v1627 = vpop.permute.xlu0 %1626
  %1628 = vrot.lane.b32.xlu0 %v1404, 15
  %v1629 = vpop.permute.xlu0 %1628
  %1630 = vrot.lane.b32.xlu0 %v1405, 15
  %v1631 = vpop.permute.xlu0 %1630
  %1632 = vrot.lane.b32.xlu0 %v1406, 15
  %v1633 = vpop.permute.xlu0 %1632
  %1634 = vrot.lane.b32.xlu0 %v1407, 15
  %v1635 = vpop.permute.xlu0 %1634
  %1636 = vrot.lane.b32.xlu0 %v1408, 15
  %v1637 = vpop.permute.xlu0 %1636
  %1638 = vrot.lane.b32.xlu0 %v1409, 15
  %v1639 = vpop.permute.xlu0 %1638
  %1640 = vrot.lane.b32.xlu0 %v1410, 15
  %v1641 = vpop.permute.xlu0 %1640
  %1642 = vrot.lane.b32.xlu0 %v1411, 15
  %v1643 = vpop.permute.xlu0 %1642
  %1644 = vrot.lane.b32.xlu0 %v1412, 15
  %v1645 = vpop.permute.xlu0 %1644
  %1646 = vrot.lane.b32.xlu0 %v1413, 15
  %v1647 = vpop.permute.xlu0 %1646
  %1648 = vrot.lane.b32.xlu0 %v1414, 15
  %v1649 = vpop.permute.xlu0 %1648
  %1650 = vrot.lane.b32.xlu0 %v1415, 15
  %v1651 = vpop.permute.xlu0 %1650
  %1652 = vrot.lane.b32.xlu0 %v1416, 15
  %v1653 = vpop.permute.xlu0 %1652
  %1654 = vrot.lane.b32.xlu0 %v1417, 15
  %v1655 = vpop.permute.xlu0 %1654
  %1656 = vrot.lane.b32.xlu0 %v1418, 15
  %v1657 = vpop.permute.xlu0 %1656
  %1658 = vrot.lane.b32.xlu0 %v1419, 15
  %v1659 = vpop.permute.xlu0 %1658
  %1660 = vrot.lane.b32.xlu0 %v1420, 15
  %v1661 = vpop.permute.xlu0 %1660
  %1662 = vrot.lane.b32.xlu0 %v1421, 15
  %v1663 = vpop.permute.xlu0 %1662
  %1664 = vrot.lane.b32.xlu0 %v1422, 15
  %v1665 = vpop.permute.xlu0 %1664
  %1666 = vrot.lane.b32.xlu0 %v1423, 15
  %v1667 = vpop.permute.xlu0 %1666
  %1694 = vrot.lane.b32.xlu0 %v700, 20
  %v1695 = vpop.permute.xlu0 %1694
  %1696 = vrot.lane.b32.xlu0 %v701, 20
  %v1697 = vpop.permute.xlu0 %1696
  %1698 = vrot.lane.b32.xlu0 %v702, 20
  %v1699 = vpop.permute.xlu0 %1698
  %1700 = vrot.lane.b32.xlu0 %v703, 20
  %v1701 = vpop.permute.xlu0 %1700
  %1702 = vrot.lane.b32.xlu0 %v704, 20
  %v1703 = vpop.permute.xlu0 %1702
  %1704 = vrot.lane.b32.xlu0 %v705, 20
  %v1705 = vpop.permute.xlu0 %1704
  %1706 = vrot.lane.b32.xlu0 %v706, 20
  %v1707 = vpop.permute.xlu0 %1706
  %1708 = vrot.lane.b32.xlu0 %v707, 20
  %v1709 = vpop.permute.xlu0 %1708
  %1710 = vrot.lane.b32.xlu0 %v708, 20
  %v1711 = vpop.permute.xlu0 %1710
  %1712 = vrot.lane.b32.xlu0 %v709, 20
  %v1713 = vpop.permute.xlu0 %1712
  %1714 = vrot.lane.b32.xlu0 %v710, 20
  %v1715 = vpop.permute.xlu0 %1714
  %1716 = vrot.lane.b32.xlu0 %v711, 20
  %v1717 = vpop.permute.xlu0 %1716
  %1718 = vrot.lane.b32.xlu0 %v712, 20
  %v1719 = vpop.permute.xlu0 %1718
  %1720 = vrot.lane.b32.xlu0 %v713, 20
  %v1721 = vpop.permute.xlu0 %1720
  %1722 = vrot.lane.b32.xlu0 %v714, 20
  %v1723 = vpop.permute.xlu0 %1722
  %1724 = vrot.lane.b32.xlu0 %v715, 20
  %v1725 = vpop.permute.xlu0 %1724
  %1726 = vrot.lane.b32.xlu0 %v716, 20
  %v1727 = vpop.permute.xlu0 %1726
  %1728 = vrot.lane.b32.xlu0 %v717, 20
  %v1729 = vpop.permute.xlu0 %1728
  %1730 = vrot.lane.b32.xlu0 %v718, 20
  %v1731 = vpop.permute.xlu0 %1730
  %1732 = vrot.lane.b32.xlu0 %v719, 20
  %v1733 = vpop.permute.xlu0 %1732
  %1734 = vrot.lane.b32.xlu0 %v720, 20
  %v1735 = vpop.permute.xlu0 %1734
  %1736 = vrot.lane.b32.xlu0 %v721, 20
  %v1737 = vpop.permute.xlu0 %1736
  %1738 = vrot.lane.b32.xlu0 %v722, 20
  %v1739 = vpop.permute.xlu0 %1738
  %1740 = vrot.lane.b32.xlu0 %v723, 20
  %v1741 = vpop.permute.xlu0 %1740
  %vm1766 = vcmask 39936
  %v1767 = vsel %vm1766, %v696, %v1451
  %v1768 = vsel %vm1766, %v697, %v1453
  %v1769 = vsel %vm1766, %v698, %v1455
  %v1770 = vsel %vm1766, %v699, %v1457
  %v1771 = vsel %vm1766, %v700, %v1459
  %v1772 = vsel %vm1766, %v701, %v1461
  %v1773 = vsel %vm1766, %v702, %v1463
  %v1774 = vsel %vm1766, %v703, %v1465
  %v1775 = vsel %vm1766, %v704, %v1467
  %v1776 = vsel %vm1766, %v705, %v1469
  %v1777 = vsel %vm1766, %v706, %v1471
  %v1778 = vsel %vm1766, %v707, %v1473
  %v1779 = vsel %vm1766, %v708, %v1475
  %v1780 = vsel %vm1766, %v709, %v1477
  %v1781 = vsel %vm1766, %v710, %v1479
  %v1782 = vsel %vm1766, %v711, %v1481
  %v1783 = vsel %vm1766, %v712, %v1483
  %v1784 = vsel %vm1766, %v713, %v1485
  %v1785 = vsel %vm1766, %v714, %v1487
  %v1786 = vsel %vm1766, %v715, %v1489
  %v1787 = vsel %vm1766, %v716, %v1491
  %v1788 = vsel %vm1766, %v717, %v1493
  %v1789 = vsel %vm1766, %v718, %v1495
  %v1790 = vsel %vm1766, %v719, %v1497
  %vm1791 = vcmask 80896
  %v1792 = vsel %vm1791, %v1767, %v1547
  %v1793 = vsel %vm1791, %v1768, %v1549
  %v1794 = vsel %vm1791, %v1769, %v1551
  %v1795 = vsel %vm1791, %v1770, %v1553
  %v1796 = vsel %vm1791, %v1771, %v1555
  %v1797 = vsel %vm1791, %v1772, %v1557
  %v1798 = vsel %vm1791, %v1773, %v1559
  %v1799 = vsel %vm1791, %v1774, %v1561
  %v1800 = vsel %vm1791, %v1775, %v1563
  %v1801 = vsel %vm1791, %v1776, %v1565
  %v1802 = vsel %vm1791, %v1777, %v1567
  %v1803 = vsel %vm1791, %v1778, %v1569
  %v1804 = vsel %vm1791, %v1779, %v1571
  %v1805 = vsel %vm1791, %v1780, %v1573
  %v1806 = vsel %vm1791, %v1781, %v1575
  %v1807 = vsel %vm1791, %v1782, %v1577
  %v1808 = vsel %vm1791, %v1783, %v1579
  %v1809 = vsel %vm1791, %v1784, %v1581
  %v1810 = vsel %vm1791, %v1785, %v1583
  %v1811 = vsel %vm1791, %v1786, %v1585
  %v1812 = vsel %vm1791, %v1787, %v1587
  %v1813 = vsel %vm1791, %v1788, %v1589
  %v1814 = vsel %vm1791, %v1789, %v1591
  %v1815 = vsel %vm1791, %v1790, %v1593
  %vm1816 = vcmask 121856
  %v1817 = vsel %vm1816, %v1792, %v1621
  %v1818 = vsel %vm1816, %v1793, %v1623
  %v1819 = vsel %vm1816, %v1794, %v1625
  %v1820 = vsel %vm1816, %v1795, %v1627
  %v1821 = vsel %vm1816, %v1796, %v1629
  %v1822 = vsel %vm1816, %v1797, %v1631
  %v1823 = vsel %vm1816, %v1798, %v1633
  %v1824 = vsel %vm1816, %v1799, %v1635
  %v1825 = vsel %vm1816, %v1800, %v1637
  %v1826 = vsel %vm1816, %v1801, %v1639
  %v1827 = vsel %vm1816, %v1802, %v1641
  %v1828 = vsel %vm1816, %v1803, %v1643
  %v1829 = vsel %vm1816, %v1804, %v1645
  %v1830 = vsel %vm1816, %v1805, %v1647
  %v1831 = vsel %vm1816, %v1806, %v1649
  %v1832 = vsel %vm1816, %v1807, %v1651
  %v1833 = vsel %vm1816, %v1808, %v1653
  %v1834 = vsel %vm1816, %v1809, %v1655
  %v1835 = vsel %vm1816, %v1810, %v1657
  %v1836 = vsel %vm1816, %v1811, %v1659
  %v1837 = vsel %vm1816, %v1812, %v1661
  %v1838 = vsel %vm1816, %v1813, %v1663
  %v1839 = vsel %vm1816, %v1814, %v1665
  %v1840 = vsel %vm1816, %v1815, %v1667
  %vm1841 = vcmask 162816
  %v1842 = vsel %vm1841, %v1817, %v1695
  %v1843 = vsel %vm1841, %v1818, %v1697
  %v1844 = vsel %vm1841, %v1819, %v1699
  %v1845 = vsel %vm1841, %v1820, %v1701
  %v1846 = vsel %vm1841, %v1821, %v1703
  %v1847 = vsel %vm1841, %v1822, %v1705
  %v1848 = vsel %vm1841, %v1823, %v1707
  %v1849 = vsel %vm1841, %v1824, %v1709
  %v1850 = vsel %vm1841, %v1825, %v1711
  %v1851 = vsel %vm1841, %v1826, %v1713
  %v1852 = vsel %vm1841, %v1827, %v1715
  %v1853 = vsel %vm1841, %v1828, %v1717
  %v1854 = vsel %vm1841, %v1829, %v1719
  %v1855 = vsel %vm1841, %v1830, %v1721
  %v1856 = vsel %vm1841, %v1831, %v1723
  %v1857 = vsel %vm1841, %v1832, %v1725
  %v1858 = vsel %vm1841, %v1833, %v1727
  %v1859 = vsel %vm1841, %v1834, %v1729
  %v1860 = vsel %vm1841, %v1835, %v1731
  %v1861 = vsel %vm1841, %v1836, %v1733
  %v1862 = vsel %vm1841, %v1837, %v1735
  %v1863 = vsel %vm1841, %v1838, %v1737
  %v1864 = vsel %vm1841, %v1839, %v1739
  %v1865 = vsel %vm1841, %v1840, %v1741
  %vm1868 = vcmask 1043456
  %v1869 = vrot.slane %v1844, 4
  %v1870 = vrot.slane %v1845, 4
  %v1871 = vsel %vm1868, %v1869, %v1870
  %v1875 = vrot.slane %v1848, 4
  %v1876 = vrot.slane %v1849, 4
  %v1877 = vsel %vm1868, %v1875, %v1876
  %v1881 = vrot.slane %v1852, 4
  %v1882 = vrot.slane %v1853, 4
  %v1883 = vsel %vm1868, %v1881, %v1882
  %v1887 = vrot.slane %v1856, 4
  %v1888 = vrot.slane %v1857, 4
  %v1889 = vsel %vm1868, %v1887, %v1888
  %v1893 = vrot.slane %v1860, 4
  %v1894 = vrot.slane %v1861, 4
  %v1895 = vsel %vm1868, %v1893, %v1894
  %v1899 = vrot.slane %v1864, 4
  %v1900 = vrot.slane %v1865, 4
  %v1901 = vsel %vm1868, %v1899, %v1900
  %v1903 = vsel %vm1868, %v1843, %v1869
  %v1904 = vsel %vm1868, %v1847, %v1875
  %v1905 = vsel %vm1868, %v1851, %v1881
  %v1906 = vsel %vm1868, %v1855, %v1887
  %v1907 = vsel %vm1868, %v1859, %v1893
  %v1908 = vsel %vm1868, %v1863, %v1899
  %v1910 = vperm.slane %v18, 0
  %vm1912 = vcmask 203776
  %v1914 = vsel %vm1912, %v1842, 0
  %v1917 = vsel %vm1912, %v1903, 0
  %v1919 = vsel %vm1912, %v1871, 0
  %v1922 = vsel %vm1912, %v1846, 0
  %v1925 = vsel %vm1912, %v1904, 0
  %v1927 = vsel %vm1912, %v1877, 0
  %v1930 = vsel %vm1912, %v1850, 0
  %v1933 = vsel %vm1912, %v1905, 0
  %v1935 = vsel %vm1912, %v1883, 0
  %v1938 = vsel %vm1912, %v1854, 0
  %v1941 = vsel %vm1912, %v1906, 0
  %v1943 = vsel %vm1912, %v1889, 0
  %v1946 = vsel %vm1912, %v1858, 0
  %v1949 = vsel %vm1912, %v1907, 0
  %v1951 = vsel %vm1912, %v1895, 0
  %v1954 = vsel %vm1912, %v1862, 0
  %v1957 = vsel %vm1912, %v1908, 0
  %v1959 = vsel %vm1912, %v1901, 0
  %vm1961 = vcmask 1040384
  %v1963 = vsel %vm1961, %v17, 0
  %1965 = vmatpush.msra.mxu0 0.0
  %1966 = vmatpush.msra.mxu0 0.0
  %1967 = vmatpush.msra.mxu0 0.0
  %1968 = vmatpush.msra.mxu0 0.0
  %1969 = vmatpush.msra.mxu0 0.0
  %1970 = vmatpush.msra.mxu0 0.0
  %1971 = vmatpush.msra.mxu0 0.0
  %1972 = vmatpush.msra.mxu0 0.0
  %1973 = vmatpush.msra.mxu0 0.0
  %1974 = vmatpush.msra.mxu0 0.0
  %1975 = vmatpush.msra.mxu0 0.0
  %1976 = vmatpush.msra.mxu0 0.0
  %1977 = vmatpush.msra.mxu0 %v1963
  %1978 = vmatpush.msra.mxu0 %v16
  %1979 = vmatpush.msra.mxu0 %v15
  %1980 = vmatpush.msra.mxu0 %v14
  %1981 = vmatmul.f32.gmra.mxu0 %v1914
  %v1982 = vpop.f32.mrf.mxu0
  %v1983 = vadd.f32 %v1910, %v1982
  %1984 = vmatmul.f32.gmra.mxu0 %v1917
  %v1985 = vpop.f32.mrf.mxu0
  %v1986 = vadd.f32 %v1910, %v1985
  %1987 = vmatmul.f32.gmra.mxu0 %v1919
  %v1988 = vpop.f32.mrf.mxu0
  %v1989 = vadd.f32 %v1910, %v1988
  %1990 = vmatmul.f32.gmra.mxu0 %v1922
  %v1991 = vpop.f32.mrf.mxu0
  %v1992 = vadd.f32 %v1910, %v1991
  %1993 = vmatmul.f32.gmra.mxu0 %v1925
  %v1994 = vpop.f32.mrf.mxu0
  %v1995 = vadd.f32 %v1910, %v1994
  %1996 = vmatmul.f32.gmra.mxu0 %v1927
  %v1997 = vpop.f32.mrf.mxu0
  %v1998 = vadd.f32 %v1910, %v1997
  %1999 = vmatmul.f32.gmra.mxu0 %v1930
  %v2000 = vpop.f32.mrf.mxu0
  %v2001 = vadd.f32 %v1910, %v2000
  %2002 = vmatmul.f32.gmra.mxu0 %v1933
  %v2003 = vpop.f32.mrf.mxu0
  %v2004 = vadd.f32 %v1910, %v2003
  %2005 = vmatmul.f32.gmra.mxu0 %v1935
  %v2006 = vpop.f32.mrf.mxu0
  %v2007 = vadd.f32 %v1910, %v2006
  %2008 = vmatmul.f32.gmra.mxu0 %v1938
  %v2009 = vpop.f32.mrf.mxu0
  %v2010 = vadd.f32 %v1910, %v2009
  %2011 = vmatmul.f32.gmra.mxu0 %v1941
  %v2012 = vpop.f32.mrf.mxu0
  %v2013 = vadd.f32 %v1910, %v2012
  %2014 = vmatmul.f32.gmra.mxu0 %v1943
  %v2015 = vpop.f32.mrf.mxu0
  %v2016 = vadd.f32 %v1910, %v2015
  %2017 = vmatmul.f32.gmra.mxu0 %v1946
  %v2018 = vpop.f32.mrf.mxu0
  %v2019 = vadd.f32 %v1910, %v2018
  %2020 = vmatmul.f32.gmra.mxu0 %v1949
  %v2021 = vpop.f32.mrf.mxu0
  %v2022 = vadd.f32 %v1910, %v2021
  %2023 = vmatmul.f32.gmra.mxu0 %v1951
  %v2024 = vpop.f32.mrf.mxu0
  %v2025 = vadd.f32 %v1910, %v2024
  %2026 = vmatmul.f32.gmra.mxu0 %v1954
  %v2027 = vpop.f32.mrf.mxu0
  %v2028 = vadd.f32 %v1910, %v2027
  %2029 = vmatmul.f32.gmra.mxu0 %v1957
  %v2030 = vpop.f32.mrf.mxu0
  %v2031 = vadd.f32 %v1910, %v2030
  %2032 = vmatmul.f32.gmra.mxu0 %v1959
  %v2033 = vpop.f32.mrf.mxu0
  %v2034 = vadd.f32 %v1910, %v2033
  %2035 = vdwg.mxu0
  %v2036 = vmax.f32 %v1983, 0.0
  %v2037 = vmax.f32 %v1986, 0.0
  %v2038 = vmax.f32 %v1989, 0.0
  %v2039 = vmax.f32 %v1992, 0.0
  %v2040 = vmax.f32 %v1995, 0.0
  %v2041 = vmax.f32 %v1998, 0.0
  %v2042 = vmax.f32 %v2001, 0.0
  %v2043 = vmax.f32 %v2004, 0.0
  %v2044 = vmax.f32 %v2007, 0.0
  %v2045 = vmax.f32 %v2010, 0.0
  %v2046 = vmax.f32 %v2013, 0.0
  %v2047 = vmax.f32 %v2016, 0.0
  %v2048 = vmax.f32 %v2019, 0.0
  %v2049 = vmax.f32 %v2022, 0.0
  %v2050 = vmax.f32 %v2025, 0.0
  %v2051 = vmax.f32 %v2028, 0.0
  %v2052 = vmax.f32 %v2031, 0.0
  %v2053 = vmax.f32 %v2034, 0.0
  %2054 = vrot.lane.b32.xlu0 %v698, 5
  %v2055 = vpop.permute.xlu0 %2054
  %2056 = vrot.lane.b32.xlu0 %v699, 5
  %v2057 = vpop.permute.xlu0 %2056
  %2058 = vrot.lane.b32.xlu0 %v700, 5
  %v2059 = vpop.permute.xlu0 %2058
  %2060 = vrot.lane.b32.xlu0 %v701, 5
  %v2061 = vpop.permute.xlu0 %2060
  %2062 = vrot.lane.b32.xlu0 %v702, 5
  %v2063 = vpop.permute.xlu0 %2062
  %2064 = vrot.lane.b32.xlu0 %v703, 5
  %v2065 = vpop.permute.xlu0 %2064
  %2066 = vrot.lane.b32.xlu0 %v704, 5
  %v2067 = vpop.permute.xlu0 %2066
  %2068 = vrot.lane.b32.xlu0 %v705, 5
  %v2069 = vpop.permute.xlu0 %2068
  %2070 = vrot.lane.b32.xlu0 %v706, 5
  %v2071 = vpop.permute.xlu0 %2070
  %2072 = vrot.lane.b32.xlu0 %v707, 5
  %v2073 = vpop.permute.xlu0 %2072
  %2074 = vrot.lane.b32.xlu0 %v708, 5
  %v2075 = vpop.permute.xlu0 %2074
  %2076 = vrot.lane.b32.xlu0 %v709, 5
  %v2077 = vpop.permute.xlu0 %2076
  %2078 = vrot.lane.b32.xlu0 %v710, 5
  %v2079 = vpop.permute.xlu0 %2078
  %2080 = vrot.lane.b32.xlu0 %v711, 5
  %v2081 = vpop.permute.xlu0 %2080
  %2082 = vrot.lane.b32.xlu0 %v712, 5
  %v2083 = vpop.permute.xlu0 %2082
  %2084 = vrot.lane.b32.xlu0 %v713, 5
  %v2085 = vpop.permute.xlu0 %2084
  %2086 = vrot.lane.b32.xlu0 %v714, 5
  %v2087 = vpop.permute.xlu0 %2086
  %2088 = vrot.lane.b32.xlu0 %v715, 5
  %v2089 = vpop.permute.xlu0 %2088
  %2090 = vrot.lane.b32.xlu0 %v716, 5
  %v2091 = vpop.permute.xlu0 %2090
  %2092 = vrot.lane.b32.xlu0 %v717, 5
  %v2093 = vpop.permute.xlu0 %2092
  %2094 = vrot.lane.b32.xlu0 %v718, 5
  %v2095 = vpop.permute.xlu0 %2094
  %2096 = vrot.lane.b32.xlu0 %v719, 5
  %v2097 = vpop.permute.xlu0 %2096
  %2098 = vrot.lane.b32.xlu0 %v720, 5
  %v2099 = vpop.permute.xlu0 %2098
  %2100 = vrot.lane.b32.xlu0 %v721, 5
  %v2101 = vpop.permute.xlu0 %2100
  %2126 = vrot.lane.b32.xlu0 %v1400, 10
  %v2127 = vpop.permute.xlu0 %2126
  %2128 = vrot.lane.b32.xlu0 %v1401, 10
  %v2129 = vpop.permute.xlu0 %2128
  %2130 = vrot.lane.b32.xlu0 %v1402, 10
  %v2131 = vpop.permute.xlu0 %2130
  %2132 = vrot.lane.b32.xlu0 %v1403, 10
  %v2133 = vpop.permute.xlu0 %2132
  %2134 = vrot.lane.b32.xlu0 %v1404, 10
  %v2135 = vpop.permute.xlu0 %2134
  %2136 = vrot.lane.b32.xlu0 %v1405, 10
  %v2137 = vpop.permute.xlu0 %2136
  %2138 = vrot.lane.b32.xlu0 %v1406, 10
  %v2139 = vpop.permute.xlu0 %2138
  %2140 = vrot.lane.b32.xlu0 %v1407, 10
  %v2141 = vpop.permute.xlu0 %2140
  %2142 = vrot.lane.b32.xlu0 %v1408, 10
  %v2143 = vpop.permute.xlu0 %2142
  %2144 = vrot.lane.b32.xlu0 %v1409, 10
  %v2145 = vpop.permute.xlu0 %2144
  %2146 = vrot.lane.b32.xlu0 %v1410, 10
  %v2147 = vpop.permute.xlu0 %2146
  %2148 = vrot.lane.b32.xlu0 %v1411, 10
  %v2149 = vpop.permute.xlu0 %2148
  %2150 = vrot.lane.b32.xlu0 %v1412, 10
  %v2151 = vpop.permute.xlu0 %2150
  %2152 = vrot.lane.b32.xlu0 %v1413, 10
  %v2153 = vpop.permute.xlu0 %2152
  %2154 = vrot.lane.b32.xlu0 %v1414, 10
  %v2155 = vpop.permute.xlu0 %2154
  %2156 = vrot.lane.b32.xlu0 %v1415, 10
  %v2157 = vpop.permute.xlu0 %2156
  %2158 = vrot.lane.b32.xlu0 %v1416, 10
  %v2159 = vpop.permute.xlu0 %2158
  %2160 = vrot.lane.b32.xlu0 %v1417, 10
  %v2161 = vpop.permute.xlu0 %2160
  %2162 = vrot.lane.b32.xlu0 %v1418, 10
  %v2163 = vpop.permute.xlu0 %2162
  %2164 = vrot.lane.b32.xlu0 %v1419, 10
  %v2165 = vpop.permute.xlu0 %2164
  %2166 = vrot.lane.b32.xlu0 %v1420, 10
  %v2167 = vpop.permute.xlu0 %2166
  %2168 = vrot.lane.b32.xlu0 %v1421, 10
  %v2169 = vpop.permute.xlu0 %2168
  %2170 = vrot.lane.b32.xlu0 %v1422, 10
  %v2171 = vpop.permute.xlu0 %2170
  %2172 = vrot.lane.b32.xlu0 %v1423, 10
  %v2173 = vpop.permute.xlu0 %2172
  %2198 = vrot.lane.b32.xlu0 %v700, 15
  %v2199 = vpop.permute.xlu0 %2198
  %2200 = vrot.lane.b32.xlu0 %v701, 15
  %v2201 = vpop.permute.xlu0 %2200
  %2202 = vrot.lane.b32.xlu0 %v702, 15
  %v2203 = vpop.permute.xlu0 %2202
  %2204 = vrot.lane.b32.xlu0 %v703, 15
  %v2205 = vpop.permute.xlu0 %2204
  %2206 = vrot.lane.b32.xlu0 %v704, 15
  %v2207 = vpop.permute.xlu0 %2206
  %2208 = vrot.lane.b32.xlu0 %v705, 15
  %v2209 = vpop.permute.xlu0 %2208
  %2210 = vrot.lane.b32.xlu0 %v706, 15
  %v2211 = vpop.permute.xlu0 %2210
  %2212 = vrot.lane.b32.xlu0 %v707, 15
  %v2213 = vpop.permute.xlu0 %2212
  %2214 = vrot.lane.b32.xlu0 %v708, 15
  %v2215 = vpop.permute.xlu0 %2214
  %2216 = vrot.lane.b32.xlu0 %v709, 15
  %v2217 = vpop.permute.xlu0 %2216
  %2218 = vrot.lane.b32.xlu0 %v710, 15
  %v2219 = vpop.permute.xlu0 %2218
  %2220 = vrot.lane.b32.xlu0 %v711, 15
  %v2221 = vpop.permute.xlu0 %2220
  %2222 = vrot.lane.b32.xlu0 %v712, 15
  %v2223 = vpop.permute.xlu0 %2222
  %2224 = vrot.lane.b32.xlu0 %v713, 15
  %v2225 = vpop.permute.xlu0 %2224
  %2226 = vrot.lane.b32.xlu0 %v714, 15
  %v2227 = vpop.permute.xlu0 %2226
  %2228 = vrot.lane.b32.xlu0 %v715, 15
  %v2229 = vpop.permute.xlu0 %2228
  %2230 = vrot.lane.b32.xlu0 %v716, 15
  %v2231 = vpop.permute.xlu0 %2230
  %2232 = vrot.lane.b32.xlu0 %v717, 15
  %v2233 = vpop.permute.xlu0 %2232
  %2234 = vrot.lane.b32.xlu0 %v718, 15
  %v2235 = vpop.permute.xlu0 %2234
  %2236 = vrot.lane.b32.xlu0 %v719, 15
  %v2237 = vpop.permute.xlu0 %2236
  %2238 = vrot.lane.b32.xlu0 %v720, 15
  %v2239 = vpop.permute.xlu0 %2238
  %2240 = vrot.lane.b32.xlu0 %v721, 15
  %v2241 = vpop.permute.xlu0 %2240
  %2242 = vrot.lane.b32.xlu0 %v722, 15
  %v2243 = vpop.permute.xlu0 %2242
  %2244 = vrot.lane.b32.xlu0 %v723, 15
  %v2245 = vpop.permute.xlu0 %2244
  %2272 = vrot.lane.b32.xlu0 %v1402, 20
  %v2273 = vpop.permute.xlu0 %2272
  %2274 = vrot.lane.b32.xlu0 %v1403, 20
  %v2275 = vpop.permute.xlu0 %2274
  %2276 = vrot.lane.b32.xlu0 %v1404, 20
  %v2277 = vpop.permute.xlu0 %2276
  %2278 = vrot.lane.b32.xlu0 %v1405, 20
  %v2279 = vpop.permute.xlu0 %2278
  %2280 = vrot.lane.b32.xlu0 %v1406, 20
  %v2281 = vpop.permute.xlu0 %2280
  %2282 = vrot.lane.b32.xlu0 %v1407, 20
  %v2283 = vpop.permute.xlu0 %2282
  %2284 = vrot.lane.b32.xlu0 %v1408, 20
  %v2285 = vpop.permute.xlu0 %2284
  %2286 = vrot.lane.b32.xlu0 %v1409, 20
  %v2287 = vpop.permute.xlu0 %2286
  %2288 = vrot.lane.b32.xlu0 %v1410, 20
  %v2289 = vpop.permute.xlu0 %2288
  %2290 = vrot.lane.b32.xlu0 %v1411, 20
  %v2291 = vpop.permute.xlu0 %2290
  %2292 = vrot.lane.b32.xlu0 %v1412, 20
  %v2293 = vpop.permute.xlu0 %2292
  %2294 = vrot.lane.b32.xlu0 %v1413, 20
  %v2295 = vpop.permute.xlu0 %2294
  %2296 = vrot.lane.b32.xlu0 %v1414, 20
  %v2297 = vpop.permute.xlu0 %2296
  %2298 = vrot.lane.b32.xlu0 %v1415, 20
  %v2299 = vpop.permute.xlu0 %2298
  %2300 = vrot.lane.b32.xlu0 %v1416, 20
  %v2301 = vpop.permute.xlu0 %2300
  %2302 = vrot.lane.b32.xlu0 %v1417, 20
  %v2303 = vpop.permute.xlu0 %2302
  %2304 = vrot.lane.b32.xlu0 %v1418, 20
  %v2305 = vpop.permute.xlu0 %2304
  %2306 = vrot.lane.b32.xlu0 %v1419, 20
  %v2307 = vpop.permute.xlu0 %2306
  %2308 = vrot.lane.b32.xlu0 %v1420, 20
  %v2309 = vpop.permute.xlu0 %2308
  %2310 = vrot.lane.b32.xlu0 %v1421, 20
  %v2311 = vpop.permute.xlu0 %2310
  %2312 = vrot.lane.b32.xlu0 %v1422, 20
  %v2313 = vpop.permute.xlu0 %2312
  %2314 = vrot.lane.b32.xlu0 %v1423, 20
  %v2315 = vpop.permute.xlu0 %2314
  %2316 = vrot.lane.b32.xlu0 %v1424, 20
  %v2317 = vpop.permute.xlu0 %2316
  %2318 = vrot.lane.b32.xlu0 %v1425, 20
  %v2319 = vpop.permute.xlu0 %2318
  %v2344 = vsel %vm1766, %v1398, %v2055
  %v2345 = vsel %vm1766, %v1399, %v2057
  %v2346 = vsel %vm1766, %v1400, %v2059
  %v2347 = vsel %vm1766, %v1401, %v2061
  %v2348 = vsel %vm1766, %v1402, %v2063
  %v2349 = vsel %vm1766, %v1403, %v2065
  %v2350 = vsel %vm1766, %v1404, %v2067
  %v2351 = vsel %vm1766, %v1405, %v2069
  %v2352 = vsel %vm1766, %v1406, %v2071
  %v2353 = vsel %vm1766, %v1407, %v2073
  %v2354 = vsel %vm1766, %v1408, %v2075
  %v2355 = vsel %vm1766, %v1409, %v2077
  %v2356 = vsel %vm1766, %v1410, %v2079
  %v2357 = vsel %vm1766, %v1411, %v2081
  %v2358 = vsel %vm1766, %v1412, %v2083
  %v2359 = vsel %vm1766, %v1413, %v2085
  %v2360 = vsel %vm1766, %v1414, %v2087
  %v2361 = vsel %vm1766, %v1415, %v2089
  %v2362 = vsel %vm1766, %v1416, %v2091
  %v2363 = vsel %vm1766, %v1417, %v2093
  %v2364 = vsel %vm1766, %v1418, %v2095
  %v2365 = vsel %vm1766, %v1419, %v2097
  %v2366 = vsel %vm1766, %v1420, %v2099
  %v2367 = vsel %vm1766, %v1421, %v2101
  %v2368 = vsel %vm1791, %v2344, %v2127
  %v2369 = vsel %vm1791, %v2345, %v2129
  %v2370 = vsel %vm1791, %v2346, %v2131
  %v2371 = vsel %vm1791, %v2347, %v2133
  %v2372 = vsel %vm1791, %v2348, %v2135
  %v2373 = vsel %vm1791, %v2349, %v2137
  %v2374 = vsel %vm1791, %v2350, %v2139
  %v2375 = vsel %vm1791, %v2351, %v2141
  %v2376 = vsel %vm1791, %v2352, %v2143
  %v2377 = vsel %vm1791, %v2353, %v2145
  %v2378 = vsel %vm1791, %v2354, %v2147
  %v2379 = vsel %vm1791, %v2355, %v2149
  %v2380 = vsel %vm1791, %v2356, %v2151
  %v2381 = vsel %vm1791, %v2357, %v2153
  %v2382 = vsel %vm1791, %v2358, %v2155
  %v2383 = vsel %vm1791, %v2359, %v2157
  %v2384 = vsel %vm1791, %v2360, %v2159
  %v2385 = vsel %vm1791, %v2361, %v2161
  %v2386 = vsel %vm1791, %v2362, %v2163
  %v2387 = vsel %vm1791, %v2363, %v2165
  %v2388 = vsel %vm1791, %v2364, %v2167
  %v2389 = vsel %vm1791, %v2365, %v2169
  %v2390 = vsel %vm1791, %v2366, %v2171
  %v2391 = vsel %vm1791, %v2367, %v2173
  %v2392 = vsel %vm1816, %v2368, %v2199
  %v2393 = vsel %vm1816, %v2369, %v2201
  %v2394 = vsel %vm1816, %v2370, %v2203
  %v2395 = vsel %vm1816, %v2371, %v2205
  %v2396 = vsel %vm1816, %v2372, %v2207
  %v2397 = vsel %vm1816, %v2373, %v2209
  %v2398 = vsel %vm1816, %v2374, %v2211
  %v2399 = vsel %vm1816, %v2375, %v2213
  %v2400 = vsel %vm1816, %v2376, %v2215
  %v2401 = vsel %vm1816, %v2377, %v2217
  %v2402 = vsel %vm1816, %v2378, %v2219
  %v2403 = vsel %vm1816, %v2379, %v2221
  %v2404 = vsel %vm1816, %v2380, %v2223
  %v2405 = vsel %vm1816, %v2381, %v2225
  %v2406 = vsel %vm1816, %v2382, %v2227
  %v2407 = vsel %vm1816, %v2383, %v2229
  %v2408 = vsel %vm1816, %v2384, %v2231
  %v2409 = vsel %vm1816, %v2385, %v2233
  %v2410 = vsel %vm1816, %v2386, %v2235
  %v2411 = vsel %vm1816, %v2387, %v2237
  %v2412 = vsel %vm1816, %v2388, %v2239
  %v2413 = vsel %vm1816, %v2389, %v2241
  %v2414 = vsel %vm1816, %v2390, %v2243
  %v2415 = vsel %vm1816, %v2391, %v2245
  %v2416 = vsel %vm1841, %v2392, %v2273
  %v2417 = vsel %vm1841, %v2393, %v2275
  %v2418 = vsel %vm1841, %v2394, %v2277
  %v2419 = vsel %vm1841, %v2395, %v2279
  %v2420 = vsel %vm1841, %v2396, %v2281
  %v2421 = vsel %vm1841, %v2397, %v2283
  %v2422 = vsel %vm1841, %v2398, %v2285
  %v2423 = vsel %vm1841, %v2399, %v2287
  %v2424 = vsel %vm1841, %v2400, %v2289
  %v2425 = vsel %vm1841, %v2401, %v2291
  %v2426 = vsel %vm1841, %v2402, %v2293
  %v2427 = vsel %vm1841, %v2403, %v2295
  %v2428 = vsel %vm1841, %v2404, %v2297
  %v2429 = vsel %vm1841, %v2405, %v2299
  %v2430 = vsel %vm1841, %v2406, %v2301
  %v2431 = vsel %vm1841, %v2407, %v2303
  %v2432 = vsel %vm1841, %v2408, %v2305
  %v2433 = vsel %vm1841, %v2409, %v2307
  %v2434 = vsel %vm1841, %v2410, %v2309
  %v2435 = vsel %vm1841, %v2411, %v2311
  %v2436 = vsel %vm1841, %v2412, %v2313
  %v2437 = vsel %vm1841, %v2413, %v2315
  %v2438 = vsel %vm1841, %v2414, %v2317
  %v2439 = vsel %vm1841, %v2415, %v2319
  %v2442 = vrot.slane %v2418, 4
  %v2443 = vrot.slane %v2419, 4
  %v2444 = vsel %vm1868, %v2442, %v2443
  %v2448 = vrot.slane %v2422, 4
  %v2449 = vrot.slane %v2423, 4
  %v2450 = vsel %vm1868, %v2448, %v2449
  %v2454 = vrot.slane %v2426, 4
  %v2455 = vrot.slane %v2427, 4
  %v2456 = vsel %vm1868, %v2454, %v2455
  %v2460 = vrot.slane %v2430, 4
  %v2461 = vrot.slane %v2431, 4
  %v2462 = vsel %vm1868, %v2460, %v2461
  %v2466 = vrot.slane %v2434, 4
  %v2467 = vrot.slane %v2435, 4
  %v2468 = vsel %vm1868, %v2466, %v2467
  %v2472 = vrot.slane %v2438, 4
  %v2473 = vrot.slane %v2439, 4
  %v2474 = vsel %vm1868, %v2472, %v2473
  %v2476 = vsel %vm1868, %v2417, %v2442
  %v2477 = vsel %vm1868, %v2421, %v2448
  %v2478 = vsel %vm1868, %v2425, %v2454
  %v2479 = vsel %vm1868, %v2429, %v2460
  %v2480 = vsel %vm1868, %v2433, %v2466
  %v2481 = vsel %vm1868, %v2437, %v2472
  %v2483 = vsel %vm1912, %v2416, 0
  %v2486 = vsel %vm1912, %v2476, 0
  %v2488 = vsel %vm1912, %v2444, 0
  %v2491 = vsel %vm1912, %v2420, 0
  %v2494 = vsel %vm1912, %v2477, 0
  %v2496 = vsel %vm1912, %v2450, 0
  %v2499 = vsel %vm1912, %v2424, 0
  %v2502 = vsel %vm1912, %v2478, 0
  %v2504 = vsel %vm1912, %v2456, 0
  %v2507 = vsel %vm1912, %v2428, 0
  %v2510 = vsel %vm1912, %v2479, 0
  %v2512 = vsel %vm1912, %v2462, 0
  %v2515 = vsel %vm1912, %v2432, 0
  %v2518 = vsel %vm1912, %v2480, 0
  %v2520 = vsel %vm1912, %v2468, 0
  %v2523 = vsel %vm1912, %v2436, 0
  %v2526 = vsel %vm1912, %v2481, 0
  %v2528 = vsel %vm1912, %v2474, 0
  %2530 = vmatpush.msra.mxu0 0.0
  %2531 = vmatpush.msra.mxu0 0.0
  %2532 = vmatpush.msra.mxu0 0.0
  %2533 = vmatpush.msra.mxu0 0.0
  %2534 = vmatpush.msra.mxu0 0.0
  %2535 = vmatpush.msra.mxu0 0.0
  %2536 = vmatpush.msra.mxu0 0.0
  %2537 = vmatpush.msra.mxu0 0.0
  %2538 = vmatpush.msra.mxu0 0.0
  %2539 = vmatpush.msra.mxu0 0.0
  %2540 = vmatpush.msra.mxu0 0.0
  %2541 = vmatpush.msra.mxu0 0.0
  %2542 = vmatpush.msra.mxu0 %v1963
  %2543 = vmatpush.msra.mxu0 %v16
  %2544 = vmatpush.msra.mxu0 %v15
  %2545 = vmatpush.msra.mxu0 %v14
  %2546 = vmatmul.f32.gmra.mxu0 %v2483
  %v2547 = vpop.f32.mrf.mxu0
  %v2548 = vadd.f32 %v1910, %v2547
  %2549 = vmatmul.f32.gmra.mxu0 %v2486
  %v2550 = vpop.f32.mrf.mxu0
  %v2551 = vadd.f32 %v1910, %v2550
  %2552 = vmatmul.f32.gmra.mxu0 %v2488
  %v2553 = vpop.f32.mrf.mxu0
  %v2554 = vadd.f32 %v1910, %v2553
  %2555 = vmatmul.f32.gmra.mxu0 %v2491
  %v2556 = vpop.f32.mrf.mxu0
  %v2557 = vadd.f32 %v1910, %v2556
  %2558 = vmatmul.f32.gmra.mxu0 %v2494
  %v2559 = vpop.f32.mrf.mxu0
  %v2560 = vadd.f32 %v1910, %v2559
  %2561 = vmatmul.f32.gmra.mxu0 %v2496
  %v2562 = vpop.f32.mrf.mxu0
  %v2563 = vadd.f32 %v1910, %v2562
  %2564 = vmatmul.f32.gmra.mxu0 %v2499
  %v2565 = vpop.f32.mrf.mxu0
  %v2566 = vadd.f32 %v1910, %v2565
  %2567 = vmatmul.f32.gmra.mxu0 %v2502
  %v2568 = vpop.f32.mrf.mxu0
  %v2569 = vadd.f32 %v1910, %v2568
  %2570 = vmatmul.f32.gmra.mxu0 %v2504
  %v2571 = vpop.f32.mrf.mxu0
  %v2572 = vadd.f32 %v1910, %v2571
  %2573 = vmatmul.f32.gmra.mxu0 %v2507
  %v2574 = vpop.f32.mrf.mxu0
  %v2575 = vadd.f32 %v1910, %v2574
  %2576 = vmatmul.f32.gmra.mxu0 %v2510
  %v2577 = vpop.f32.mrf.mxu0
  %v2578 = vadd.f32 %v1910, %v2577
  %2579 = vmatmul.f32.gmra.mxu0 %v2512
  %v2580 = vpop.f32.mrf.mxu0
  %v2581 = vadd.f32 %v1910, %v2580
  %2582 = vmatmul.f32.gmra.mxu0 %v2515
  %v2583 = vpop.f32.mrf.mxu0
  %v2584 = vadd.f32 %v1910, %v2583
  %2585 = vmatmul.f32.gmra.mxu0 %v2518
  %v2586 = vpop.f32.mrf.mxu0
  %v2587 = vadd.f32 %v1910, %v2586
  %2588 = vmatmul.f32.gmra.mxu0 %v2520
  %v2589 = vpop.f32.mrf.mxu0
  %v2590 = vadd.f32 %v1910, %v2589
  %2591 = vmatmul.f32.gmra.mxu0 %v2523
  %v2592 = vpop.f32.mrf.mxu0
  %v2593 = vadd.f32 %v1910, %v2592
  %2594 = vmatmul.f32.gmra.mxu0 %v2526
  %v2595 = vpop.f32.mrf.mxu0
  %v2596 = vadd.f32 %v1910, %v2595
  %2597 = vmatmul.f32.gmra.mxu0 %v2528
  %v2598 = vpop.f32.mrf.mxu0
  %v2599 = vadd.f32 %v1910, %v2598
  %2600 = vdwg.mxu0
  %v2601 = vmax.f32 %v2548, 0.0
  %v2602 = vmax.f32 %v2551, 0.0
  %v2603 = vmax.f32 %v2554, 0.0
  %v2604 = vmax.f32 %v2557, 0.0
  %v2605 = vmax.f32 %v2560, 0.0
  %v2606 = vmax.f32 %v2563, 0.0
  %v2607 = vmax.f32 %v2566, 0.0
  %v2608 = vmax.f32 %v2569, 0.0
  %v2609 = vmax.f32 %v2572, 0.0
  %v2610 = vmax.f32 %v2575, 0.0
  %v2611 = vmax.f32 %v2578, 0.0
  %v2612 = vmax.f32 %v2581, 0.0
  %v2613 = vmax.f32 %v2584, 0.0
  %v2614 = vmax.f32 %v2587, 0.0
  %v2615 = vmax.f32 %v2590, 0.0
  %v2616 = vmax.f32 %v2593, 0.0
  %v2617 = vmax.f32 %v2596, 0.0
  %v2618 = vmax.f32 %v2599, 0.0
  %v2619 = vmax.f32 %v2036, %v2601
  %v2620 = vmax.f32 %v2037, %v2602
  %v2621 = vmax.f32 %v2038, %v2603
  %v2622 = vmax.f32 %v2039, %v2604
  %v2623 = vmax.f32 %v2040, %v2605
  %v2624 = vmax.f32 %v2041, %v2606
  %v2625 = vmax.f32 %v2042, %v2607
  %v2626 = vmax.f32 %v2043, %v2608
  %v2627 = vmax.f32 %v2044, %v2609
  %v2628 = vmax.f32 %v2045, %v2610
  %v2629 = vmax.f32 %v2046, %v2611
  %v2630 = vmax.f32 %v2047, %v2612
  %v2631 = vmax.f32 %v2048, %v2613
  %v2632 = vmax.f32 %v2049, %v2614
  %v2633 = vmax.f32 %v2050, %v2615
  %v2634 = vmax.f32 %v2051, %v2616
  %v2635 = vmax.f32 %v2052, %v2617
  %v2636 = vmax.f32 %v2053, %v2618
  %v2637 = vld [vmem:[%s47 + $0x2] sm:$0xff]
  %v2638 = vld [vmem:[%s47 + $0xa] sm:$0xf]
  %v2639 = vld [vmem:[%s47 + $0x12] sm:$0xff]
  %v2640 = vld [vmem:[%s47 + $0x1a] sm:$0xf]
  %v2641 = vld [vmem:[%s47 + $0x22] sm:$0xff]
  %v2642 = vld [vmem:[%s47 + $0x2a] sm:$0xf]
  %v2643 = vld [vmem:[%s47 + $0x32] sm:$0xff]
  %v2644 = vld [vmem:[%s47 + $0x3a] sm:$0xf]
  %v2645 = vld [vmem:[%s47 + $0x42] sm:$0xff]
  %v2646 = vld [vmem:[%s47 + $0x4a] sm:$0xf]
  %v2647 = vld [vmem:[%s47 + $0x52] sm:$0xff]
  %v2648 = vld [vmem:[%s47 + $0x5a] sm:$0xf]
  %v2649 = vld [vmem:[%s47 + $0x62] sm:$0xff]
  %v2650 = vld [vmem:[%s47 + $0x6a] sm:$0xf]
  %v2651 = vld [vmem:[%s47 + $0x72] sm:$0xff]
  %v2652 = vld [vmem:[%s47 + $0x7a] sm:$0xf]
  %v2653 = vld [vmem:[%s47 + $0x82] sm:$0xff]
  %v2654 = vld [vmem:[%s47 + $0x8a] sm:$0xf]
  %v2655 = vld [vmem:[%s47 + $0x92] sm:$0xff]
  %v2656 = vld [vmem:[%s47 + $0x9a] sm:$0xf]
  %v2657 = vld [vmem:[%s47 + $0xa2] sm:$0xff]
  %v2658 = vld [vmem:[%s47 + $0xaa] sm:$0xf]
  %v2659 = vld [vmem:[%s47 + $0xb2] sm:$0xff]
  %v2660 = vld [vmem:[%s47 + $0xba] sm:$0xf]
  %v2661 = vld [vmem:[%s47 + $0xc2] sm:$0xff]
  %v2662 = vld [vmem:[%s47 + $0xca] sm:$0xf]
  %v2663 = vld [vmem:[%s47 + $0xd2] sm:$0xff]
  %v2664 = vld [vmem:[%s47 + $0xda] sm:$0xf]
  %2665 = vrot.lane.b32.xlu0 %v76, 1
  %v2666 = vpop.permute.xlu0 %2665
  %2667 = vrot.lane.b32.xlu0 %v77, 1
  %v2668 = vpop.permute.xlu0 %2667
  %2669 = vrot.lane.b32.xlu0 %v78, 1
  %v2670 = vpop.permute.xlu0 %2669
  %2671 = vrot.lane.b32.xlu0 %v79, 1
  %v2672 = vpop.permute.xlu0 %2671
  %2673 = vrot.lane.b32.xlu0 %v80, 1
  %v2674 = vpop.permute.xlu0 %2673
  %2675 = vrot.lane.b32.xlu0 %v81, 1
  %v2676 = vpop.permute.xlu0 %2675
  %2677 = vrot.lane.b32.xlu0 %v82, 1
  %v2678 = vpop.permute.xlu0 %2677
  %2679 = vrot.lane.b32.xlu0 %v83, 1
  %v2680 = vpop.permute.xlu0 %2679
  %2681 = vrot.lane.b32.xlu0 %v84, 1
  %v2682 = vpop.permute.xlu0 %2681
  %2683 = vrot.lane.b32.xlu0 %v85, 1
  %v2684 = vpop.permute.xlu0 %2683
  %2685 = vrot.lane.b32.xlu0 %v86, 1
  %v2686 = vpop.permute.xlu0 %2685
  %2687 = vrot.lane.b32.xlu0 %v87, 1
  %v2688 = vpop.permute.xlu0 %2687
  %2689 = vrot.lane.b32.xlu0 %v88, 1
  %v2690 = vpop.permute.xlu0 %2689
  %2691 = vrot.lane.b32.xlu0 %v89, 1
  %v2692 = vpop.permute.xlu0 %2691
  %2693 = vrot.lane.b32.xlu0 %v90, 1
  %v2694 = vpop.permute.xlu0 %2693
  %2695 = vrot.lane.b32.xlu0 %v91, 1
  %v2696 = vpop.permute.xlu0 %2695
  %2697 = vrot.lane.b32.xlu0 %v92, 1
  %v2698 = vpop.permute.xlu0 %2697
  %2699 = vrot.lane.b32.xlu0 %v93, 1
  %v2700 = vpop.permute.xlu0 %2699
  %2701 = vrot.lane.b32.xlu0 %v94, 1
  %v2702 = vpop.permute.xlu0 %2701
  %2703 = vrot.lane.b32.xlu0 %v95, 1
  %v2704 = vpop.permute.xlu0 %2703
  %2705 = vrot.lane.b32.xlu0 %v96, 1
  %v2706 = vpop.permute.xlu0 %2705
  %2707 = vrot.lane.b32.xlu0 %v97, 1
  %v2708 = vpop.permute.xlu0 %2707
  %2709 = vrot.lane.b32.xlu0 %v98, 1
  %v2710 = vpop.permute.xlu0 %2709
  %2711 = vrot.lane.b32.xlu0 %v99, 1
  %v2712 = vpop.permute.xlu0 %2711
  %2713 = vrot.lane.b32.xlu0 %v100, 1
  %v2714 = vpop.permute.xlu0 %2713
  %2715 = vrot.lane.b32.xlu0 %v101, 1
  %v2716 = vpop.permute.xlu0 %2715
  %2717 = vrot.lane.b32.xlu0 %v102, 1
  %v2718 = vpop.permute.xlu0 %2717
  %2719 = vrot.lane.b32.xlu0 %v103, 1
  %v2720 = vpop.permute.xlu0 %2719
  %2749 = vrot.lane.b32.xlu0 %v104, 2
  %v2750 = vpop.permute.xlu0 %2749
  %2751 = vrot.lane.b32.xlu0 %v105, 2
  %v2752 = vpop.permute.xlu0 %2751
  %2753 = vrot.lane.b32.xlu0 %v106, 2
  %v2754 = vpop.permute.xlu0 %2753
  %2755 = vrot.lane.b32.xlu0 %v107, 2
  %v2756 = vpop.permute.xlu0 %2755
  %2757 = vrot.lane.b32.xlu0 %v108, 2
  %v2758 = vpop.permute.xlu0 %2757
  %2759 = vrot.lane.b32.xlu0 %v109, 2
  %v2760 = vpop.permute.xlu0 %2759
  %2761 = vrot.lane.b32.xlu0 %v110, 2
  %v2762 = vpop.permute.xlu0 %2761
  %2763 = vrot.lane.b32.xlu0 %v111, 2
  %v2764 = vpop.permute.xlu0 %2763
  %2765 = vrot.lane.b32.xlu0 %v112, 2
  %v2766 = vpop.permute.xlu0 %2765
  %2767 = vrot.lane.b32.xlu0 %v113, 2
  %v2768 = vpop.permute.xlu0 %2767
  %2769 = vrot.lane.b32.xlu0 %v114, 2
  %v2770 = vpop.permute.xlu0 %2769
  %2771 = vrot.lane.b32.xlu0 %v115, 2
  %v2772 = vpop.permute.xlu0 %2771
  %2773 = vrot.lane.b32.xlu0 %v116, 2
  %v2774 = vpop.permute.xlu0 %2773
  %2775 = vrot.lane.b32.xlu0 %v117, 2
  %v2776 = vpop.permute.xlu0 %2775
  %2777 = vrot.lane.b32.xlu0 %v118, 2
  %v2778 = vpop.permute.xlu0 %2777
  %2779 = vrot.lane.b32.xlu0 %v119, 2
  %v2780 = vpop.permute.xlu0 %2779
  %2781 = vrot.lane.b32.xlu0 %v120, 2
  %v2782 = vpop.permute.xlu0 %2781
  %2783 = vrot.lane.b32.xlu0 %v121, 2
  %v2784 = vpop.permute.xlu0 %2783
  %2785 = vrot.lane.b32.xlu0 %v122, 2
  %v2786 = vpop.permute.xlu0 %2785
  %2787 = vrot.lane.b32.xlu0 %v123, 2
  %v2788 = vpop.permute.xlu0 %2787
  %2789 = vrot.lane.b32.xlu0 %v124, 2
  %v2790 = vpop.permute.xlu0 %2789
  %2791 = vrot.lane.b32.xlu0 %v125, 2
  %v2792 = vpop.permute.xlu0 %2791
  %2793 = vrot.lane.b32.xlu0 %v126, 2
  %v2794 = vpop.permute.xlu0 %2793
  %2795 = vrot.lane.b32.xlu0 %v127, 2
  %v2796 = vpop.permute.xlu0 %2795
  %2797 = vrot.lane.b32.xlu0 %v128, 2
  %v2798 = vpop.permute.xlu0 %2797
  %2799 = vrot.lane.b32.xlu0 %v129, 2
  %v2800 = vpop.permute.xlu0 %2799
  %2801 = vrot.lane.b32.xlu0 %v130, 2
  %v2802 = vpop.permute.xlu0 %2801
  %2803 = vrot.lane.b32.xlu0 %v131, 2
  %v2804 = vpop.permute.xlu0 %2803
  %2833 = vrot.lane.b32.xlu0 %v132, 3
  %v2834 = vpop.permute.xlu0 %2833
  %2835 = vrot.lane.b32.xlu0 %v133, 3
  %v2836 = vpop.permute.xlu0 %2835
  %2837 = vrot.lane.b32.xlu0 %v134, 3
  %v2838 = vpop.permute.xlu0 %2837
  %2839 = vrot.lane.b32.xlu0 %v135, 3
  %v2840 = vpop.permute.xlu0 %2839
  %2841 = vrot.lane.b32.xlu0 %v136, 3
  %v2842 = vpop.permute.xlu0 %2841
  %2843 = vrot.lane.b32.xlu0 %v137, 3
  %v2844 = vpop.permute.xlu0 %2843
  %2845 = vrot.lane.b32.xlu0 %v138, 3
  %v2846 = vpop.permute.xlu0 %2845
  %2847 = vrot.lane.b32.xlu0 %v139, 3
  %v2848 = vpop.permute.xlu0 %2847
  %2849 = vrot.lane.b32.xlu0 %v140, 3
  %v2850 = vpop.permute.xlu0 %2849
  %2851 = vrot.lane.b32.xlu0 %v141, 3
  %v2852 = vpop.permute.xlu0 %2851
  %2853 = vrot.lane.b32.xlu0 %v142, 3
  %v2854 = vpop.permute.xlu0 %2853
  %2855 = vrot.lane.b32.xlu0 %v143, 3
  %v2856 = vpop.permute.xlu0 %2855
  %2857 = vrot.lane.b32.xlu0 %v144, 3
  %v2858 = vpop.permute.xlu0 %2857
  %2859 = vrot.lane.b32.xlu0 %v145, 3
  %v2860 = vpop.permute.xlu0 %2859
  %2861 = vrot.lane.b32.xlu0 %v146, 3
  %v2862 = vpop.permute.xlu0 %2861
  %2863 = vrot.lane.b32.xlu0 %v147, 3
  %v2864 = vpop.permute.xlu0 %2863
  %2865 = vrot.lane.b32.xlu0 %v148, 3
  %v2866 = vpop.permute.xlu0 %2865
  %2867 = vrot.lane.b32.xlu0 %v149, 3
  %v2868 = vpop.permute.xlu0 %2867
  %2869 = vrot.lane.b32.xlu0 %v150, 3
  %v2870 = vpop.permute.xlu0 %2869
  %2871 = vrot.lane.b32.xlu0 %v151, 3
  %v2872 = vpop.permute.xlu0 %2871
  %2873 = vrot.lane.b32.xlu0 %v152, 3
  %v2874 = vpop.permute.xlu0 %2873
  %2875 = vrot.lane.b32.xlu0 %v153, 3
  %v2876 = vpop.permute.xlu0 %2875
  %2877 = vrot.lane.b32.xlu0 %v154, 3
  %v2878 = vpop.permute.xlu0 %2877
  %2879 = vrot.lane.b32.xlu0 %v155, 3
  %v2880 = vpop.permute.xlu0 %2879
  %2881 = vrot.lane.b32.xlu0 %v156, 3
  %v2882 = vpop.permute.xlu0 %2881
  %2883 = vrot.lane.b32.xlu0 %v157, 3
  %v2884 = vpop.permute.xlu0 %2883
  %2885 = vrot.lane.b32.xlu0 %v158, 3
  %v2886 = vpop.permute.xlu0 %2885
  %2887 = vrot.lane.b32.xlu0 %v159, 3
  %v2888 = vpop.permute.xlu0 %2887
  %2945 = vrot.lane.b32.xlu0 %v2637, 4
  %v2946 = vpop.permute.xlu0 %2945
  %2947 = vrot.lane.b32.xlu0 %v2638, 4
  %v2948 = vpop.permute.xlu0 %2947
  %2949 = vrot.lane.b32.xlu0 %v2639, 4
  %v2950 = vpop.permute.xlu0 %2949
  %2951 = vrot.lane.b32.xlu0 %v2640, 4
  %v2952 = vpop.permute.xlu0 %2951
  %2953 = vrot.lane.b32.xlu0 %v2641, 4
  %v2954 = vpop.permute.xlu0 %2953
  %2955 = vrot.lane.b32.xlu0 %v2642, 4
  %v2956 = vpop.permute.xlu0 %2955
  %2957 = vrot.lane.b32.xlu0 %v2643, 4
  %v2958 = vpop.permute.xlu0 %2957
  %2959 = vrot.lane.b32.xlu0 %v2644, 4
  %v2960 = vpop.permute.xlu0 %2959
  %2961 = vrot.lane.b32.xlu0 %v2645, 4
  %v2962 = vpop.permute.xlu0 %2961
  %2963 = vrot.lane.b32.xlu0 %v2646, 4
  %v2964 = vpop.permute.xlu0 %2963
  %2965 = vrot.lane.b32.xlu0 %v2647, 4
  %v2966 = vpop.permute.xlu0 %2965
  %2967 = vrot.lane.b32.xlu0 %v2648, 4
  %v2968 = vpop.permute.xlu0 %2967
  %2969 = vrot.lane.b32.xlu0 %v2649, 4
  %v2970 = vpop.permute.xlu0 %2969
  %2971 = vrot.lane.b32.xlu0 %v2650, 4
  %v2972 = vpop.permute.xlu0 %2971
  %2973 = vrot.lane.b32.xlu0 %v2651, 4
  %v2974 = vpop.permute.xlu0 %2973
  %2975 = vrot.lane.b32.xlu0 %v2652, 4
  %v2976 = vpop.permute.xlu0 %2975
  %2977 = vrot.lane.b32.xlu0 %v2653, 4
  %v2978 = vpop.permute.xlu0 %2977
  %2979 = vrot.lane.b32.xlu0 %v2654, 4
  %v2980 = vpop.permute.xlu0 %2979
  %2981 = vrot.lane.b32.xlu0 %v2655, 4
  %v2982 = vpop.permute.xlu0 %2981
  %2983 = vrot.lane.b32.xlu0 %v2656, 4
  %v2984 = vpop.permute.xlu0 %2983
  %2985 = vrot.lane.b32.xlu0 %v2657, 4
  %v2986 = vpop.permute.xlu0 %2985
  %2987 = vrot.lane.b32.xlu0 %v2658, 4
  %v2988 = vpop.permute.xlu0 %2987
  %2989 = vrot.lane.b32.xlu0 %v2659, 4
  %v2990 = vpop.permute.xlu0 %2989
  %2991 = vrot.lane.b32.xlu0 %v2660, 4
  %v2992 = vpop.permute.xlu0 %2991
  %2993 = vrot.lane.b32.xlu0 %v2661, 4
  %v2994 = vpop.permute.xlu0 %2993
  %2995 = vrot.lane.b32.xlu0 %v2662, 4
  %v2996 = vpop.permute.xlu0 %2995
  %2997 = vrot.lane.b32.xlu0 %v2663, 4
  %v2998 = vpop.permute.xlu0 %2997
  %2999 = vrot.lane.b32.xlu0 %v2664, 4
  %v3000 = vpop.permute.xlu0 %2999
  %v3029 = vsel %vm608, %v48, %v2666
  %v3030 = vsel %vm608, %v49, %v2668
  %v3031 = vsel %vm608, %v50, %v2670
  %v3032 = vsel %vm608, %v51, %v2672
  %v3033 = vsel %vm608, %v52, %v2674
  %v3034 = vsel %vm608, %v53, %v2676
  %v3035 = vsel %vm608, %v54, %v2678
  %v3036 = vsel %vm608, %v55, %v2680
  %v3037 = vsel %vm608, %v56, %v2682
  %v3038 = vsel %vm608, %v57, %v2684
  %v3039 = vsel %vm608, %v58, %v2686
  %v3040 = vsel %vm608, %v59, %v2688
  %v3041 = vsel %vm608, %v60, %v2690
  %v3042 = vsel %vm608, %v61, %v2692
  %v3043 = vsel %vm608, %v62, %v2694
  %v3044 = vsel %vm608, %v63, %v2696
  %v3045 = vsel %vm608, %v64, %v2698
  %v3046 = vsel %vm608, %v65, %v2700
  %v3047 = vsel %vm608, %v66, %v2702
  %v3048 = vsel %vm608, %v67, %v2704
  %v3049 = vsel %vm608, %v68, %v2706
  %v3050 = vsel %vm608, %v69, %v2708
  %v3051 = vsel %vm608, %v70, %v2710
  %v3052 = vsel %vm608, %v71, %v2712
  %v3053 = vsel %vm608, %v72, %v2714
  %v3054 = vsel %vm608, %v73, %v2716
  %v3055 = vsel %vm608, %v74, %v2718
  %v3056 = vsel %vm608, %v75, %v2720
  %v3057 = vsel %vm637, %v3029, %v2750
  %v3058 = vsel %vm637, %v3030, %v2752
  %v3059 = vsel %vm637, %v3031, %v2754
  %v3060 = vsel %vm637, %v3032, %v2756
  %v3061 = vsel %vm637, %v3033, %v2758
  %v3062 = vsel %vm637, %v3034, %v2760
  %v3063 = vsel %vm637, %v3035, %v2762
  %v3064 = vsel %vm637, %v3036, %v2764
  %v3065 = vsel %vm637, %v3037, %v2766
  %v3066 = vsel %vm637, %v3038, %v2768
  %v3067 = vsel %vm637, %v3039, %v2770
  %v3068 = vsel %vm637, %v3040, %v2772
  %v3069 = vsel %vm637, %v3041, %v2774
  %v3070 = vsel %vm637, %v3042, %v2776
  %v3071 = vsel %vm637, %v3043, %v2778
  %v3072 = vsel %vm637, %v3044, %v2780
  %v3073 = vsel %vm637, %v3045, %v2782
  %v3074 = vsel %vm637, %v3046, %v2784
  %v3075 = vsel %vm637, %v3047, %v2786
  %v3076 = vsel %vm637, %v3048, %v2788
  %v3077 = vsel %vm637, %v3049, %v2790
  %v3078 = vsel %vm637, %v3050, %v2792
  %v3079 = vsel %vm637, %v3051, %v2794
  %v3080 = vsel %vm637, %v3052, %v2796
  %v3081 = vsel %vm637, %v3053, %v2798
  %v3082 = vsel %vm637, %v3054, %v2800
  %v3083 = vsel %vm637, %v3055, %v2802
  %v3084 = vsel %vm637, %v3056, %v2804
  %v3085 = vsel %vm666, %v3057, %v2834
  %v3086 = vsel %vm666, %v3058, %v2836
  %v3087 = vsel %vm666, %v3059, %v2838
  %v3088 = vsel %vm666, %v3060, %v2840
  %v3089 = vsel %vm666, %v3061, %v2842
  %v3090 = vsel %vm666, %v3062, %v2844
  %v3091 = vsel %vm666, %v3063, %v2846
  %v3092 = vsel %vm666, %v3064, %v2848
  %v3093 = vsel %vm666, %v3065, %v2850
  %v3094 = vsel %vm666, %v3066, %v2852
  %v3095 = vsel %vm666, %v3067, %v2854
  %v3096 = vsel %vm666, %v3068, %v2856
  %v3097 = vsel %vm666, %v3069, %v2858
  %v3098 = vsel %vm666, %v3070, %v2860
  %v3099 = vsel %vm666, %v3071, %v2862
  %v3100 = vsel %vm666, %v3072, %v2864
  %v3101 = vsel %vm666, %v3073, %v2866
  %v3102 = vsel %vm666, %v3074, %v2868
  %v3103 = vsel %vm666, %v3075, %v2870
  %v3104 = vsel %vm666, %v3076, %v2872
  %v3105 = vsel %vm666, %v3077, %v2874
  %v3106 = vsel %vm666, %v3078, %v2876
  %v3107 = vsel %vm666, %v3079, %v2878
  %v3108 = vsel %vm666, %v3080, %v2880
  %v3109 = vsel %vm666, %v3081, %v2882
  %v3110 = vsel %vm666, %v3082, %v2884
  %v3111 = vsel %vm666, %v3083, %v2886
  %v3112 = vsel %vm666, %v3084, %v2888
  %v3113 = vsel %vm695, %v3085, %v2946
  %v3114 = vsel %vm695, %v3086, %v2948
  %v3115 = vsel %vm695, %v3087, %v2950
  %v3116 = vsel %vm695, %v3088, %v2952
  %v3117 = vsel %vm695, %v3089, %v2954
  %v3118 = vsel %vm695, %v3090, %v2956
  %v3119 = vsel %vm695, %v3091, %v2958
  %v3120 = vsel %vm695, %v3092, %v2960
  %v3121 = vsel %vm695, %v3093, %v2962
  %v3122 = vsel %vm695, %v3094, %v2964
  %v3123 = vsel %vm695, %v3095, %v2966
  %v3124 = vsel %vm695, %v3096, %v2968
  %v3125 = vsel %vm695, %v3097, %v2970
  %v3126 = vsel %vm695, %v3098, %v2972
  %v3127 = vsel %vm695, %v3099, %v2974
  %v3128 = vsel %vm695, %v3100, %v2976
  %v3129 = vsel %vm695, %v3101, %v2978
  %v3130 = vsel %vm695, %v3102, %v2980
  %v3131 = vsel %vm695, %v3103, %v2982
  %v3132 = vsel %vm695, %v3104, %v2984
  %v3133 = vsel %vm695, %v3105, %v2986
  %v3134 = vsel %vm695, %v3106, %v2988
  %v3135 = vsel %vm695, %v3107, %v2990
  %v3136 = vsel %vm695, %v3108, %v2992
  %v3137 = vsel %vm695, %v3109, %v2994
  %v3138 = vsel %vm695, %v3110, %v2996
  %v3139 = vsel %vm695, %v3111, %v2998
  %v3140 = vsel %vm695, %v3112, %v3000
  %v3141 = vld [vmem:[%s753 + $0x2] sm:$0xff]
  %v3142 = vld [vmem:[%s753 + $0xa] sm:$0xf]
  %v3143 = vld [vmem:[%s753 + $0x12] sm:$0xff]
  %v3144 = vld [vmem:[%s753 + $0x1a] sm:$0xf]
  %v3145 = vld [vmem:[%s753 + $0x22] sm:$0xff]
  %v3146 = vld [vmem:[%s753 + $0x2a] sm:$0xf]
  %v3147 = vld [vmem:[%s753 + $0x32] sm:$0xff]
  %v3148 = vld [vmem:[%s753 + $0x3a] sm:$0xf]
  %v3149 = vld [vmem:[%s753 + $0x42] sm:$0xff]
  %v3150 = vld [vmem:[%s753 + $0x4a] sm:$0xf]
  %v3151 = vld [vmem:[%s753 + $0x52] sm:$0xff]
  %v3152 = vld [vmem:[%s753 + $0x5a] sm:$0xf]
  %v3153 = vld [vmem:[%s753 + $0x62] sm:$0xff]
  %v3154 = vld [vmem:[%s753 + $0x6a] sm:$0xf]
  %v3155 = vld [vmem:[%s753 + $0x72] sm:$0xff]
  %v3156 = vld [vmem:[%s753 + $0x7a] sm:$0xf]
  %v3157 = vld [vmem:[%s753 + $0x82] sm:$0xff]
  %v3158 = vld [vmem:[%s753 + $0x8a] sm:$0xf]
  %v3159 = vld [vmem:[%s753 + $0x92] sm:$0xff]
  %v3160 = vld [vmem:[%s753 + $0x9a] sm:$0xf]
  %v3161 = vld [vmem:[%s753 + $0xa2] sm:$0xff]
  %v3162 = vld [vmem:[%s753 + $0xaa] sm:$0xf]
  %v3163 = vld [vmem:[%s753 + $0xb2] sm:$0xff]
  %v3164 = vld [vmem:[%s753 + $0xba] sm:$0xf]
  %v3165 = vld [vmem:[%s753 + $0xc2] sm:$0xff]
  %v3166 = vld [vmem:[%s753 + $0xca] sm:$0xf]
  %v3167 = vld [vmem:[%s753 + $0xd2] sm:$0xff]
  %v3168 = vld [vmem:[%s753 + $0xda] sm:$0xf]
  %3169 = vrot.lane.b32.xlu0 %v782, 1
  %v3170 = vpop.permute.xlu0 %3169
  %3171 = vrot.lane.b32.xlu0 %v783, 1
  %v3172 = vpop.permute.xlu0 %3171
  %3173 = vrot.lane.b32.xlu0 %v784, 1
  %v3174 = vpop.permute.xlu0 %3173
  %3175 = vrot.lane.b32.xlu0 %v785, 1
  %v3176 = vpop.permute.xlu0 %3175
  %3177 = vrot.lane.b32.xlu0 %v786, 1
  %v3178 = vpop.permute.xlu0 %3177
  %3179 = vrot.lane.b32.xlu0 %v787, 1
  %v3180 = vpop.permute.xlu0 %3179
  %3181 = vrot.lane.b32.xlu0 %v788, 1
  %v3182 = vpop.permute.xlu0 %3181
  %3183 = vrot.lane.b32.xlu0 %v789, 1
  %v3184 = vpop.permute.xlu0 %3183
  %3185 = vrot.lane.b32.xlu0 %v790, 1
  %v3186 = vpop.permute.xlu0 %3185
  %3187 = vrot.lane.b32.xlu0 %v791, 1
  %v3188 = vpop.permute.xlu0 %3187
  %3189 = vrot.lane.b32.xlu0 %v792, 1
  %v3190 = vpop.permute.xlu0 %3189
  %3191 = vrot.lane.b32.xlu0 %v793, 1
  %v3192 = vpop.permute.xlu0 %3191
  %3193 = vrot.lane.b32.xlu0 %v794, 1
  %v3194 = vpop.permute.xlu0 %3193
  %3195 = vrot.lane.b32.xlu0 %v795, 1
  %v3196 = vpop.permute.xlu0 %3195
  %3197 = vrot.lane.b32.xlu0 %v796, 1
  %v3198 = vpop.permute.xlu0 %3197
  %3199 = vrot.lane.b32.xlu0 %v797, 1
  %v3200 = vpop.permute.xlu0 %3199
  %3201 = vrot.lane.b32.xlu0 %v798, 1
  %v3202 = vpop.permute.xlu0 %3201
  %3203 = vrot.lane.b32.xlu0 %v799, 1
  %v3204 = vpop.permute.xlu0 %3203
  %3205 = vrot.lane.b32.xlu0 %v800, 1
  %v3206 = vpop.permute.xlu0 %3205
  %3207 = vrot.lane.b32.xlu0 %v801, 1
  %v3208 = vpop.permute.xlu0 %3207
  %3209 = vrot.lane.b32.xlu0 %v802, 1
  %v3210 = vpop.permute.xlu0 %3209
  %3211 = vrot.lane.b32.xlu0 %v803, 1
  %v3212 = vpop.permute.xlu0 %3211
  %3213 = vrot.lane.b32.xlu0 %v804, 1
  %v3214 = vpop.permute.xlu0 %3213
  %3215 = vrot.lane.b32.xlu0 %v805, 1
  %v3216 = vpop.permute.xlu0 %3215
  %3217 = vrot.lane.b32.xlu0 %v806, 1
  %v3218 = vpop.permute.xlu0 %3217
  %3219 = vrot.lane.b32.xlu0 %v807, 1
  %v3220 = vpop.permute.xlu0 %3219
  %3221 = vrot.lane.b32.xlu0 %v808, 1
  %v3222 = vpop.permute.xlu0 %3221
  %3223 = vrot.lane.b32.xlu0 %v809, 1
  %v3224 = vpop.permute.xlu0 %3223
  %3253 = vrot.lane.b32.xlu0 %v810, 2
  %v3254 = vpop.permute.xlu0 %3253
  %3255 = vrot.lane.b32.xlu0 %v811, 2
  %v3256 = vpop.permute.xlu0 %3255
  %3257 = vrot.lane.b32.xlu0 %v812, 2
  %v3258 = vpop.permute.xlu0 %3257
  %3259 = vrot.lane.b32.xlu0 %v813, 2
  %v3260 = vpop.permute.xlu0 %3259
  %3261 = vrot.lane.b32.xlu0 %v814, 2
  %v3262 = vpop.permute.xlu0 %3261
  %3263 = vrot.lane.b32.xlu0 %v815, 2
  %v3264 = vpop.permute.xlu0 %3263
  %3265 = vrot.lane.b32.xlu0 %v816, 2
  %v3266 = vpop.permute.xlu0 %3265
  %3267 = vrot.lane.b32.xlu0 %v817, 2
  %v3268 = vpop.permute.xlu0 %3267
  %3269 = vrot.lane.b32.xlu0 %v818, 2
  %v3270 = vpop.permute.xlu0 %3269
  %3271 = vrot.lane.b32.xlu0 %v819, 2
  %v3272 = vpop.permute.xlu0 %3271
  %3273 = vrot.lane.b32.xlu0 %v820, 2
  %v3274 = vpop.permute.xlu0 %3273
  %3275 = vrot.lane.b32.xlu0 %v821, 2
  %v3276 = vpop.permute.xlu0 %3275
  %3277 = vrot.lane.b32.xlu0 %v822, 2
  %v3278 = vpop.permute.xlu0 %3277
  %3279 = vrot.lane.b32.xlu0 %v823, 2
  %v3280 = vpop.permute.xlu0 %3279
  %3281 = vrot.lane.b32.xlu0 %v824, 2
  %v3282 = vpop.permute.xlu0 %3281
  %3283 = vrot.lane.b32.xlu0 %v825, 2
  %v3284 = vpop.permute.xlu0 %3283
  %3285 = vrot.lane.b32.xlu0 %v826, 2
  %v3286 = vpop.permute.xlu0 %3285
  %3287 = vrot.lane.b32.xlu0 %v827, 2
  %v3288 = vpop.permute.xlu0 %3287
  %3289 = vrot.lane.b32.xlu0 %v828, 2
  %v3290 = vpop.permute.xlu0 %3289
  %3291 = vrot.lane.b32.xlu0 %v829, 2
  %v3292 = vpop.permute.xlu0 %3291
  %3293 = vrot.lane.b32.xlu0 %v830, 2
  %v3294 = vpop.permute.xlu0 %3293
  %3295 = vrot.lane.b32.xlu0 %v831, 2
  %v3296 = vpop.permute.xlu0 %3295
  %3297 = vrot.lane.b32.xlu0 %v832, 2
  %v3298 = vpop.permute.xlu0 %3297
  %3299 = vrot.lane.b32.xlu0 %v833, 2
  %v3300 = vpop.permute.xlu0 %3299
  %3301 = vrot.lane.b32.xlu0 %v834, 2
  %v3302 = vpop.permute.xlu0 %3301
  %3303 = vrot.lane.b32.xlu0 %v835, 2
  %v3304 = vpop.permute.xlu0 %3303
  %3305 = vrot.lane.b32.xlu0 %v836, 2
  %v3306 = vpop.permute.xlu0 %3305
  %3307 = vrot.lane.b32.xlu0 %v837, 2
  %v3308 = vpop.permute.xlu0 %3307
  %3337 = vrot.lane.b32.xlu0 %v838, 3
  %v3338 = vpop.permute.xlu0 %3337
  %3339 = vrot.lane.b32.xlu0 %v839, 3
  %v3340 = vpop.permute.xlu0 %3339
  %3341 = vrot.lane.b32.xlu0 %v840, 3
  %v3342 = vpop.permute.xlu0 %3341
  %3343 = vrot.lane.b32.xlu0 %v841, 3
  %v3344 = vpop.permute.xlu0 %3343
  %3345 = vrot.lane.b32.xlu0 %v842, 3
  %v3346 = vpop.permute.xlu0 %3345
  %3347 = vrot.lane.b32.xlu0 %v843, 3
  %v3348 = vpop.permute.xlu0 %3347
  %3349 = vrot.lane.b32.xlu0 %v844, 3
  %v3350 = vpop.permute.xlu0 %3349
  %3351 = vrot.lane.b32.xlu0 %v845, 3
  %v3352 = vpop.permute.xlu0 %3351
  %3353 = vrot.lane.b32.xlu0 %v846, 3
  %v3354 = vpop.permute.xlu0 %3353
  %3355 = vrot.lane.b32.xlu0 %v847, 3
  %v3356 = vpop.permute.xlu0 %3355
  %3357 = vrot.lane.b32.xlu0 %v848, 3
  %v3358 = vpop.permute.xlu0 %3357
  %3359 = vrot.lane.b32.xlu0 %v849, 3
  %v3360 = vpop.permute.xlu0 %3359
  %3361 = vrot.lane.b32.xlu0 %v850, 3
  %v3362 = vpop.permute.xlu0 %3361
  %3363 = vrot.lane.b32.xlu0 %v851, 3
  %v3364 = vpop.permute.xlu0 %3363
  %3365 = vrot.lane.b32.xlu0 %v852, 3
  %v3366 = vpop.permute.xlu0 %3365
  %3367 = vrot.lane.b32.xlu0 %v853, 3
  %v3368 = vpop.permute.xlu0 %3367
  %3369 = vrot.lane.b32.xlu0 %v854, 3
  %v3370 = vpop.permute.xlu0 %3369
  %3371 = vrot.lane.b32.xlu0 %v855, 3
  %v3372 = vpop.permute.xlu0 %3371
  %3373 = vrot.lane.b32.xlu0 %v856, 3
  %v3374 = vpop.permute.xlu0 %3373
  %3375 = vrot.lane.b32.xlu0 %v857, 3
  %v3376 = vpop.permute.xlu0 %3375
  %3377 = vrot.lane.b32.xlu0 %v858, 3
  %v3378 = vpop.permute.xlu0 %3377
  %3379 = vrot.lane.b32.xlu0 %v859, 3
  %v3380 = vpop.permute.xlu0 %3379
  %3381 = vrot.lane.b32.xlu0 %v860, 3
  %v3382 = vpop.permute.xlu0 %3381
  %3383 = vrot.lane.b32.xlu0 %v861, 3
  %v3384 = vpop.permute.xlu0 %3383
  %3385 = vrot.lane.b32.xlu0 %v862, 3
  %v3386 = vpop.permute.xlu0 %3385
  %3387 = vrot.lane.b32.xlu0 %v863, 3
  %v3388 = vpop.permute.xlu0 %3387
  %3389 = vrot.lane.b32.xlu0 %v864, 3
  %v3390 = vpop.permute.xlu0 %3389
  %3391 = vrot.lane.b32.xlu0 %v865, 3
  %v3392 = vpop.permute.xlu0 %3391
  %3449 = vrot.lane.b32.xlu0 %v3141, 4
  %v3450 = vpop.permute.xlu0 %3449
  %3451 = vrot.lane.b32.xlu0 %v3142, 4
  %v3452 = vpop.permute.xlu0 %3451
  %3453 = vrot.lane.b32.xlu0 %v3143, 4
  %v3454 = vpop.permute.xlu0 %3453
  %3455 = vrot.lane.b32.xlu0 %v3144, 4
  %v3456 = vpop.permute.xlu0 %3455
  %3457 = vrot.lane.b32.xlu0 %v3145, 4
  %v3458 = vpop.permute.xlu0 %3457
  %3459 = vrot.lane.b32.xlu0 %v3146, 4
  %v3460 = vpop.permute.xlu0 %3459
  %3461 = vrot.lane.b32.xlu0 %v3147, 4
  %v3462 = vpop.permute.xlu0 %3461
  %3463 = vrot.lane.b32.xlu0 %v3148, 4
  %v3464 = vpop.permute.xlu0 %3463
  %3465 = vrot.lane.b32.xlu0 %v3149, 4
  %v3466 = vpop.permute.xlu0 %3465
  %3467 = vrot.lane.b32.xlu0 %v3150, 4
  %v3468 = vpop.permute.xlu0 %3467
  %3469 = vrot.lane.b32.xlu0 %v3151, 4
  %v3470 = vpop.permute.xlu0 %3469
  %3471 = vrot.lane.b32.xlu0 %v3152, 4
  %v3472 = vpop.permute.xlu0 %3471
  %3473 = vrot.lane.b32.xlu0 %v3153, 4
  %v3474 = vpop.permute.xlu0 %3473
  %3475 = vrot.lane.b32.xlu0 %v3154, 4
  %v3476 = vpop.permute.xlu0 %3475
  %3477 = vrot.lane.b32.xlu0 %v3155, 4
  %v3478 = vpop.permute.xlu0 %3477
  %3479 = vrot.lane.b32.xlu0 %v3156, 4
  %v3480 = vpop.permute.xlu0 %3479
  %3481 = vrot.lane.b32.xlu0 %v3157, 4
  %v3482 = vpop.permute.xlu0 %3481
  %3483 = vrot.lane.b32.xlu0 %v3158, 4
  %v3484 = vpop.permute.xlu0 %3483
  %3485 = vrot.lane.b32.xlu0 %v3159, 4
  %v3486 = vpop.permute.xlu0 %3485
  %3487 = vrot.lane.b32.xlu0 %v3160, 4
  %v3488 = vpop.permute.xlu0 %3487
  %3489 = vrot.lane.b32.xlu0 %v3161, 4
  %v3490 = vpop.permute.xlu0 %3489
  %3491 = vrot.lane.b32.xlu0 %v3162, 4
  %v3492 = vpop.permute.xlu0 %3491
  %3493 = vrot.lane.b32.xlu0 %v3163, 4
  %v3494 = vpop.permute.xlu0 %3493
  %3495 = vrot.lane.b32.xlu0 %v3164, 4
  %v3496 = vpop.permute.xlu0 %3495
  %3497 = vrot.lane.b32.xlu0 %v3165, 4
  %v3498 = vpop.permute.xlu0 %3497
  %3499 = vrot.lane.b32.xlu0 %v3166, 4
  %v3500 = vpop.permute.xlu0 %3499
  %3501 = vrot.lane.b32.xlu0 %v3167, 4
  %v3502 = vpop.permute.xlu0 %3501
  %3503 = vrot.lane.b32.xlu0 %v3168, 4
  %v3504 = vpop.permute.xlu0 %3503
  %v3533 = vsel %vm608, %v754, %v3170
  %v3534 = vsel %vm608, %v755, %v3172
  %v3535 = vsel %vm608, %v756, %v3174
  %v3536 = vsel %vm608, %v757, %v3176
  %v3537 = vsel %vm608, %v758, %v3178
  %v3538 = vsel %vm608, %v759, %v3180
  %v3539 = vsel %vm608, %v760, %v3182
  %v3540 = vsel %vm608, %v761, %v3184
  %v3541 = vsel %vm608, %v762, %v3186
  %v3542 = vsel %vm608, %v763, %v3188
  %v3543 = vsel %vm608, %v764, %v3190
  %v3544 = vsel %vm608, %v765, %v3192
  %v3545 = vsel %vm608, %v766, %v3194
  %v3546 = vsel %vm608, %v767, %v3196
  %v3547 = vsel %vm608, %v768, %v3198
  %v3548 = vsel %vm608, %v769, %v3200
  %v3549 = vsel %vm608, %v770, %v3202
  %v3550 = vsel %vm608, %v771, %v3204
  %v3551 = vsel %vm608, %v772, %v3206
  %v3552 = vsel %vm608, %v773, %v3208
  %v3553 = vsel %vm608, %v774, %v3210
  %v3554 = vsel %vm608, %v775, %v3212
  %v3555 = vsel %vm608, %v776, %v3214
  %v3556 = vsel %vm608, %v777, %v3216
  %v3557 = vsel %vm608, %v778, %v3218
  %v3558 = vsel %vm608, %v779, %v3220
  %v3559 = vsel %vm608, %v780, %v3222
  %v3560 = vsel %vm608, %v781, %v3224
  %v3561 = vsel %vm637, %v3533, %v3254
  %v3562 = vsel %vm637, %v3534, %v3256
  %v3563 = vsel %vm637, %v3535, %v3258
  %v3564 = vsel %vm637, %v3536, %v3260
  %v3565 = vsel %vm637, %v3537, %v3262
  %v3566 = vsel %vm637, %v3538, %v3264
  %v3567 = vsel %vm637, %v3539, %v3266
  %v3568 = vsel %vm637, %v3540, %v3268
  %v3569 = vsel %vm637, %v3541, %v3270
  %v3570 = vsel %vm637, %v3542, %v3272
  %v3571 = vsel %vm637, %v3543, %v3274
  %v3572 = vsel %vm637, %v3544, %v3276
  %v3573 = vsel %vm637, %v3545, %v3278
  %v3574 = vsel %vm637, %v3546, %v3280
  %v3575 = vsel %vm637, %v3547, %v3282
  %v3576 = vsel %vm637, %v3548, %v3284
  %v3577 = vsel %vm637, %v3549, %v3286
  %v3578 = vsel %vm637, %v3550, %v3288
  %v3579 = vsel %vm637, %v3551, %v3290
  %v3580 = vsel %vm637, %v3552, %v3292
  %v3581 = vsel %vm637, %v3553, %v3294
  %v3582 = vsel %vm637, %v3554, %v3296
  %v3583 = vsel %vm637, %v3555, %v3298
  %v3584 = vsel %vm637, %v3556, %v3300
  %v3585 = vsel %vm637, %v3557, %v3302
  %v3586 = vsel %vm637, %v3558, %v3304
  %v3587 = vsel %vm637, %v3559, %v3306
  %v3588 = vsel %vm637, %v3560, %v3308
  %v3589 = vsel %vm666, %v3561, %v3338
  %v3590 = vsel %vm666, %v3562, %v3340
  %v3591 = vsel %vm666, %v3563, %v3342
  %v3592 = vsel %vm666, %v3564, %v3344
  %v3593 = vsel %vm666, %v3565, %v3346
  %v3594 = vsel %vm666, %v3566, %v3348
  %v3595 = vsel %vm666, %v3567, %v3350
  %v3596 = vsel %vm666, %v3568, %v3352
  %v3597 = vsel %vm666, %v3569, %v3354
  %v3598 = vsel %vm666, %v3570, %v3356
  %v3599 = vsel %vm666, %v3571, %v3358
  %v3600 = vsel %vm666, %v3572, %v3360
  %v3601 = vsel %vm666, %v3573, %v3362
  %v3602 = vsel %vm666, %v3574, %v3364
  %v3603 = vsel %vm666, %v3575, %v3366
  %v3604 = vsel %vm666, %v3576, %v3368
  %v3605 = vsel %vm666, %v3577, %v3370
  %v3606 = vsel %vm666, %v3578, %v3372
  %v3607 = vsel %vm666, %v3579, %v3374
  %v3608 = vsel %vm666, %v3580, %v3376
  %v3609 = vsel %vm666, %v3581, %v3378
  %v3610 = vsel %vm666, %v3582, %v3380
  %v3611 = vsel %vm666, %v3583, %v3382
  %v3612 = vsel %vm666, %v3584, %v3384
  %v3613 = vsel %vm666, %v3585, %v3386
  %v3614 = vsel %vm666, %v3586, %v3388
  %v3615 = vsel %vm666, %v3587, %v3390
  %v3616 = vsel %vm666, %v3588, %v3392
  %v3617 = vsel %vm695, %v3589, %v3450
  %v3618 = vsel %vm695, %v3590, %v3452
  %v3619 = vsel %vm695, %v3591, %v3454
  %v3620 = vsel %vm695, %v3592, %v3456
  %v3621 = vsel %vm695, %v3593, %v3458
  %v3622 = vsel %vm695, %v3594, %v3460
  %v3623 = vsel %vm695, %v3595, %v3462
  %v3624 = vsel %vm695, %v3596, %v3464
  %v3625 = vsel %vm695, %v3597, %v3466
  %v3626 = vsel %vm695, %v3598, %v3468
  %v3627 = vsel %vm695, %v3599, %v3470
  %v3628 = vsel %vm695, %v3600, %v3472
  %v3629 = vsel %vm695, %v3601, %v3474
  %v3630 = vsel %vm695, %v3602, %v3476
  %v3631 = vsel %vm695, %v3603, %v3478
  %v3632 = vsel %vm695, %v3604, %v3480
  %v3633 = vsel %vm695, %v3605, %v3482
  %v3634 = vsel %vm695, %v3606, %v3484
  %v3635 = vsel %vm695, %v3607, %v3486
  %v3636 = vsel %vm695, %v3608, %v3488
  %v3637 = vsel %vm695, %v3609, %v3490
  %v3638 = vsel %vm695, %v3610, %v3492
  %v3639 = vsel %vm695, %v3611, %v3494
  %v3640 = vsel %vm695, %v3612, %v3496
  %v3641 = vsel %vm695, %v3613, %v3498
  %v3642 = vsel %vm695, %v3614, %v3500
  %v3643 = vsel %vm695, %v3615, %v3502
  %v3644 = vsel %vm695, %v3616, %v3504
  %3669 = vrot.lane.b32.xlu0 %v3617, 5
  %v3670 = vpop.permute.xlu0 %3669
  %3671 = vrot.lane.b32.xlu0 %v3618, 5
  %v3672 = vpop.permute.xlu0 %3671
  %3673 = vrot.lane.b32.xlu0 %v3619, 5
  %v3674 = vpop.permute.xlu0 %3673
  %3675 = vrot.lane.b32.xlu0 %v3620, 5
  %v3676 = vpop.permute.xlu0 %3675
  %3677 = vrot.lane.b32.xlu0 %v3621, 5
  %v3678 = vpop.permute.xlu0 %3677
  %3679 = vrot.lane.b32.xlu0 %v3622, 5
  %v3680 = vpop.permute.xlu0 %3679
  %3681 = vrot.lane.b32.xlu0 %v3623, 5
  %v3682 = vpop.permute.xlu0 %3681
  %3683 = vrot.lane.b32.xlu0 %v3624, 5
  %v3684 = vpop.permute.xlu0 %3683
  %3685 = vrot.lane.b32.xlu0 %v3625, 5
  %v3686 = vpop.permute.xlu0 %3685
  %3687 = vrot.lane.b32.xlu0 %v3626, 5
  %v3688 = vpop.permute.xlu0 %3687
  %3689 = vrot.lane.b32.xlu0 %v3627, 5
  %v3690 = vpop.permute.xlu0 %3689
  %3691 = vrot.lane.b32.xlu0 %v3628, 5
  %v3692 = vpop.permute.xlu0 %3691
  %3693 = vrot.lane.b32.xlu0 %v3629, 5
  %v3694 = vpop.permute.xlu0 %3693
  %3695 = vrot.lane.b32.xlu0 %v3630, 5
  %v3696 = vpop.permute.xlu0 %3695
  %3697 = vrot.lane.b32.xlu0 %v3631, 5
  %v3698 = vpop.permute.xlu0 %3697
  %3699 = vrot.lane.b32.xlu0 %v3632, 5
  %v3700 = vpop.permute.xlu0 %3699
  %3701 = vrot.lane.b32.xlu0 %v3633, 5
  %v3702 = vpop.permute.xlu0 %3701
  %3703 = vrot.lane.b32.xlu0 %v3634, 5
  %v3704 = vpop.permute.xlu0 %3703
  %3705 = vrot.lane.b32.xlu0 %v3635, 5
  %v3706 = vpop.permute.xlu0 %3705
  %3707 = vrot.lane.b32.xlu0 %v3636, 5
  %v3708 = vpop.permute.xlu0 %3707
  %3709 = vrot.lane.b32.xlu0 %v3637, 5
  %v3710 = vpop.permute.xlu0 %3709
  %3711 = vrot.lane.b32.xlu0 %v3638, 5
  %v3712 = vpop.permute.xlu0 %3711
  %3713 = vrot.lane.b32.xlu0 %v3639, 5
  %v3714 = vpop.permute.xlu0 %3713
  %3715 = vrot.lane.b32.xlu0 %v3640, 5
  %v3716 = vpop.permute.xlu0 %3715
  %3765 = vrot.lane.b32.xlu0 %v3115, 10
  %v3766 = vpop.permute.xlu0 %3765
  %3767 = vrot.lane.b32.xlu0 %v3116, 10
  %v3768 = vpop.permute.xlu0 %3767
  %3769 = vrot.lane.b32.xlu0 %v3117, 10
  %v3770 = vpop.permute.xlu0 %3769
  %3771 = vrot.lane.b32.xlu0 %v3118, 10
  %v3772 = vpop.permute.xlu0 %3771
  %3773 = vrot.lane.b32.xlu0 %v3119, 10
  %v3774 = vpop.permute.xlu0 %3773
  %3775 = vrot.lane.b32.xlu0 %v3120, 10
  %v3776 = vpop.permute.xlu0 %3775
  %3777 = vrot.lane.b32.xlu0 %v3121, 10
  %v3778 = vpop.permute.xlu0 %3777
  %3779 = vrot.lane.b32.xlu0 %v3122, 10
  %v3780 = vpop.permute.xlu0 %3779
  %3781 = vrot.lane.b32.xlu0 %v3123, 10
  %v3782 = vpop.permute.xlu0 %3781
  %3783 = vrot.lane.b32.xlu0 %v3124, 10
  %v3784 = vpop.permute.xlu0 %3783
  %3785 = vrot.lane.b32.xlu0 %v3125, 10
  %v3786 = vpop.permute.xlu0 %3785
  %3787 = vrot.lane.b32.xlu0 %v3126, 10
  %v3788 = vpop.permute.xlu0 %3787
  %3789 = vrot.lane.b32.xlu0 %v3127, 10
  %v3790 = vpop.permute.xlu0 %3789
  %3791 = vrot.lane.b32.xlu0 %v3128, 10
  %v3792 = vpop.permute.xlu0 %3791
  %3793 = vrot.lane.b32.xlu0 %v3129, 10
  %v3794 = vpop.permute.xlu0 %3793
  %3795 = vrot.lane.b32.xlu0 %v3130, 10
  %v3796 = vpop.permute.xlu0 %3795
  %3797 = vrot.lane.b32.xlu0 %v3131, 10
  %v3798 = vpop.permute.xlu0 %3797
  %3799 = vrot.lane.b32.xlu0 %v3132, 10
  %v3800 = vpop.permute.xlu0 %3799
  %3801 = vrot.lane.b32.xlu0 %v3133, 10
  %v3802 = vpop.permute.xlu0 %3801
  %3803 = vrot.lane.b32.xlu0 %v3134, 10
  %v3804 = vpop.permute.xlu0 %3803
  %3805 = vrot.lane.b32.xlu0 %v3135, 10
  %v3806 = vpop.permute.xlu0 %3805
  %3807 = vrot.lane.b32.xlu0 %v3136, 10
  %v3808 = vpop.permute.xlu0 %3807
  %3809 = vrot.lane.b32.xlu0 %v3137, 10
  %v3810 = vpop.permute.xlu0 %3809
  %3811 = vrot.lane.b32.xlu0 %v3138, 10
  %v3812 = vpop.permute.xlu0 %3811
  %3839 = vrot.lane.b32.xlu0 %v3619, 15
  %v3840 = vpop.permute.xlu0 %3839
  %3841 = vrot.lane.b32.xlu0 %v3620, 15
  %v3842 = vpop.permute.xlu0 %3841
  %3843 = vrot.lane.b32.xlu0 %v3621, 15
  %v3844 = vpop.permute.xlu0 %3843
  %3845 = vrot.lane.b32.xlu0 %v3622, 15
  %v3846 = vpop.permute.xlu0 %3845
  %3847 = vrot.lane.b32.xlu0 %v3623, 15
  %v3848 = vpop.permute.xlu0 %3847
  %3849 = vrot.lane.b32.xlu0 %v3624, 15
  %v3850 = vpop.permute.xlu0 %3849
  %3851 = vrot.lane.b32.xlu0 %v3625, 15
  %v3852 = vpop.permute.xlu0 %3851
  %3853 = vrot.lane.b32.xlu0 %v3626, 15
  %v3854 = vpop.permute.xlu0 %3853
  %3855 = vrot.lane.b32.xlu0 %v3627, 15
  %v3856 = vpop.permute.xlu0 %3855
  %3857 = vrot.lane.b32.xlu0 %v3628, 15
  %v3858 = vpop.permute.xlu0 %3857
  %3859 = vrot.lane.b32.xlu0 %v3629, 15
  %v3860 = vpop.permute.xlu0 %3859
  %3861 = vrot.lane.b32.xlu0 %v3630, 15
  %v3862 = vpop.permute.xlu0 %3861
  %3863 = vrot.lane.b32.xlu0 %v3631, 15
  %v3864 = vpop.permute.xlu0 %3863
  %3865 = vrot.lane.b32.xlu0 %v3632, 15
  %v3866 = vpop.permute.xlu0 %3865
  %3867 = vrot.lane.b32.xlu0 %v3633, 15
  %v3868 = vpop.permute.xlu0 %3867
  %3869 = vrot.lane.b32.xlu0 %v3634, 15
  %v3870 = vpop.permute.xlu0 %3869
  %3871 = vrot.lane.b32.xlu0 %v3635, 15
  %v3872 = vpop.permute.xlu0 %3871
  %3873 = vrot.lane.b32.xlu0 %v3636, 15
  %v3874 = vpop.permute.xlu0 %3873
  %3875 = vrot.lane.b32.xlu0 %v3637, 15
  %v3876 = vpop.permute.xlu0 %3875
  %3877 = vrot.lane.b32.xlu0 %v3638, 15
  %v3878 = vpop.permute.xlu0 %3877
  %3879 = vrot.lane.b32.xlu0 %v3639, 15
  %v3880 = vpop.permute.xlu0 %3879
  %3881 = vrot.lane.b32.xlu0 %v3640, 15
  %v3882 = vpop.permute.xlu0 %3881
  %3883 = vrot.lane.b32.xlu0 %v3641, 15
  %v3884 = vpop.permute.xlu0 %3883
  %3885 = vrot.lane.b32.xlu0 %v3642, 15
  %v3886 = vpop.permute.xlu0 %3885
  %3913 = vrot.lane.b32.xlu0 %v3117, 20
  %v3914 = vpop.permute.xlu0 %3913
  %3915 = vrot.lane.b32.xlu0 %v3118, 20
  %v3916 = vpop.permute.xlu0 %3915
  %3917 = vrot.lane.b32.xlu0 %v3119, 20
  %v3918 = vpop.permute.xlu0 %3917
  %3919 = vrot.lane.b32.xlu0 %v3120, 20
  %v3920 = vpop.permute.xlu0 %3919
  %3921 = vrot.lane.b32.xlu0 %v3121, 20
  %v3922 = vpop.permute.xlu0 %3921
  %3923 = vrot.lane.b32.xlu0 %v3122, 20
  %v3924 = vpop.permute.xlu0 %3923
  %3925 = vrot.lane.b32.xlu0 %v3123, 20
  %v3926 = vpop.permute.xlu0 %3925
  %3927 = vrot.lane.b32.xlu0 %v3124, 20
  %v3928 = vpop.permute.xlu0 %3927
  %3929 = vrot.lane.b32.xlu0 %v3125, 20
  %v3930 = vpop.permute.xlu0 %3929
  %3931 = vrot.lane.b32.xlu0 %v3126, 20
  %v3932 = vpop.permute.xlu0 %3931
  %3933 = vrot.lane.b32.xlu0 %v3127, 20
  %v3934 = vpop.permute.xlu0 %3933
  %3935 = vrot.lane.b32.xlu0 %v3128, 20
  %v3936 = vpop.permute.xlu0 %3935
  %3937 = vrot.lane.b32.xlu0 %v3129, 20
  %v3938 = vpop.permute.xlu0 %3937
  %3939 = vrot.lane.b32.xlu0 %v3130, 20
  %v3940 = vpop.permute.xlu0 %3939
  %3941 = vrot.lane.b32.xlu0 %v3131, 20
  %v3942 = vpop.permute.xlu0 %3941
  %3943 = vrot.lane.b32.xlu0 %v3132, 20
  %v3944 = vpop.permute.xlu0 %3943
  %3945 = vrot.lane.b32.xlu0 %v3133, 20
  %v3946 = vpop.permute.xlu0 %3945
  %3947 = vrot.lane.b32.xlu0 %v3134, 20
  %v3948 = vpop.permute.xlu0 %3947
  %3949 = vrot.lane.b32.xlu0 %v3135, 20
  %v3950 = vpop.permute.xlu0 %3949
  %3951 = vrot.lane.b32.xlu0 %v3136, 20
  %v3952 = vpop.permute.xlu0 %3951
  %3953 = vrot.lane.b32.xlu0 %v3137, 20
  %v3954 = vpop.permute.xlu0 %3953
  %3955 = vrot.lane.b32.xlu0 %v3138, 20
  %v3956 = vpop.permute.xlu0 %3955
  %3957 = vrot.lane.b32.xlu0 %v3139, 20
  %v3958 = vpop.permute.xlu0 %3957
  %3959 = vrot.lane.b32.xlu0 %v3140, 20
  %v3960 = vpop.permute.xlu0 %3959
  %v3985 = vsel %vm1766, %v3113, %v3670
  %v3986 = vsel %vm1766, %v3114, %v3672
  %v3987 = vsel %vm1766, %v3115, %v3674
  %v3988 = vsel %vm1766, %v3116, %v3676
  %v3989 = vsel %vm1766, %v3117, %v3678
  %v3990 = vsel %vm1766, %v3118, %v3680
  %v3991 = vsel %vm1766, %v3119, %v3682
  %v3992 = vsel %vm1766, %v3120, %v3684
  %v3993 = vsel %vm1766, %v3121, %v3686
  %v3994 = vsel %vm1766, %v3122, %v3688
  %v3995 = vsel %vm1766, %v3123, %v3690
  %v3996 = vsel %vm1766, %v3124, %v3692
  %v3997 = vsel %vm1766, %v3125, %v3694
  %v3998 = vsel %vm1766, %v3126, %v3696
  %v3999 = vsel %vm1766, %v3127, %v3698
  %v4000 = vsel %vm1766, %v3128, %v3700
  %v4001 = vsel %vm1766, %v3129, %v3702
  %v4002 = vsel %vm1766, %v3130, %v3704
  %v4003 = vsel %vm1766, %v3131, %v3706
  %v4004 = vsel %vm1766, %v3132, %v3708
  %v4005 = vsel %vm1766, %v3133, %v3710
  %v4006 = vsel %vm1766, %v3134, %v3712
  %v4007 = vsel %vm1766, %v3135, %v3714
  %v4008 = vsel %vm1766, %v3136, %v3716
  %v4009 = vsel %vm1791, %v3985, %v3766
  %v4010 = vsel %vm1791, %v3986, %v3768
  %v4011 = vsel %vm1791, %v3987, %v3770
  %v4012 = vsel %vm1791, %v3988, %v3772
  %v4013 = vsel %vm1791, %v3989, %v3774
  %v4014 = vsel %vm1791, %v3990, %v3776
  %v4015 = vsel %vm1791, %v3991, %v3778
  %v4016 = vsel %vm1791, %v3992, %v3780
  %v4017 = vsel %vm1791, %v3993, %v3782
  %v4018 = vsel %vm1791, %v3994, %v3784
  %v4019 = vsel %vm1791, %v3995, %v3786
  %v4020 = vsel %vm1791, %v3996, %v3788
  %v4021 = vsel %vm1791, %v3997, %v3790
  %v4022 = vsel %vm1791, %v3998, %v3792
  %v4023 = vsel %vm1791, %v3999, %v3794
  %v4024 = vsel %vm1791, %v4000, %v3796
  %v4025 = vsel %vm1791, %v4001, %v3798
  %v4026 = vsel %vm1791, %v4002, %v3800
  %v4027 = vsel %vm1791, %v4003, %v3802
  %v4028 = vsel %vm1791, %v4004, %v3804
  %v4029 = vsel %vm1791, %v4005, %v3806
  %v4030 = vsel %vm1791, %v4006, %v3808
  %v4031 = vsel %vm1791, %v4007, %v3810
  %v4032 = vsel %vm1791, %v4008, %v3812
  %v4033 = vsel %vm1816, %v4009, %v3840
  %v4034 = vsel %vm1816, %v4010, %v3842
  %v4035 = vsel %vm1816, %v4011, %v3844
  %v4036 = vsel %vm1816, %v4012, %v3846
  %v4037 = vsel %vm1816, %v4013, %v3848
  %v4038 = vsel %vm1816, %v4014, %v3850
  %v4039 = vsel %vm1816, %v4015, %v3852
  %v4040 = vsel %vm1816, %v4016, %v3854
  %v4041 = vsel %vm1816, %v4017, %v3856
  %v4042 = vsel %vm1816, %v4018, %v3858
  %v4043 = vsel %vm1816, %v4019, %v3860
  %v4044 = vsel %vm1816, %v4020, %v3862
  %v4045 = vsel %vm1816, %v4021, %v3864
  %v4046 = vsel %vm1816, %v4022, %v3866
  %v4047 = vsel %vm1816, %v4023, %v3868
  %v4048 = vsel %vm1816, %v4024, %v3870
  %v4049 = vsel %vm1816, %v4025, %v3872
  %v4050 = vsel %vm1816, %v4026, %v3874
  %v4051 = vsel %vm1816, %v4027, %v3876
  %v4052 = vsel %vm1816, %v4028, %v3878
  %v4053 = vsel %vm1816, %v4029, %v3880
  %v4054 = vsel %vm1816, %v4030, %v3882
  %v4055 = vsel %vm1816, %v4031, %v3884
  %v4056 = vsel %vm1816, %v4032, %v3886
  %v4057 = vsel %vm1841, %v4033, %v3914
  %v4058 = vsel %vm1841, %v4034, %v3916
  %v4059 = vsel %vm1841, %v4035, %v3918
  %v4060 = vsel %vm1841, %v4036, %v3920
  %v4061 = vsel %vm1841, %v4037, %v3922
  %v4062 = vsel %vm1841, %v4038, %v3924
  %v4063 = vsel %vm1841, %v4039, %v3926
  %v4064 = vsel %vm1841, %v4040, %v3928
  %v4065 = vsel %vm1841, %v4041, %v3930
  %v4066 = vsel %vm1841, %v4042, %v3932
  %v4067 = vsel %vm1841, %v4043, %v3934
  %v4068 = vsel %vm1841, %v4044, %v3936
  %v4069 = vsel %vm1841, %v4045, %v3938
  %v4070 = vsel %vm1841, %v4046, %v3940
  %v4071 = vsel %vm1841, %v4047, %v3942
  %v4072 = vsel %vm1841, %v4048, %v3944
  %v4073 = vsel %vm1841, %v4049, %v3946
  %v4074 = vsel %vm1841, %v4050, %v3948
  %v4075 = vsel %vm1841, %v4051, %v3950
  %v4076 = vsel %vm1841, %v4052, %v3952
  %v4077 = vsel %vm1841, %v4053, %v3954
  %v4078 = vsel %vm1841, %v4054, %v3956
  %v4079 = vsel %vm1841, %v4055, %v3958
  %v4080 = vsel %vm1841, %v4056, %v3960
  %v4083 = vrot.slane %v4059, 4
  %v4084 = vrot.slane %v4060, 4
  %v4085 = vsel %vm1868, %v4083, %v4084
  %v4089 = vrot.slane %v4063, 4
  %v4090 = vrot.slane %v4064, 4
  %v4091 = vsel %vm1868, %v4089, %v4090
  %v4095 = vrot.slane %v4067, 4
  %v4096 = vrot.slane %v4068, 4
  %v4097 = vsel %vm1868, %v4095, %v4096
  %v4101 = vrot.slane %v4071, 4
  %v4102 = vrot.slane %v4072, 4
  %v4103 = vsel %vm1868, %v4101, %v4102
  %v4107 = vrot.slane %v4075, 4
  %v4108 = vrot.slane %v4076, 4
  %v4109 = vsel %vm1868, %v4107, %v4108
  %v4113 = vrot.slane %v4079, 4
  %v4114 = vrot.slane %v4080, 4
  %v4115 = vsel %vm1868, %v4113, %v4114
  %v4117 = vsel %vm1868, %v4058, %v4083
  %v4118 = vsel %vm1868, %v4062, %v4089
  %v4119 = vsel %vm1868, %v4066, %v4095
  %v4120 = vsel %vm1868, %v4070, %v4101
  %v4121 = vsel %vm1868, %v4074, %v4107
  %v4122 = vsel %vm1868, %v4078, %v4113
  %v4124 = vsel %vm1912, %v4057, 0
  %v4127 = vsel %vm1912, %v4117, 0
  %v4129 = vsel %vm1912, %v4085, 0
  %v4132 = vsel %vm1912, %v4061, 0
  %v4135 = vsel %vm1912, %v4118, 0
  %v4137 = vsel %vm1912, %v4091, 0
  %v4140 = vsel %vm1912, %v4065, 0
  %v4143 = vsel %vm1912, %v4119, 0
  %v4145 = vsel %vm1912, %v4097, 0
  %v4148 = vsel %vm1912, %v4069, 0
  %v4151 = vsel %vm1912, %v4120, 0
  %v4153 = vsel %vm1912, %v4103, 0
  %v4156 = vsel %vm1912, %v4073, 0
  %v4159 = vsel %vm1912, %v4121, 0
  %v4161 = vsel %vm1912, %v4109, 0
  %v4164 = vsel %vm1912, %v4077, 0
  %v4167 = vsel %vm1912, %v4122, 0
  %v4169 = vsel %vm1912, %v4115, 0
  %4171 = vmatpush.msra.mxu0 0.0
  %4172 = vmatpush.msra.mxu0 0.0
  %4173 = vmatpush.msra.mxu0 0.0
  %4174 = vmatpush.msra.mxu0 0.0
  %4175 = vmatpush.msra.mxu0 0.0
  %4176 = vmatpush.msra.mxu0 0.0
  %4177 = vmatpush.msra.mxu0 0.0
  %4178 = vmatpush.msra.mxu0 0.0
  %4179 = vmatpush.msra.mxu0 0.0
  %4180 = vmatpush.msra.mxu0 0.0
  %4181 = vmatpush.msra.mxu0 0.0
  %4182 = vmatpush.msra.mxu0 0.0
  %4183 = vmatpush.msra.mxu0 %v1963
  %4184 = vmatpush.msra.mxu0 %v16
  %4185 = vmatpush.msra.mxu0 %v15
  %4186 = vmatpush.msra.mxu0 %v14
  %4187 = vmatmul.f32.gmra.mxu0 %v4124
  %v4188 = vpop.f32.mrf.mxu0
  %v4189 = vadd.f32 %v1910, %v4188
  %4190 = vmatmul.f32.gmra.mxu0 %v4127
  %v4191 = vpop.f32.mrf.mxu0
  %v4192 = vadd.f32 %v1910, %v4191
  %4193 = vmatmul.f32.gmra.mxu0 %v4129
  %v4194 = vpop.f32.mrf.mxu0
  %v4195 = vadd.f32 %v1910, %v4194
  %4196 = vmatmul.f32.gmra.mxu0 %v4132
  %v4197 = vpop.f32.mrf.mxu0
  %v4198 = vadd.f32 %v1910, %v4197
  %4199 = vmatmul.f32.gmra.mxu0 %v4135
  %v4200 = vpop.f32.mrf.mxu0
  %v4201 = vadd.f32 %v1910, %v4200
  %4202 = vmatmul.f32.gmra.mxu0 %v4137
  %v4203 = vpop.f32.mrf.mxu0
  %v4204 = vadd.f32 %v1910, %v4203
  %4205 = vmatmul.f32.gmra.mxu0 %v4140
  %v4206 = vpop.f32.mrf.mxu0
  %v4207 = vadd.f32 %v1910, %v4206
  %4208 = vmatmul.f32.gmra.mxu0 %v4143
  %v4209 = vpop.f32.mrf.mxu0
  %v4210 = vadd.f32 %v1910, %v4209
  %4211 = vmatmul.f32.gmra.mxu0 %v4145
  %v4212 = vpop.f32.mrf.mxu0
  %v4213 = vadd.f32 %v1910, %v4212
  %4214 = vmatmul.f32.gmra.mxu0 %v4148
  %v4215 = vpop.f32.mrf.mxu0
  %v4216 = vadd.f32 %v1910, %v4215
  %4217 = vmatmul.f32.gmra.mxu0 %v4151
  %v4218 = vpop.f32.mrf.mxu0
  %v4219 = vadd.f32 %v1910, %v4218
  %4220 = vmatmul.f32.gmra.mxu0 %v4153
  %v4221 = vpop.f32.mrf.mxu0
  %v4222 = vadd.f32 %v1910, %v4221
  %4223 = vmatmul.f32.gmra.mxu0 %v4156
  %v4224 = vpop.f32.mrf.mxu0
  %v4225 = vadd.f32 %v1910, %v4224
  %4226 = vmatmul.f32.gmra.mxu0 %v4159
  %v4227 = vpop.f32.mrf.mxu0
  %v4228 = vadd.f32 %v1910, %v4227
  %4229 = vmatmul.f32.gmra.mxu0 %v4161
  %v4230 = vpop.f32.mrf.mxu0
  %v4231 = vadd.f32 %v1910, %v4230
  %4232 = vmatmul.f32.gmra.mxu0 %v4164
  %v4233 = vpop.f32.mrf.mxu0
  %v4234 = vadd.f32 %v1910, %v4233
  %4235 = vmatmul.f32.gmra.mxu0 %v4167
  %v4236 = vpop.f32.mrf.mxu0
  %v4237 = vadd.f32 %v1910, %v4236
  %4238 = vmatmul.f32.gmra.mxu0 %v4169
  %v4239 = vpop.f32.mrf.mxu0
  %v4240 = vadd.f32 %v1910, %v4239
  %4241 = vdwg.mxu0
  %v4242 = vmax.f32 %v4189, 0.0
  %v4243 = vmax.f32 %v4192, 0.0
  %v4244 = vmax.f32 %v4195, 0.0
  %v4245 = vmax.f32 %v4198, 0.0
  %v4246 = vmax.f32 %v4201, 0.0
  %v4247 = vmax.f32 %v4204, 0.0
  %v4248 = vmax.f32 %v4207, 0.0
  %v4249 = vmax.f32 %v4210, 0.0
  %v4250 = vmax.f32 %v4213, 0.0
  %v4251 = vmax.f32 %v4216, 0.0
  %v4252 = vmax.f32 %v4219, 0.0
  %v4253 = vmax.f32 %v4222, 0.0
  %v4254 = vmax.f32 %v4225, 0.0
  %v4255 = vmax.f32 %v4228, 0.0
  %v4256 = vmax.f32 %v4231, 0.0
  %v4257 = vmax.f32 %v4234, 0.0
  %v4258 = vmax.f32 %v4237, 0.0
  %v4259 = vmax.f32 %v4240, 0.0
  %v4260 = vmax.f32 %v2619, %v4242
  %v4261 = vmax.f32 %v2620, %v4243
  %v4262 = vmax.f32 %v2621, %v4244
  %v4263 = vmax.f32 %v2622, %v4245
  %v4264 = vmax.f32 %v2623, %v4246
  %v4265 = vmax.f32 %v2624, %v4247
  %v4266 = vmax.f32 %v2625, %v4248
  %v4267 = vmax.f32 %v2626, %v4249
  %v4268 = vmax.f32 %v2627, %v4250
  %v4269 = vmax.f32 %v2628, %v4251
  %v4270 = vmax.f32 %v2629, %v4252
  %v4271 = vmax.f32 %v2630, %v4253
  %v4272 = vmax.f32 %v2631, %v4254
  %v4273 = vmax.f32 %v2632, %v4255
  %v4274 = vmax.f32 %v2633, %v4256
  %v4275 = vmax.f32 %v2634, %v4257
  %v4276 = vmax.f32 %v2635, %v4258
  %v4277 = vmax.f32 %v2636, %v4259
  %4278 = vrot.lane.b32.xlu0 %v3115, 5
  %v4279 = vpop.permute.xlu0 %4278
  %4280 = vrot.lane.b32.xlu0 %v3116, 5
  %v4281 = vpop.permute.xlu0 %4280
  %4282 = vrot.lane.b32.xlu0 %v3117, 5
  %v4283 = vpop.permute.xlu0 %4282
  %4284 = vrot.lane.b32.xlu0 %v3118, 5
  %v4285 = vpop.permute.xlu0 %4284
  %4286 = vrot.lane.b32.xlu0 %v3119, 5
  %v4287 = vpop.permute.xlu0 %4286
  %4288 = vrot.lane.b32.xlu0 %v3120, 5
  %v4289 = vpop.permute.xlu0 %4288
  %4290 = vrot.lane.b32.xlu0 %v3121, 5
  %v4291 = vpop.permute.xlu0 %4290
  %4292 = vrot.lane.b32.xlu0 %v3122, 5
  %v4293 = vpop.permute.xlu0 %4292
  %4294 = vrot.lane.b32.xlu0 %v3123, 5
  %v4295 = vpop.permute.xlu0 %4294
  %4296 = vrot.lane.b32.xlu0 %v3124, 5
  %v4297 = vpop.permute.xlu0 %4296
  %4298 = vrot.lane.b32.xlu0 %v3125, 5
  %v4299 = vpop.permute.xlu0 %4298
  %4300 = vrot.lane.b32.xlu0 %v3126, 5
  %v4301 = vpop.permute.xlu0 %4300
  %4302 = vrot.lane.b32.xlu0 %v3127, 5
  %v4303 = vpop.permute.xlu0 %4302
  %4304 = vrot.lane.b32.xlu0 %v3128, 5
  %v4305 = vpop.permute.xlu0 %4304
  %4306 = vrot.lane.b32.xlu0 %v3129, 5
  %v4307 = vpop.permute.xlu0 %4306
  %4308 = vrot.lane.b32.xlu0 %v3130, 5
  %v4309 = vpop.permute.xlu0 %4308
  %4310 = vrot.lane.b32.xlu0 %v3131, 5
  %v4311 = vpop.permute.xlu0 %4310
  %4312 = vrot.lane.b32.xlu0 %v3132, 5
  %v4313 = vpop.permute.xlu0 %4312
  %4314 = vrot.lane.b32.xlu0 %v3133, 5
  %v4315 = vpop.permute.xlu0 %4314
  %4316 = vrot.lane.b32.xlu0 %v3134, 5
  %v4317 = vpop.permute.xlu0 %4316
  %4318 = vrot.lane.b32.xlu0 %v3135, 5
  %v4319 = vpop.permute.xlu0 %4318
  %4320 = vrot.lane.b32.xlu0 %v3136, 5
  %v4321 = vpop.permute.xlu0 %4320
  %4322 = vrot.lane.b32.xlu0 %v3137, 5
  %v4323 = vpop.permute.xlu0 %4322
  %4324 = vrot.lane.b32.xlu0 %v3138, 5
  %v4325 = vpop.permute.xlu0 %4324
  %4350 = vrot.lane.b32.xlu0 %v3619, 10
  %v4351 = vpop.permute.xlu0 %4350
  %4352 = vrot.lane.b32.xlu0 %v3620, 10
  %v4353 = vpop.permute.xlu0 %4352
  %4354 = vrot.lane.b32.xlu0 %v3621, 10
  %v4355 = vpop.permute.xlu0 %4354
  %4356 = vrot.lane.b32.xlu0 %v3622, 10
  %v4357 = vpop.permute.xlu0 %4356
  %4358 = vrot.lane.b32.xlu0 %v3623, 10
  %v4359 = vpop.permute.xlu0 %4358
  %4360 = vrot.lane.b32.xlu0 %v3624, 10
  %v4361 = vpop.permute.xlu0 %4360
  %4362 = vrot.lane.b32.xlu0 %v3625, 10
  %v4363 = vpop.permute.xlu0 %4362
  %4364 = vrot.lane.b32.xlu0 %v3626, 10
  %v4365 = vpop.permute.xlu0 %4364
  %4366 = vrot.lane.b32.xlu0 %v3627, 10
  %v4367 = vpop.permute.xlu0 %4366
  %4368 = vrot.lane.b32.xlu0 %v3628, 10
  %v4369 = vpop.permute.xlu0 %4368
  %4370 = vrot.lane.b32.xlu0 %v3629, 10
  %v4371 = vpop.permute.xlu0 %4370
  %4372 = vrot.lane.b32.xlu0 %v3630, 10
  %v4373 = vpop.permute.xlu0 %4372
  %4374 = vrot.lane.b32.xlu0 %v3631, 10
  %v4375 = vpop.permute.xlu0 %4374
  %4376 = vrot.lane.b32.xlu0 %v3632, 10
  %v4377 = vpop.permute.xlu0 %4376
  %4378 = vrot.lane.b32.xlu0 %v3633, 10
  %v4379 = vpop.permute.xlu0 %4378
  %4380 = vrot.lane.b32.xlu0 %v3634, 10
  %v4381 = vpop.permute.xlu0 %4380
  %4382 = vrot.lane.b32.xlu0 %v3635, 10
  %v4383 = vpop.permute.xlu0 %4382
  %4384 = vrot.lane.b32.xlu0 %v3636, 10
  %v4385 = vpop.permute.xlu0 %4384
  %4386 = vrot.lane.b32.xlu0 %v3637, 10
  %v4387 = vpop.permute.xlu0 %4386
  %4388 = vrot.lane.b32.xlu0 %v3638, 10
  %v4389 = vpop.permute.xlu0 %4388
  %4390 = vrot.lane.b32.xlu0 %v3639, 10
  %v4391 = vpop.permute.xlu0 %4390
  %4392 = vrot.lane.b32.xlu0 %v3640, 10
  %v4393 = vpop.permute.xlu0 %4392
  %4394 = vrot.lane.b32.xlu0 %v3641, 10
  %v4395 = vpop.permute.xlu0 %4394
  %4396 = vrot.lane.b32.xlu0 %v3642, 10
  %v4397 = vpop.permute.xlu0 %4396
  %4422 = vrot.lane.b32.xlu0 %v3117, 15
  %v4423 = vpop.permute.xlu0 %4422
  %4424 = vrot.lane.b32.xlu0 %v3118, 15
  %v4425 = vpop.permute.xlu0 %4424
  %4426 = vrot.lane.b32.xlu0 %v3119, 15
  %v4427 = vpop.permute.xlu0 %4426
  %4428 = vrot.lane.b32.xlu0 %v3120, 15
  %v4429 = vpop.permute.xlu0 %4428
  %4430 = vrot.lane.b32.xlu0 %v3121, 15
  %v4431 = vpop.permute.xlu0 %4430
  %4432 = vrot.lane.b32.xlu0 %v3122, 15
  %v4433 = vpop.permute.xlu0 %4432
  %4434 = vrot.lane.b32.xlu0 %v3123, 15
  %v4435 = vpop.permute.xlu0 %4434
  %4436 = vrot.lane.b32.xlu0 %v3124, 15
  %v4437 = vpop.permute.xlu0 %4436
  %4438 = vrot.lane.b32.xlu0 %v3125, 15
  %v4439 = vpop.permute.xlu0 %4438
  %4440 = vrot.lane.b32.xlu0 %v3126, 15
  %v4441 = vpop.permute.xlu0 %4440
  %4442 = vrot.lane.b32.xlu0 %v3127, 15
  %v4443 = vpop.permute.xlu0 %4442
  %4444 = vrot.lane.b32.xlu0 %v3128, 15
  %v4445 = vpop.permute.xlu0 %4444
  %4446 = vrot.lane.b32.xlu0 %v3129, 15
  %v4447 = vpop.permute.xlu0 %4446
  %4448 = vrot.lane.b32.xlu0 %v3130, 15
  %v4449 = vpop.permute.xlu0 %4448
  %4450 = vrot.lane.b32.xlu0 %v3131, 15
  %v4451 = vpop.permute.xlu0 %4450
  %4452 = vrot.lane.b32.xlu0 %v3132, 15
  %v4453 = vpop.permute.xlu0 %4452
  %4454 = vrot.lane.b32.xlu0 %v3133, 15
  %v4455 = vpop.permute.xlu0 %4454
  %4456 = vrot.lane.b32.xlu0 %v3134, 15
  %v4457 = vpop.permute.xlu0 %4456
  %4458 = vrot.lane.b32.xlu0 %v3135, 15
  %v4459 = vpop.permute.xlu0 %4458
  %4460 = vrot.lane.b32.xlu0 %v3136, 15
  %v4461 = vpop.permute.xlu0 %4460
  %4462 = vrot.lane.b32.xlu0 %v3137, 15
  %v4463 = vpop.permute.xlu0 %4462
  %4464 = vrot.lane.b32.xlu0 %v3138, 15
  %v4465 = vpop.permute.xlu0 %4464
  %4466 = vrot.lane.b32.xlu0 %v3139, 15
  %v4467 = vpop.permute.xlu0 %4466
  %4468 = vrot.lane.b32.xlu0 %v3140, 15
  %v4469 = vpop.permute.xlu0 %4468
  %4496 = vrot.lane.b32.xlu0 %v3621, 20
  %v4497 = vpop.permute.xlu0 %4496
  %4498 = vrot.lane.b32.xlu0 %v3622, 20
  %v4499 = vpop.permute.xlu0 %4498
  %4500 = vrot.lane.b32.xlu0 %v3623, 20
  %v4501 = vpop.permute.xlu0 %4500
  %4502 = vrot.lane.b32.xlu0 %v3624, 20
  %v4503 = vpop.permute.xlu0 %4502
  %4504 = vrot.lane.b32.xlu0 %v3625, 20
  %v4505 = vpop.permute.xlu0 %4504
  %4506 = vrot.lane.b32.xlu0 %v3626, 20
  %v4507 = vpop.permute.xlu0 %4506
  %4508 = vrot.lane.b32.xlu0 %v3627, 20
  %v4509 = vpop.permute.xlu0 %4508
  %4510 = vrot.lane.b32.xlu0 %v3628, 20
  %v4511 = vpop.permute.xlu0 %4510
  %4512 = vrot.lane.b32.xlu0 %v3629, 20
  %v4513 = vpop.permute.xlu0 %4512
  %4514 = vrot.lane.b32.xlu0 %v3630, 20
  %v4515 = vpop.permute.xlu0 %4514
  %4516 = vrot.lane.b32.xlu0 %v3631, 20
  %v4517 = vpop.permute.xlu0 %4516
  %4518 = vrot.lane.b32.xlu0 %v3632, 20
  %v4519 = vpop.permute.xlu0 %4518
  %4520 = vrot.lane.b32.xlu0 %v3633, 20
  %v4521 = vpop.permute.xlu0 %4520
  %4522 = vrot.lane.b32.xlu0 %v3634, 20
  %v4523 = vpop.permute.xlu0 %4522
  %4524 = vrot.lane.b32.xlu0 %v3635, 20
  %v4525 = vpop.permute.xlu0 %4524
  %4526 = vrot.lane.b32.xlu0 %v3636, 20
  %v4527 = vpop.permute.xlu0 %4526
  %4528 = vrot.lane.b32.xlu0 %v3637, 20
  %v4529 = vpop.permute.xlu0 %4528
  %4530 = vrot.lane.b32.xlu0 %v3638, 20
  %v4531 = vpop.permute.xlu0 %4530
  %4532 = vrot.lane.b32.xlu0 %v3639, 20
  %v4533 = vpop.permute.xlu0 %4532
  %4534 = vrot.lane.b32.xlu0 %v3640, 20
  %v4535 = vpop.permute.xlu0 %4534
  %4536 = vrot.lane.b32.xlu0 %v3641, 20
  %v4537 = vpop.permute.xlu0 %4536
  %4538 = vrot.lane.b32.xlu0 %v3642, 20
  %v4539 = vpop.permute.xlu0 %4538
  %4540 = vrot.lane.b32.xlu0 %v3643, 20
  %v4541 = vpop.permute.xlu0 %4540
  %4542 = vrot.lane.b32.xlu0 %v3644, 20
  %v4543 = vpop.permute.xlu0 %4542
  %v4568 = vsel %vm1766, %v3617, %v4279
  %v4569 = vsel %vm1766, %v3618, %v4281
  %v4570 = vsel %vm1766, %v3619, %v4283
  %v4571 = vsel %vm1766, %v3620, %v4285
  %v4572 = vsel %vm1766, %v3621, %v4287
  %v4573 = vsel %vm1766, %v3622, %v4289
  %v4574 = vsel %vm1766, %v3623, %v4291
  %v4575 = vsel %vm1766, %v3624, %v4293
  %v4576 = vsel %vm1766, %v3625, %v4295
  %v4577 = vsel %vm1766, %v3626, %v4297
  %v4578 = vsel %vm1766, %v3627, %v4299
  %v4579 = vsel %vm1766, %v3628, %v4301
  %v4580 = vsel %vm1766, %v3629, %v4303
  %v4581 = vsel %vm1766, %v3630, %v4305
  %v4582 = vsel %vm1766, %v3631, %v4307
  %v4583 = vsel %vm1766, %v3632, %v4309
  %v4584 = vsel %vm1766, %v3633, %v4311
  %v4585 = vsel %vm1766, %v3634, %v4313
  %v4586 = vsel %vm1766, %v3635, %v4315
  %v4587 = vsel %vm1766, %v3636, %v4317
  %v4588 = vsel %vm1766, %v3637, %v4319
  %v4589 = vsel %vm1766, %v3638, %v4321
  %v4590 = vsel %vm1766, %v3639, %v4323
  %v4591 = vsel %vm1766, %v3640, %v4325
  %v4592 = vsel %vm1791, %v4568, %v4351
  %v4593 = vsel %vm1791, %v4569, %v4353
  %v4594 = vsel %vm1791, %v4570, %v4355
  %v4595 = vsel %vm1791, %v4571, %v4357
  %v4596 = vsel %vm1791, %v4572, %v4359
  %v4597 = vsel %vm1791, %v4573, %v4361
  %v4598 = vsel %vm1791, %v4574, %v4363
  %v4599 = vsel %vm1791, %v4575, %v4365
  %v4600 = vsel %vm1791, %v4576, %v4367
  %v4601 = vsel %vm1791, %v4577, %v4369
  %v4602 = vsel %vm1791, %v4578, %v4371
  %v4603 = vsel %vm1791, %v4579, %v4373
  %v4604 = vsel %vm1791, %v4580, %v4375
  %v4605 = vsel %vm1791, %v4581, %v4377
  %v4606 = vsel %vm1791, %v4582, %v4379
  %v4607 = vsel %vm1791, %v4583, %v4381
  %v4608 = vsel %vm1791, %v4584, %v4383
  %v4609 = vsel %vm1791, %v4585, %v4385
  %v4610 = vsel %vm1791, %v4586, %v4387
  %v4611 = vsel %vm1791, %v4587, %v4389
  %v4612 = vsel %vm1791, %v4588, %v4391
  %v4613 = vsel %vm1791, %v4589, %v4393
  %v4614 = vsel %vm1791, %v4590, %v4395
  %v4615 = vsel %vm1791, %v4591, %v4397
  %v4616 = vsel %vm1816, %v4592, %v4423
  %v4617 = vsel %vm1816, %v4593, %v4425
  %v4618 = vsel %vm1816, %v4594, %v4427
  %v4619 = vsel %vm1816, %v4595, %v4429
  %v4620 = vsel %vm1816, %v4596, %v4431
  %v4621 = vsel %vm1816, %v4597, %v4433
  %v4622 = vsel %vm1816, %v4598, %v4435
  %v4623 = vsel %vm1816, %v4599, %v4437
  %v4624 = vsel %vm1816, %v4600, %v4439
  %v4625 = vsel %vm1816, %v4601, %v4441
  %v4626 = vsel %vm1816, %v4602, %v4443
  %v4627 = vsel %vm1816, %v4603, %v4445
  %v4628 = vsel %vm1816, %v4604, %v4447
  %v4629 = vsel %vm1816, %v4605, %v4449
  %v4630 = vsel %vm1816, %v4606, %v4451
  %v4631 = vsel %vm1816, %v4607, %v4453
  %v4632 = vsel %vm1816, %v4608, %v4455
  %v4633 = vsel %vm1816, %v4609, %v4457
  %v4634 = vsel %vm1816, %v4610, %v4459
  %v4635 = vsel %vm1816, %v4611, %v4461
  %v4636 = vsel %vm1816, %v4612, %v4463
  %v4637 = vsel %vm1816, %v4613, %v4465
  %v4638 = vsel %vm1816, %v4614, %v4467
  %v4639 = vsel %vm1816, %v4615, %v4469
  %v4640 = vsel %vm1841, %v4616, %v4497
  %v4641 = vsel %vm1841, %v4617, %v4499
  %v4642 = vsel %vm1841, %v4618, %v4501
  %v4643 = vsel %vm1841, %v4619, %v4503
  %v4644 = vsel %vm1841, %v4620, %v4505
  %v4645 = vsel %vm1841, %v4621, %v4507
  %v4646 = vsel %vm1841, %v4622, %v4509
  %v4647 = vsel %vm1841, %v4623, %v4511
  %v4648 = vsel %vm1841, %v4624, %v4513
  %v4649 = vsel %vm1841, %v4625, %v4515
  %v4650 = vsel %vm1841, %v4626, %v4517
  %v4651 = vsel %vm1841, %v4627, %v4519
  %v4652 = vsel %vm1841, %v4628, %v4521
  %v4653 = vsel %vm1841, %v4629, %v4523
  %v4654 = vsel %vm1841, %v4630, %v4525
  %v4655 = vsel %vm1841, %v4631, %v4527
  %v4656 = vsel %vm1841, %v4632, %v4529
  %v4657 = vsel %vm1841, %v4633, %v4531
  %v4658 = vsel %vm1841, %v4634, %v4533
  %v4659 = vsel %vm1841, %v4635, %v4535
  %v4660 = vsel %vm1841, %v4636, %v4537
  %v4661 = vsel %vm1841, %v4637, %v4539
  %v4662 = vsel %vm1841, %v4638, %v4541
  %v4663 = vsel %vm1841, %v4639, %v4543
  %v4666 = vrot.slane %v4642, 4
  %v4667 = vrot.slane %v4643, 4
  %v4668 = vsel %vm1868, %v4666, %v4667
  %v4672 = vrot.slane %v4646, 4
  %v4673 = vrot.slane %v4647, 4
  %v4674 = vsel %vm1868, %v4672, %v4673
  %v4678 = vrot.slane %v4650, 4
  %v4679 = vrot.slane %v4651, 4
  %v4680 = vsel %vm1868, %v4678, %v4679
  %v4684 = vrot.slane %v4654, 4
  %v4685 = vrot.slane %v4655, 4
  %v4686 = vsel %vm1868, %v4684, %v4685
  %v4690 = vrot.slane %v4658, 4
  %v4691 = vrot.slane %v4659, 4
  %v4692 = vsel %vm1868, %v4690, %v4691
  %v4696 = vrot.slane %v4662, 4
  %v4697 = vrot.slane %v4663, 4
  %v4698 = vsel %vm1868, %v4696, %v4697
  %v4700 = vsel %vm1868, %v4641, %v4666
  %v4701 = vsel %vm1868, %v4645, %v4672
  %v4702 = vsel %vm1868, %v4649, %v4678
  %v4703 = vsel %vm1868, %v4653, %v4684
  %v4704 = vsel %vm1868, %v4657, %v4690
  %v4705 = vsel %vm1868, %v4661, %v4696
  %v4707 = vsel %vm1912, %v4640, 0
  %v4710 = vsel %vm1912, %v4700, 0
  %v4712 = vsel %vm1912, %v4668, 0
  %v4715 = vsel %vm1912, %v4644, 0
  %v4718 = vsel %vm1912, %v4701, 0
  %v4720 = vsel %vm1912, %v4674, 0
  %v4723 = vsel %vm1912, %v4648, 0
  %v4726 = vsel %vm1912, %v4702, 0
  %v4728 = vsel %vm1912, %v4680, 0
  %v4731 = vsel %vm1912, %v4652, 0
  %v4734 = vsel %vm1912, %v4703, 0
  %v4736 = vsel %vm1912, %v4686, 0
  %v4739 = vsel %vm1912, %v4656, 0
  %v4742 = vsel %vm1912, %v4704, 0
  %v4744 = vsel %vm1912, %v4692, 0
  %v4747 = vsel %vm1912, %v4660, 0
  %v4750 = vsel %vm1912, %v4705, 0
  %v4752 = vsel %vm1912, %v4698, 0
  %4754 = vmatpush.msra.mxu0 0.0
  %4755 = vmatpush.msra.mxu0 0.0
  %4756 = vmatpush.msra.mxu0 0.0
  %4757 = vmatpush.msra.mxu0 0.0
  %4758 = vmatpush.msra.mxu0 0.0
  %4759 = vmatpush.msra.mxu0 0.0
  %4760 = vmatpush.msra.mxu0 0.0
  %4761 = vmatpush.msra.mxu0 0.0
  %4762 = vmatpush.msra.mxu0 0.0
  %4763 = vmatpush.msra.mxu0 0.0
  %4764 = vmatpush.msra.mxu0 0.0
  %4765 = vmatpush.msra.mxu0 0.0
  %4766 = vmatpush.msra.mxu0 %v1963
  %4767 = vmatpush.msra.mxu0 %v16
  %4768 = vmatpush.msra.mxu0 %v15
  %4769 = vmatpush.msra.mxu0 %v14
  %4770 = vmatmul.f32.gmra.mxu0 %v4707
  %v4771 = vpop.f32.mrf.mxu0
  %v4772 = vadd.f32 %v1910, %v4771
  %4773 = vmatmul.f32.gmra.mxu0 %v4710
  %v4774 = vpop.f32.mrf.mxu0
  %v4775 = vadd.f32 %v1910, %v4774
  %4776 = vmatmul.f32.gmra.mxu0 %v4712
  %v4777 = vpop.f32.mrf.mxu0
  %v4778 = vadd.f32 %v1910, %v4777
  %4779 = vmatmul.f32.gmra.mxu0 %v4715
  %v4780 = vpop.f32.mrf.mxu0
  %v4781 = vadd.f32 %v1910, %v4780
  %4782 = vmatmul.f32.gmra.mxu0 %v4718
  %v4783 = vpop.f32.mrf.mxu0
  %v4784 = vadd.f32 %v1910, %v4783
  %4785 = vmatmul.f32.gmra.mxu0 %v4720
  %v4786 = vpop.f32.mrf.mxu0
  %v4787 = vadd.f32 %v1910, %v4786
  %4788 = vmatmul.f32.gmra.mxu0 %v4723
  %v4789 = vpop.f32.mrf.mxu0
  %v4790 = vadd.f32 %v1910, %v4789
  %4791 = vmatmul.f32.gmra.mxu0 %v4726
  %v4792 = vpop.f32.mrf.mxu0
  %v4793 = vadd.f32 %v1910, %v4792
  %4794 = vmatmul.f32.gmra.mxu0 %v4728
  %v4795 = vpop.f32.mrf.mxu0
  %v4796 = vadd.f32 %v1910, %v4795
  %4797 = vmatmul.f32.gmra.mxu0 %v4731
  %v4798 = vpop.f32.mrf.mxu0
  %v4799 = vadd.f32 %v1910, %v4798
  %4800 = vmatmul.f32.gmra.mxu0 %v4734
  %v4801 = vpop.f32.mrf.mxu0
  %v4802 = vadd.f32 %v1910, %v4801
  %4803 = vmatmul.f32.gmra.mxu0 %v4736
  %v4804 = vpop.f32.mrf.mxu0
  %v4805 = vadd.f32 %v1910, %v4804
  %4806 = vmatmul.f32.gmra.mxu0 %v4739
  %v4807 = vpop.f32.mrf.mxu0
  %v4808 = vadd.f32 %v1910, %v4807
  %4809 = vmatmul.f32.gmra.mxu0 %v4742
  %v4810 = vpop.f32.mrf.mxu0
  %v4811 = vadd.f32 %v1910, %v4810
  %4812 = vmatmul.f32.gmra.mxu0 %v4744
  %v4813 = vpop.f32.mrf.mxu0
  %v4814 = vadd.f32 %v1910, %v4813
  %4815 = vmatmul.f32.gmra.mxu0 %v4747
  %v4816 = vpop.f32.mrf.mxu0
  %v4817 = vadd.f32 %v1910, %v4816
  %4818 = vmatmul.f32.gmra.mxu0 %v4750
  %v4819 = vpop.f32.mrf.mxu0
  %v4820 = vadd.f32 %v1910, %v4819
  %4821 = vmatmul.f32.gmra.mxu0 %v4752
  %v4822 = vpop.f32.mrf.mxu0
  %v4823 = vadd.f32 %v1910, %v4822
  %4824 = vdwg.mxu0
  %v4825 = vmax.f32 %v4772, 0.0
  %v4826 = vmax.f32 %v4775, 0.0
  %v4827 = vmax.f32 %v4778, 0.0
  %v4828 = vmax.f32 %v4781, 0.0
  %v4829 = vmax.f32 %v4784, 0.0
  %v4830 = vmax.f32 %v4787, 0.0
  %v4831 = vmax.f32 %v4790, 0.0
  %v4832 = vmax.f32 %v4793, 0.0
  %v4833 = vmax.f32 %v4796, 0.0
  %v4834 = vmax.f32 %v4799, 0.0
  %v4835 = vmax.f32 %v4802, 0.0
  %v4836 = vmax.f32 %v4805, 0.0
  %v4837 = vmax.f32 %v4808, 0.0
  %v4838 = vmax.f32 %v4811, 0.0
  %v4839 = vmax.f32 %v4814, 0.0
  %v4840 = vmax.f32 %v4817, 0.0
  %v4841 = vmax.f32 %v4820, 0.0
  %v4842 = vmax.f32 %v4823, 0.0
  %v4843 = vmax.f32 %v4260, %v4825
  %v4844 = vmax.f32 %v4261, %v4826
  %v4845 = vmax.f32 %v4262, %v4827
  %v4846 = vmax.f32 %v4263, %v4828
  %v4847 = vmax.f32 %v4264, %v4829
  %v4848 = vmax.f32 %v4265, %v4830
  %v4849 = vmax.f32 %v4266, %v4831
  %v4850 = vmax.f32 %v4267, %v4832
  %v4851 = vmax.f32 %v4268, %v4833
  %v4852 = vmax.f32 %v4269, %v4834
  %v4853 = vmax.f32 %v4270, %v4835
  %v4854 = vmax.f32 %v4271, %v4836
  %v4855 = vmax.f32 %v4272, %v4837
  %v4856 = vmax.f32 %v4273, %v4838
  %v4857 = vmax.f32 %v4274, %v4839
  %v4858 = vmax.f32 %v4275, %v4840
  %v4859 = vmax.f32 %v4276, %v4841
  %v4860 = vmax.f32 %v4277, %v4842
  %4861 = vst.msk [vmem:[%s3] sm:$0xff] %vm1791, %v4843
  %4862 = vst.msk [vmem:[%s3 + $0x8] sm:$0xff] %vm1791, %v4844
  %4863 = vst.msk [vmem:[%s3 + $0x10] sm:$0xff] %vm1791, %v4845
  %4864 = vst.msk [vmem:[%s3 + $0x18] sm:$0xff] %vm1791, %v4846
  %4865 = vst.msk [vmem:[%s3 + $0x20] sm:$0xff] %vm1791, %v4847
  %4866 = vst.msk [vmem:[%s3 + $0x28] sm:$0xff] %vm1791, %v4848
  %4867 = vst.msk [vmem:[%s3 + $0x30] sm:$0xff] %vm1791, %v4849
  %4868 = vst.msk [vmem:[%s3 + $0x38] sm:$0xff] %vm1791, %v4850
  %4869 = vst.msk [vmem:[%s3 + $0x40] sm:$0xff] %vm1791, %v4851
  %4870 = vst.msk [vmem:[%s3 + $0x48] sm:$0xff] %vm1791, %v4852
  %4871 = vst.msk [vmem:[%s3 + $0x50] sm:$0xff] %vm1791, %v4853
  %4872 = vst.msk [vmem:[%s3 + $0x58] sm:$0xff] %vm1791, %v4854
  %4873 = vst.msk [vmem:[%s3 + $0x60] sm:$0xff] %vm1791, %v4855
  %4874 = vst.msk [vmem:[%s3 + $0x68] sm:$0xff] %vm1791, %v4856
  %4875 = vst.msk [vmem:[%s3 + $0x70] sm:$0xff] %vm1791, %v4857
  %4876 = vst.msk [vmem:[%s3 + $0x78] sm:$0xff] %vm1791, %v4858
  %4877 = vst.msk [vmem:[%s3 + $0x80] sm:$0xff] %vm1791, %v4859
  %4878 = vst.msk [vmem:[%s3 + $0x88] sm:$0xff] %vm1791, %v4860
  %s4879 = scalar_lea.vmem %s0, 896
  %v4880 = vld [vmem:[%s4879] sm:$0xff]
  %v4881 = vld [vmem:[%s4879 + $0x8] sm:$0xf]
  %v4882 = vld [vmem:[%s4879 + $0x10] sm:$0xff]
  %v4883 = vld [vmem:[%s4879 + $0x18] sm:$0xf]
  %v4884 = vld [vmem:[%s4879 + $0x20] sm:$0xff]
  %v4885 = vld [vmem:[%s4879 + $0x28] sm:$0xf]
  %v4886 = vld [vmem:[%s4879 + $0x30] sm:$0xff]
  %v4887 = vld [vmem:[%s4879 + $0x38] sm:$0xf]
  %v4888 = vld [vmem:[%s4879 + $0x40] sm:$0xff]
  %v4889 = vld [vmem:[%s4879 + $0x48] sm:$0xf]
  %v4890 = vld [vmem:[%s4879 + $0x50] sm:$0xff]
  %v4891 = vld [vmem:[%s4879 + $0x58] sm:$0xf]
  %v4892 = vld [vmem:[%s4879 + $0x60] sm:$0xff]
  %v4893 = vld [vmem:[%s4879 + $0x68] sm:$0xf]
  %v4894 = vld [vmem:[%s4879 + $0x70] sm:$0xff]
  %v4895 = vld [vmem:[%s4879 + $0x78] sm:$0xf]
  %v4896 = vld [vmem:[%s4879 + $0x80] sm:$0xff]
  %v4897 = vld [vmem:[%s4879 + $0x88] sm:$0xf]
  %v4898 = vld [vmem:[%s4879 + $0x90] sm:$0xff]
  %v4899 = vld [vmem:[%s4879 + $0x98] sm:$0xf]
  %v4900 = vld [vmem:[%s4879 + $0xa0] sm:$0xff]
  %v4901 = vld [vmem:[%s4879 + $0xa8] sm:$0xf]
  %v4902 = vld [vmem:[%s4879 + $0xb0] sm:$0xff]
  %v4903 = vld [vmem:[%s4879 + $0xb8] sm:$0xf]
  %v4904 = vld [vmem:[%s4879 + $0xc0] sm:$0xff]
  %v4905 = vld [vmem:[%s4879 + $0xc8] sm:$0xf]
  %v4906 = vld [vmem:[%s4879 + $0xd0] sm:$0xff]
  %v4907 = vld [vmem:[%s4879 + $0xd8] sm:$0xf]
  %s4908 = scalar_lea.vmem %s0, 1120
  %v4909 = vld [vmem:[%s4908] sm:$0xff]
  %v4910 = vld [vmem:[%s4908 + $0x8] sm:$0xf]
  %v4911 = vld [vmem:[%s4908 + $0x10] sm:$0xff]
  %v4912 = vld [vmem:[%s4908 + $0x18] sm:$0xf]
  %v4913 = vld [vmem:[%s4908 + $0x20] sm:$0xff]
  %v4914 = vld [vmem:[%s4908 + $0x28] sm:$0xf]
  %v4915 = vld [vmem:[%s4908 + $0x30] sm:$0xff]
  %v4916 = vld [vmem:[%s4908 + $0x38] sm:$0xf]
  %v4917 = vld [vmem:[%s4908 + $0x40] sm:$0xff]
  %v4918 = vld [vmem:[%s4908 + $0x48] sm:$0xf]
  %v4919 = vld [vmem:[%s4908 + $0x50] sm:$0xff]
  %v4920 = vld [vmem:[%s4908 + $0x58] sm:$0xf]
  %v4921 = vld [vmem:[%s4908 + $0x60] sm:$0xff]
  %v4922 = vld [vmem:[%s4908 + $0x68] sm:$0xf]
  %v4923 = vld [vmem:[%s4908 + $0x70] sm:$0xff]
  %v4924 = vld [vmem:[%s4908 + $0x78] sm:$0xf]
  %v4925 = vld [vmem:[%s4908 + $0x80] sm:$0xff]
  %v4926 = vld [vmem:[%s4908 + $0x88] sm:$0xf]
  %v4927 = vld [vmem:[%s4908 + $0x90] sm:$0xff]
  %v4928 = vld [vmem:[%s4908 + $0x98] sm:$0xf]
  %v4929 = vld [vmem:[%s4908 + $0xa0] sm:$0xff]
  %v4930 = vld [vmem:[%s4908 + $0xa8] sm:$0xf]
  %v4931 = vld [vmem:[%s4908 + $0xb0] sm:$0xff]
  %v4932 = vld [vmem:[%s4908 + $0xb8] sm:$0xf]
  %v4933 = vld [vmem:[%s4908 + $0xc0] sm:$0xff]
  %v4934 = vld [vmem:[%s4908 + $0xc8] sm:$0xf]
  %v4935 = vld [vmem:[%s4908 + $0xd0] sm:$0xff]
  %v4936 = vld [vmem:[%s4908 + $0xd8] sm:$0xf]
  %v4937 = vld [vmem:[%s4879 + $0x1] sm:$0xff]
  %v4938 = vld [vmem:[%s4879 + $0x9] sm:$0xf]
  %v4939 = vld [vmem:[%s4879 + $0x11] sm:$0xff]
  %v4940 = vld [vmem:[%s4879 + $0x19] sm:$0xf]
  %v4941 = vld [vmem:[%s4879 + $0x21] sm:$0xff]
  %v4942 = vld [vmem:[%s4879 + $0x29] sm:$0xf]
  %v4943 = vld [vmem:[%s4879 + $0x31] sm:$0xff]
  %v4944 = vld [vmem:[%s4879 + $0x39] sm:$0xf]
  %v4945 = vld [vmem:[%s4879 + $0x41] sm:$0xff]
  %v4946 = vld [vmem:[%s4879 + $0x49] sm:$0xf]
  %v4947 = vld [vmem:[%s4879 + $0x51] sm:$0xff]
  %v4948 = vld [vmem:[%s4879 + $0x59] sm:$0xf]
  %v4949 = vld [vmem:[%s4879 + $0x61] sm:$0xff]
  %v4950 = vld [vmem:[%s4879 + $0x69] sm:$0xf]
  %v4951 = vld [vmem:[%s4879 + $0x71] sm:$0xff]
  %v4952 = vld [vmem:[%s4879 + $0x79] sm:$0xf]
  %v4953 = vld [vmem:[%s4879 + $0x81] sm:$0xff]
  %v4954 = vld [vmem:[%s4879 + $0x89] sm:$0xf]
  %v4955 = vld [vmem:[%s4879 + $0x91] sm:$0xff]
  %v4956 = vld [vmem:[%s4879 + $0x99] sm:$0xf]
  %v4957 = vld [vmem:[%s4879 + $0xa1] sm:$0xff]
  %v4958 = vld [vmem:[%s4879 + $0xa9] sm:$0xf]
  %v4959 = vld [vmem:[%s4879 + $0xb1] sm:$0xff]
  %v4960 = vld [vmem:[%s4879 + $0xb9] sm:$0xf]
  %v4961 = vld [vmem:[%s4879 + $0xc1] sm:$0xff]
  %v4962 = vld [vmem:[%s4879 + $0xc9] sm:$0xf]
  %v4963 = vld [vmem:[%s4879 + $0xd1] sm:$0xff]
  %v4964 = vld [vmem:[%s4879 + $0xd9] sm:$0xf]
  %v4965 = vld [vmem:[%s4908 + $0x1] sm:$0xff]
  %v4966 = vld [vmem:[%s4908 + $0x9] sm:$0xf]
  %v4967 = vld [vmem:[%s4908 + $0x11] sm:$0xff]
  %v4968 = vld [vmem:[%s4908 + $0x19] sm:$0xf]
  %v4969 = vld [vmem:[%s4908 + $0x21] sm:$0xff]
  %v4970 = vld [vmem:[%s4908 + $0x29] sm:$0xf]
  %v4971 = vld [vmem:[%s4908 + $0x31] sm:$0xff]
  %v4972 = vld [vmem:[%s4908 + $0x39] sm:$0xf]
  %v4973 = vld [vmem:[%s4908 + $0x41] sm:$0xff]
  %v4974 = vld [vmem:[%s4908 + $0x49] sm:$0xf]
  %v4975 = vld [vmem:[%s4908 + $0x51] sm:$0xff]
  %v4976 = vld [vmem:[%s4908 + $0x59] sm:$0xf]
  %v4977 = vld [vmem:[%s4908 + $0x61] sm:$0xff]
  %v4978 = vld [vmem:[%s4908 + $0x69] sm:$0xf]
  %v4979 = vld [vmem:[%s4908 + $0x71] sm:$0xff]
  %v4980 = vld [vmem:[%s4908 + $0x79] sm:$0xf]
  %v4981 = vld [vmem:[%s4908 + $0x81] sm:$0xff]
  %v4982 = vld [vmem:[%s4908 + $0x89] sm:$0xf]
  %v4983 = vld [vmem:[%s4908 + $0x91] sm:$0xff]
  %v4984 = vld [vmem:[%s4908 + $0x99] sm:$0xf]
  %v4985 = vld [vmem:[%s4908 + $0xa1] sm:$0xff]
  %v4986 = vld [vmem:[%s4908 + $0xa9] sm:$0xf]
  %v4987 = vld [vmem:[%s4908 + $0xb1] sm:$0xff]
  %v4988 = vld [vmem:[%s4908 + $0xb9] sm:$0xf]
  %v4989 = vld [vmem:[%s4908 + $0xc1] sm:$0xff]
  %v4990 = vld [vmem:[%s4908 + $0xc9] sm:$0xf]
  %v4991 = vld [vmem:[%s4908 + $0xd1] sm:$0xff]
  %v4992 = vld [vmem:[%s4908 + $0xd9] sm:$0xf]
  %v4993 = vld [vmem:[%s4879 + $0x2] sm:$0xff]
  %v4994 = vld [vmem:[%s4879 + $0xa] sm:$0xf]
  %v4995 = vld [vmem:[%s4879 + $0x12] sm:$0xff]
  %v4996 = vld [vmem:[%s4879 + $0x1a] sm:$0xf]
  %v4997 = vld [vmem:[%s4879 + $0x22] sm:$0xff]
  %v4998 = vld [vmem:[%s4879 + $0x2a] sm:$0xf]
  %v4999 = vld [vmem:[%s4879 + $0x32] sm:$0xff]
  %v5000 = vld [vmem:[%s4879 + $0x3a] sm:$0xf]
  %v5001 = vld [vmem:[%s4879 + $0x42] sm:$0xff]
  %v5002 = vld [vmem:[%s4879 + $0x4a] sm:$0xf]
  %v5003 = vld [vmem:[%s4879 + $0x52] sm:$0xff]
  %v5004 = vld [vmem:[%s4879 + $0x5a] sm:$0xf]
  %v5005 = vld [vmem:[%s4879 + $0x62] sm:$0xff]
  %v5006 = vld [vmem:[%s4879 + $0x6a] sm:$0xf]
  %v5007 = vld [vmem:[%s4879 + $0x72] sm:$0xff]
  %v5008 = vld [vmem:[%s4879 + $0x7a] sm:$0xf]
  %v5009 = vld [vmem:[%s4879 + $0x82] sm:$0xff]
  %v5010 = vld [vmem:[%s4879 + $0x8a] sm:$0xf]
  %v5011 = vld [vmem:[%s4879 + $0x92] sm:$0xff]
  %v5012 = vld [vmem:[%s4879 + $0x9a] sm:$0xf]
  %v5013 = vld [vmem:[%s4879 + $0xa2] sm:$0xff]
  %v5014 = vld [vmem:[%s4879 + $0xaa] sm:$0xf]
  %v5015 = vld [vmem:[%s4879 + $0xb2] sm:$0xff]
  %v5016 = vld [vmem:[%s4879 + $0xba] sm:$0xf]
  %v5017 = vld [vmem:[%s4879 + $0xc2] sm:$0xff]
  %v5018 = vld [vmem:[%s4879 + $0xca] sm:$0xf]
  %v5019 = vld [vmem:[%s4879 + $0xd2] sm:$0xff]
  %v5020 = vld [vmem:[%s4879 + $0xda] sm:$0xf]
  %5049 = vrot.lane.b32.xlu0 %v4909, 1
  %v5050 = vpop.permute.xlu0 %5049
  %5051 = vrot.lane.b32.xlu0 %v4910, 1
  %v5052 = vpop.permute.xlu0 %5051
  %5053 = vrot.lane.b32.xlu0 %v4911, 1
  %v5054 = vpop.permute.xlu0 %5053
  %5055 = vrot.lane.b32.xlu0 %v4912, 1
  %v5056 = vpop.permute.xlu0 %5055
  %5057 = vrot.lane.b32.xlu0 %v4913, 1
  %v5058 = vpop.permute.xlu0 %5057
  %5059 = vrot.lane.b32.xlu0 %v4914, 1
  %v5060 = vpop.permute.xlu0 %5059
  %5061 = vrot.lane.b32.xlu0 %v4915, 1
  %v5062 = vpop.permute.xlu0 %5061
  %5063 = vrot.lane.b32.xlu0 %v4916, 1
  %v5064 = vpop.permute.xlu0 %5063
  %5065 = vrot.lane.b32.xlu0 %v4917, 1
  %v5066 = vpop.permute.xlu0 %5065
  %5067 = vrot.lane.b32.xlu0 %v4918, 1
  %v5068 = vpop.permute.xlu0 %5067
  %5069 = vrot.lane.b32.xlu0 %v4919, 1
  %v5070 = vpop.permute.xlu0 %5069
  %5071 = vrot.lane.b32.xlu0 %v4920, 1
  %v5072 = vpop.permute.xlu0 %5071
  %5073 = vrot.lane.b32.xlu0 %v4921, 1
  %v5074 = vpop.permute.xlu0 %5073
  %5075 = vrot.lane.b32.xlu0 %v4922, 1
  %v5076 = vpop.permute.xlu0 %5075
  %5077 = vrot.lane.b32.xlu0 %v4923, 1
  %v5078 = vpop.permute.xlu0 %5077
  %5079 = vrot.lane.b32.xlu0 %v4924, 1
  %v5080 = vpop.permute.xlu0 %5079
  %5081 = vrot.lane.b32.xlu0 %v4925, 1
  %v5082 = vpop.permute.xlu0 %5081
  %5083 = vrot.lane.b32.xlu0 %v4926, 1
  %v5084 = vpop.permute.xlu0 %5083
  %5085 = vrot.lane.b32.xlu0 %v4927, 1
  %v5086 = vpop.permute.xlu0 %5085
  %5087 = vrot.lane.b32.xlu0 %v4928, 1
  %v5088 = vpop.permute.xlu0 %5087
  %5089 = vrot.lane.b32.xlu0 %v4929, 1
  %v5090 = vpop.permute.xlu0 %5089
  %5091 = vrot.lane.b32.xlu0 %v4930, 1
  %v5092 = vpop.permute.xlu0 %5091
  %5093 = vrot.lane.b32.xlu0 %v4931, 1
  %v5094 = vpop.permute.xlu0 %5093
  %5095 = vrot.lane.b32.xlu0 %v4932, 1
  %v5096 = vpop.permute.xlu0 %5095
  %5097 = vrot.lane.b32.xlu0 %v4933, 1
  %v5098 = vpop.permute.xlu0 %5097
  %5099 = vrot.lane.b32.xlu0 %v4934, 1
  %v5100 = vpop.permute.xlu0 %5099
  %5101 = vrot.lane.b32.xlu0 %v4935, 1
  %v5102 = vpop.permute.xlu0 %5101
  %5103 = vrot.lane.b32.xlu0 %v4936, 1
  %v5104 = vpop.permute.xlu0 %5103
  %5161 = vrot.lane.b32.xlu0 %v4937, 2
  %v5162 = vpop.permute.xlu0 %5161
  %5163 = vrot.lane.b32.xlu0 %v4938, 2
  %v5164 = vpop.permute.xlu0 %5163
  %5165 = vrot.lane.b32.xlu0 %v4939, 2
  %v5166 = vpop.permute.xlu0 %5165
  %5167 = vrot.lane.b32.xlu0 %v4940, 2
  %v5168 = vpop.permute.xlu0 %5167
  %5169 = vrot.lane.b32.xlu0 %v4941, 2
  %v5170 = vpop.permute.xlu0 %5169
  %5171 = vrot.lane.b32.xlu0 %v4942, 2
  %v5172 = vpop.permute.xlu0 %5171
  %5173 = vrot.lane.b32.xlu0 %v4943, 2
  %v5174 = vpop.permute.xlu0 %5173
  %5175 = vrot.lane.b32.xlu0 %v4944, 2
  %v5176 = vpop.permute.xlu0 %5175
  %5177 = vrot.lane.b32.xlu0 %v4945, 2
  %v5178 = vpop.permute.xlu0 %5177
  %5179 = vrot.lane.b32.xlu0 %v4946, 2
  %v5180 = vpop.permute.xlu0 %5179
  %5181 = vrot.lane.b32.xlu0 %v4947, 2
  %v5182 = vpop.permute.xlu0 %5181
  %5183 = vrot.lane.b32.xlu0 %v4948, 2
  %v5184 = vpop.permute.xlu0 %5183
  %5185 = vrot.lane.b32.xlu0 %v4949, 2
  %v5186 = vpop.permute.xlu0 %5185
  %5187 = vrot.lane.b32.xlu0 %v4950, 2
  %v5188 = vpop.permute.xlu0 %5187
  %5189 = vrot.lane.b32.xlu0 %v4951, 2
  %v5190 = vpop.permute.xlu0 %5189
  %5191 = vrot.lane.b32.xlu0 %v4952, 2
  %v5192 = vpop.permute.xlu0 %5191
  %5193 = vrot.lane.b32.xlu0 %v4953, 2
  %v5194 = vpop.permute.xlu0 %5193
  %5195 = vrot.lane.b32.xlu0 %v4954, 2
  %v5196 = vpop.permute.xlu0 %5195
  %5197 = vrot.lane.b32.xlu0 %v4955, 2
  %v5198 = vpop.permute.xlu0 %5197
  %5199 = vrot.lane.b32.xlu0 %v4956, 2
  %v5200 = vpop.permute.xlu0 %5199
  %5201 = vrot.lane.b32.xlu0 %v4957, 2
  %v5202 = vpop.permute.xlu0 %5201
  %5203 = vrot.lane.b32.xlu0 %v4958, 2
  %v5204 = vpop.permute.xlu0 %5203
  %5205 = vrot.lane.b32.xlu0 %v4959, 2
  %v5206 = vpop.permute.xlu0 %5205
  %5207 = vrot.lane.b32.xlu0 %v4960, 2
  %v5208 = vpop.permute.xlu0 %5207
  %5209 = vrot.lane.b32.xlu0 %v4961, 2
  %v5210 = vpop.permute.xlu0 %5209
  %5211 = vrot.lane.b32.xlu0 %v4962, 2
  %v5212 = vpop.permute.xlu0 %5211
  %5213 = vrot.lane.b32.xlu0 %v4963, 2
  %v5214 = vpop.permute.xlu0 %5213
  %5215 = vrot.lane.b32.xlu0 %v4964, 2
  %v5216 = vpop.permute.xlu0 %5215
  %5273 = vrot.lane.b32.xlu0 %v4965, 3
  %v5274 = vpop.permute.xlu0 %5273
  %5275 = vrot.lane.b32.xlu0 %v4966, 3
  %v5276 = vpop.permute.xlu0 %5275
  %5277 = vrot.lane.b32.xlu0 %v4967, 3
  %v5278 = vpop.permute.xlu0 %5277
  %5279 = vrot.lane.b32.xlu0 %v4968, 3
  %v5280 = vpop.permute.xlu0 %5279
  %5281 = vrot.lane.b32.xlu0 %v4969, 3
  %v5282 = vpop.permute.xlu0 %5281
  %5283 = vrot.lane.b32.xlu0 %v4970, 3
  %v5284 = vpop.permute.xlu0 %5283
  %5285 = vrot.lane.b32.xlu0 %v4971, 3
  %v5286 = vpop.permute.xlu0 %5285
  %5287 = vrot.lane.b32.xlu0 %v4972, 3
  %v5288 = vpop.permute.xlu0 %5287
  %5289 = vrot.lane.b32.xlu0 %v4973, 3
  %v5290 = vpop.permute.xlu0 %5289
  %5291 = vrot.lane.b32.xlu0 %v4974, 3
  %v5292 = vpop.permute.xlu0 %5291
  %5293 = vrot.lane.b32.xlu0 %v4975, 3
  %v5294 = vpop.permute.xlu0 %5293
  %5295 = vrot.lane.b32.xlu0 %v4976, 3
  %v5296 = vpop.permute.xlu0 %5295
  %5297 = vrot.lane.b32.xlu0 %v4977, 3
  %v5298 = vpop.permute.xlu0 %5297
  %5299 = vrot.lane.b32.xlu0 %v4978, 3
  %v5300 = vpop.permute.xlu0 %5299
  %5301 = vrot.lane.b32.xlu0 %v4979, 3
  %v5302 = vpop.permute.xlu0 %5301
  %5303 = vrot.lane.b32.xlu0 %v4980, 3
  %v5304 = vpop.permute.xlu0 %5303
  %5305 = vrot.lane.b32.xlu0 %v4981, 3
  %v5306 = vpop.permute.xlu0 %5305
  %5307 = vrot.lane.b32.xlu0 %v4982, 3
  %v5308 = vpop.permute.xlu0 %5307
  %5309 = vrot.lane.b32.xlu0 %v4983, 3
  %v5310 = vpop.permute.xlu0 %5309
  %5311 = vrot.lane.b32.xlu0 %v4984, 3
  %v5312 = vpop.permute.xlu0 %5311
  %5313 = vrot.lane.b32.xlu0 %v4985, 3
  %v5314 = vpop.permute.xlu0 %5313
  %5315 = vrot.lane.b32.xlu0 %v4986, 3
  %v5316 = vpop.permute.xlu0 %5315
  %5317 = vrot.lane.b32.xlu0 %v4987, 3
  %v5318 = vpop.permute.xlu0 %5317
  %5319 = vrot.lane.b32.xlu0 %v4988, 3
  %v5320 = vpop.permute.xlu0 %5319
  %5321 = vrot.lane.b32.xlu0 %v4989, 3
  %v5322 = vpop.permute.xlu0 %5321
  %5323 = vrot.lane.b32.xlu0 %v4990, 3
  %v5324 = vpop.permute.xlu0 %5323
  %5325 = vrot.lane.b32.xlu0 %v4991, 3
  %v5326 = vpop.permute.xlu0 %5325
  %5327 = vrot.lane.b32.xlu0 %v4992, 3
  %v5328 = vpop.permute.xlu0 %5327
  %5385 = vrot.lane.b32.xlu0 %v4993, 4
  %v5386 = vpop.permute.xlu0 %5385
  %5387 = vrot.lane.b32.xlu0 %v4994, 4
  %v5388 = vpop.permute.xlu0 %5387
  %5389 = vrot.lane.b32.xlu0 %v4995, 4
  %v5390 = vpop.permute.xlu0 %5389
  %5391 = vrot.lane.b32.xlu0 %v4996, 4
  %v5392 = vpop.permute.xlu0 %5391
  %5393 = vrot.lane.b32.xlu0 %v4997, 4
  %v5394 = vpop.permute.xlu0 %5393
  %5395 = vrot.lane.b32.xlu0 %v4998, 4
  %v5396 = vpop.permute.xlu0 %5395
  %5397 = vrot.lane.b32.xlu0 %v4999, 4
  %v5398 = vpop.permute.xlu0 %5397
  %5399 = vrot.lane.b32.xlu0 %v5000, 4
  %v5400 = vpop.permute.xlu0 %5399
  %5401 = vrot.lane.b32.xlu0 %v5001, 4
  %v5402 = vpop.permute.xlu0 %5401
  %5403 = vrot.lane.b32.xlu0 %v5002, 4
  %v5404 = vpop.permute.xlu0 %5403
  %5405 = vrot.lane.b32.xlu0 %v5003, 4
  %v5406 = vpop.permute.xlu0 %5405
  %5407 = vrot.lane.b32.xlu0 %v5004, 4
  %v5408 = vpop.permute.xlu0 %5407
  %5409 = vrot.lane.b32.xlu0 %v5005, 4
  %v5410 = vpop.permute.xlu0 %5409
  %5411 = vrot.lane.b32.xlu0 %v5006, 4
  %v5412 = vpop.permute.xlu0 %5411
  %5413 = vrot.lane.b32.xlu0 %v5007, 4
  %v5414 = vpop.permute.xlu0 %5413
  %5415 = vrot.lane.b32.xlu0 %v5008, 4
  %v5416 = vpop.permute.xlu0 %5415
  %5417 = vrot.lane.b32.xlu0 %v5009, 4
  %v5418 = vpop.permute.xlu0 %5417
  %5419 = vrot.lane.b32.xlu0 %v5010, 4
  %v5420 = vpop.permute.xlu0 %5419
  %5421 = vrot.lane.b32.xlu0 %v5011, 4
  %v5422 = vpop.permute.xlu0 %5421
  %5423 = vrot.lane.b32.xlu0 %v5012, 4
  %v5424 = vpop.permute.xlu0 %5423
  %5425 = vrot.lane.b32.xlu0 %v5013, 4
  %v5426 = vpop.permute.xlu0 %5425
  %5427 = vrot.lane.b32.xlu0 %v5014, 4
  %v5428 = vpop.permute.xlu0 %5427
  %5429 = vrot.lane.b32.xlu0 %v5015, 4
  %v5430 = vpop.permute.xlu0 %5429
  %5431 = vrot.lane.b32.xlu0 %v5016, 4
  %v5432 = vpop.permute.xlu0 %5431
  %5433 = vrot.lane.b32.xlu0 %v5017, 4
  %v5434 = vpop.permute.xlu0 %5433
  %5435 = vrot.lane.b32.xlu0 %v5018, 4
  %v5436 = vpop.permute.xlu0 %5435
  %5437 = vrot.lane.b32.xlu0 %v5019, 4
  %v5438 = vpop.permute.xlu0 %5437
  %5439 = vrot.lane.b32.xlu0 %v5020, 4
  %v5440 = vpop.permute.xlu0 %5439
  %v5469 = vsel %vm608, %v4880, %v5050
  %v5470 = vsel %vm608, %v4881, %v5052
  %v5471 = vsel %vm608, %v4882, %v5054
  %v5472 = vsel %vm608, %v4883, %v5056
  %v5473 = vsel %vm608, %v4884, %v5058
  %v5474 = vsel %vm608, %v4885, %v5060
  %v5475 = vsel %vm608, %v4886, %v5062
  %v5476 = vsel %vm608, %v4887, %v5064
  %v5477 = vsel %vm608, %v4888, %v5066
  %v5478 = vsel %vm608, %v4889, %v5068
  %v5479 = vsel %vm608, %v4890, %v5070
  %v5480 = vsel %vm608, %v4891, %v5072
  %v5481 = vsel %vm608, %v4892, %v5074
  %v5482 = vsel %vm608, %v4893, %v5076
  %v5483 = vsel %vm608, %v4894, %v5078
  %v5484 = vsel %vm608, %v4895, %v5080
  %v5485 = vsel %vm608, %v4896, %v5082
  %v5486 = vsel %vm608, %v4897, %v5084
  %v5487 = vsel %vm608, %v4898, %v5086
  %v5488 = vsel %vm608, %v4899, %v5088
  %v5489 = vsel %vm608, %v4900, %v5090
  %v5490 = vsel %vm608, %v4901, %v5092
  %v5491 = vsel %vm608, %v4902, %v5094
  %v5492 = vsel %vm608, %v4903, %v5096
  %v5493 = vsel %vm608, %v4904, %v5098
  %v5494 = vsel %vm608, %v4905, %v5100
  %v5495 = vsel %vm608, %v4906, %v5102
  %v5496 = vsel %vm608, %v4907, %v5104
  %v5497 = vsel %vm637, %v5469, %v5162
  %v5498 = vsel %vm637, %v5470, %v5164
  %v5499 = vsel %vm637, %v5471, %v5166
  %v5500 = vsel %vm637, %v5472, %v5168
  %v5501 = vsel %vm637, %v5473, %v5170
  %v5502 = vsel %vm637, %v5474, %v5172
  %v5503 = vsel %vm637, %v5475, %v5174
  %v5504 = vsel %vm637, %v5476, %v5176
  %v5505 = vsel %vm637, %v5477, %v5178
  %v5506 = vsel %vm637, %v5478, %v5180
  %v5507 = vsel %vm637, %v5479, %v5182
  %v5508 = vsel %vm637, %v5480, %v5184
  %v5509 = vsel %vm637, %v5481, %v5186
  %v5510 = vsel %vm637, %v5482, %v5188
  %v5511 = vsel %vm637, %v5483, %v5190
  %v5512 = vsel %vm637, %v5484, %v5192
  %v5513 = vsel %vm637, %v5485, %v5194
  %v5514 = vsel %vm637, %v5486, %v5196
  %v5515 = vsel %vm637, %v5487, %v5198
  %v5516 = vsel %vm637, %v5488, %v5200
  %v5517 = vsel %vm637, %v5489, %v5202
  %v5518 = vsel %vm637, %v5490, %v5204
  %v5519 = vsel %vm637, %v5491, %v5206
  %v5520 = vsel %vm637, %v5492, %v5208
  %v5521 = vsel %vm637, %v5493, %v5210
  %v5522 = vsel %vm637, %v5494, %v5212
  %v5523 = vsel %vm637, %v5495, %v5214
  %v5524 = vsel %vm637, %v5496, %v5216
  %v5525 = vsel %vm666, %v5497, %v5274
  %v5526 = vsel %vm666, %v5498, %v5276
  %v5527 = vsel %vm666, %v5499, %v5278
  %v5528 = vsel %vm666, %v5500, %v5280
  %v5529 = vsel %vm666, %v5501, %v5282
  %v5530 = vsel %vm666, %v5502, %v5284
  %v5531 = vsel %vm666, %v5503, %v5286
  %v5532 = vsel %vm666, %v5504, %v5288
  %v5533 = vsel %vm666, %v5505, %v5290
  %v5534 = vsel %vm666, %v5506, %v5292
  %v5535 = vsel %vm666, %v5507, %v5294
  %v5536 = vsel %vm666, %v5508, %v5296
  %v5537 = vsel %vm666, %v5509, %v5298
  %v5538 = vsel %vm666, %v5510, %v5300
  %v5539 = vsel %vm666, %v5511, %v5302
  %v5540 = vsel %vm666, %v5512, %v5304
  %v5541 = vsel %vm666, %v5513, %v5306
  %v5542 = vsel %vm666, %v5514, %v5308
  %v5543 = vsel %vm666, %v5515, %v5310
  %v5544 = vsel %vm666, %v5516, %v5312
  %v5545 = vsel %vm666, %v5517, %v5314
  %v5546 = vsel %vm666, %v5518, %v5316
  %v5547 = vsel %vm666, %v5519, %v5318
  %v5548 = vsel %vm666, %v5520, %v5320
  %v5549 = vsel %vm666, %v5521, %v5322
  %v5550 = vsel %vm666, %v5522, %v5324
  %v5551 = vsel %vm666, %v5523, %v5326
  %v5552 = vsel %vm666, %v5524, %v5328
  %v5553 = vsel %vm695, %v5525, %v5386
  %v5554 = vsel %vm695, %v5526, %v5388
  %v5555 = vsel %vm695, %v5527, %v5390
  %v5556 = vsel %vm695, %v5528, %v5392
  %v5557 = vsel %vm695, %v5529, %v5394
  %v5558 = vsel %vm695, %v5530, %v5396
  %v5559 = vsel %vm695, %v5531, %v5398
  %v5560 = vsel %vm695, %v5532, %v5400
  %v5561 = vsel %vm695, %v5533, %v5402
  %v5562 = vsel %vm695, %v5534, %v5404
  %v5563 = vsel %vm695, %v5535, %v5406
  %v5564 = vsel %vm695, %v5536, %v5408
  %v5565 = vsel %vm695, %v5537, %v5410
  %v5566 = vsel %vm695, %v5538, %v5412
  %v5567 = vsel %vm695, %v5539, %v5414
  %v5568 = vsel %vm695, %v5540, %v5416
  %v5569 = vsel %vm695, %v5541, %v5418
  %v5570 = vsel %vm695, %v5542, %v5420
  %v5571 = vsel %vm695, %v5543, %v5422
  %v5572 = vsel %vm695, %v5544, %v5424
  %v5573 = vsel %vm695, %v5545, %v5426
  %v5574 = vsel %vm695, %v5546, %v5428
  %v5575 = vsel %vm695, %v5547, %v5430
  %v5576 = vsel %vm695, %v5548, %v5432
  %v5577 = vsel %vm695, %v5549, %v5434
  %v5578 = vsel %vm695, %v5550, %v5436
  %v5579 = vsel %vm695, %v5551, %v5438
  %v5580 = vsel %vm695, %v5552, %v5440
  %s5581 = scalar_lea.vmem %s0, 1344
  %v5582 = vld [vmem:[%s5581] sm:$0xff]
  %v5583 = vld [vmem:[%s5581 + $0x8] sm:$0xf]
  %v5584 = vld [vmem:[%s5581 + $0x10] sm:$0xff]
  %v5585 = vld [vmem:[%s5581 + $0x18] sm:$0xf]
  %v5586 = vld [vmem:[%s5581 + $0x20] sm:$0xff]
  %v5587 = vld [vmem:[%s5581 + $0x28] sm:$0xf]
  %v5588 = vld [vmem:[%s5581 + $0x30] sm:$0xff]
  %v5589 = vld [vmem:[%s5581 + $0x38] sm:$0xf]
  %v5590 = vld [vmem:[%s5581 + $0x40] sm:$0xff]
  %v5591 = vld [vmem:[%s5581 + $0x48] sm:$0xf]
  %v5592 = vld [vmem:[%s5581 + $0x50] sm:$0xff]
  %v5593 = vld [vmem:[%s5581 + $0x58] sm:$0xf]
  %v5594 = vld [vmem:[%s5581 + $0x60] sm:$0xff]
  %v5595 = vld [vmem:[%s5581 + $0x68] sm:$0xf]
  %v5596 = vld [vmem:[%s5581 + $0x70] sm:$0xff]
  %v5597 = vld [vmem:[%s5581 + $0x78] sm:$0xf]
  %v5598 = vld [vmem:[%s5581 + $0x80] sm:$0xff]
  %v5599 = vld [vmem:[%s5581 + $0x88] sm:$0xf]
  %v5600 = vld [vmem:[%s5581 + $0x90] sm:$0xff]
  %v5601 = vld [vmem:[%s5581 + $0x98] sm:$0xf]
  %v5602 = vld [vmem:[%s5581 + $0xa0] sm:$0xff]
  %v5603 = vld [vmem:[%s5581 + $0xa8] sm:$0xf]
  %v5604 = vld [vmem:[%s5581 + $0xb0] sm:$0xff]
  %v5605 = vld [vmem:[%s5581 + $0xb8] sm:$0xf]
  %v5606 = vld [vmem:[%s5581 + $0xc0] sm:$0xff]
  %v5607 = vld [vmem:[%s5581 + $0xc8] sm:$0xf]
  %v5608 = vld [vmem:[%s5581 + $0xd0] sm:$0xff]
  %v5609 = vld [vmem:[%s5581 + $0xd8] sm:$0xf]
  %s5610 = scalar_lea.vmem %s0, 1568
  %v5611 = vld [vmem:[%s5610] sm:$0xff]
  %v5612 = vld [vmem:[%s5610 + $0x8] sm:$0xf]
  %v5613 = vld [vmem:[%s5610 + $0x10] sm:$0xff]
  %v5614 = vld [vmem:[%s5610 + $0x18] sm:$0xf]
  %v5615 = vld [vmem:[%s5610 + $0x20] sm:$0xff]
  %v5616 = vld [vmem:[%s5610 + $0x28] sm:$0xf]
  %v5617 = vld [vmem:[%s5610 + $0x30] sm:$0xff]
  %v5618 = vld [vmem:[%s5610 + $0x38] sm:$0xf]
  %v5619 = vld [vmem:[%s5610 + $0x40] sm:$0xff]
  %v5620 = vld [vmem:[%s5610 + $0x48] sm:$0xf]
  %v5621 = vld [vmem:[%s5610 + $0x50] sm:$0xff]
  %v5622 = vld [vmem:[%s5610 + $0x58] sm:$0xf]
  %v5623 = vld [vmem:[%s5610 + $0x60] sm:$0xff]
  %v5624 = vld [vmem:[%s5610 + $0x68] sm:$0xf]
  %v5625 = vld [vmem:[%s5610 + $0x70] sm:$0xff]
  %v5626 = vld [vmem:[%s5610 + $0x78] sm:$0xf]
  %v5627 = vld [vmem:[%s5610 + $0x80] sm:$0xff]
  %v5628 = vld [vmem:[%s5610 + $0x88] sm:$0xf]
  %v5629 = vld [vmem:[%s5610 + $0x90] sm:$0xff]
  %v5630 = vld [vmem:[%s5610 + $0x98] sm:$0xf]
  %v5631 = vld [vmem:[%s5610 + $0xa0] sm:$0xff]
  %v5632 = vld [vmem:[%s5610 + $0xa8] sm:$0xf]
  %v5633 = vld [vmem:[%s5610 + $0xb0] sm:$0xff]
  %v5634 = vld [vmem:[%s5610 + $0xb8] sm:$0xf]
  %v5635 = vld [vmem:[%s5610 + $0xc0] sm:$0xff]
  %v5636 = vld [vmem:[%s5610 + $0xc8] sm:$0xf]
  %v5637 = vld [vmem:[%s5610 + $0xd0] sm:$0xff]
  %v5638 = vld [vmem:[%s5610 + $0xd8] sm:$0xf]
  %v5639 = vld [vmem:[%s5581 + $0x1] sm:$0xff]
  %v5640 = vld [vmem:[%s5581 + $0x9] sm:$0xf]
  %v5641 = vld [vmem:[%s5581 + $0x11] sm:$0xff]
  %v5642 = vld [vmem:[%s5581 + $0x19] sm:$0xf]
  %v5643 = vld [vmem:[%s5581 + $0x21] sm:$0xff]
  %v5644 = vld [vmem:[%s5581 + $0x29] sm:$0xf]
  %v5645 = vld [vmem:[%s5581 + $0x31] sm:$0xff]
  %v5646 = vld [vmem:[%s5581 + $0x39] sm:$0xf]
  %v5647 = vld [vmem:[%s5581 + $0x41] sm:$0xff]
  %v5648 = vld [vmem:[%s5581 + $0x49] sm:$0xf]
  %v5649 = vld [vmem:[%s5581 + $0x51] sm:$0xff]
  %v5650 = vld [vmem:[%s5581 + $0x59] sm:$0xf]
  %v5651 = vld [vmem:[%s5581 + $0x61] sm:$0xff]
  %v5652 = vld [vmem:[%s5581 + $0x69] sm:$0xf]
  %v5653 = vld [vmem:[%s5581 + $0x71] sm:$0xff]
  %v5654 = vld [vmem:[%s5581 + $0x79] sm:$0xf]
  %v5655 = vld [vmem:[%s5581 + $0x81] sm:$0xff]
  %v5656 = vld [vmem:[%s5581 + $0x89] sm:$0xf]
  %v5657 = vld [vmem:[%s5581 + $0x91] sm:$0xff]
  %v5658 = vld [vmem:[%s5581 + $0x99] sm:$0xf]
  %v5659 = vld [vmem:[%s5581 + $0xa1] sm:$0xff]
  %v5660 = vld [vmem:[%s5581 + $0xa9] sm:$0xf]
  %v5661 = vld [vmem:[%s5581 + $0xb1] sm:$0xff]
  %v5662 = vld [vmem:[%s5581 + $0xb9] sm:$0xf]
  %v5663 = vld [vmem:[%s5581 + $0xc1] sm:$0xff]
  %v5664 = vld [vmem:[%s5581 + $0xc9] sm:$0xf]
  %v5665 = vld [vmem:[%s5581 + $0xd1] sm:$0xff]
  %v5666 = vld [vmem:[%s5581 + $0xd9] sm:$0xf]
  %v5667 = vld [vmem:[%s5610 + $0x1] sm:$0xff]
  %v5668 = vld [vmem:[%s5610 + $0x9] sm:$0xf]
  %v5669 = vld [vmem:[%s5610 + $0x11] sm:$0xff]
  %v5670 = vld [vmem:[%s5610 + $0x19] sm:$0xf]
  %v5671 = vld [vmem:[%s5610 + $0x21] sm:$0xff]
  %v5672 = vld [vmem:[%s5610 + $0x29] sm:$0xf]
  %v5673 = vld [vmem:[%s5610 + $0x31] sm:$0xff]
  %v5674 = vld [vmem:[%s5610 + $0x39] sm:$0xf]
  %v5675 = vld [vmem:[%s5610 + $0x41] sm:$0xff]
  %v5676 = vld [vmem:[%s5610 + $0x49] sm:$0xf]
  %v5677 = vld [vmem:[%s5610 + $0x51] sm:$0xff]
  %v5678 = vld [vmem:[%s5610 + $0x59] sm:$0xf]
  %v5679 = vld [vmem:[%s5610 + $0x61] sm:$0xff]
  %v5680 = vld [vmem:[%s5610 + $0x69] sm:$0xf]
  %v5681 = vld [vmem:[%s5610 + $0x71] sm:$0xff]
  %v5682 = vld [vmem:[%s5610 + $0x79] sm:$0xf]
  %v5683 = vld [vmem:[%s5610 + $0x81] sm:$0xff]
  %v5684 = vld [vmem:[%s5610 + $0x89] sm:$0xf]
  %v5685 = vld [vmem:[%s5610 + $0x91] sm:$0xff]
  %v5686 = vld [vmem:[%s5610 + $0x99] sm:$0xf]
  %v5687 = vld [vmem:[%s5610 + $0xa1] sm:$0xff]
  %v5688 = vld [vmem:[%s5610 + $0xa9] sm:$0xf]
  %v5689 = vld [vmem:[%s5610 + $0xb1] sm:$0xff]
  %v5690 = vld [vmem:[%s5610 + $0xb9] sm:$0xf]
  %v5691 = vld [vmem:[%s5610 + $0xc1] sm:$0xff]
  %v5692 = vld [vmem:[%s5610 + $0xc9] sm:$0xf]
  %v5693 = vld [vmem:[%s5610 + $0xd1] sm:$0xff]
  %v5694 = vld [vmem:[%s5610 + $0xd9] sm:$0xf]
  %v5695 = vld [vmem:[%s5581 + $0x2] sm:$0xff]
  %v5696 = vld [vmem:[%s5581 + $0xa] sm:$0xf]
  %v5697 = vld [vmem:[%s5581 + $0x12] sm:$0xff]
  %v5698 = vld [vmem:[%s5581 + $0x1a] sm:$0xf]
  %v5699 = vld [vmem:[%s5581 + $0x22] sm:$0xff]
  %v5700 = vld [vmem:[%s5581 + $0x2a] sm:$0xf]
  %v5701 = vld [vmem:[%s5581 + $0x32] sm:$0xff]
  %v5702 = vld [vmem:[%s5581 + $0x3a] sm:$0xf]
  %v5703 = vld [vmem:[%s5581 + $0x42] sm:$0xff]
  %v5704 = vld [vmem:[%s5581 + $0x4a] sm:$0xf]
  %v5705 = vld [vmem:[%s5581 + $0x52] sm:$0xff]
  %v5706 = vld [vmem:[%s5581 + $0x5a] sm:$0xf]
  %v5707 = vld [vmem:[%s5581 + $0x62] sm:$0xff]
  %v5708 = vld [vmem:[%s5581 + $0x6a] sm:$0xf]
  %v5709 = vld [vmem:[%s5581 + $0x72] sm:$0xff]
  %v5710 = vld [vmem:[%s5581 + $0x7a] sm:$0xf]
  %v5711 = vld [vmem:[%s5581 + $0x82] sm:$0xff]
  %v5712 = vld [vmem:[%s5581 + $0x8a] sm:$0xf]
  %v5713 = vld [vmem:[%s5581 + $0x92] sm:$0xff]
  %v5714 = vld [vmem:[%s5581 + $0x9a] sm:$0xf]
  %v5715 = vld [vmem:[%s5581 + $0xa2] sm:$0xff]
  %v5716 = vld [vmem:[%s5581 + $0xaa] sm:$0xf]
  %v5717 = vld [vmem:[%s5581 + $0xb2] sm:$0xff]
  %v5718 = vld [vmem:[%s5581 + $0xba] sm:$0xf]
  %v5719 = vld [vmem:[%s5581 + $0xc2] sm:$0xff]
  %v5720 = vld [vmem:[%s5581 + $0xca] sm:$0xf]
  %v5721 = vld [vmem:[%s5581 + $0xd2] sm:$0xff]
  %v5722 = vld [vmem:[%s5581 + $0xda] sm:$0xf]
  %5751 = vrot.lane.b32.xlu0 %v5611, 1
  %v5752 = vpop.permute.xlu0 %5751
  %5753 = vrot.lane.b32.xlu0 %v5612, 1
  %v5754 = vpop.permute.xlu0 %5753
  %5755 = vrot.lane.b32.xlu0 %v5613, 1
  %v5756 = vpop.permute.xlu0 %5755
  %5757 = vrot.lane.b32.xlu0 %v5614, 1
  %v5758 = vpop.permute.xlu0 %5757
  %5759 = vrot.lane.b32.xlu0 %v5615, 1
  %v5760 = vpop.permute.xlu0 %5759
  %5761 = vrot.lane.b32.xlu0 %v5616, 1
  %v5762 = vpop.permute.xlu0 %5761
  %5763 = vrot.lane.b32.xlu0 %v5617, 1
  %v5764 = vpop.permute.xlu0 %5763
  %5765 = vrot.lane.b32.xlu0 %v5618, 1
  %v5766 = vpop.permute.xlu0 %5765
  %5767 = vrot.lane.b32.xlu0 %v5619, 1
  %v5768 = vpop.permute.xlu0 %5767
  %5769 = vrot.lane.b32.xlu0 %v5620, 1
  %v5770 = vpop.permute.xlu0 %5769
  %5771 = vrot.lane.b32.xlu0 %v5621, 1
  %v5772 = vpop.permute.xlu0 %5771
  %5773 = vrot.lane.b32.xlu0 %v5622, 1
  %v5774 = vpop.permute.xlu0 %5773
  %5775 = vrot.lane.b32.xlu0 %v5623, 1
  %v5776 = vpop.permute.xlu0 %5775
  %5777 = vrot.lane.b32.xlu0 %v5624, 1
  %v5778 = vpop.permute.xlu0 %5777
  %5779 = vrot.lane.b32.xlu0 %v5625, 1
  %v5780 = vpop.permute.xlu0 %5779
  %5781 = vrot.lane.b32.xlu0 %v5626, 1
  %v5782 = vpop.permute.xlu0 %5781
  %5783 = vrot.lane.b32.xlu0 %v5627, 1
  %v5784 = vpop.permute.xlu0 %5783
  %5785 = vrot.lane.b32.xlu0 %v5628, 1
  %v5786 = vpop.permute.xlu0 %5785
  %5787 = vrot.lane.b32.xlu0 %v5629, 1
  %v5788 = vpop.permute.xlu0 %5787
  %5789 = vrot.lane.b32.xlu0 %v5630, 1
  %v5790 = vpop.permute.xlu0 %5789
  %5791 = vrot.lane.b32.xlu0 %v5631, 1
  %v5792 = vpop.permute.xlu0 %5791
  %5793 = vrot.lane.b32.xlu0 %v5632, 1
  %v5794 = vpop.permute.xlu0 %5793
  %5795 = vrot.lane.b32.xlu0 %v5633, 1
  %v5796 = vpop.permute.xlu0 %5795
  %5797 = vrot.lane.b32.xlu0 %v5634, 1
  %v5798 = vpop.permute.xlu0 %5797
  %5799 = vrot.lane.b32.xlu0 %v5635, 1
  %v5800 = vpop.permute.xlu0 %5799
  %5801 = vrot.lane.b32.xlu0 %v5636, 1
  %v5802 = vpop.permute.xlu0 %5801
  %5803 = vrot.lane.b32.xlu0 %v5637, 1
  %v5804 = vpop.permute.xlu0 %5803
  %5805 = vrot.lane.b32.xlu0 %v5638, 1
  %v5806 = vpop.permute.xlu0 %5805
  %5863 = vrot.lane.b32.xlu0 %v5639, 2
  %v5864 = vpop.permute.xlu0 %5863
  %5865 = vrot.lane.b32.xlu0 %v5640, 2
  %v5866 = vpop.permute.xlu0 %5865
  %5867 = vrot.lane.b32.xlu0 %v5641, 2
  %v5868 = vpop.permute.xlu0 %5867
  %5869 = vrot.lane.b32.xlu0 %v5642, 2
  %v5870 = vpop.permute.xlu0 %5869
  %5871 = vrot.lane.b32.xlu0 %v5643, 2
  %v5872 = vpop.permute.xlu0 %5871
  %5873 = vrot.lane.b32.xlu0 %v5644, 2
  %v5874 = vpop.permute.xlu0 %5873
  %5875 = vrot.lane.b32.xlu0 %v5645, 2
  %v5876 = vpop.permute.xlu0 %5875
  %5877 = vrot.lane.b32.xlu0 %v5646, 2
  %v5878 = vpop.permute.xlu0 %5877
  %5879 = vrot.lane.b32.xlu0 %v5647, 2
  %v5880 = vpop.permute.xlu0 %5879
  %5881 = vrot.lane.b32.xlu0 %v5648, 2
  %v5882 = vpop.permute.xlu0 %5881
  %5883 = vrot.lane.b32.xlu0 %v5649, 2
  %v5884 = vpop.permute.xlu0 %5883
  %5885 = vrot.lane.b32.xlu0 %v5650, 2
  %v5886 = vpop.permute.xlu0 %5885
  %5887 = vrot.lane.b32.xlu0 %v5651, 2
  %v5888 = vpop.permute.xlu0 %5887
  %5889 = vrot.lane.b32.xlu0 %v5652, 2
  %v5890 = vpop.permute.xlu0 %5889
  %5891 = vrot.lane.b32.xlu0 %v5653, 2
  %v5892 = vpop.permute.xlu0 %5891
  %5893 = vrot.lane.b32.xlu0 %v5654, 2
  %v5894 = vpop.permute.xlu0 %5893
  %5895 = vrot.lane.b32.xlu0 %v5655, 2
  %v5896 = vpop.permute.xlu0 %5895
  %5897 = vrot.lane.b32.xlu0 %v5656, 2
  %v5898 = vpop.permute.xlu0 %5897
  %5899 = vrot.lane.b32.xlu0 %v5657, 2
  %v5900 = vpop.permute.xlu0 %5899
  %5901 = vrot.lane.b32.xlu0 %v5658, 2
  %v5902 = vpop.permute.xlu0 %5901
  %5903 = vrot.lane.b32.xlu0 %v5659, 2
  %v5904 = vpop.permute.xlu0 %5903
  %5905 = vrot.lane.b32.xlu0 %v5660, 2
  %v5906 = vpop.permute.xlu0 %5905
  %5907 = vrot.lane.b32.xlu0 %v5661, 2
  %v5908 = vpop.permute.xlu0 %5907
  %5909 = vrot.lane.b32.xlu0 %v5662, 2
  %v5910 = vpop.permute.xlu0 %5909
  %5911 = vrot.lane.b32.xlu0 %v5663, 2
  %v5912 = vpop.permute.xlu0 %5911
  %5913 = vrot.lane.b32.xlu0 %v5664, 2
  %v5914 = vpop.permute.xlu0 %5913
  %5915 = vrot.lane.b32.xlu0 %v5665, 2
  %v5916 = vpop.permute.xlu0 %5915
  %5917 = vrot.lane.b32.xlu0 %v5666, 2
  %v5918 = vpop.permute.xlu0 %5917
  %5975 = vrot.lane.b32.xlu0 %v5667, 3
  %v5976 = vpop.permute.xlu0 %5975
  %5977 = vrot.lane.b32.xlu0 %v5668, 3
  %v5978 = vpop.permute.xlu0 %5977
  %5979 = vrot.lane.b32.xlu0 %v5669, 3
  %v5980 = vpop.permute.xlu0 %5979
  %5981 = vrot.lane.b32.xlu0 %v5670, 3
  %v5982 = vpop.permute.xlu0 %5981
  %5983 = vrot.lane.b32.xlu0 %v5671, 3
  %v5984 = vpop.permute.xlu0 %5983
  %5985 = vrot.lane.b32.xlu0 %v5672, 3
  %v5986 = vpop.permute.xlu0 %5985
  %5987 = vrot.lane.b32.xlu0 %v5673, 3
  %v5988 = vpop.permute.xlu0 %5987
  %5989 = vrot.lane.b32.xlu0 %v5674, 3
  %v5990 = vpop.permute.xlu0 %5989
  %5991 = vrot.lane.b32.xlu0 %v5675, 3
  %v5992 = vpop.permute.xlu0 %5991
  %5993 = vrot.lane.b32.xlu0 %v5676, 3
  %v5994 = vpop.permute.xlu0 %5993
  %5995 = vrot.lane.b32.xlu0 %v5677, 3
  %v5996 = vpop.permute.xlu0 %5995
  %5997 = vrot.lane.b32.xlu0 %v5678, 3
  %v5998 = vpop.permute.xlu0 %5997
  %5999 = vrot.lane.b32.xlu0 %v5679, 3
  %v6000 = vpop.permute.xlu0 %5999
  %6001 = vrot.lane.b32.xlu0 %v5680, 3
  %v6002 = vpop.permute.xlu0 %6001
  %6003 = vrot.lane.b32.xlu0 %v5681, 3
  %v6004 = vpop.permute.xlu0 %6003
  %6005 = vrot.lane.b32.xlu0 %v5682, 3
  %v6006 = vpop.permute.xlu0 %6005
  %6007 = vrot.lane.b32.xlu0 %v5683, 3
  %v6008 = vpop.permute.xlu0 %6007
  %6009 = vrot.lane.b32.xlu0 %v5684, 3
  %v6010 = vpop.permute.xlu0 %6009
  %6011 = vrot.lane.b32.xlu0 %v5685, 3
  %v6012 = vpop.permute.xlu0 %6011
  %6013 = vrot.lane.b32.xlu0 %v5686, 3
  %v6014 = vpop.permute.xlu0 %6013
  %6015 = vrot.lane.b32.xlu0 %v5687, 3
  %v6016 = vpop.permute.xlu0 %6015
  %6017 = vrot.lane.b32.xlu0 %v5688, 3
  %v6018 = vpop.permute.xlu0 %6017
  %6019 = vrot.lane.b32.xlu0 %v5689, 3
  %v6020 = vpop.permute.xlu0 %6019
  %6021 = vrot.lane.b32.xlu0 %v5690, 3
  %v6022 = vpop.permute.xlu0 %6021
  %6023 = vrot.lane.b32.xlu0 %v5691, 3
  %v6024 = vpop.permute.xlu0 %6023
  %6025 = vrot.lane.b32.xlu0 %v5692, 3
  %v6026 = vpop.permute.xlu0 %6025
  %6027 = vrot.lane.b32.xlu0 %v5693, 3
  %v6028 = vpop.permute.xlu0 %6027
  %6029 = vrot.lane.b32.xlu0 %v5694, 3
  %v6030 = vpop.permute.xlu0 %6029
  %6087 = vrot.lane.b32.xlu0 %v5695, 4
  %v6088 = vpop.permute.xlu0 %6087
  %6089 = vrot.lane.b32.xlu0 %v5696, 4
  %v6090 = vpop.permute.xlu0 %6089
  %6091 = vrot.lane.b32.xlu0 %v5697, 4
  %v6092 = vpop.permute.xlu0 %6091
  %6093 = vrot.lane.b32.xlu0 %v5698, 4
  %v6094 = vpop.permute.xlu0 %6093
  %6095 = vrot.lane.b32.xlu0 %v5699, 4
  %v6096 = vpop.permute.xlu0 %6095
  %6097 = vrot.lane.b32.xlu0 %v5700, 4
  %v6098 = vpop.permute.xlu0 %6097
  %6099 = vrot.lane.b32.xlu0 %v5701, 4
  %v6100 = vpop.permute.xlu0 %6099
  %6101 = vrot.lane.b32.xlu0 %v5702, 4
  %v6102 = vpop.permute.xlu0 %6101
  %6103 = vrot.lane.b32.xlu0 %v5703, 4
  %v6104 = vpop.permute.xlu0 %6103
  %6105 = vrot.lane.b32.xlu0 %v5704, 4
  %v6106 = vpop.permute.xlu0 %6105
  %6107 = vrot.lane.b32.xlu0 %v5705, 4
  %v6108 = vpop.permute.xlu0 %6107
  %6109 = vrot.lane.b32.xlu0 %v5706, 4
  %v6110 = vpop.permute.xlu0 %6109
  %6111 = vrot.lane.b32.xlu0 %v5707, 4
  %v6112 = vpop.permute.xlu0 %6111
  %6113 = vrot.lane.b32.xlu0 %v5708, 4
  %v6114 = vpop.permute.xlu0 %6113
  %6115 = vrot.lane.b32.xlu0 %v5709, 4
  %v6116 = vpop.permute.xlu0 %6115
  %6117 = vrot.lane.b32.xlu0 %v5710, 4
  %v6118 = vpop.permute.xlu0 %6117
  %6119 = vrot.lane.b32.xlu0 %v5711, 4
  %v6120 = vpop.permute.xlu0 %6119
  %6121 = vrot.lane.b32.xlu0 %v5712, 4
  %v6122 = vpop.permute.xlu0 %6121
  %6123 = vrot.lane.b32.xlu0 %v5713, 4
  %v6124 = vpop.permute.xlu0 %6123
  %6125 = vrot.lane.b32.xlu0 %v5714, 4
  %v6126 = vpop.permute.xlu0 %6125
  %6127 = vrot.lane.b32.xlu0 %v5715, 4
  %v6128 = vpop.permute.xlu0 %6127
  %6129 = vrot.lane.b32.xlu0 %v5716, 4
  %v6130 = vpop.permute.xlu0 %6129
  %6131 = vrot.lane.b32.xlu0 %v5717, 4
  %v6132 = vpop.permute.xlu0 %6131
  %6133 = vrot.lane.b32.xlu0 %v5718, 4
  %v6134 = vpop.permute.xlu0 %6133
  %6135 = vrot.lane.b32.xlu0 %v5719, 4
  %v6136 = vpop.permute.xlu0 %6135
  %6137 = vrot.lane.b32.xlu0 %v5720, 4
  %v6138 = vpop.permute.xlu0 %6137
  %6139 = vrot.lane.b32.xlu0 %v5721, 4
  %v6140 = vpop.permute.xlu0 %6139
  %6141 = vrot.lane.b32.xlu0 %v5722, 4
  %v6142 = vpop.permute.xlu0 %6141
  %v6171 = vsel %vm608, %v5582, %v5752
  %v6172 = vsel %vm608, %v5583, %v5754
  %v6173 = vsel %vm608, %v5584, %v5756
  %v6174 = vsel %vm608, %v5585, %v5758
  %v6175 = vsel %vm608, %v5586, %v5760
  %v6176 = vsel %vm608, %v5587, %v5762
  %v6177 = vsel %vm608, %v5588, %v5764
  %v6178 = vsel %vm608, %v5589, %v5766
  %v6179 = vsel %vm608, %v5590, %v5768
  %v6180 = vsel %vm608, %v5591, %v5770
  %v6181 = vsel %vm608, %v5592, %v5772
  %v6182 = vsel %vm608, %v5593, %v5774
  %v6183 = vsel %vm608, %v5594, %v5776
  %v6184 = vsel %vm608, %v5595, %v5778
  %v6185 = vsel %vm608, %v5596, %v5780
  %v6186 = vsel %vm608, %v5597, %v5782
  %v6187 = vsel %vm608, %v5598, %v5784
  %v6188 = vsel %vm608, %v5599, %v5786
  %v6189 = vsel %vm608, %v5600, %v5788
  %v6190 = vsel %vm608, %v5601, %v5790
  %v6191 = vsel %vm608, %v5602, %v5792
  %v6192 = vsel %vm608, %v5603, %v5794
  %v6193 = vsel %vm608, %v5604, %v5796
  %v6194 = vsel %vm608, %v5605, %v5798
  %v6195 = vsel %vm608, %v5606, %v5800
  %v6196 = vsel %vm608, %v5607, %v5802
  %v6197 = vsel %vm608, %v5608, %v5804
  %v6198 = vsel %vm608, %v5609, %v5806
  %v6199 = vsel %vm637, %v6171, %v5864
  %v6200 = vsel %vm637, %v6172, %v5866
  %v6201 = vsel %vm637, %v6173, %v5868
  %v6202 = vsel %vm637, %v6174, %v5870
  %v6203 = vsel %vm637, %v6175, %v5872
  %v6204 = vsel %vm637, %v6176, %v5874
  %v6205 = vsel %vm637, %v6177, %v5876
  %v6206 = vsel %vm637, %v6178, %v5878
  %v6207 = vsel %vm637, %v6179, %v5880
  %v6208 = vsel %vm637, %v6180, %v5882
  %v6209 = vsel %vm637, %v6181, %v5884
  %v6210 = vsel %vm637, %v6182, %v5886
  %v6211 = vsel %vm637, %v6183, %v5888
  %v6212 = vsel %vm637, %v6184, %v5890
  %v6213 = vsel %vm637, %v6185, %v5892
  %v6214 = vsel %vm637, %v6186, %v5894
  %v6215 = vsel %vm637, %v6187, %v5896
  %v6216 = vsel %vm637, %v6188, %v5898
  %v6217 = vsel %vm637, %v6189, %v5900
  %v6218 = vsel %vm637, %v6190, %v5902
  %v6219 = vsel %vm637, %v6191, %v5904
  %v6220 = vsel %vm637, %v6192, %v5906
  %v6221 = vsel %vm637, %v6193, %v5908
  %v6222 = vsel %vm637, %v6194, %v5910
  %v6223 = vsel %vm637, %v6195, %v5912
  %v6224 = vsel %vm637, %v6196, %v5914
  %v6225 = vsel %vm637, %v6197, %v5916
  %v6226 = vsel %vm637, %v6198, %v5918
  %v6227 = vsel %vm666, %v6199, %v5976
  %v6228 = vsel %vm666, %v6200, %v5978
  %v6229 = vsel %vm666, %v6201, %v5980
  %v6230 = vsel %vm666, %v6202, %v5982
  %v6231 = vsel %vm666, %v6203, %v5984
  %v6232 = vsel %vm666, %v6204, %v5986
  %v6233 = vsel %vm666, %v6205, %v5988
  %v6234 = vsel %vm666, %v6206, %v5990
  %v6235 = vsel %vm666, %v6207, %v5992
  %v6236 = vsel %vm666, %v6208, %v5994
  %v6237 = vsel %vm666, %v6209, %v5996
  %v6238 = vsel %vm666, %v6210, %v5998
  %v6239 = vsel %vm666, %v6211, %v6000
  %v6240 = vsel %vm666, %v6212, %v6002
  %v6241 = vsel %vm666, %v6213, %v6004
  %v6242 = vsel %vm666, %v6214, %v6006
  %v6243 = vsel %vm666, %v6215, %v6008
  %v6244 = vsel %vm666, %v6216, %v6010
  %v6245 = vsel %vm666, %v6217, %v6012
  %v6246 = vsel %vm666, %v6218, %v6014
  %v6247 = vsel %vm666, %v6219, %v6016
  %v6248 = vsel %vm666, %v6220, %v6018
  %v6249 = vsel %vm666, %v6221, %v6020
  %v6250 = vsel %vm666, %v6222, %v6022
  %v6251 = vsel %vm666, %v6223, %v6024
  %v6252 = vsel %vm666, %v6224, %v6026
  %v6253 = vsel %vm666, %v6225, %v6028
  %v6254 = vsel %vm666, %v6226, %v6030
  %v6255 = vsel %vm695, %v6227, %v6088
  %v6256 = vsel %vm695, %v6228, %v6090
  %v6257 = vsel %vm695, %v6229, %v6092
  %v6258 = vsel %vm695, %v6230, %v6094
  %v6259 = vsel %vm695, %v6231, %v6096
  %v6260 = vsel %vm695, %v6232, %v6098
  %v6261 = vsel %vm695, %v6233, %v6100
  %v6262 = vsel %vm695, %v6234, %v6102
  %v6263 = vsel %vm695, %v6235, %v6104
  %v6264 = vsel %vm695, %v6236, %v6106
  %v6265 = vsel %vm695, %v6237, %v6108
  %v6266 = vsel %vm695, %v6238, %v6110
  %v6267 = vsel %vm695, %v6239, %v6112
  %v6268 = vsel %vm695, %v6240, %v6114
  %v6269 = vsel %vm695, %v6241, %v6116
  %v6270 = vsel %vm695, %v6242, %v6118
  %v6271 = vsel %vm695, %v6243, %v6120
  %v6272 = vsel %vm695, %v6244, %v6122
  %v6273 = vsel %vm695, %v6245, %v6124
  %v6274 = vsel %vm695, %v6246, %v6126
  %v6275 = vsel %vm695, %v6247, %v6128
  %v6276 = vsel %vm695, %v6248, %v6130
  %v6277 = vsel %vm695, %v6249, %v6132
  %v6278 = vsel %vm695, %v6250, %v6134
  %v6279 = vsel %vm695, %v6251, %v6136
  %v6280 = vsel %vm695, %v6252, %v6138
  %v6281 = vsel %vm695, %v6253, %v6140
  %v6282 = vsel %vm695, %v6254, %v6142
  %6307 = vrot.lane.b32.xlu0 %v6255, 5
  %v6308 = vpop.permute.xlu0 %6307
  %6309 = vrot.lane.b32.xlu0 %v6256, 5
  %v6310 = vpop.permute.xlu0 %6309
  %6311 = vrot.lane.b32.xlu0 %v6257, 5
  %v6312 = vpop.permute.xlu0 %6311
  %6313 = vrot.lane.b32.xlu0 %v6258, 5
  %v6314 = vpop.permute.xlu0 %6313
  %6315 = vrot.lane.b32.xlu0 %v6259, 5
  %v6316 = vpop.permute.xlu0 %6315
  %6317 = vrot.lane.b32.xlu0 %v6260, 5
  %v6318 = vpop.permute.xlu0 %6317
  %6319 = vrot.lane.b32.xlu0 %v6261, 5
  %v6320 = vpop.permute.xlu0 %6319
  %6321 = vrot.lane.b32.xlu0 %v6262, 5
  %v6322 = vpop.permute.xlu0 %6321
  %6323 = vrot.lane.b32.xlu0 %v6263, 5
  %v6324 = vpop.permute.xlu0 %6323
  %6325 = vrot.lane.b32.xlu0 %v6264, 5
  %v6326 = vpop.permute.xlu0 %6325
  %6327 = vrot.lane.b32.xlu0 %v6265, 5
  %v6328 = vpop.permute.xlu0 %6327
  %6329 = vrot.lane.b32.xlu0 %v6266, 5
  %v6330 = vpop.permute.xlu0 %6329
  %6331 = vrot.lane.b32.xlu0 %v6267, 5
  %v6332 = vpop.permute.xlu0 %6331
  %6333 = vrot.lane.b32.xlu0 %v6268, 5
  %v6334 = vpop.permute.xlu0 %6333
  %6335 = vrot.lane.b32.xlu0 %v6269, 5
  %v6336 = vpop.permute.xlu0 %6335
  %6337 = vrot.lane.b32.xlu0 %v6270, 5
  %v6338 = vpop.permute.xlu0 %6337
  %6339 = vrot.lane.b32.xlu0 %v6271, 5
  %v6340 = vpop.permute.xlu0 %6339
  %6341 = vrot.lane.b32.xlu0 %v6272, 5
  %v6342 = vpop.permute.xlu0 %6341
  %6343 = vrot.lane.b32.xlu0 %v6273, 5
  %v6344 = vpop.permute.xlu0 %6343
  %6345 = vrot.lane.b32.xlu0 %v6274, 5
  %v6346 = vpop.permute.xlu0 %6345
  %6347 = vrot.lane.b32.xlu0 %v6275, 5
  %v6348 = vpop.permute.xlu0 %6347
  %6349 = vrot.lane.b32.xlu0 %v6276, 5
  %v6350 = vpop.permute.xlu0 %6349
  %6351 = vrot.lane.b32.xlu0 %v6277, 5
  %v6352 = vpop.permute.xlu0 %6351
  %6353 = vrot.lane.b32.xlu0 %v6278, 5
  %v6354 = vpop.permute.xlu0 %6353
  %6403 = vrot.lane.b32.xlu0 %v5555, 10
  %v6404 = vpop.permute.xlu0 %6403
  %6405 = vrot.lane.b32.xlu0 %v5556, 10
  %v6406 = vpop.permute.xlu0 %6405
  %6407 = vrot.lane.b32.xlu0 %v5557, 10
  %v6408 = vpop.permute.xlu0 %6407
  %6409 = vrot.lane.b32.xlu0 %v5558, 10
  %v6410 = vpop.permute.xlu0 %6409
  %6411 = vrot.lane.b32.xlu0 %v5559, 10
  %v6412 = vpop.permute.xlu0 %6411
  %6413 = vrot.lane.b32.xlu0 %v5560, 10
  %v6414 = vpop.permute.xlu0 %6413
  %6415 = vrot.lane.b32.xlu0 %v5561, 10
  %v6416 = vpop.permute.xlu0 %6415
  %6417 = vrot.lane.b32.xlu0 %v5562, 10
  %v6418 = vpop.permute.xlu0 %6417
  %6419 = vrot.lane.b32.xlu0 %v5563, 10
  %v6420 = vpop.permute.xlu0 %6419
  %6421 = vrot.lane.b32.xlu0 %v5564, 10
  %v6422 = vpop.permute.xlu0 %6421
  %6423 = vrot.lane.b32.xlu0 %v5565, 10
  %v6424 = vpop.permute.xlu0 %6423
  %6425 = vrot.lane.b32.xlu0 %v5566, 10
  %v6426 = vpop.permute.xlu0 %6425
  %6427 = vrot.lane.b32.xlu0 %v5567, 10
  %v6428 = vpop.permute.xlu0 %6427
  %6429 = vrot.lane.b32.xlu0 %v5568, 10
  %v6430 = vpop.permute.xlu0 %6429
  %6431 = vrot.lane.b32.xlu0 %v5569, 10
  %v6432 = vpop.permute.xlu0 %6431
  %6433 = vrot.lane.b32.xlu0 %v5570, 10
  %v6434 = vpop.permute.xlu0 %6433
  %6435 = vrot.lane.b32.xlu0 %v5571, 10
  %v6436 = vpop.permute.xlu0 %6435
  %6437 = vrot.lane.b32.xlu0 %v5572, 10
  %v6438 = vpop.permute.xlu0 %6437
  %6439 = vrot.lane.b32.xlu0 %v5573, 10
  %v6440 = vpop.permute.xlu0 %6439
  %6441 = vrot.lane.b32.xlu0 %v5574, 10
  %v6442 = vpop.permute.xlu0 %6441
  %6443 = vrot.lane.b32.xlu0 %v5575, 10
  %v6444 = vpop.permute.xlu0 %6443
  %6445 = vrot.lane.b32.xlu0 %v5576, 10
  %v6446 = vpop.permute.xlu0 %6445
  %6447 = vrot.lane.b32.xlu0 %v5577, 10
  %v6448 = vpop.permute.xlu0 %6447
  %6449 = vrot.lane.b32.xlu0 %v5578, 10
  %v6450 = vpop.permute.xlu0 %6449
  %6477 = vrot.lane.b32.xlu0 %v6257, 15
  %v6478 = vpop.permute.xlu0 %6477
  %6479 = vrot.lane.b32.xlu0 %v6258, 15
  %v6480 = vpop.permute.xlu0 %6479
  %6481 = vrot.lane.b32.xlu0 %v6259, 15
  %v6482 = vpop.permute.xlu0 %6481
  %6483 = vrot.lane.b32.xlu0 %v6260, 15
  %v6484 = vpop.permute.xlu0 %6483
  %6485 = vrot.lane.b32.xlu0 %v6261, 15
  %v6486 = vpop.permute.xlu0 %6485
  %6487 = vrot.lane.b32.xlu0 %v6262, 15
  %v6488 = vpop.permute.xlu0 %6487
  %6489 = vrot.lane.b32.xlu0 %v6263, 15
  %v6490 = vpop.permute.xlu0 %6489
  %6491 = vrot.lane.b32.xlu0 %v6264, 15
  %v6492 = vpop.permute.xlu0 %6491
  %6493 = vrot.lane.b32.xlu0 %v6265, 15
  %v6494 = vpop.permute.xlu0 %6493
  %6495 = vrot.lane.b32.xlu0 %v6266, 15
  %v6496 = vpop.permute.xlu0 %6495
  %6497 = vrot.lane.b32.xlu0 %v6267, 15
  %v6498 = vpop.permute.xlu0 %6497
  %6499 = vrot.lane.b32.xlu0 %v6268, 15
  %v6500 = vpop.permute.xlu0 %6499
  %6501 = vrot.lane.b32.xlu0 %v6269, 15
  %v6502 = vpop.permute.xlu0 %6501
  %6503 = vrot.lane.b32.xlu0 %v6270, 15
  %v6504 = vpop.permute.xlu0 %6503
  %6505 = vrot.lane.b32.xlu0 %v6271, 15
  %v6506 = vpop.permute.xlu0 %6505
  %6507 = vrot.lane.b32.xlu0 %v6272, 15
  %v6508 = vpop.permute.xlu0 %6507
  %6509 = vrot.lane.b32.xlu0 %v6273, 15
  %v6510 = vpop.permute.xlu0 %6509
  %6511 = vrot.lane.b32.xlu0 %v6274, 15
  %v6512 = vpop.permute.xlu0 %6511
  %6513 = vrot.lane.b32.xlu0 %v6275, 15
  %v6514 = vpop.permute.xlu0 %6513
  %6515 = vrot.lane.b32.xlu0 %v6276, 15
  %v6516 = vpop.permute.xlu0 %6515
  %6517 = vrot.lane.b32.xlu0 %v6277, 15
  %v6518 = vpop.permute.xlu0 %6517
  %6519 = vrot.lane.b32.xlu0 %v6278, 15
  %v6520 = vpop.permute.xlu0 %6519
  %6521 = vrot.lane.b32.xlu0 %v6279, 15
  %v6522 = vpop.permute.xlu0 %6521
  %6523 = vrot.lane.b32.xlu0 %v6280, 15
  %v6524 = vpop.permute.xlu0 %6523
  %6551 = vrot.lane.b32.xlu0 %v5557, 20
  %v6552 = vpop.permute.xlu0 %6551
  %6553 = vrot.lane.b32.xlu0 %v5558, 20
  %v6554 = vpop.permute.xlu0 %6553
  %6555 = vrot.lane.b32.xlu0 %v5559, 20
  %v6556 = vpop.permute.xlu0 %6555
  %6557 = vrot.lane.b32.xlu0 %v5560, 20
  %v6558 = vpop.permute.xlu0 %6557
  %6559 = vrot.lane.b32.xlu0 %v5561, 20
  %v6560 = vpop.permute.xlu0 %6559
  %6561 = vrot.lane.b32.xlu0 %v5562, 20
  %v6562 = vpop.permute.xlu0 %6561
  %6563 = vrot.lane.b32.xlu0 %v5563, 20
  %v6564 = vpop.permute.xlu0 %6563
  %6565 = vrot.lane.b32.xlu0 %v5564, 20
  %v6566 = vpop.permute.xlu0 %6565
  %6567 = vrot.lane.b32.xlu0 %v5565, 20
  %v6568 = vpop.permute.xlu0 %6567
  %6569 = vrot.lane.b32.xlu0 %v5566, 20
  %v6570 = vpop.permute.xlu0 %6569
  %6571 = vrot.lane.b32.xlu0 %v5567, 20
  %v6572 = vpop.permute.xlu0 %6571
  %6573 = vrot.lane.b32.xlu0 %v5568, 20
  %v6574 = vpop.permute.xlu0 %6573
  %6575 = vrot.lane.b32.xlu0 %v5569, 20
  %v6576 = vpop.permute.xlu0 %6575
  %6577 = vrot.lane.b32.xlu0 %v5570, 20
  %v6578 = vpop.permute.xlu0 %6577
  %6579 = vrot.lane.b32.xlu0 %v5571, 20
  %v6580 = vpop.permute.xlu0 %6579
  %6581 = vrot.lane.b32.xlu0 %v5572, 20
  %v6582 = vpop.permute.xlu0 %6581
  %6583 = vrot.lane.b32.xlu0 %v5573, 20
  %v6584 = vpop.permute.xlu0 %6583
  %6585 = vrot.lane.b32.xlu0 %v5574, 20
  %v6586 = vpop.permute.xlu0 %6585
  %6587 = vrot.lane.b32.xlu0 %v5575, 20
  %v6588 = vpop.permute.xlu0 %6587
  %6589 = vrot.lane.b32.xlu0 %v5576, 20
  %v6590 = vpop.permute.xlu0 %6589
  %6591 = vrot.lane.b32.xlu0 %v5577, 20
  %v6592 = vpop.permute.xlu0 %6591
  %6593 = vrot.lane.b32.xlu0 %v5578, 20
  %v6594 = vpop.permute.xlu0 %6593
  %6595 = vrot.lane.b32.xlu0 %v5579, 20
  %v6596 = vpop.permute.xlu0 %6595
  %6597 = vrot.lane.b32.xlu0 %v5580, 20
  %v6598 = vpop.permute.xlu0 %6597
  %v6623 = vsel %vm1766, %v5553, %v6308
  %v6624 = vsel %vm1766, %v5554, %v6310
  %v6625 = vsel %vm1766, %v5555, %v6312
  %v6626 = vsel %vm1766, %v5556, %v6314
  %v6627 = vsel %vm1766, %v5557, %v6316
  %v6628 = vsel %vm1766, %v5558, %v6318
  %v6629 = vsel %vm1766, %v5559, %v6320
  %v6630 = vsel %vm1766, %v5560, %v6322
  %v6631 = vsel %vm1766, %v5561, %v6324
  %v6632 = vsel %vm1766, %v5562, %v6326
  %v6633 = vsel %vm1766, %v5563, %v6328
  %v6634 = vsel %vm1766, %v5564, %v6330
  %v6635 = vsel %vm1766, %v5565, %v6332
  %v6636 = vsel %vm1766, %v5566, %v6334
  %v6637 = vsel %vm1766, %v5567, %v6336
  %v6638 = vsel %vm1766, %v5568, %v6338
  %v6639 = vsel %vm1766, %v5569, %v6340
  %v6640 = vsel %vm1766, %v5570, %v6342
  %v6641 = vsel %vm1766, %v5571, %v6344
  %v6642 = vsel %vm1766, %v5572, %v6346
  %v6643 = vsel %vm1766, %v5573, %v6348
  %v6644 = vsel %vm1766, %v5574, %v6350
  %v6645 = vsel %vm1766, %v5575, %v6352
  %v6646 = vsel %vm1766, %v5576, %v6354
  %v6647 = vsel %vm1791, %v6623, %v6404
  %v6648 = vsel %vm1791, %v6624, %v6406
  %v6649 = vsel %vm1791, %v6625, %v6408
  %v6650 = vsel %vm1791, %v6626, %v6410
  %v6651 = vsel %vm1791, %v6627, %v6412
  %v6652 = vsel %vm1791, %v6628, %v6414
  %v6653 = vsel %vm1791, %v6629, %v6416
  %v6654 = vsel %vm1791, %v6630, %v6418
  %v6655 = vsel %vm1791, %v6631, %v6420
  %v6656 = vsel %vm1791, %v6632, %v6422
  %v6657 = vsel %vm1791, %v6633, %v6424
  %v6658 = vsel %vm1791, %v6634, %v6426
  %v6659 = vsel %vm1791, %v6635, %v6428
  %v6660 = vsel %vm1791, %v6636, %v6430
  %v6661 = vsel %vm1791, %v6637, %v6432
  %v6662 = vsel %vm1791, %v6638, %v6434
  %v6663 = vsel %vm1791, %v6639, %v6436
  %v6664 = vsel %vm1791, %v6640, %v6438
  %v6665 = vsel %vm1791, %v6641, %v6440
  %v6666 = vsel %vm1791, %v6642, %v6442
  %v6667 = vsel %vm1791, %v6643, %v6444
  %v6668 = vsel %vm1791, %v6644, %v6446
  %v6669 = vsel %vm1791, %v6645, %v6448
  %v6670 = vsel %vm1791, %v6646, %v6450
  %v6671 = vsel %vm1816, %v6647, %v6478
  %v6672 = vsel %vm1816, %v6648, %v6480
  %v6673 = vsel %vm1816, %v6649, %v6482
  %v6674 = vsel %vm1816, %v6650, %v6484
  %v6675 = vsel %vm1816, %v6651, %v6486
  %v6676 = vsel %vm1816, %v6652, %v6488
  %v6677 = vsel %vm1816, %v6653, %v6490
  %v6678 = vsel %vm1816, %v6654, %v6492
  %v6679 = vsel %vm1816, %v6655, %v6494
  %v6680 = vsel %vm1816, %v6656, %v6496
  %v6681 = vsel %vm1816, %v6657, %v6498
  %v6682 = vsel %vm1816, %v6658, %v6500
  %v6683 = vsel %vm1816, %v6659, %v6502
  %v6684 = vsel %vm1816, %v6660, %v6504
  %v6685 = vsel %vm1816, %v6661, %v6506
  %v6686 = vsel %vm1816, %v6662, %v6508
  %v6687 = vsel %vm1816, %v6663, %v6510
  %v6688 = vsel %vm1816, %v6664, %v6512
  %v6689 = vsel %vm1816, %v6665, %v6514
  %v6690 = vsel %vm1816, %v6666, %v6516
  %v6691 = vsel %vm1816, %v6667, %v6518
  %v6692 = vsel %vm1816, %v6668, %v6520
  %v6693 = vsel %vm1816, %v6669, %v6522
  %v6694 = vsel %vm1816, %v6670, %v6524
  %v6695 = vsel %vm1841, %v6671, %v6552
  %v6696 = vsel %vm1841, %v6672, %v6554
  %v6697 = vsel %vm1841, %v6673, %v6556
  %v6698 = vsel %vm1841, %v6674, %v6558
  %v6699 = vsel %vm1841, %v6675, %v6560
  %v6700 = vsel %vm1841, %v6676, %v6562
  %v6701 = vsel %vm1841, %v6677, %v6564
  %v6702 = vsel %vm1841, %v6678, %v6566
  %v6703 = vsel %vm1841, %v6679, %v6568
  %v6704 = vsel %vm1841, %v6680, %v6570
  %v6705 = vsel %vm1841, %v6681, %v6572
  %v6706 = vsel %vm1841, %v6682, %v6574
  %v6707 = vsel %vm1841, %v6683, %v6576
  %v6708 = vsel %vm1841, %v6684, %v6578
  %v6709 = vsel %vm1841, %v6685, %v6580
  %v6710 = vsel %vm1841, %v6686, %v6582
  %v6711 = vsel %vm1841, %v6687, %v6584
  %v6712 = vsel %vm1841, %v6688, %v6586
  %v6713 = vsel %vm1841, %v6689, %v6588
  %v6714 = vsel %vm1841, %v6690, %v6590
  %v6715 = vsel %vm1841, %v6691, %v6592
  %v6716 = vsel %vm1841, %v6692, %v6594
  %v6717 = vsel %vm1841, %v6693, %v6596
  %v6718 = vsel %vm1841, %v6694, %v6598
  %v6721 = vrot.slane %v6697, 4
  %v6722 = vrot.slane %v6698, 4
  %v6723 = vsel %vm1868, %v6721, %v6722
  %v6727 = vrot.slane %v6701, 4
  %v6728 = vrot.slane %v6702, 4
  %v6729 = vsel %vm1868, %v6727, %v6728
  %v6733 = vrot.slane %v6705, 4
  %v6734 = vrot.slane %v6706, 4
  %v6735 = vsel %vm1868, %v6733, %v6734
  %v6739 = vrot.slane %v6709, 4
  %v6740 = vrot.slane %v6710, 4
  %v6741 = vsel %vm1868, %v6739, %v6740
  %v6745 = vrot.slane %v6713, 4
  %v6746 = vrot.slane %v6714, 4
  %v6747 = vsel %vm1868, %v6745, %v6746
  %v6751 = vrot.slane %v6717, 4
  %v6752 = vrot.slane %v6718, 4
  %v6753 = vsel %vm1868, %v6751, %v6752
  %v6755 = vsel %vm1868, %v6696, %v6721
  %v6756 = vsel %vm1868, %v6700, %v6727
  %v6757 = vsel %vm1868, %v6704, %v6733
  %v6758 = vsel %vm1868, %v6708, %v6739
  %v6759 = vsel %vm1868, %v6712, %v6745
  %v6760 = vsel %vm1868, %v6716, %v6751
  %v6762 = vsel %vm1912, %v6695, 0
  %v6765 = vsel %vm1912, %v6755, 0
  %v6767 = vsel %vm1912, %v6723, 0
  %v6770 = vsel %vm1912, %v6699, 0
  %v6773 = vsel %vm1912, %v6756, 0
  %v6775 = vsel %vm1912, %v6729, 0
  %v6778 = vsel %vm1912, %v6703, 0
  %v6781 = vsel %vm1912, %v6757, 0
  %v6783 = vsel %vm1912, %v6735, 0
  %v6786 = vsel %vm1912, %v6707, 0
  %v6789 = vsel %vm1912, %v6758, 0
  %v6791 = vsel %vm1912, %v6741, 0
  %v6794 = vsel %vm1912, %v6711, 0
  %v6797 = vsel %vm1912, %v6759, 0
  %v6799 = vsel %vm1912, %v6747, 0
  %v6802 = vsel %vm1912, %v6715, 0
  %v6805 = vsel %vm1912, %v6760, 0
  %v6807 = vsel %vm1912, %v6753, 0
  %6809 = vmatpush.msra.mxu0 0.0
  %6810 = vmatpush.msra.mxu0 0.0
  %6811 = vmatpush.msra.mxu0 0.0
  %6812 = vmatpush.msra.mxu0 0.0
  %6813 = vmatpush.msra.mxu0 0.0
  %6814 = vmatpush.msra.mxu0 0.0
  %6815 = vmatpush.msra.mxu0 0.0
  %6816 = vmatpush.msra.mxu0 0.0
  %6817 = vmatpush.msra.mxu0 0.0
  %6818 = vmatpush.msra.mxu0 0.0
  %6819 = vmatpush.msra.mxu0 0.0
  %6820 = vmatpush.msra.mxu0 0.0
  %6821 = vmatpush.msra.mxu0 %v1963
  %6822 = vmatpush.msra.mxu0 %v16
  %6823 = vmatpush.msra.mxu0 %v15
  %6824 = vmatpush.msra.mxu0 %v14
  %6825 = vmatmul.f32.gmra.mxu0 %v6762
  %v6826 = vpop.f32.mrf.mxu0
  %v6827 = vadd.f32 %v1910, %v6826
  %6828 = vmatmul.f32.gmra.mxu0 %v6765
  %v6829 = vpop.f32.mrf.mxu0
  %v6830 = vadd.f32 %v1910, %v6829
  %6831 = vmatmul.f32.gmra.mxu0 %v6767
  %v6832 = vpop.f32.mrf.mxu0
  %v6833 = vadd.f32 %v1910, %v6832
  %6834 = vmatmul.f32.gmra.mxu0 %v6770
  %v6835 = vpop.f32.mrf.mxu0
  %v6836 = vadd.f32 %v1910, %v6835
  %6837 = vmatmul.f32.gmra.mxu0 %v6773
  %v6838 = vpop.f32.mrf.mxu0
  %v6839 = vadd.f32 %v1910, %v6838
  %6840 = vmatmul.f32.gmra.mxu0 %v6775
  %v6841 = vpop.f32.mrf.mxu0
  %v6842 = vadd.f32 %v1910, %v6841
  %6843 = vmatmul.f32.gmra.mxu0 %v6778
  %v6844 = vpop.f32.mrf.mxu0
  %v6845 = vadd.f32 %v1910, %v6844
  %6846 = vmatmul.f32.gmra.mxu0 %v6781
  %v6847 = vpop.f32.mrf.mxu0
  %v6848 = vadd.f32 %v1910, %v6847
  %6849 = vmatmul.f32.gmra.mxu0 %v6783
  %v6850 = vpop.f32.mrf.mxu0
  %v6851 = vadd.f32 %v1910, %v6850
  %6852 = vmatmul.f32.gmra.mxu0 %v6786
  %v6853 = vpop.f32.mrf.mxu0
  %v6854 = vadd.f32 %v1910, %v6853
  %6855 = vmatmul.f32.gmra.mxu0 %v6789
  %v6856 = vpop.f32.mrf.mxu0
  %v6857 = vadd.f32 %v1910, %v6856
  %6858 = vmatmul.f32.gmra.mxu0 %v6791
  %v6859 = vpop.f32.mrf.mxu0
  %v6860 = vadd.f32 %v1910, %v6859
  %6861 = vmatmul.f32.gmra.mxu0 %v6794
  %v6862 = vpop.f32.mrf.mxu0
  %v6863 = vadd.f32 %v1910, %v6862
  %6864 = vmatmul.f32.gmra.mxu0 %v6797
  %v6865 = vpop.f32.mrf.mxu0
  %v6866 = vadd.f32 %v1910, %v6865
  %6867 = vmatmul.f32.gmra.mxu0 %v6799
  %v6868 = vpop.f32.mrf.mxu0
  %v6869 = vadd.f32 %v1910, %v6868
  %6870 = vmatmul.f32.gmra.mxu0 %v6802
  %v6871 = vpop.f32.mrf.mxu0
  %v6872 = vadd.f32 %v1910, %v6871
  %6873 = vmatmul.f32.gmra.mxu0 %v6805
  %v6874 = vpop.f32.mrf.mxu0
  %v6875 = vadd.f32 %v1910, %v6874
  %6876 = vmatmul.f32.gmra.mxu0 %v6807
  %v6877 = vpop.f32.mrf.mxu0
  %v6878 = vadd.f32 %v1910, %v6877
  %6879 = vdwg.mxu0
  %v6880 = vmax.f32 %v6827, 0.0
  %v6881 = vmax.f32 %v6830, 0.0
  %v6882 = vmax.f32 %v6833, 0.0
  %v6883 = vmax.f32 %v6836, 0.0
  %v6884 = vmax.f32 %v6839, 0.0
  %v6885 = vmax.f32 %v6842, 0.0
  %v6886 = vmax.f32 %v6845, 0.0
  %v6887 = vmax.f32 %v6848, 0.0
  %v6888 = vmax.f32 %v6851, 0.0
  %v6889 = vmax.f32 %v6854, 0.0
  %v6890 = vmax.f32 %v6857, 0.0
  %v6891 = vmax.f32 %v6860, 0.0
  %v6892 = vmax.f32 %v6863, 0.0
  %v6893 = vmax.f32 %v6866, 0.0
  %v6894 = vmax.f32 %v6869, 0.0
  %v6895 = vmax.f32 %v6872, 0.0
  %v6896 = vmax.f32 %v6875, 0.0
  %v6897 = vmax.f32 %v6878, 0.0
  %6898 = vrot.lane.b32.xlu0 %v5555, 5
  %v6899 = vpop.permute.xlu0 %6898
  %6900 = vrot.lane.b32.xlu0 %v5556, 5
  %v6901 = vpop.permute.xlu0 %6900
  %6902 = vrot.lane.b32.xlu0 %v5557, 5
  %v6903 = vpop.permute.xlu0 %6902
  %6904 = vrot.lane.b32.xlu0 %v5558, 5
  %v6905 = vpop.permute.xlu0 %6904
  %6906 = vrot.lane.b32.xlu0 %v5559, 5
  %v6907 = vpop.permute.xlu0 %6906
  %6908 = vrot.lane.b32.xlu0 %v5560, 5
  %v6909 = vpop.permute.xlu0 %6908
  %6910 = vrot.lane.b32.xlu0 %v5561, 5
  %v6911 = vpop.permute.xlu0 %6910
  %6912 = vrot.lane.b32.xlu0 %v5562, 5
  %v6913 = vpop.permute.xlu0 %6912
  %6914 = vrot.lane.b32.xlu0 %v5563, 5
  %v6915 = vpop.permute.xlu0 %6914
  %6916 = vrot.lane.b32.xlu0 %v5564, 5
  %v6917 = vpop.permute.xlu0 %6916
  %6918 = vrot.lane.b32.xlu0 %v5565, 5
  %v6919 = vpop.permute.xlu0 %6918
  %6920 = vrot.lane.b32.xlu0 %v5566, 5
  %v6921 = vpop.permute.xlu0 %6920
  %6922 = vrot.lane.b32.xlu0 %v5567, 5
  %v6923 = vpop.permute.xlu0 %6922
  %6924 = vrot.lane.b32.xlu0 %v5568, 5
  %v6925 = vpop.permute.xlu0 %6924
  %6926 = vrot.lane.b32.xlu0 %v5569, 5
  %v6927 = vpop.permute.xlu0 %6926
  %6928 = vrot.lane.b32.xlu0 %v5570, 5
  %v6929 = vpop.permute.xlu0 %6928
  %6930 = vrot.lane.b32.xlu0 %v5571, 5
  %v6931 = vpop.permute.xlu0 %6930
  %6932 = vrot.lane.b32.xlu0 %v5572, 5
  %v6933 = vpop.permute.xlu0 %6932
  %6934 = vrot.lane.b32.xlu0 %v5573, 5
  %v6935 = vpop.permute.xlu0 %6934
  %6936 = vrot.lane.b32.xlu0 %v5574, 5
  %v6937 = vpop.permute.xlu0 %6936
  %6938 = vrot.lane.b32.xlu0 %v5575, 5
  %v6939 = vpop.permute.xlu0 %6938
  %6940 = vrot.lane.b32.xlu0 %v5576, 5
  %v6941 = vpop.permute.xlu0 %6940
  %6942 = vrot.lane.b32.xlu0 %v5577, 5
  %v6943 = vpop.permute.xlu0 %6942
  %6944 = vrot.lane.b32.xlu0 %v5578, 5
  %v6945 = vpop.permute.xlu0 %6944
  %6970 = vrot.lane.b32.xlu0 %v6257, 10
  %v6971 = vpop.permute.xlu0 %6970
  %6972 = vrot.lane.b32.xlu0 %v6258, 10
  %v6973 = vpop.permute.xlu0 %6972
  %6974 = vrot.lane.b32.xlu0 %v6259, 10
  %v6975 = vpop.permute.xlu0 %6974
  %6976 = vrot.lane.b32.xlu0 %v6260, 10
  %v6977 = vpop.permute.xlu0 %6976
  %6978 = vrot.lane.b32.xlu0 %v6261, 10
  %v6979 = vpop.permute.xlu0 %6978
  %6980 = vrot.lane.b32.xlu0 %v6262, 10
  %v6981 = vpop.permute.xlu0 %6980
  %6982 = vrot.lane.b32.xlu0 %v6263, 10
  %v6983 = vpop.permute.xlu0 %6982
  %6984 = vrot.lane.b32.xlu0 %v6264, 10
  %v6985 = vpop.permute.xlu0 %6984
  %6986 = vrot.lane.b32.xlu0 %v6265, 10
  %v6987 = vpop.permute.xlu0 %6986
  %6988 = vrot.lane.b32.xlu0 %v6266, 10
  %v6989 = vpop.permute.xlu0 %6988
  %6990 = vrot.lane.b32.xlu0 %v6267, 10
  %v6991 = vpop.permute.xlu0 %6990
  %6992 = vrot.lane.b32.xlu0 %v6268, 10
  %v6993 = vpop.permute.xlu0 %6992
  %6994 = vrot.lane.b32.xlu0 %v6269, 10
  %v6995 = vpop.permute.xlu0 %6994
  %6996 = vrot.lane.b32.xlu0 %v6270, 10
  %v6997 = vpop.permute.xlu0 %6996
  %6998 = vrot.lane.b32.xlu0 %v6271, 10
  %v6999 = vpop.permute.xlu0 %6998
  %7000 = vrot.lane.b32.xlu0 %v6272, 10
  %v7001 = vpop.permute.xlu0 %7000
  %7002 = vrot.lane.b32.xlu0 %v6273, 10
  %v7003 = vpop.permute.xlu0 %7002
  %7004 = vrot.lane.b32.xlu0 %v6274, 10
  %v7005 = vpop.permute.xlu0 %7004
  %7006 = vrot.lane.b32.xlu0 %v6275, 10
  %v7007 = vpop.permute.xlu0 %7006
  %7008 = vrot.lane.b32.xlu0 %v6276, 10
  %v7009 = vpop.permute.xlu0 %7008
  %7010 = vrot.lane.b32.xlu0 %v6277, 10
  %v7011 = vpop.permute.xlu0 %7010
  %7012 = vrot.lane.b32.xlu0 %v6278, 10
  %v7013 = vpop.permute.xlu0 %7012
  %7014 = vrot.lane.b32.xlu0 %v6279, 10
  %v7015 = vpop.permute.xlu0 %7014
  %7016 = vrot.lane.b32.xlu0 %v6280, 10
  %v7017 = vpop.permute.xlu0 %7016
  %7042 = vrot.lane.b32.xlu0 %v5557, 15
  %v7043 = vpop.permute.xlu0 %7042
  %7044 = vrot.lane.b32.xlu0 %v5558, 15
  %v7045 = vpop.permute.xlu0 %7044
  %7046 = vrot.lane.b32.xlu0 %v5559, 15
  %v7047 = vpop.permute.xlu0 %7046
  %7048 = vrot.lane.b32.xlu0 %v5560, 15
  %v7049 = vpop.permute.xlu0 %7048
  %7050 = vrot.lane.b32.xlu0 %v5561, 15
  %v7051 = vpop.permute.xlu0 %7050
  %7052 = vrot.lane.b32.xlu0 %v5562, 15
  %v7053 = vpop.permute.xlu0 %7052
  %7054 = vrot.lane.b32.xlu0 %v5563, 15
  %v7055 = vpop.permute.xlu0 %7054
  %7056 = vrot.lane.b32.xlu0 %v5564, 15
  %v7057 = vpop.permute.xlu0 %7056
  %7058 = vrot.lane.b32.xlu0 %v5565, 15
  %v7059 = vpop.permute.xlu0 %7058
  %7060 = vrot.lane.b32.xlu0 %v5566, 15
  %v7061 = vpop.permute.xlu0 %7060
  %7062 = vrot.lane.b32.xlu0 %v5567, 15
  %v7063 = vpop.permute.xlu0 %7062
  %7064 = vrot.lane.b32.xlu0 %v5568, 15
  %v7065 = vpop.permute.xlu0 %7064
  %7066 = vrot.lane.b32.xlu0 %v5569, 15
  %v7067 = vpop.permute.xlu0 %7066
  %7068 = vrot.lane.b32.xlu0 %v5570, 15
  %v7069 = vpop.permute.xlu0 %7068
  %7070 = vrot.lane.b32.xlu0 %v5571, 15
  %v7071 = vpop.permute.xlu0 %7070
  %7072 = vrot.lane.b32.xlu0 %v5572, 15
  %v7073 = vpop.permute.xlu0 %7072
  %7074 = vrot.lane.b32.xlu0 %v5573, 15
  %v7075 = vpop.permute.xlu0 %7074
  %7076 = vrot.lane.b32.xlu0 %v5574, 15
  %v7077 = vpop.permute.xlu0 %7076
  %7078 = vrot.lane.b32.xlu0 %v5575, 15
  %v7079 = vpop.permute.xlu0 %7078
  %7080 = vrot.lane.b32.xlu0 %v5576, 15
  %v7081 = vpop.permute.xlu0 %7080
  %7082 = vrot.lane.b32.xlu0 %v5577, 15
  %v7083 = vpop.permute.xlu0 %7082
  %7084 = vrot.lane.b32.xlu0 %v5578, 15
  %v7085 = vpop.permute.xlu0 %7084
  %7086 = vrot.lane.b32.xlu0 %v5579, 15
  %v7087 = vpop.permute.xlu0 %7086
  %7088 = vrot.lane.b32.xlu0 %v5580, 15
  %v7089 = vpop.permute.xlu0 %7088
  %7116 = vrot.lane.b32.xlu0 %v6259, 20
  %v7117 = vpop.permute.xlu0 %7116
  %7118 = vrot.lane.b32.xlu0 %v6260, 20
  %v7119 = vpop.permute.xlu0 %7118
  %7120 = vrot.lane.b32.xlu0 %v6261, 20
  %v7121 = vpop.permute.xlu0 %7120
  %7122 = vrot.lane.b32.xlu0 %v6262, 20
  %v7123 = vpop.permute.xlu0 %7122
  %7124 = vrot.lane.b32.xlu0 %v6263, 20
  %v7125 = vpop.permute.xlu0 %7124
  %7126 = vrot.lane.b32.xlu0 %v6264, 20
  %v7127 = vpop.permute.xlu0 %7126
  %7128 = vrot.lane.b32.xlu0 %v6265, 20
  %v7129 = vpop.permute.xlu0 %7128
  %7130 = vrot.lane.b32.xlu0 %v6266, 20
  %v7131 = vpop.permute.xlu0 %7130
  %7132 = vrot.lane.b32.xlu0 %v6267, 20
  %v7133 = vpop.permute.xlu0 %7132
  %7134 = vrot.lane.b32.xlu0 %v6268, 20
  %v7135 = vpop.permute.xlu0 %7134
  %7136 = vrot.lane.b32.xlu0 %v6269, 20
  %v7137 = vpop.permute.xlu0 %7136
  %7138 = vrot.lane.b32.xlu0 %v6270, 20
  %v7139 = vpop.permute.xlu0 %7138
  %7140 = vrot.lane.b32.xlu0 %v6271, 20
  %v7141 = vpop.permute.xlu0 %7140
  %7142 = vrot.lane.b32.xlu0 %v6272, 20
  %v7143 = vpop.permute.xlu0 %7142
  %7144 = vrot.lane.b32.xlu0 %v6273, 20
  %v7145 = vpop.permute.xlu0 %7144
  %7146 = vrot.lane.b32.xlu0 %v6274, 20
  %v7147 = vpop.permute.xlu0 %7146
  %7148 = vrot.lane.b32.xlu0 %v6275, 20
  %v7149 = vpop.permute.xlu0 %7148
  %7150 = vrot.lane.b32.xlu0 %v6276, 20
  %v7151 = vpop.permute.xlu0 %7150
  %7152 = vrot.lane.b32.xlu0 %v6277, 20
  %v7153 = vpop.permute.xlu0 %7152
  %7154 = vrot.lane.b32.xlu0 %v6278, 20
  %v7155 = vpop.permute.xlu0 %7154
  %7156 = vrot.lane.b32.xlu0 %v6279, 20
  %v7157 = vpop.permute.xlu0 %7156
  %7158 = vrot.lane.b32.xlu0 %v6280, 20
  %v7159 = vpop.permute.xlu0 %7158
  %7160 = vrot.lane.b32.xlu0 %v6281, 20
  %v7161 = vpop.permute.xlu0 %7160
  %7162 = vrot.lane.b32.xlu0 %v6282, 20
  %v7163 = vpop.permute.xlu0 %7162
  %v7188 = vsel %vm1766, %v6255, %v6899
  %v7189 = vsel %vm1766, %v6256, %v6901
  %v7190 = vsel %vm1766, %v6257, %v6903
  %v7191 = vsel %vm1766, %v6258, %v6905
  %v7192 = vsel %vm1766, %v6259, %v6907
  %v7193 = vsel %vm1766, %v6260, %v6909
  %v7194 = vsel %vm1766, %v6261, %v6911
  %v7195 = vsel %vm1766, %v6262, %v6913
  %v7196 = vsel %vm1766, %v6263, %v6915
  %v7197 = vsel %vm1766, %v6264, %v6917
  %v7198 = vsel %vm1766, %v6265, %v6919
  %v7199 = vsel %vm1766, %v6266, %v6921
  %v7200 = vsel %vm1766, %v6267, %v6923
  %v7201 = vsel %vm1766, %v6268, %v6925
  %v7202 = vsel %vm1766, %v6269, %v6927
  %v7203 = vsel %vm1766, %v6270, %v6929
  %v7204 = vsel %vm1766, %v6271, %v6931
  %v7205 = vsel %vm1766, %v6272, %v6933
  %v7206 = vsel %vm1766, %v6273, %v6935
  %v7207 = vsel %vm1766, %v6274, %v6937
  %v7208 = vsel %vm1766, %v6275, %v6939
  %v7209 = vsel %vm1766, %v6276, %v6941
  %v7210 = vsel %vm1766, %v6277, %v6943
  %v7211 = vsel %vm1766, %v6278, %v6945
  %v7212 = vsel %vm1791, %v7188, %v6971
  %v7213 = vsel %vm1791, %v7189, %v6973
  %v7214 = vsel %vm1791, %v7190, %v6975
  %v7215 = vsel %vm1791, %v7191, %v6977
  %v7216 = vsel %vm1791, %v7192, %v6979
  %v7217 = vsel %vm1791, %v7193, %v6981
  %v7218 = vsel %vm1791, %v7194, %v6983
  %v7219 = vsel %vm1791, %v7195, %v6985
  %v7220 = vsel %vm1791, %v7196, %v6987
  %v7221 = vsel %vm1791, %v7197, %v6989
  %v7222 = vsel %vm1791, %v7198, %v6991
  %v7223 = vsel %vm1791, %v7199, %v6993
  %v7224 = vsel %vm1791, %v7200, %v6995
  %v7225 = vsel %vm1791, %v7201, %v6997
  %v7226 = vsel %vm1791, %v7202, %v6999
  %v7227 = vsel %vm1791, %v7203, %v7001
  %v7228 = vsel %vm1791, %v7204, %v7003
  %v7229 = vsel %vm1791, %v7205, %v7005
  %v7230 = vsel %vm1791, %v7206, %v7007
  %v7231 = vsel %vm1791, %v7207, %v7009
  %v7232 = vsel %vm1791, %v7208, %v7011
  %v7233 = vsel %vm1791, %v7209, %v7013
  %v7234 = vsel %vm1791, %v7210, %v7015
  %v7235 = vsel %vm1791, %v7211, %v7017
  %v7236 = vsel %vm1816, %v7212, %v7043
  %v7237 = vsel %vm1816, %v7213, %v7045
  %v7238 = vsel %vm1816, %v7214, %v7047
  %v7239 = vsel %vm1816, %v7215, %v7049
  %v7240 = vsel %vm1816, %v7216, %v7051
  %v7241 = vsel %vm1816, %v7217, %v7053
  %v7242 = vsel %vm1816, %v7218, %v7055
  %v7243 = vsel %vm1816, %v7219, %v7057
  %v7244 = vsel %vm1816, %v7220, %v7059
  %v7245 = vsel %vm1816, %v7221, %v7061
  %v7246 = vsel %vm1816, %v7222, %v7063
  %v7247 = vsel %vm1816, %v7223, %v7065
  %v7248 = vsel %vm1816, %v7224, %v7067
  %v7249 = vsel %vm1816, %v7225, %v7069
  %v7250 = vsel %vm1816, %v7226, %v7071
  %v7251 = vsel %vm1816, %v7227, %v7073
  %v7252 = vsel %vm1816, %v7228, %v7075
  %v7253 = vsel %vm1816, %v7229, %v7077
  %v7254 = vsel %vm1816, %v7230, %v7079
  %v7255 = vsel %vm1816, %v7231, %v7081
  %v7256 = vsel %vm1816, %v7232, %v7083
  %v7257 = vsel %vm1816, %v7233, %v7085
  %v7258 = vsel %vm1816, %v7234, %v7087
  %v7259 = vsel %vm1816, %v7235, %v7089
  %v7260 = vsel %vm1841, %v7236, %v7117
  %v7261 = vsel %vm1841, %v7237, %v7119
  %v7262 = vsel %vm1841, %v7238, %v7121
  %v7263 = vsel %vm1841, %v7239, %v7123
  %v7264 = vsel %vm1841, %v7240, %v7125
  %v7265 = vsel %vm1841, %v7241, %v7127
  %v7266 = vsel %vm1841, %v7242, %v7129
  %v7267 = vsel %vm1841, %v7243, %v7131
  %v7268 = vsel %vm1841, %v7244, %v7133
  %v7269 = vsel %vm1841, %v7245, %v7135
  %v7270 = vsel %vm1841, %v7246, %v7137
  %v7271 = vsel %vm1841, %v7247, %v7139
  %v7272 = vsel %vm1841, %v7248, %v7141
  %v7273 = vsel %vm1841, %v7249, %v7143
  %v7274 = vsel %vm1841, %v7250, %v7145
  %v7275 = vsel %vm1841, %v7251, %v7147
  %v7276 = vsel %vm1841, %v7252, %v7149
  %v7277 = vsel %vm1841, %v7253, %v7151
  %v7278 = vsel %vm1841, %v7254, %v7153
  %v7279 = vsel %vm1841, %v7255, %v7155
  %v7280 = vsel %vm1841, %v7256, %v7157
  %v7281 = vsel %vm1841, %v7257, %v7159
  %v7282 = vsel %vm1841, %v7258, %v7161
  %v7283 = vsel %vm1841, %v7259, %v7163
  %v7286 = vrot.slane %v7262, 4
  %v7287 = vrot.slane %v7263, 4
  %v7288 = vsel %vm1868, %v7286, %v7287
  %v7292 = vrot.slane %v7266, 4
  %v7293 = vrot.slane %v7267, 4
  %v7294 = vsel %vm1868, %v7292, %v7293
  %v7298 = vrot.slane %v7270, 4
  %v7299 = vrot.slane %v7271, 4
  %v7300 = vsel %vm1868, %v7298, %v7299
  %v7304 = vrot.slane %v7274, 4
  %v7305 = vrot.slane %v7275, 4
  %v7306 = vsel %vm1868, %v7304, %v7305
  %v7310 = vrot.slane %v7278, 4
  %v7311 = vrot.slane %v7279, 4
  %v7312 = vsel %vm1868, %v7310, %v7311
  %v7316 = vrot.slane %v7282, 4
  %v7317 = vrot.slane %v7283, 4
  %v7318 = vsel %vm1868, %v7316, %v7317
  %v7320 = vsel %vm1868, %v7261, %v7286
  %v7321 = vsel %vm1868, %v7265, %v7292
  %v7322 = vsel %vm1868, %v7269, %v7298
  %v7323 = vsel %vm1868, %v7273, %v7304
  %v7324 = vsel %vm1868, %v7277, %v7310
  %v7325 = vsel %vm1868, %v7281, %v7316
  %v7327 = vsel %vm1912, %v7260, 0
  %v7330 = vsel %vm1912, %v7320, 0
  %v7332 = vsel %vm1912, %v7288, 0
  %v7335 = vsel %vm1912, %v7264, 0
  %v7338 = vsel %vm1912, %v7321, 0
  %v7340 = vsel %vm1912, %v7294, 0
  %v7343 = vsel %vm1912, %v7268, 0
  %v7346 = vsel %vm1912, %v7322, 0
  %v7348 = vsel %vm1912, %v7300, 0
  %v7351 = vsel %vm1912, %v7272, 0
  %v7354 = vsel %vm1912, %v7323, 0
  %v7356 = vsel %vm1912, %v7306, 0
  %v7359 = vsel %vm1912, %v7276, 0
  %v7362 = vsel %vm1912, %v7324, 0
  %v7364 = vsel %vm1912, %v7312, 0
  %v7367 = vsel %vm1912, %v7280, 0
  %v7370 = vsel %vm1912, %v7325, 0
  %v7372 = vsel %vm1912, %v7318, 0
  %7374 = vmatpush.msra.mxu0 0.0
  %7375 = vmatpush.msra.mxu0 0.0
  %7376 = vmatpush.msra.mxu0 0.0
  %7377 = vmatpush.msra.mxu0 0.0
  %7378 = vmatpush.msra.mxu0 0.0
  %7379 = vmatpush.msra.mxu0 0.0
  %7380 = vmatpush.msra.mxu0 0.0
  %7381 = vmatpush.msra.mxu0 0.0
  %7382 = vmatpush.msra.mxu0 0.0
  %7383 = vmatpush.msra.mxu0 0.0
  %7384 = vmatpush.msra.mxu0 0.0
  %7385 = vmatpush.msra.mxu0 0.0
  %7386 = vmatpush.msra.mxu0 %v1963
  %7387 = vmatpush.msra.mxu0 %v16
  %7388 = vmatpush.msra.mxu0 %v15
  %7389 = vmatpush.msra.mxu0 %v14
  %7390 = vmatmul.f32.gmra.mxu0 %v7327
  %v7391 = vpop.f32.mrf.mxu0
  %v7392 = vadd.f32 %v1910, %v7391
  %7393 = vmatmul.f32.gmra.mxu0 %v7330
  %v7394 = vpop.f32.mrf.mxu0
  %v7395 = vadd.f32 %v1910, %v7394
  %7396 = vmatmul.f32.gmra.mxu0 %v7332
  %v7397 = vpop.f32.mrf.mxu0
  %v7398 = vadd.f32 %v1910, %v7397
  %7399 = vmatmul.f32.gmra.mxu0 %v7335
  %v7400 = vpop.f32.mrf.mxu0
  %v7401 = vadd.f32 %v1910, %v7400
  %7402 = vmatmul.f32.gmra.mxu0 %v7338
  %v7403 = vpop.f32.mrf.mxu0
  %v7404 = vadd.f32 %v1910, %v7403
  %7405 = vmatmul.f32.gmra.mxu0 %v7340
  %v7406 = vpop.f32.mrf.mxu0
  %v7407 = vadd.f32 %v1910, %v7406
  %7408 = vmatmul.f32.gmra.mxu0 %v7343
  %v7409 = vpop.f32.mrf.mxu0
  %v7410 = vadd.f32 %v1910, %v7409
  %7411 = vmatmul.f32.gmra.mxu0 %v7346
  %v7412 = vpop.f32.mrf.mxu0
  %v7413 = vadd.f32 %v1910, %v7412
  %7414 = vmatmul.f32.gmra.mxu0 %v7348
  %v7415 = vpop.f32.mrf.mxu0
  %v7416 = vadd.f32 %v1910, %v7415
  %7417 = vmatmul.f32.gmra.mxu0 %v7351
  %v7418 = vpop.f32.mrf.mxu0
  %v7419 = vadd.f32 %v1910, %v7418
  %7420 = vmatmul.f32.gmra.mxu0 %v7354
  %v7421 = vpop.f32.mrf.mxu0
  %v7422 = vadd.f32 %v1910, %v7421
  %7423 = vmatmul.f32.gmra.mxu0 %v7356
  %v7424 = vpop.f32.mrf.mxu0
  %v7425 = vadd.f32 %v1910, %v7424
  %7426 = vmatmul.f32.gmra.mxu0 %v7359
  %v7427 = vpop.f32.mrf.mxu0
  %v7428 = vadd.f32 %v1910, %v7427
  %7429 = vmatmul.f32.gmra.mxu0 %v7362
  %v7430 = vpop.f32.mrf.mxu0
  %v7431 = vadd.f32 %v1910, %v7430
  %7432 = vmatmul.f32.gmra.mxu0 %v7364
  %v7433 = vpop.f32.mrf.mxu0
  %v7434 = vadd.f32 %v1910, %v7433
  %7435 = vmatmul.f32.gmra.mxu0 %v7367
  %v7436 = vpop.f32.mrf.mxu0
  %v7437 = vadd.f32 %v1910, %v7436
  %7438 = vmatmul.f32.gmra.mxu0 %v7370
  %v7439 = vpop.f32.mrf.mxu0
  %v7440 = vadd.f32 %v1910, %v7439
  %7441 = vmatmul.f32.gmra.mxu0 %v7372
  %v7442 = vpop.f32.mrf.mxu0
  %v7443 = vadd.f32 %v1910, %v7442
  %7444 = vdwg.mxu0
  %v7445 = vmax.f32 %v7392, 0.0
  %v7446 = vmax.f32 %v7395, 0.0
  %v7447 = vmax.f32 %v7398, 0.0
  %v7448 = vmax.f32 %v7401, 0.0
  %v7449 = vmax.f32 %v7404, 0.0
  %v7450 = vmax.f32 %v7407, 0.0
  %v7451 = vmax.f32 %v7410, 0.0
  %v7452 = vmax.f32 %v7413, 0.0
  %v7453 = vmax.f32 %v7416, 0.0
  %v7454 = vmax.f32 %v7419, 0.0
  %v7455 = vmax.f32 %v7422, 0.0
  %v7456 = vmax.f32 %v7425, 0.0
  %v7457 = vmax.f32 %v7428, 0.0
  %v7458 = vmax.f32 %v7431, 0.0
  %v7459 = vmax.f32 %v7434, 0.0
  %v7460 = vmax.f32 %v7437, 0.0
  %v7461 = vmax.f32 %v7440, 0.0
  %v7462 = vmax.f32 %v7443, 0.0
  %v7463 = vmax.f32 %v6880, %v7445
  %v7464 = vmax.f32 %v6881, %v7446
  %v7465 = vmax.f32 %v6882, %v7447
  %v7466 = vmax.f32 %v6883, %v7448
  %v7467 = vmax.f32 %v6884, %v7449
  %v7468 = vmax.f32 %v6885, %v7450
  %v7469 = vmax.f32 %v6886, %v7451
  %v7470 = vmax.f32 %v6887, %v7452
  %v7471 = vmax.f32 %v6888, %v7453
  %v7472 = vmax.f32 %v6889, %v7454
  %v7473 = vmax.f32 %v6890, %v7455
  %v7474 = vmax.f32 %v6891, %v7456
  %v7475 = vmax.f32 %v6892, %v7457
  %v7476 = vmax.f32 %v6893, %v7458
  %v7477 = vmax.f32 %v6894, %v7459
  %v7478 = vmax.f32 %v6895, %v7460
  %v7479 = vmax.f32 %v6896, %v7461
  %v7480 = vmax.f32 %v6897, %v7462
  %v7481 = vld [vmem:[%s4908 + $0x2] sm:$0xff]
  %v7482 = vld [vmem:[%s4908 + $0xa] sm:$0xf]
  %v7483 = vld [vmem:[%s4908 + $0x12] sm:$0xff]
  %v7484 = vld [vmem:[%s4908 + $0x1a] sm:$0xf]
  %v7485 = vld [vmem:[%s4908 + $0x22] sm:$0xff]
  %v7486 = vld [vmem:[%s4908 + $0x2a] sm:$0xf]
  %v7487 = vld [vmem:[%s4908 + $0x32] sm:$0xff]
  %v7488 = vld [vmem:[%s4908 + $0x3a] sm:$0xf]
  %v7489 = vld [vmem:[%s4908 + $0x42] sm:$0xff]
  %v7490 = vld [vmem:[%s4908 + $0x4a] sm:$0xf]
  %v7491 = vld [vmem:[%s4908 + $0x52] sm:$0xff]
  %v7492 = vld [vmem:[%s4908 + $0x5a] sm:$0xf]
  %v7493 = vld [vmem:[%s4908 + $0x62] sm:$0xff]
  %v7494 = vld [vmem:[%s4908 + $0x6a] sm:$0xf]
  %v7495 = vld [vmem:[%s4908 + $0x72] sm:$0xff]
  %v7496 = vld [vmem:[%s4908 + $0x7a] sm:$0xf]
  %v7497 = vld [vmem:[%s4908 + $0x82] sm:$0xff]
  %v7498 = vld [vmem:[%s4908 + $0x8a] sm:$0xf]
  %v7499 = vld [vmem:[%s4908 + $0x92] sm:$0xff]
  %v7500 = vld [vmem:[%s4908 + $0x9a] sm:$0xf]
  %v7501 = vld [vmem:[%s4908 + $0xa2] sm:$0xff]
  %v7502 = vld [vmem:[%s4908 + $0xaa] sm:$0xf]
  %v7503 = vld [vmem:[%s4908 + $0xb2] sm:$0xff]
  %v7504 = vld [vmem:[%s4908 + $0xba] sm:$0xf]
  %v7505 = vld [vmem:[%s4908 + $0xc2] sm:$0xff]
  %v7506 = vld [vmem:[%s4908 + $0xca] sm:$0xf]
  %v7507 = vld [vmem:[%s4908 + $0xd2] sm:$0xff]
  %v7508 = vld [vmem:[%s4908 + $0xda] sm:$0xf]
  %7509 = vrot.lane.b32.xlu0 %v4937, 1
  %v7510 = vpop.permute.xlu0 %7509
  %7511 = vrot.lane.b32.xlu0 %v4938, 1
  %v7512 = vpop.permute.xlu0 %7511
  %7513 = vrot.lane.b32.xlu0 %v4939, 1
  %v7514 = vpop.permute.xlu0 %7513
  %7515 = vrot.lane.b32.xlu0 %v4940, 1
  %v7516 = vpop.permute.xlu0 %7515
  %7517 = vrot.lane.b32.xlu0 %v4941, 1
  %v7518 = vpop.permute.xlu0 %7517
  %7519 = vrot.lane.b32.xlu0 %v4942, 1
  %v7520 = vpop.permute.xlu0 %7519
  %7521 = vrot.lane.b32.xlu0 %v4943, 1
  %v7522 = vpop.permute.xlu0 %7521
  %7523 = vrot.lane.b32.xlu0 %v4944, 1
  %v7524 = vpop.permute.xlu0 %7523
  %7525 = vrot.lane.b32.xlu0 %v4945, 1
  %v7526 = vpop.permute.xlu0 %7525
  %7527 = vrot.lane.b32.xlu0 %v4946, 1
  %v7528 = vpop.permute.xlu0 %7527
  %7529 = vrot.lane.b32.xlu0 %v4947, 1
  %v7530 = vpop.permute.xlu0 %7529
  %7531 = vrot.lane.b32.xlu0 %v4948, 1
  %v7532 = vpop.permute.xlu0 %7531
  %7533 = vrot.lane.b32.xlu0 %v4949, 1
  %v7534 = vpop.permute.xlu0 %7533
  %7535 = vrot.lane.b32.xlu0 %v4950, 1
  %v7536 = vpop.permute.xlu0 %7535
  %7537 = vrot.lane.b32.xlu0 %v4951, 1
  %v7538 = vpop.permute.xlu0 %7537
  %7539 = vrot.lane.b32.xlu0 %v4952, 1
  %v7540 = vpop.permute.xlu0 %7539
  %7541 = vrot.lane.b32.xlu0 %v4953, 1
  %v7542 = vpop.permute.xlu0 %7541
  %7543 = vrot.lane.b32.xlu0 %v4954, 1
  %v7544 = vpop.permute.xlu0 %7543
  %7545 = vrot.lane.b32.xlu0 %v4955, 1
  %v7546 = vpop.permute.xlu0 %7545
  %7547 = vrot.lane.b32.xlu0 %v4956, 1
  %v7548 = vpop.permute.xlu0 %7547
  %7549 = vrot.lane.b32.xlu0 %v4957, 1
  %v7550 = vpop.permute.xlu0 %7549
  %7551 = vrot.lane.b32.xlu0 %v4958, 1
  %v7552 = vpop.permute.xlu0 %7551
  %7553 = vrot.lane.b32.xlu0 %v4959, 1
  %v7554 = vpop.permute.xlu0 %7553
  %7555 = vrot.lane.b32.xlu0 %v4960, 1
  %v7556 = vpop.permute.xlu0 %7555
  %7557 = vrot.lane.b32.xlu0 %v4961, 1
  %v7558 = vpop.permute.xlu0 %7557
  %7559 = vrot.lane.b32.xlu0 %v4962, 1
  %v7560 = vpop.permute.xlu0 %7559
  %7561 = vrot.lane.b32.xlu0 %v4963, 1
  %v7562 = vpop.permute.xlu0 %7561
  %7563 = vrot.lane.b32.xlu0 %v4964, 1
  %v7564 = vpop.permute.xlu0 %7563
  %7593 = vrot.lane.b32.xlu0 %v4965, 2
  %v7594 = vpop.permute.xlu0 %7593
  %7595 = vrot.lane.b32.xlu0 %v4966, 2
  %v7596 = vpop.permute.xlu0 %7595
  %7597 = vrot.lane.b32.xlu0 %v4967, 2
  %v7598 = vpop.permute.xlu0 %7597
  %7599 = vrot.lane.b32.xlu0 %v4968, 2
  %v7600 = vpop.permute.xlu0 %7599
  %7601 = vrot.lane.b32.xlu0 %v4969, 2
  %v7602 = vpop.permute.xlu0 %7601
  %7603 = vrot.lane.b32.xlu0 %v4970, 2
  %v7604 = vpop.permute.xlu0 %7603
  %7605 = vrot.lane.b32.xlu0 %v4971, 2
  %v7606 = vpop.permute.xlu0 %7605
  %7607 = vrot.lane.b32.xlu0 %v4972, 2
  %v7608 = vpop.permute.xlu0 %7607
  %7609 = vrot.lane.b32.xlu0 %v4973, 2
  %v7610 = vpop.permute.xlu0 %7609
  %7611 = vrot.lane.b32.xlu0 %v4974, 2
  %v7612 = vpop.permute.xlu0 %7611
  %7613 = vrot.lane.b32.xlu0 %v4975, 2
  %v7614 = vpop.permute.xlu0 %7613
  %7615 = vrot.lane.b32.xlu0 %v4976, 2
  %v7616 = vpop.permute.xlu0 %7615
  %7617 = vrot.lane.b32.xlu0 %v4977, 2
  %v7618 = vpop.permute.xlu0 %7617
  %7619 = vrot.lane.b32.xlu0 %v4978, 2
  %v7620 = vpop.permute.xlu0 %7619
  %7621 = vrot.lane.b32.xlu0 %v4979, 2
  %v7622 = vpop.permute.xlu0 %7621
  %7623 = vrot.lane.b32.xlu0 %v4980, 2
  %v7624 = vpop.permute.xlu0 %7623
  %7625 = vrot.lane.b32.xlu0 %v4981, 2
  %v7626 = vpop.permute.xlu0 %7625
  %7627 = vrot.lane.b32.xlu0 %v4982, 2
  %v7628 = vpop.permute.xlu0 %7627
  %7629 = vrot.lane.b32.xlu0 %v4983, 2
  %v7630 = vpop.permute.xlu0 %7629
  %7631 = vrot.lane.b32.xlu0 %v4984, 2
  %v7632 = vpop.permute.xlu0 %7631
  %7633 = vrot.lane.b32.xlu0 %v4985, 2
  %v7634 = vpop.permute.xlu0 %7633
  %7635 = vrot.lane.b32.xlu0 %v4986, 2
  %v7636 = vpop.permute.xlu0 %7635
  %7637 = vrot.lane.b32.xlu0 %v4987, 2
  %v7638 = vpop.permute.xlu0 %7637
  %7639 = vrot.lane.b32.xlu0 %v4988, 2
  %v7640 = vpop.permute.xlu0 %7639
  %7641 = vrot.lane.b32.xlu0 %v4989, 2
  %v7642 = vpop.permute.xlu0 %7641
  %7643 = vrot.lane.b32.xlu0 %v4990, 2
  %v7644 = vpop.permute.xlu0 %7643
  %7645 = vrot.lane.b32.xlu0 %v4991, 2
  %v7646 = vpop.permute.xlu0 %7645
  %7647 = vrot.lane.b32.xlu0 %v4992, 2
  %v7648 = vpop.permute.xlu0 %7647
  %7677 = vrot.lane.b32.xlu0 %v4993, 3
  %v7678 = vpop.permute.xlu0 %7677
  %7679 = vrot.lane.b32.xlu0 %v4994, 3
  %v7680 = vpop.permute.xlu0 %7679
  %7681 = vrot.lane.b32.xlu0 %v4995, 3
  %v7682 = vpop.permute.xlu0 %7681
  %7683 = vrot.lane.b32.xlu0 %v4996, 3
  %v7684 = vpop.permute.xlu0 %7683
  %7685 = vrot.lane.b32.xlu0 %v4997, 3
  %v7686 = vpop.permute.xlu0 %7685
  %7687 = vrot.lane.b32.xlu0 %v4998, 3
  %v7688 = vpop.permute.xlu0 %7687
  %7689 = vrot.lane.b32.xlu0 %v4999, 3
  %v7690 = vpop.permute.xlu0 %7689
  %7691 = vrot.lane.b32.xlu0 %v5000, 3
  %v7692 = vpop.permute.xlu0 %7691
  %7693 = vrot.lane.b32.xlu0 %v5001, 3
  %v7694 = vpop.permute.xlu0 %7693
  %7695 = vrot.lane.b32.xlu0 %v5002, 3
  %v7696 = vpop.permute.xlu0 %7695
  %7697 = vrot.lane.b32.xlu0 %v5003, 3
  %v7698 = vpop.permute.xlu0 %7697
  %7699 = vrot.lane.b32.xlu0 %v5004, 3
  %v7700 = vpop.permute.xlu0 %7699
  %7701 = vrot.lane.b32.xlu0 %v5005, 3
  %v7702 = vpop.permute.xlu0 %7701
  %7703 = vrot.lane.b32.xlu0 %v5006, 3
  %v7704 = vpop.permute.xlu0 %7703
  %7705 = vrot.lane.b32.xlu0 %v5007, 3
  %v7706 = vpop.permute.xlu0 %7705
  %7707 = vrot.lane.b32.xlu0 %v5008, 3
  %v7708 = vpop.permute.xlu0 %7707
  %7709 = vrot.lane.b32.xlu0 %v5009, 3
  %v7710 = vpop.permute.xlu0 %7709
  %7711 = vrot.lane.b32.xlu0 %v5010, 3
  %v7712 = vpop.permute.xlu0 %7711
  %7713 = vrot.lane.b32.xlu0 %v5011, 3
  %v7714 = vpop.permute.xlu0 %7713
  %7715 = vrot.lane.b32.xlu0 %v5012, 3
  %v7716 = vpop.permute.xlu0 %7715
  %7717 = vrot.lane.b32.xlu0 %v5013, 3
  %v7718 = vpop.permute.xlu0 %7717
  %7719 = vrot.lane.b32.xlu0 %v5014, 3
  %v7720 = vpop.permute.xlu0 %7719
  %7721 = vrot.lane.b32.xlu0 %v5015, 3
  %v7722 = vpop.permute.xlu0 %7721
  %7723 = vrot.lane.b32.xlu0 %v5016, 3
  %v7724 = vpop.permute.xlu0 %7723
  %7725 = vrot.lane.b32.xlu0 %v5017, 3
  %v7726 = vpop.permute.xlu0 %7725
  %7727 = vrot.lane.b32.xlu0 %v5018, 3
  %v7728 = vpop.permute.xlu0 %7727
  %7729 = vrot.lane.b32.xlu0 %v5019, 3
  %v7730 = vpop.permute.xlu0 %7729
  %7731 = vrot.lane.b32.xlu0 %v5020, 3
  %v7732 = vpop.permute.xlu0 %7731
  %7789 = vrot.lane.b32.xlu0 %v7481, 4
  %v7790 = vpop.permute.xlu0 %7789
  %7791 = vrot.lane.b32.xlu0 %v7482, 4
  %v7792 = vpop.permute.xlu0 %7791
  %7793 = vrot.lane.b32.xlu0 %v7483, 4
  %v7794 = vpop.permute.xlu0 %7793
  %7795 = vrot.lane.b32.xlu0 %v7484, 4
  %v7796 = vpop.permute.xlu0 %7795
  %7797 = vrot.lane.b32.xlu0 %v7485, 4
  %v7798 = vpop.permute.xlu0 %7797
  %7799 = vrot.lane.b32.xlu0 %v7486, 4
  %v7800 = vpop.permute.xlu0 %7799
  %7801 = vrot.lane.b32.xlu0 %v7487, 4
  %v7802 = vpop.permute.xlu0 %7801
  %7803 = vrot.lane.b32.xlu0 %v7488, 4
  %v7804 = vpop.permute.xlu0 %7803
  %7805 = vrot.lane.b32.xlu0 %v7489, 4
  %v7806 = vpop.permute.xlu0 %7805
  %7807 = vrot.lane.b32.xlu0 %v7490, 4
  %v7808 = vpop.permute.xlu0 %7807
  %7809 = vrot.lane.b32.xlu0 %v7491, 4
  %v7810 = vpop.permute.xlu0 %7809
  %7811 = vrot.lane.b32.xlu0 %v7492, 4
  %v7812 = vpop.permute.xlu0 %7811
  %7813 = vrot.lane.b32.xlu0 %v7493, 4
  %v7814 = vpop.permute.xlu0 %7813
  %7815 = vrot.lane.b32.xlu0 %v7494, 4
  %v7816 = vpop.permute.xlu0 %7815
  %7817 = vrot.lane.b32.xlu0 %v7495, 4
  %v7818 = vpop.permute.xlu0 %7817
  %7819 = vrot.lane.b32.xlu0 %v7496, 4
  %v7820 = vpop.permute.xlu0 %7819
  %7821 = vrot.lane.b32.xlu0 %v7497, 4
  %v7822 = vpop.permute.xlu0 %7821
  %7823 = vrot.lane.b32.xlu0 %v7498, 4
  %v7824 = vpop.permute.xlu0 %7823
  %7825 = vrot.lane.b32.xlu0 %v7499, 4
  %v7826 = vpop.permute.xlu0 %7825
  %7827 = vrot.lane.b32.xlu0 %v7500, 4
  %v7828 = vpop.permute.xlu0 %7827
  %7829 = vrot.lane.b32.xlu0 %v7501, 4
  %v7830 = vpop.permute.xlu0 %7829
  %7831 = vrot.lane.b32.xlu0 %v7502, 4
  %v7832 = vpop.permute.xlu0 %7831
  %7833 = vrot.lane.b32.xlu0 %v7503, 4
  %v7834 = vpop.permute.xlu0 %7833
  %7835 = vrot.lane.b32.xlu0 %v7504, 4
  %v7836 = vpop.permute.xlu0 %7835
  %7837 = vrot.lane.b32.xlu0 %v7505, 4
  %v7838 = vpop.permute.xlu0 %7837
  %7839 = vrot.lane.b32.xlu0 %v7506, 4
  %v7840 = vpop.permute.xlu0 %7839
  %7841 = vrot.lane.b32.xlu0 %v7507, 4
  %v7842 = vpop.permute.xlu0 %7841
  %7843 = vrot.lane.b32.xlu0 %v7508, 4
  %v7844 = vpop.permute.xlu0 %7843
  %v7873 = vsel %vm608, %v4909, %v7510
  %v7874 = vsel %vm608, %v4910, %v7512
  %v7875 = vsel %vm608, %v4911, %v7514
  %v7876 = vsel %vm608, %v4912, %v7516
  %v7877 = vsel %vm608, %v4913, %v7518
  %v7878 = vsel %vm608, %v4914, %v7520
  %v7879 = vsel %vm608, %v4915, %v7522
  %v7880 = vsel %vm608, %v4916, %v7524
  %v7881 = vsel %vm608, %v4917, %v7526
  %v7882 = vsel %vm608, %v4918, %v7528
  %v7883 = vsel %vm608, %v4919, %v7530
  %v7884 = vsel %vm608, %v4920, %v7532
  %v7885 = vsel %vm608, %v4921, %v7534
  %v7886 = vsel %vm608, %v4922, %v7536
  %v7887 = vsel %vm608, %v4923, %v7538
  %v7888 = vsel %vm608, %v4924, %v7540
  %v7889 = vsel %vm608, %v4925, %v7542
  %v7890 = vsel %vm608, %v4926, %v7544
  %v7891 = vsel %vm608, %v4927, %v7546
  %v7892 = vsel %vm608, %v4928, %v7548
  %v7893 = vsel %vm608, %v4929, %v7550
  %v7894 = vsel %vm608, %v4930, %v7552
  %v7895 = vsel %vm608, %v4931, %v7554
  %v7896 = vsel %vm608, %v4932, %v7556
  %v7897 = vsel %vm608, %v4933, %v7558
  %v7898 = vsel %vm608, %v4934, %v7560
  %v7899 = vsel %vm608, %v4935, %v7562
  %v7900 = vsel %vm608, %v4936, %v7564
  %v7901 = vsel %vm637, %v7873, %v7594
  %v7902 = vsel %vm637, %v7874, %v7596
  %v7903 = vsel %vm637, %v7875, %v7598
  %v7904 = vsel %vm637, %v7876, %v7600
  %v7905 = vsel %vm637, %v7877, %v7602
  %v7906 = vsel %vm637, %v7878, %v7604
  %v7907 = vsel %vm637, %v7879, %v7606
  %v7908 = vsel %vm637, %v7880, %v7608
  %v7909 = vsel %vm637, %v7881, %v7610
  %v7910 = vsel %vm637, %v7882, %v7612
  %v7911 = vsel %vm637, %v7883, %v7614
  %v7912 = vsel %vm637, %v7884, %v7616
  %v7913 = vsel %vm637, %v7885, %v7618
  %v7914 = vsel %vm637, %v7886, %v7620
  %v7915 = vsel %vm637, %v7887, %v7622
  %v7916 = vsel %vm637, %v7888, %v7624
  %v7917 = vsel %vm637, %v7889, %v7626
  %v7918 = vsel %vm637, %v7890, %v7628
  %v7919 = vsel %vm637, %v7891, %v7630
  %v7920 = vsel %vm637, %v7892, %v7632
  %v7921 = vsel %vm637, %v7893, %v7634
  %v7922 = vsel %vm637, %v7894, %v7636
  %v7923 = vsel %vm637, %v7895, %v7638
  %v7924 = vsel %vm637, %v7896, %v7640
  %v7925 = vsel %vm637, %v7897, %v7642
  %v7926 = vsel %vm637, %v7898, %v7644
  %v7927 = vsel %vm637, %v7899, %v7646
  %v7928 = vsel %vm637, %v7900, %v7648
  %v7929 = vsel %vm666, %v7901, %v7678
  %v7930 = vsel %vm666, %v7902, %v7680
  %v7931 = vsel %vm666, %v7903, %v7682
  %v7932 = vsel %vm666, %v7904, %v7684
  %v7933 = vsel %vm666, %v7905, %v7686
  %v7934 = vsel %vm666, %v7906, %v7688
  %v7935 = vsel %vm666, %v7907, %v7690
  %v7936 = vsel %vm666, %v7908, %v7692
  %v7937 = vsel %vm666, %v7909, %v7694
  %v7938 = vsel %vm666, %v7910, %v7696
  %v7939 = vsel %vm666, %v7911, %v7698
  %v7940 = vsel %vm666, %v7912, %v7700
  %v7941 = vsel %vm666, %v7913, %v7702
  %v7942 = vsel %vm666, %v7914, %v7704
  %v7943 = vsel %vm666, %v7915, %v7706
  %v7944 = vsel %vm666, %v7916, %v7708
  %v7945 = vsel %vm666, %v7917, %v7710
  %v7946 = vsel %vm666, %v7918, %v7712
  %v7947 = vsel %vm666, %v7919, %v7714
  %v7948 = vsel %vm666, %v7920, %v7716
  %v7949 = vsel %vm666, %v7921, %v7718
  %v7950 = vsel %vm666, %v7922, %v7720
  %v7951 = vsel %vm666, %v7923, %v7722
  %v7952 = vsel %vm666, %v7924, %v7724
  %v7953 = vsel %vm666, %v7925, %v7726
  %v7954 = vsel %vm666, %v7926, %v7728
  %v7955 = vsel %vm666, %v7927, %v7730
  %v7956 = vsel %vm666, %v7928, %v7732
  %v7957 = vsel %vm695, %v7929, %v7790
  %v7958 = vsel %vm695, %v7930, %v7792
  %v7959 = vsel %vm695, %v7931, %v7794
  %v7960 = vsel %vm695, %v7932, %v7796
  %v7961 = vsel %vm695, %v7933, %v7798
  %v7962 = vsel %vm695, %v7934, %v7800
  %v7963 = vsel %vm695, %v7935, %v7802
  %v7964 = vsel %vm695, %v7936, %v7804
  %v7965 = vsel %vm695, %v7937, %v7806
  %v7966 = vsel %vm695, %v7938, %v7808
  %v7967 = vsel %vm695, %v7939, %v7810
  %v7968 = vsel %vm695, %v7940, %v7812
  %v7969 = vsel %vm695, %v7941, %v7814
  %v7970 = vsel %vm695, %v7942, %v7816
  %v7971 = vsel %vm695, %v7943, %v7818
  %v7972 = vsel %vm695, %v7944, %v7820
  %v7973 = vsel %vm695, %v7945, %v7822
  %v7974 = vsel %vm695, %v7946, %v7824
  %v7975 = vsel %vm695, %v7947, %v7826
  %v7976 = vsel %vm695, %v7948, %v7828
  %v7977 = vsel %vm695, %v7949, %v7830
  %v7978 = vsel %vm695, %v7950, %v7832
  %v7979 = vsel %vm695, %v7951, %v7834
  %v7980 = vsel %vm695, %v7952, %v7836
  %v7981 = vsel %vm695, %v7953, %v7838
  %v7982 = vsel %vm695, %v7954, %v7840
  %v7983 = vsel %vm695, %v7955, %v7842
  %v7984 = vsel %vm695, %v7956, %v7844
  %v7985 = vld [vmem:[%s5610 + $0x2] sm:$0xff]
  %v7986 = vld [vmem:[%s5610 + $0xa] sm:$0xf]
  %v7987 = vld [vmem:[%s5610 + $0x12] sm:$0xff]
  %v7988 = vld [vmem:[%s5610 + $0x1a] sm:$0xf]
  %v7989 = vld [vmem:[%s5610 + $0x22] sm:$0xff]
  %v7990 = vld [vmem:[%s5610 + $0x2a] sm:$0xf]
  %v7991 = vld [vmem:[%s5610 + $0x32] sm:$0xff]
  %v7992 = vld [vmem:[%s5610 + $0x3a] sm:$0xf]
  %v7993 = vld [vmem:[%s5610 + $0x42] sm:$0xff]
  %v7994 = vld [vmem:[%s5610 + $0x4a] sm:$0xf]
  %v7995 = vld [vmem:[%s5610 + $0x52] sm:$0xff]
  %v7996 = vld [vmem:[%s5610 + $0x5a] sm:$0xf]
  %v7997 = vld [vmem:[%s5610 + $0x62] sm:$0xff]
  %v7998 = vld [vmem:[%s5610 + $0x6a] sm:$0xf]
  %v7999 = vld [vmem:[%s5610 + $0x72] sm:$0xff]
  %v8000 = vld [vmem:[%s5610 + $0x7a] sm:$0xf]
  %v8001 = vld [vmem:[%s5610 + $0x82] sm:$0xff]
  %v8002 = vld [vmem:[%s5610 + $0x8a] sm:$0xf]
  %v8003 = vld [vmem:[%s5610 + $0x92] sm:$0xff]
  %v8004 = vld [vmem:[%s5610 + $0x9a] sm:$0xf]
  %v8005 = vld [vmem:[%s5610 + $0xa2] sm:$0xff]
  %v8006 = vld [vmem:[%s5610 + $0xaa] sm:$0xf]
  %v8007 = vld [vmem:[%s5610 + $0xb2] sm:$0xff]
  %v8008 = vld [vmem:[%s5610 + $0xba] sm:$0xf]
  %v8009 = vld [vmem:[%s5610 + $0xc2] sm:$0xff]
  %v8010 = vld [vmem:[%s5610 + $0xca] sm:$0xf]
  %v8011 = vld [vmem:[%s5610 + $0xd2] sm:$0xff]
  %v8012 = vld [vmem:[%s5610 + $0xda] sm:$0xf]
  %8013 = vrot.lane.b32.xlu0 %v5639, 1
  %v8014 = vpop.permute.xlu0 %8013
  %8015 = vrot.lane.b32.xlu0 %v5640, 1
  %v8016 = vpop.permute.xlu0 %8015
  %8017 = vrot.lane.b32.xlu0 %v5641, 1
  %v8018 = vpop.permute.xlu0 %8017
  %8019 = vrot.lane.b32.xlu0 %v5642, 1
  %v8020 = vpop.permute.xlu0 %8019
  %8021 = vrot.lane.b32.xlu0 %v5643, 1
  %v8022 = vpop.permute.xlu0 %8021
  %8023 = vrot.lane.b32.xlu0 %v5644, 1
  %v8024 = vpop.permute.xlu0 %8023
  %8025 = vrot.lane.b32.xlu0 %v5645, 1
  %v8026 = vpop.permute.xlu0 %8025
  %8027 = vrot.lane.b32.xlu0 %v5646, 1
  %v8028 = vpop.permute.xlu0 %8027
  %8029 = vrot.lane.b32.xlu0 %v5647, 1
  %v8030 = vpop.permute.xlu0 %8029
  %8031 = vrot.lane.b32.xlu0 %v5648, 1
  %v8032 = vpop.permute.xlu0 %8031
  %8033 = vrot.lane.b32.xlu0 %v5649, 1
  %v8034 = vpop.permute.xlu0 %8033
  %8035 = vrot.lane.b32.xlu0 %v5650, 1
  %v8036 = vpop.permute.xlu0 %8035
  %8037 = vrot.lane.b32.xlu0 %v5651, 1
  %v8038 = vpop.permute.xlu0 %8037
  %8039 = vrot.lane.b32.xlu0 %v5652, 1
  %v8040 = vpop.permute.xlu0 %8039
  %8041 = vrot.lane.b32.xlu0 %v5653, 1
  %v8042 = vpop.permute.xlu0 %8041
  %8043 = vrot.lane.b32.xlu0 %v5654, 1
  %v8044 = vpop.permute.xlu0 %8043
  %8045 = vrot.lane.b32.xlu0 %v5655, 1
  %v8046 = vpop.permute.xlu0 %8045
  %8047 = vrot.lane.b32.xlu0 %v5656, 1
  %v8048 = vpop.permute.xlu0 %8047
  %8049 = vrot.lane.b32.xlu0 %v5657, 1
  %v8050 = vpop.permute.xlu0 %8049
  %8051 = vrot.lane.b32.xlu0 %v5658, 1
  %v8052 = vpop.permute.xlu0 %8051
  %8053 = vrot.lane.b32.xlu0 %v5659, 1
  %v8054 = vpop.permute.xlu0 %8053
  %8055 = vrot.lane.b32.xlu0 %v5660, 1
  %v8056 = vpop.permute.xlu0 %8055
  %8057 = vrot.lane.b32.xlu0 %v5661, 1
  %v8058 = vpop.permute.xlu0 %8057
  %8059 = vrot.lane.b32.xlu0 %v5662, 1
  %v8060 = vpop.permute.xlu0 %8059
  %8061 = vrot.lane.b32.xlu0 %v5663, 1
  %v8062 = vpop.permute.xlu0 %8061
  %8063 = vrot.lane.b32.xlu0 %v5664, 1
  %v8064 = vpop.permute.xlu0 %8063
  %8065 = vrot.lane.b32.xlu0 %v5665, 1
  %v8066 = vpop.permute.xlu0 %8065
  %8067 = vrot.lane.b32.xlu0 %v5666, 1
  %v8068 = vpop.permute.xlu0 %8067
  %8097 = vrot.lane.b32.xlu0 %v5667, 2
  %v8098 = vpop.permute.xlu0 %8097
  %8099 = vrot.lane.b32.xlu0 %v5668, 2
  %v8100 = vpop.permute.xlu0 %8099
  %8101 = vrot.lane.b32.xlu0 %v5669, 2
  %v8102 = vpop.permute.xlu0 %8101
  %8103 = vrot.lane.b32.xlu0 %v5670, 2
  %v8104 = vpop.permute.xlu0 %8103
  %8105 = vrot.lane.b32.xlu0 %v5671, 2
  %v8106 = vpop.permute.xlu0 %8105
  %8107 = vrot.lane.b32.xlu0 %v5672, 2
  %v8108 = vpop.permute.xlu0 %8107
  %8109 = vrot.lane.b32.xlu0 %v5673, 2
  %v8110 = vpop.permute.xlu0 %8109
  %8111 = vrot.lane.b32.xlu0 %v5674, 2
  %v8112 = vpop.permute.xlu0 %8111
  %8113 = vrot.lane.b32.xlu0 %v5675, 2
  %v8114 = vpop.permute.xlu0 %8113
  %8115 = vrot.lane.b32.xlu0 %v5676, 2
  %v8116 = vpop.permute.xlu0 %8115
  %8117 = vrot.lane.b32.xlu0 %v5677, 2
  %v8118 = vpop.permute.xlu0 %8117
  %8119 = vrot.lane.b32.xlu0 %v5678, 2
  %v8120 = vpop.permute.xlu0 %8119
  %8121 = vrot.lane.b32.xlu0 %v5679, 2
  %v8122 = vpop.permute.xlu0 %8121
  %8123 = vrot.lane.b32.xlu0 %v5680, 2
  %v8124 = vpop.permute.xlu0 %8123
  %8125 = vrot.lane.b32.xlu0 %v5681, 2
  %v8126 = vpop.permute.xlu0 %8125
  %8127 = vrot.lane.b32.xlu0 %v5682, 2
  %v8128 = vpop.permute.xlu0 %8127
  %8129 = vrot.lane.b32.xlu0 %v5683, 2
  %v8130 = vpop.permute.xlu0 %8129
  %8131 = vrot.lane.b32.xlu0 %v5684, 2
  %v8132 = vpop.permute.xlu0 %8131
  %8133 = vrot.lane.b32.xlu0 %v5685, 2
  %v8134 = vpop.permute.xlu0 %8133
  %8135 = vrot.lane.b32.xlu0 %v5686, 2
  %v8136 = vpop.permute.xlu0 %8135
  %8137 = vrot.lane.b32.xlu0 %v5687, 2
  %v8138 = vpop.permute.xlu0 %8137
  %8139 = vrot.lane.b32.xlu0 %v5688, 2
  %v8140 = vpop.permute.xlu0 %8139
  %8141 = vrot.lane.b32.xlu0 %v5689, 2
  %v8142 = vpop.permute.xlu0 %8141
  %8143 = vrot.lane.b32.xlu0 %v5690, 2
  %v8144 = vpop.permute.xlu0 %8143
  %8145 = vrot.lane.b32.xlu0 %v5691, 2
  %v8146 = vpop.permute.xlu0 %8145
  %8147 = vrot.lane.b32.xlu0 %v5692, 2
  %v8148 = vpop.permute.xlu0 %8147
  %8149 = vrot.lane.b32.xlu0 %v5693, 2
  %v8150 = vpop.permute.xlu0 %8149
  %8151 = vrot.lane.b32.xlu0 %v5694, 2
  %v8152 = vpop.permute.xlu0 %8151
  %8181 = vrot.lane.b32.xlu0 %v5695, 3
  %v8182 = vpop.permute.xlu0 %8181
  %8183 = vrot.lane.b32.xlu0 %v5696, 3
  %v8184 = vpop.permute.xlu0 %8183
  %8185 = vrot.lane.b32.xlu0 %v5697, 3
  %v8186 = vpop.permute.xlu0 %8185
  %8187 = vrot.lane.b32.xlu0 %v5698, 3
  %v8188 = vpop.permute.xlu0 %8187
  %8189 = vrot.lane.b32.xlu0 %v5699, 3
  %v8190 = vpop.permute.xlu0 %8189
  %8191 = vrot.lane.b32.xlu0 %v5700, 3
  %v8192 = vpop.permute.xlu0 %8191
  %8193 = vrot.lane.b32.xlu0 %v5701, 3
  %v8194 = vpop.permute.xlu0 %8193
  %8195 = vrot.lane.b32.xlu0 %v5702, 3
  %v8196 = vpop.permute.xlu0 %8195
  %8197 = vrot.lane.b32.xlu0 %v5703, 3
  %v8198 = vpop.permute.xlu0 %8197
  %8199 = vrot.lane.b32.xlu0 %v5704, 3
  %v8200 = vpop.permute.xlu0 %8199
  %8201 = vrot.lane.b32.xlu0 %v5705, 3
  %v8202 = vpop.permute.xlu0 %8201
  %8203 = vrot.lane.b32.xlu0 %v5706, 3
  %v8204 = vpop.permute.xlu0 %8203
  %8205 = vrot.lane.b32.xlu0 %v5707, 3
  %v8206 = vpop.permute.xlu0 %8205
  %8207 = vrot.lane.b32.xlu0 %v5708, 3
  %v8208 = vpop.permute.xlu0 %8207
  %8209 = vrot.lane.b32.xlu0 %v5709, 3
  %v8210 = vpop.permute.xlu0 %8209
  %8211 = vrot.lane.b32.xlu0 %v5710, 3
  %v8212 = vpop.permute.xlu0 %8211
  %8213 = vrot.lane.b32.xlu0 %v5711, 3
  %v8214 = vpop.permute.xlu0 %8213
  %8215 = vrot.lane.b32.xlu0 %v5712, 3
  %v8216 = vpop.permute.xlu0 %8215
  %8217 = vrot.lane.b32.xlu0 %v5713, 3
  %v8218 = vpop.permute.xlu0 %8217
  %8219 = vrot.lane.b32.xlu0 %v5714, 3
  %v8220 = vpop.permute.xlu0 %8219
  %8221 = vrot.lane.b32.xlu0 %v5715, 3
  %v8222 = vpop.permute.xlu0 %8221
  %8223 = vrot.lane.b32.xlu0 %v5716, 3
  %v8224 = vpop.permute.xlu0 %8223
  %8225 = vrot.lane.b32.xlu0 %v5717, 3
  %v8226 = vpop.permute.xlu0 %8225
  %8227 = vrot.lane.b32.xlu0 %v5718, 3
  %v8228 = vpop.permute.xlu0 %8227
  %8229 = vrot.lane.b32.xlu0 %v5719, 3
  %v8230 = vpop.permute.xlu0 %8229
  %8231 = vrot.lane.b32.xlu0 %v5720, 3
  %v8232 = vpop.permute.xlu0 %8231
  %8233 = vrot.lane.b32.xlu0 %v5721, 3
  %v8234 = vpop.permute.xlu0 %8233
  %8235 = vrot.lane.b32.xlu0 %v5722, 3
  %v8236 = vpop.permute.xlu0 %8235
  %8293 = vrot.lane.b32.xlu0 %v7985, 4
  %v8294 = vpop.permute.xlu0 %8293
  %8295 = vrot.lane.b32.xlu0 %v7986, 4
  %v8296 = vpop.permute.xlu0 %8295
  %8297 = vrot.lane.b32.xlu0 %v7987, 4
  %v8298 = vpop.permute.xlu0 %8297
  %8299 = vrot.lane.b32.xlu0 %v7988, 4
  %v8300 = vpop.permute.xlu0 %8299
  %8301 = vrot.lane.b32.xlu0 %v7989, 4
  %v8302 = vpop.permute.xlu0 %8301
  %8303 = vrot.lane.b32.xlu0 %v7990, 4
  %v8304 = vpop.permute.xlu0 %8303
  %8305 = vrot.lane.b32.xlu0 %v7991, 4
  %v8306 = vpop.permute.xlu0 %8305
  %8307 = vrot.lane.b32.xlu0 %v7992, 4
  %v8308 = vpop.permute.xlu0 %8307
  %8309 = vrot.lane.b32.xlu0 %v7993, 4
  %v8310 = vpop.permute.xlu0 %8309
  %8311 = vrot.lane.b32.xlu0 %v7994, 4
  %v8312 = vpop.permute.xlu0 %8311
  %8313 = vrot.lane.b32.xlu0 %v7995, 4
  %v8314 = vpop.permute.xlu0 %8313
  %8315 = vrot.lane.b32.xlu0 %v7996, 4
  %v8316 = vpop.permute.xlu0 %8315
  %8317 = vrot.lane.b32.xlu0 %v7997, 4
  %v8318 = vpop.permute.xlu0 %8317
  %8319 = vrot.lane.b32.xlu0 %v7998, 4
  %v8320 = vpop.permute.xlu0 %8319
  %8321 = vrot.lane.b32.xlu0 %v7999, 4
  %v8322 = vpop.permute.xlu0 %8321
  %8323 = vrot.lane.b32.xlu0 %v8000, 4
  %v8324 = vpop.permute.xlu0 %8323
  %8325 = vrot.lane.b32.xlu0 %v8001, 4
  %v8326 = vpop.permute.xlu0 %8325
  %8327 = vrot.lane.b32.xlu0 %v8002, 4
  %v8328 = vpop.permute.xlu0 %8327
  %8329 = vrot.lane.b32.xlu0 %v8003, 4
  %v8330 = vpop.permute.xlu0 %8329
  %8331 = vrot.lane.b32.xlu0 %v8004, 4
  %v8332 = vpop.permute.xlu0 %8331
  %8333 = vrot.lane.b32.xlu0 %v8005, 4
  %v8334 = vpop.permute.xlu0 %8333
  %8335 = vrot.lane.b32.xlu0 %v8006, 4
  %v8336 = vpop.permute.xlu0 %8335
  %8337 = vrot.lane.b32.xlu0 %v8007, 4
  %v8338 = vpop.permute.xlu0 %8337
  %8339 = vrot.lane.b32.xlu0 %v8008, 4
  %v8340 = vpop.permute.xlu0 %8339
  %8341 = vrot.lane.b32.xlu0 %v8009, 4
  %v8342 = vpop.permute.xlu0 %8341
  %8343 = vrot.lane.b32.xlu0 %v8010, 4
  %v8344 = vpop.permute.xlu0 %8343
  %8345 = vrot.lane.b32.xlu0 %v8011, 4
  %v8346 = vpop.permute.xlu0 %8345
  %8347 = vrot.lane.b32.xlu0 %v8012, 4
  %v8348 = vpop.permute.xlu0 %8347
  %v8377 = vsel %vm608, %v5611, %v8014
  %v8378 = vsel %vm608, %v5612, %v8016
  %v8379 = vsel %vm608, %v5613, %v8018
  %v8380 = vsel %vm608, %v5614, %v8020
  %v8381 = vsel %vm608, %v5615, %v8022
  %v8382 = vsel %vm608, %v5616, %v8024
  %v8383 = vsel %vm608, %v5617, %v8026
  %v8384 = vsel %vm608, %v5618, %v8028
  %v8385 = vsel %vm608, %v5619, %v8030
  %v8386 = vsel %vm608, %v5620, %v8032
  %v8387 = vsel %vm608, %v5621, %v8034
  %v8388 = vsel %vm608, %v5622, %v8036
  %v8389 = vsel %vm608, %v5623, %v8038
  %v8390 = vsel %vm608, %v5624, %v8040
  %v8391 = vsel %vm608, %v5625, %v8042
  %v8392 = vsel %vm608, %v5626, %v8044
  %v8393 = vsel %vm608, %v5627, %v8046
  %v8394 = vsel %vm608, %v5628, %v8048
  %v8395 = vsel %vm608, %v5629, %v8050
  %v8396 = vsel %vm608, %v5630, %v8052
  %v8397 = vsel %vm608, %v5631, %v8054
  %v8398 = vsel %vm608, %v5632, %v8056
  %v8399 = vsel %vm608, %v5633, %v8058
  %v8400 = vsel %vm608, %v5634, %v8060
  %v8401 = vsel %vm608, %v5635, %v8062
  %v8402 = vsel %vm608, %v5636, %v8064
  %v8403 = vsel %vm608, %v5637, %v8066
  %v8404 = vsel %vm608, %v5638, %v8068
  %v8405 = vsel %vm637, %v8377, %v8098
  %v8406 = vsel %vm637, %v8378, %v8100
  %v8407 = vsel %vm637, %v8379, %v8102
  %v8408 = vsel %vm637, %v8380, %v8104
  %v8409 = vsel %vm637, %v8381, %v8106
  %v8410 = vsel %vm637, %v8382, %v8108
  %v8411 = vsel %vm637, %v8383, %v8110
  %v8412 = vsel %vm637, %v8384, %v8112
  %v8413 = vsel %vm637, %v8385, %v8114
  %v8414 = vsel %vm637, %v8386, %v8116
  %v8415 = vsel %vm637, %v8387, %v8118
  %v8416 = vsel %vm637, %v8388, %v8120
  %v8417 = vsel %vm637, %v8389, %v8122
  %v8418 = vsel %vm637, %v8390, %v8124
  %v8419 = vsel %vm637, %v8391, %v8126
  %v8420 = vsel %vm637, %v8392, %v8128
  %v8421 = vsel %vm637, %v8393, %v8130
  %v8422 = vsel %vm637, %v8394, %v8132
  %v8423 = vsel %vm637, %v8395, %v8134
  %v8424 = vsel %vm637, %v8396, %v8136
  %v8425 = vsel %vm637, %v8397, %v8138
  %v8426 = vsel %vm637, %v8398, %v8140
  %v8427 = vsel %vm637, %v8399, %v8142
  %v8428 = vsel %vm637, %v8400, %v8144
  %v8429 = vsel %vm637, %v8401, %v8146
  %v8430 = vsel %vm637, %v8402, %v8148
  %v8431 = vsel %vm637, %v8403, %v8150
  %v8432 = vsel %vm637, %v8404, %v8152
  %v8433 = vsel %vm666, %v8405, %v8182
  %v8434 = vsel %vm666, %v8406, %v8184
  %v8435 = vsel %vm666, %v8407, %v8186
  %v8436 = vsel %vm666, %v8408, %v8188
  %v8437 = vsel %vm666, %v8409, %v8190
  %v8438 = vsel %vm666, %v8410, %v8192
  %v8439 = vsel %vm666, %v8411, %v8194
  %v8440 = vsel %vm666, %v8412, %v8196
  %v8441 = vsel %vm666, %v8413, %v8198
  %v8442 = vsel %vm666, %v8414, %v8200
  %v8443 = vsel %vm666, %v8415, %v8202
  %v8444 = vsel %vm666, %v8416, %v8204
  %v8445 = vsel %vm666, %v8417, %v8206
  %v8446 = vsel %vm666, %v8418, %v8208
  %v8447 = vsel %vm666, %v8419, %v8210
  %v8448 = vsel %vm666, %v8420, %v8212
  %v8449 = vsel %vm666, %v8421, %v8214
  %v8450 = vsel %vm666, %v8422, %v8216
  %v8451 = vsel %vm666, %v8423, %v8218
  %v8452 = vsel %vm666, %v8424, %v8220
  %v8453 = vsel %vm666, %v8425, %v8222
  %v8454 = vsel %vm666, %v8426, %v8224
  %v8455 = vsel %vm666, %v8427, %v8226
  %v8456 = vsel %vm666, %v8428, %v8228
  %v8457 = vsel %vm666, %v8429, %v8230
  %v8458 = vsel %vm666, %v8430, %v8232
  %v8459 = vsel %vm666, %v8431, %v8234
  %v8460 = vsel %vm666, %v8432, %v8236
  %v8461 = vsel %vm695, %v8433, %v8294
  %v8462 = vsel %vm695, %v8434, %v8296
  %v8463 = vsel %vm695, %v8435, %v8298
  %v8464 = vsel %vm695, %v8436, %v8300
  %v8465 = vsel %vm695, %v8437, %v8302
  %v8466 = vsel %vm695, %v8438, %v8304
  %v8467 = vsel %vm695, %v8439, %v8306
  %v8468 = vsel %vm695, %v8440, %v8308
  %v8469 = vsel %vm695, %v8441, %v8310
  %v8470 = vsel %vm695, %v8442, %v8312
  %v8471 = vsel %vm695, %v8443, %v8314
  %v8472 = vsel %vm695, %v8444, %v8316
  %v8473 = vsel %vm695, %v8445, %v8318
  %v8474 = vsel %vm695, %v8446, %v8320
  %v8475 = vsel %vm695, %v8447, %v8322
  %v8476 = vsel %vm695, %v8448, %v8324
  %v8477 = vsel %vm695, %v8449, %v8326
  %v8478 = vsel %vm695, %v8450, %v8328
  %v8479 = vsel %vm695, %v8451, %v8330
  %v8480 = vsel %vm695, %v8452, %v8332
  %v8481 = vsel %vm695, %v8453, %v8334
  %v8482 = vsel %vm695, %v8454, %v8336
  %v8483 = vsel %vm695, %v8455, %v8338
  %v8484 = vsel %vm695, %v8456, %v8340
  %v8485 = vsel %vm695, %v8457, %v8342
  %v8486 = vsel %vm695, %v8458, %v8344
  %v8487 = vsel %vm695, %v8459, %v8346
  %v8488 = vsel %vm695, %v8460, %v8348
  %8513 = vrot.lane.b32.xlu0 %v8461, 5
  %v8514 = vpop.permute.xlu0 %8513
  %8515 = vrot.lane.b32.xlu0 %v8462, 5
  %v8516 = vpop.permute.xlu0 %8515
  %8517 = vrot.lane.b32.xlu0 %v8463, 5
  %v8518 = vpop.permute.xlu0 %8517
  %8519 = vrot.lane.b32.xlu0 %v8464, 5
  %v8520 = vpop.permute.xlu0 %8519
  %8521 = vrot.lane.b32.xlu0 %v8465, 5
  %v8522 = vpop.permute.xlu0 %8521
  %8523 = vrot.lane.b32.xlu0 %v8466, 5
  %v8524 = vpop.permute.xlu0 %8523
  %8525 = vrot.lane.b32.xlu0 %v8467, 5
  %v8526 = vpop.permute.xlu0 %8525
  %8527 = vrot.lane.b32.xlu0 %v8468, 5
  %v8528 = vpop.permute.xlu0 %8527
  %8529 = vrot.lane.b32.xlu0 %v8469, 5
  %v8530 = vpop.permute.xlu0 %8529
  %8531 = vrot.lane.b32.xlu0 %v8470, 5
  %v8532 = vpop.permute.xlu0 %8531
  %8533 = vrot.lane.b32.xlu0 %v8471, 5
  %v8534 = vpop.permute.xlu0 %8533
  %8535 = vrot.lane.b32.xlu0 %v8472, 5
  %v8536 = vpop.permute.xlu0 %8535
  %8537 = vrot.lane.b32.xlu0 %v8473, 5
  %v8538 = vpop.permute.xlu0 %8537
  %8539 = vrot.lane.b32.xlu0 %v8474, 5
  %v8540 = vpop.permute.xlu0 %8539
  %8541 = vrot.lane.b32.xlu0 %v8475, 5
  %v8542 = vpop.permute.xlu0 %8541
  %8543 = vrot.lane.b32.xlu0 %v8476, 5
  %v8544 = vpop.permute.xlu0 %8543
  %8545 = vrot.lane.b32.xlu0 %v8477, 5
  %v8546 = vpop.permute.xlu0 %8545
  %8547 = vrot.lane.b32.xlu0 %v8478, 5
  %v8548 = vpop.permute.xlu0 %8547
  %8549 = vrot.lane.b32.xlu0 %v8479, 5
  %v8550 = vpop.permute.xlu0 %8549
  %8551 = vrot.lane.b32.xlu0 %v8480, 5
  %v8552 = vpop.permute.xlu0 %8551
  %8553 = vrot.lane.b32.xlu0 %v8481, 5
  %v8554 = vpop.permute.xlu0 %8553
  %8555 = vrot.lane.b32.xlu0 %v8482, 5
  %v8556 = vpop.permute.xlu0 %8555
  %8557 = vrot.lane.b32.xlu0 %v8483, 5
  %v8558 = vpop.permute.xlu0 %8557
  %8559 = vrot.lane.b32.xlu0 %v8484, 5
  %v8560 = vpop.permute.xlu0 %8559
  %8609 = vrot.lane.b32.xlu0 %v7959, 10
  %v8610 = vpop.permute.xlu0 %8609
  %8611 = vrot.lane.b32.xlu0 %v7960, 10
  %v8612 = vpop.permute.xlu0 %8611
  %8613 = vrot.lane.b32.xlu0 %v7961, 10
  %v8614 = vpop.permute.xlu0 %8613
  %8615 = vrot.lane.b32.xlu0 %v7962, 10
  %v8616 = vpop.permute.xlu0 %8615
  %8617 = vrot.lane.b32.xlu0 %v7963, 10
  %v8618 = vpop.permute.xlu0 %8617
  %8619 = vrot.lane.b32.xlu0 %v7964, 10
  %v8620 = vpop.permute.xlu0 %8619
  %8621 = vrot.lane.b32.xlu0 %v7965, 10
  %v8622 = vpop.permute.xlu0 %8621
  %8623 = vrot.lane.b32.xlu0 %v7966, 10
  %v8624 = vpop.permute.xlu0 %8623
  %8625 = vrot.lane.b32.xlu0 %v7967, 10
  %v8626 = vpop.permute.xlu0 %8625
  %8627 = vrot.lane.b32.xlu0 %v7968, 10
  %v8628 = vpop.permute.xlu0 %8627
  %8629 = vrot.lane.b32.xlu0 %v7969, 10
  %v8630 = vpop.permute.xlu0 %8629
  %8631 = vrot.lane.b32.xlu0 %v7970, 10
  %v8632 = vpop.permute.xlu0 %8631
  %8633 = vrot.lane.b32.xlu0 %v7971, 10
  %v8634 = vpop.permute.xlu0 %8633
  %8635 = vrot.lane.b32.xlu0 %v7972, 10
  %v8636 = vpop.permute.xlu0 %8635
  %8637 = vrot.lane.b32.xlu0 %v7973, 10
  %v8638 = vpop.permute.xlu0 %8637
  %8639 = vrot.lane.b32.xlu0 %v7974, 10
  %v8640 = vpop.permute.xlu0 %8639
  %8641 = vrot.lane.b32.xlu0 %v7975, 10
  %v8642 = vpop.permute.xlu0 %8641
  %8643 = vrot.lane.b32.xlu0 %v7976, 10
  %v8644 = vpop.permute.xlu0 %8643
  %8645 = vrot.lane.b32.xlu0 %v7977, 10
  %v8646 = vpop.permute.xlu0 %8645
  %8647 = vrot.lane.b32.xlu0 %v7978, 10
  %v8648 = vpop.permute.xlu0 %8647
  %8649 = vrot.lane.b32.xlu0 %v7979, 10
  %v8650 = vpop.permute.xlu0 %8649
  %8651 = vrot.lane.b32.xlu0 %v7980, 10
  %v8652 = vpop.permute.xlu0 %8651
  %8653 = vrot.lane.b32.xlu0 %v7981, 10
  %v8654 = vpop.permute.xlu0 %8653
  %8655 = vrot.lane.b32.xlu0 %v7982, 10
  %v8656 = vpop.permute.xlu0 %8655
  %8683 = vrot.lane.b32.xlu0 %v8463, 15
  %v8684 = vpop.permute.xlu0 %8683
  %8685 = vrot.lane.b32.xlu0 %v8464, 15
  %v8686 = vpop.permute.xlu0 %8685
  %8687 = vrot.lane.b32.xlu0 %v8465, 15
  %v8688 = vpop.permute.xlu0 %8687
  %8689 = vrot.lane.b32.xlu0 %v8466, 15
  %v8690 = vpop.permute.xlu0 %8689
  %8691 = vrot.lane.b32.xlu0 %v8467, 15
  %v8692 = vpop.permute.xlu0 %8691
  %8693 = vrot.lane.b32.xlu0 %v8468, 15
  %v8694 = vpop.permute.xlu0 %8693
  %8695 = vrot.lane.b32.xlu0 %v8469, 15
  %v8696 = vpop.permute.xlu0 %8695
  %8697 = vrot.lane.b32.xlu0 %v8470, 15
  %v8698 = vpop.permute.xlu0 %8697
  %8699 = vrot.lane.b32.xlu0 %v8471, 15
  %v8700 = vpop.permute.xlu0 %8699
  %8701 = vrot.lane.b32.xlu0 %v8472, 15
  %v8702 = vpop.permute.xlu0 %8701
  %8703 = vrot.lane.b32.xlu0 %v8473, 15
  %v8704 = vpop.permute.xlu0 %8703
  %8705 = vrot.lane.b32.xlu0 %v8474, 15
  %v8706 = vpop.permute.xlu0 %8705
  %8707 = vrot.lane.b32.xlu0 %v8475, 15
  %v8708 = vpop.permute.xlu0 %8707
  %8709 = vrot.lane.b32.xlu0 %v8476, 15
  %v8710 = vpop.permute.xlu0 %8709
  %8711 = vrot.lane.b32.xlu0 %v8477, 15
  %v8712 = vpop.permute.xlu0 %8711
  %8713 = vrot.lane.b32.xlu0 %v8478, 15
  %v8714 = vpop.permute.xlu0 %8713
  %8715 = vrot.lane.b32.xlu0 %v8479, 15
  %v8716 = vpop.permute.xlu0 %8715
  %8717 = vrot.lane.b32.xlu0 %v8480, 15
  %v8718 = vpop.permute.xlu0 %8717
  %8719 = vrot.lane.b32.xlu0 %v8481, 15
  %v8720 = vpop.permute.xlu0 %8719
  %8721 = vrot.lane.b32.xlu0 %v8482, 15
  %v8722 = vpop.permute.xlu0 %8721
  %8723 = vrot.lane.b32.xlu0 %v8483, 15
  %v8724 = vpop.permute.xlu0 %8723
  %8725 = vrot.lane.b32.xlu0 %v8484, 15
  %v8726 = vpop.permute.xlu0 %8725
  %8727 = vrot.lane.b32.xlu0 %v8485, 15
  %v8728 = vpop.permute.xlu0 %8727
  %8729 = vrot.lane.b32.xlu0 %v8486, 15
  %v8730 = vpop.permute.xlu0 %8729
  %8757 = vrot.lane.b32.xlu0 %v7961, 20
  %v8758 = vpop.permute.xlu0 %8757
  %8759 = vrot.lane.b32.xlu0 %v7962, 20
  %v8760 = vpop.permute.xlu0 %8759
  %8761 = vrot.lane.b32.xlu0 %v7963, 20
  %v8762 = vpop.permute.xlu0 %8761
  %8763 = vrot.lane.b32.xlu0 %v7964, 20
  %v8764 = vpop.permute.xlu0 %8763
  %8765 = vrot.lane.b32.xlu0 %v7965, 20
  %v8766 = vpop.permute.xlu0 %8765
  %8767 = vrot.lane.b32.xlu0 %v7966, 20
  %v8768 = vpop.permute.xlu0 %8767
  %8769 = vrot.lane.b32.xlu0 %v7967, 20
  %v8770 = vpop.permute.xlu0 %8769
  %8771 = vrot.lane.b32.xlu0 %v7968, 20
  %v8772 = vpop.permute.xlu0 %8771
  %8773 = vrot.lane.b32.xlu0 %v7969, 20
  %v8774 = vpop.permute.xlu0 %8773
  %8775 = vrot.lane.b32.xlu0 %v7970, 20
  %v8776 = vpop.permute.xlu0 %8775
  %8777 = vrot.lane.b32.xlu0 %v7971, 20
  %v8778 = vpop.permute.xlu0 %8777
  %8779 = vrot.lane.b32.xlu0 %v7972, 20
  %v8780 = vpop.permute.xlu0 %8779
  %8781 = vrot.lane.b32.xlu0 %v7973, 20
  %v8782 = vpop.permute.xlu0 %8781
  %8783 = vrot.lane.b32.xlu0 %v7974, 20
  %v8784 = vpop.permute.xlu0 %8783
  %8785 = vrot.lane.b32.xlu0 %v7975, 20
  %v8786 = vpop.permute.xlu0 %8785
  %8787 = vrot.lane.b32.xlu0 %v7976, 20
  %v8788 = vpop.permute.xlu0 %8787
  %8789 = vrot.lane.b32.xlu0 %v7977, 20
  %v8790 = vpop.permute.xlu0 %8789
  %8791 = vrot.lane.b32.xlu0 %v7978, 20
  %v8792 = vpop.permute.xlu0 %8791
  %8793 = vrot.lane.b32.xlu0 %v7979, 20
  %v8794 = vpop.permute.xlu0 %8793
  %8795 = vrot.lane.b32.xlu0 %v7980, 20
  %v8796 = vpop.permute.xlu0 %8795
  %8797 = vrot.lane.b32.xlu0 %v7981, 20
  %v8798 = vpop.permute.xlu0 %8797
  %8799 = vrot.lane.b32.xlu0 %v7982, 20
  %v8800 = vpop.permute.xlu0 %8799
  %8801 = vrot.lane.b32.xlu0 %v7983, 20
  %v8802 = vpop.permute.xlu0 %8801
  %8803 = vrot.lane.b32.xlu0 %v7984, 20
  %v8804 = vpop.permute.xlu0 %8803
  %v8829 = vsel %vm1766, %v7957, %v8514
  %v8830 = vsel %vm1766, %v7958, %v8516
  %v8831 = vsel %vm1766, %v7959, %v8518
  %v8832 = vsel %vm1766, %v7960, %v8520
  %v8833 = vsel %vm1766, %v7961, %v8522
  %v8834 = vsel %vm1766, %v7962, %v8524
  %v8835 = vsel %vm1766, %v7963, %v8526
  %v8836 = vsel %vm1766, %v7964, %v8528
  %v8837 = vsel %vm1766, %v7965, %v8530
  %v8838 = vsel %vm1766, %v7966, %v8532
  %v8839 = vsel %vm1766, %v7967, %v8534
  %v8840 = vsel %vm1766, %v7968, %v8536
  %v8841 = vsel %vm1766, %v7969, %v8538
  %v8842 = vsel %vm1766, %v7970, %v8540
  %v8843 = vsel %vm1766, %v7971, %v8542
  %v8844 = vsel %vm1766, %v7972, %v8544
  %v8845 = vsel %vm1766, %v7973, %v8546
  %v8846 = vsel %vm1766, %v7974, %v8548
  %v8847 = vsel %vm1766, %v7975, %v8550
  %v8848 = vsel %vm1766, %v7976, %v8552
  %v8849 = vsel %vm1766, %v7977, %v8554
  %v8850 = vsel %vm1766, %v7978, %v8556
  %v8851 = vsel %vm1766, %v7979, %v8558
  %v8852 = vsel %vm1766, %v7980, %v8560
  %v8853 = vsel %vm1791, %v8829, %v8610
  %v8854 = vsel %vm1791, %v8830, %v8612
  %v8855 = vsel %vm1791, %v8831, %v8614
  %v8856 = vsel %vm1791, %v8832, %v8616
  %v8857 = vsel %vm1791, %v8833, %v8618
  %v8858 = vsel %vm1791, %v8834, %v8620
  %v8859 = vsel %vm1791, %v8835, %v8622
  %v8860 = vsel %vm1791, %v8836, %v8624
  %v8861 = vsel %vm1791, %v8837, %v8626
  %v8862 = vsel %vm1791, %v8838, %v8628
  %v8863 = vsel %vm1791, %v8839, %v8630
  %v8864 = vsel %vm1791, %v8840, %v8632
  %v8865 = vsel %vm1791, %v8841, %v8634
  %v8866 = vsel %vm1791, %v8842, %v8636
  %v8867 = vsel %vm1791, %v8843, %v8638
  %v8868 = vsel %vm1791, %v8844, %v8640
  %v8869 = vsel %vm1791, %v8845, %v8642
  %v8870 = vsel %vm1791, %v8846, %v8644
  %v8871 = vsel %vm1791, %v8847, %v8646
  %v8872 = vsel %vm1791, %v8848, %v8648
  %v8873 = vsel %vm1791, %v8849, %v8650
  %v8874 = vsel %vm1791, %v8850, %v8652
  %v8875 = vsel %vm1791, %v8851, %v8654
  %v8876 = vsel %vm1791, %v8852, %v8656
  %v8877 = vsel %vm1816, %v8853, %v8684
  %v8878 = vsel %vm1816, %v8854, %v8686
  %v8879 = vsel %vm1816, %v8855, %v8688
  %v8880 = vsel %vm1816, %v8856, %v8690
  %v8881 = vsel %vm1816, %v8857, %v8692
  %v8882 = vsel %vm1816, %v8858, %v8694
  %v8883 = vsel %vm1816, %v8859, %v8696
  %v8884 = vsel %vm1816, %v8860, %v8698
  %v8885 = vsel %vm1816, %v8861, %v8700
  %v8886 = vsel %vm1816, %v8862, %v8702
  %v8887 = vsel %vm1816, %v8863, %v8704
  %v8888 = vsel %vm1816, %v8864, %v8706
  %v8889 = vsel %vm1816, %v8865, %v8708
  %v8890 = vsel %vm1816, %v8866, %v8710
  %v8891 = vsel %vm1816, %v8867, %v8712
  %v8892 = vsel %vm1816, %v8868, %v8714
  %v8893 = vsel %vm1816, %v8869, %v8716
  %v8894 = vsel %vm1816, %v8870, %v8718
  %v8895 = vsel %vm1816, %v8871, %v8720
  %v8896 = vsel %vm1816, %v8872, %v8722
  %v8897 = vsel %vm1816, %v8873, %v8724
  %v8898 = vsel %vm1816, %v8874, %v8726
  %v8899 = vsel %vm1816, %v8875, %v8728
  %v8900 = vsel %vm1816, %v8876, %v8730
  %v8901 = vsel %vm1841, %v8877, %v8758
  %v8902 = vsel %vm1841, %v8878, %v8760
  %v8903 = vsel %vm1841, %v8879, %v8762
  %v8904 = vsel %vm1841, %v8880, %v8764
  %v8905 = vsel %vm1841, %v8881, %v8766
  %v8906 = vsel %vm1841, %v8882, %v8768
  %v8907 = vsel %vm1841, %v8883, %v8770
  %v8908 = vsel %vm1841, %v8884, %v8772
  %v8909 = vsel %vm1841, %v8885, %v8774
  %v8910 = vsel %vm1841, %v8886, %v8776
  %v8911 = vsel %vm1841, %v8887, %v8778
  %v8912 = vsel %vm1841, %v8888, %v8780
  %v8913 = vsel %vm1841, %v8889, %v8782
  %v8914 = vsel %vm1841, %v8890, %v8784
  %v8915 = vsel %vm1841, %v8891, %v8786
  %v8916 = vsel %vm1841, %v8892, %v8788
  %v8917 = vsel %vm1841, %v8893, %v8790
  %v8918 = vsel %vm1841, %v8894, %v8792
  %v8919 = vsel %vm1841, %v8895, %v8794
  %v8920 = vsel %vm1841, %v8896, %v8796
  %v8921 = vsel %vm1841, %v8897, %v8798
  %v8922 = vsel %vm1841, %v8898, %v8800
  %v8923 = vsel %vm1841, %v8899, %v8802
  %v8924 = vsel %vm1841, %v8900, %v8804
  %v8927 = vrot.slane %v8903, 4
  %v8928 = vrot.slane %v8904, 4
  %v8929 = vsel %vm1868, %v8927, %v8928
  %v8933 = vrot.slane %v8907, 4
  %v8934 = vrot.slane %v8908, 4
  %v8935 = vsel %vm1868, %v8933, %v8934
  %v8939 = vrot.slane %v8911, 4
  %v8940 = vrot.slane %v8912, 4
  %v8941 = vsel %vm1868, %v8939, %v8940
  %v8945 = vrot.slane %v8915, 4
  %v8946 = vrot.slane %v8916, 4
  %v8947 = vsel %vm1868, %v8945, %v8946
  %v8951 = vrot.slane %v8919, 4
  %v8952 = vrot.slane %v8920, 4
  %v8953 = vsel %vm1868, %v8951, %v8952
  %v8957 = vrot.slane %v8923, 4
  %v8958 = vrot.slane %v8924, 4
  %v8959 = vsel %vm1868, %v8957, %v8958
  %v8961 = vsel %vm1868, %v8902, %v8927
  %v8962 = vsel %vm1868, %v8906, %v8933
  %v8963 = vsel %vm1868, %v8910, %v8939
  %v8964 = vsel %vm1868, %v8914, %v8945
  %v8965 = vsel %vm1868, %v8918, %v8951
  %v8966 = vsel %vm1868, %v8922, %v8957
  %v8968 = vsel %vm1912, %v8901, 0
  %v8971 = vsel %vm1912, %v8961, 0
  %v8973 = vsel %vm1912, %v8929, 0
  %v8976 = vsel %vm1912, %v8905, 0
  %v8979 = vsel %vm1912, %v8962, 0
  %v8981 = vsel %vm1912, %v8935, 0
  %v8984 = vsel %vm1912, %v8909, 0
  %v8987 = vsel %vm1912, %v8963, 0
  %v8989 = vsel %vm1912, %v8941, 0
  %v8992 = vsel %vm1912, %v8913, 0
  %v8995 = vsel %vm1912, %v8964, 0
  %v8997 = vsel %vm1912, %v8947, 0
  %v9000 = vsel %vm1912, %v8917, 0
  %v9003 = vsel %vm1912, %v8965, 0
  %v9005 = vsel %vm1912, %v8953, 0
  %v9008 = vsel %vm1912, %v8921, 0
  %v9011 = vsel %vm1912, %v8966, 0
  %v9013 = vsel %vm1912, %v8959, 0
  %9015 = vmatpush.msra.mxu0 0.0
  %9016 = vmatpush.msra.mxu0 0.0
  %9017 = vmatpush.msra.mxu0 0.0
  %9018 = vmatpush.msra.mxu0 0.0
  %9019 = vmatpush.msra.mxu0 0.0
  %9020 = vmatpush.msra.mxu0 0.0
  %9021 = vmatpush.msra.mxu0 0.0
  %9022 = vmatpush.msra.mxu0 0.0
  %9023 = vmatpush.msra.mxu0 0.0
  %9024 = vmatpush.msra.mxu0 0.0
  %9025 = vmatpush.msra.mxu0 0.0
  %9026 = vmatpush.msra.mxu0 0.0
  %9027 = vmatpush.msra.mxu0 %v1963
  %9028 = vmatpush.msra.mxu0 %v16
  %9029 = vmatpush.msra.mxu0 %v15
  %9030 = vmatpush.msra.mxu0 %v14
  %9031 = vmatmul.f32.gmra.mxu0 %v8968
  %v9032 = vpop.f32.mrf.mxu0
  %v9033 = vadd.f32 %v1910, %v9032
  %9034 = vmatmul.f32.gmra.mxu0 %v8971
  %v9035 = vpop.f32.mrf.mxu0
  %v9036 = vadd.f32 %v1910, %v9035
  %9037 = vmatmul.f32.gmra.mxu0 %v8973
  %v9038 = vpop.f32.mrf.mxu0
  %v9039 = vadd.f32 %v1910, %v9038
  %9040 = vmatmul.f32.gmra.mxu0 %v8976
  %v9041 = vpop.f32.mrf.mxu0
  %v9042 = vadd.f32 %v1910, %v9041
  %9043 = vmatmul.f32.gmra.mxu0 %v8979
  %v9044 = vpop.f32.mrf.mxu0
  %v9045 = vadd.f32 %v1910, %v9044
  %9046 = vmatmul.f32.gmra.mxu0 %v8981
  %v9047 = vpop.f32.mrf.mxu0
  %v9048 = vadd.f32 %v1910, %v9047
  %9049 = vmatmul.f32.gmra.mxu0 %v8984
  %v9050 = vpop.f32.mrf.mxu0
  %v9051 = vadd.f32 %v1910, %v9050
  %9052 = vmatmul.f32.gmra.mxu0 %v8987
  %v9053 = vpop.f32.mrf.mxu0
  %v9054 = vadd.f32 %v1910, %v9053
  %9055 = vmatmul.f32.gmra.mxu0 %v8989
  %v9056 = vpop.f32.mrf.mxu0
  %v9057 = vadd.f32 %v1910, %v9056
  %9058 = vmatmul.f32.gmra.mxu0 %v8992
  %v9059 = vpop.f32.mrf.mxu0
  %v9060 = vadd.f32 %v1910, %v9059
  %9061 = vmatmul.f32.gmra.mxu0 %v8995
  %v9062 = vpop.f32.mrf.mxu0
  %v9063 = vadd.f32 %v1910, %v9062
  %9064 = vmatmul.f32.gmra.mxu0 %v8997
  %v9065 = vpop.f32.mrf.mxu0
  %v9066 = vadd.f32 %v1910, %v9065
  %9067 = vmatmul.f32.gmra.mxu0 %v9000
  %v9068 = vpop.f32.mrf.mxu0
  %v9069 = vadd.f32 %v1910, %v9068
  %9070 = vmatmul.f32.gmra.mxu0 %v9003
  %v9071 = vpop.f32.mrf.mxu0
  %v9072 = vadd.f32 %v1910, %v9071
  %9073 = vmatmul.f32.gmra.mxu0 %v9005
  %v9074 = vpop.f32.mrf.mxu0
  %v9075 = vadd.f32 %v1910, %v9074
  %9076 = vmatmul.f32.gmra.mxu0 %v9008
  %v9077 = vpop.f32.mrf.mxu0
  %v9078 = vadd.f32 %v1910, %v9077
  %9079 = vmatmul.f32.gmra.mxu0 %v9011
  %v9080 = vpop.f32.mrf.mxu0
  %v9081 = vadd.f32 %v1910, %v9080
  %9082 = vmatmul.f32.gmra.mxu0 %v9013
  %v9083 = vpop.f32.mrf.mxu0
  %v9084 = vadd.f32 %v1910, %v9083
  %9085 = vdwg.mxu0
  %v9086 = vmax.f32 %v9033, 0.0
  %v9087 = vmax.f32 %v9036, 0.0
  %v9088 = vmax.f32 %v9039, 0.0
  %v9089 = vmax.f32 %v9042, 0.0
  %v9090 = vmax.f32 %v9045, 0.0
  %v9091 = vmax.f32 %v9048, 0.0
  %v9092 = vmax.f32 %v9051, 0.0
  %v9093 = vmax.f32 %v9054, 0.0
  %v9094 = vmax.f32 %v9057, 0.0
  %v9095 = vmax.f32 %v9060, 0.0
  %v9096 = vmax.f32 %v9063, 0.0
  %v9097 = vmax.f32 %v9066, 0.0
  %v9098 = vmax.f32 %v9069, 0.0
  %v9099 = vmax.f32 %v9072, 0.0
  %v9100 = vmax.f32 %v9075, 0.0
  %v9101 = vmax.f32 %v9078, 0.0
  %v9102 = vmax.f32 %v9081, 0.0
  %v9103 = vmax.f32 %v9084, 0.0
  %v9104 = vmax.f32 %v7463, %v9086
  %v9105 = vmax.f32 %v7464, %v9087
  %v9106 = vmax.f32 %v7465, %v9088
  %v9107 = vmax.f32 %v7466, %v9089
  %v9108 = vmax.f32 %v7467, %v9090
  %v9109 = vmax.f32 %v7468, %v9091
  %v9110 = vmax.f32 %v7469, %v9092
  %v9111 = vmax.f32 %v7470, %v9093
  %v9112 = vmax.f32 %v7471, %v9094
  %v9113 = vmax.f32 %v7472, %v9095
  %v9114 = vmax.f32 %v7473, %v9096
  %v9115 = vmax.f32 %v7474, %v9097
  %v9116 = vmax.f32 %v7475, %v9098
  %v9117 = vmax.f32 %v7476, %v9099
  %v9118 = vmax.f32 %v7477, %v9100
  %v9119 = vmax.f32 %v7478, %v9101
  %v9120 = vmax.f32 %v7479, %v9102
  %v9121 = vmax.f32 %v7480, %v9103
  %9122 = vrot.lane.b32.xlu0 %v7959, 5
  %v9123 = vpop.permute.xlu0 %9122
  %9124 = vrot.lane.b32.xlu0 %v7960, 5
  %v9125 = vpop.permute.xlu0 %9124
  %9126 = vrot.lane.b32.xlu0 %v7961, 5
  %v9127 = vpop.permute.xlu0 %9126
  %9128 = vrot.lane.b32.xlu0 %v7962, 5
  %v9129 = vpop.permute.xlu0 %9128
  %9130 = vrot.lane.b32.xlu0 %v7963, 5
  %v9131 = vpop.permute.xlu0 %9130
  %9132 = vrot.lane.b32.xlu0 %v7964, 5
  %v9133 = vpop.permute.xlu0 %9132
  %9134 = vrot.lane.b32.xlu0 %v7965, 5
  %v9135 = vpop.permute.xlu0 %9134
  %9136 = vrot.lane.b32.xlu0 %v7966, 5
  %v9137 = vpop.permute.xlu0 %9136
  %9138 = vrot.lane.b32.xlu0 %v7967, 5
  %v9139 = vpop.permute.xlu0 %9138
  %9140 = vrot.lane.b32.xlu0 %v7968, 5
  %v9141 = vpop.permute.xlu0 %9140
  %9142 = vrot.lane.b32.xlu0 %v7969, 5
  %v9143 = vpop.permute.xlu0 %9142
  %9144 = vrot.lane.b32.xlu0 %v7970, 5
  %v9145 = vpop.permute.xlu0 %9144
  %9146 = vrot.lane.b32.xlu0 %v7971, 5
  %v9147 = vpop.permute.xlu0 %9146
  %9148 = vrot.lane.b32.xlu0 %v7972, 5
  %v9149 = vpop.permute.xlu0 %9148
  %9150 = vrot.lane.b32.xlu0 %v7973, 5
  %v9151 = vpop.permute.xlu0 %9150
  %9152 = vrot.lane.b32.xlu0 %v7974, 5
  %v9153 = vpop.permute.xlu0 %9152
  %9154 = vrot.lane.b32.xlu0 %v7975, 5
  %v9155 = vpop.permute.xlu0 %9154
  %9156 = vrot.lane.b32.xlu0 %v7976, 5
  %v9157 = vpop.permute.xlu0 %9156
  %9158 = vrot.lane.b32.xlu0 %v7977, 5
  %v9159 = vpop.permute.xlu0 %9158
  %9160 = vrot.lane.b32.xlu0 %v7978, 5
  %v9161 = vpop.permute.xlu0 %9160
  %9162 = vrot.lane.b32.xlu0 %v7979, 5
  %v9163 = vpop.permute.xlu0 %9162
  %9164 = vrot.lane.b32.xlu0 %v7980, 5
  %v9165 = vpop.permute.xlu0 %9164
  %9166 = vrot.lane.b32.xlu0 %v7981, 5
  %v9167 = vpop.permute.xlu0 %9166
  %9168 = vrot.lane.b32.xlu0 %v7982, 5
  %v9169 = vpop.permute.xlu0 %9168
  %9194 = vrot.lane.b32.xlu0 %v8463, 10
  %v9195 = vpop.permute.xlu0 %9194
  %9196 = vrot.lane.b32.xlu0 %v8464, 10
  %v9197 = vpop.permute.xlu0 %9196
  %9198 = vrot.lane.b32.xlu0 %v8465, 10
  %v9199 = vpop.permute.xlu0 %9198
  %9200 = vrot.lane.b32.xlu0 %v8466, 10
  %v9201 = vpop.permute.xlu0 %9200
  %9202 = vrot.lane.b32.xlu0 %v8467, 10
  %v9203 = vpop.permute.xlu0 %9202
  %9204 = vrot.lane.b32.xlu0 %v8468, 10
  %v9205 = vpop.permute.xlu0 %9204
  %9206 = vrot.lane.b32.xlu0 %v8469, 10
  %v9207 = vpop.permute.xlu0 %9206
  %9208 = vrot.lane.b32.xlu0 %v8470, 10
  %v9209 = vpop.permute.xlu0 %9208
  %9210 = vrot.lane.b32.xlu0 %v8471, 10
  %v9211 = vpop.permute.xlu0 %9210
  %9212 = vrot.lane.b32.xlu0 %v8472, 10
  %v9213 = vpop.permute.xlu0 %9212
  %9214 = vrot.lane.b32.xlu0 %v8473, 10
  %v9215 = vpop.permute.xlu0 %9214
  %9216 = vrot.lane.b32.xlu0 %v8474, 10
  %v9217 = vpop.permute.xlu0 %9216
  %9218 = vrot.lane.b32.xlu0 %v8475, 10
  %v9219 = vpop.permute.xlu0 %9218
  %9220 = vrot.lane.b32.xlu0 %v8476, 10
  %v9221 = vpop.permute.xlu0 %9220
  %9222 = vrot.lane.b32.xlu0 %v8477, 10
  %v9223 = vpop.permute.xlu0 %9222
  %9224 = vrot.lane.b32.xlu0 %v8478, 10
  %v9225 = vpop.permute.xlu0 %9224
  %9226 = vrot.lane.b32.xlu0 %v8479, 10
  %v9227 = vpop.permute.xlu0 %9226
  %9228 = vrot.lane.b32.xlu0 %v8480, 10
  %v9229 = vpop.permute.xlu0 %9228
  %9230 = vrot.lane.b32.xlu0 %v8481, 10
  %v9231 = vpop.permute.xlu0 %9230
  %9232 = vrot.lane.b32.xlu0 %v8482, 10
  %v9233 = vpop.permute.xlu0 %9232
  %9234 = vrot.lane.b32.xlu0 %v8483, 10
  %v9235 = vpop.permute.xlu0 %9234
  %9236 = vrot.lane.b32.xlu0 %v8484, 10
  %v9237 = vpop.permute.xlu0 %9236
  %9238 = vrot.lane.b32.xlu0 %v8485, 10
  %v9239 = vpop.permute.xlu0 %9238
  %9240 = vrot.lane.b32.xlu0 %v8486, 10
  %v9241 = vpop.permute.xlu0 %9240
  %9266 = vrot.lane.b32.xlu0 %v7961, 15
  %v9267 = vpop.permute.xlu0 %9266
  %9268 = vrot.lane.b32.xlu0 %v7962, 15
  %v9269 = vpop.permute.xlu0 %9268
  %9270 = vrot.lane.b32.xlu0 %v7963, 15
  %v9271 = vpop.permute.xlu0 %9270
  %9272 = vrot.lane.b32.xlu0 %v7964, 15
  %v9273 = vpop.permute.xlu0 %9272
  %9274 = vrot.lane.b32.xlu0 %v7965, 15
  %v9275 = vpop.permute.xlu0 %9274
  %9276 = vrot.lane.b32.xlu0 %v7966, 15
  %v9277 = vpop.permute.xlu0 %9276
  %9278 = vrot.lane.b32.xlu0 %v7967, 15
  %v9279 = vpop.permute.xlu0 %9278
  %9280 = vrot.lane.b32.xlu0 %v7968, 15
  %v9281 = vpop.permute.xlu0 %9280
  %9282 = vrot.lane.b32.xlu0 %v7969, 15
  %v9283 = vpop.permute.xlu0 %9282
  %9284 = vrot.lane.b32.xlu0 %v7970, 15
  %v9285 = vpop.permute.xlu0 %9284
  %9286 = vrot.lane.b32.xlu0 %v7971, 15
  %v9287 = vpop.permute.xlu0 %9286
  %9288 = vrot.lane.b32.xlu0 %v7972, 15
  %v9289 = vpop.permute.xlu0 %9288
  %9290 = vrot.lane.b32.xlu0 %v7973, 15
  %v9291 = vpop.permute.xlu0 %9290
  %9292 = vrot.lane.b32.xlu0 %v7974, 15
  %v9293 = vpop.permute.xlu0 %9292
  %9294 = vrot.lane.b32.xlu0 %v7975, 15
  %v9295 = vpop.permute.xlu0 %9294
  %9296 = vrot.lane.b32.xlu0 %v7976, 15
  %v9297 = vpop.permute.xlu0 %9296
  %9298 = vrot.lane.b32.xlu0 %v7977, 15
  %v9299 = vpop.permute.xlu0 %9298
  %9300 = vrot.lane.b32.xlu0 %v7978, 15
  %v9301 = vpop.permute.xlu0 %9300
  %9302 = vrot.lane.b32.xlu0 %v7979, 15
  %v9303 = vpop.permute.xlu0 %9302
  %9304 = vrot.lane.b32.xlu0 %v7980, 15
  %v9305 = vpop.permute.xlu0 %9304
  %9306 = vrot.lane.b32.xlu0 %v7981, 15
  %v9307 = vpop.permute.xlu0 %9306
  %9308 = vrot.lane.b32.xlu0 %v7982, 15
  %v9309 = vpop.permute.xlu0 %9308
  %9310 = vrot.lane.b32.xlu0 %v7983, 15
  %v9311 = vpop.permute.xlu0 %9310
  %9312 = vrot.lane.b32.xlu0 %v7984, 15
  %v9313 = vpop.permute.xlu0 %9312
  %9340 = vrot.lane.b32.xlu0 %v8465, 20
  %v9341 = vpop.permute.xlu0 %9340
  %9342 = vrot.lane.b32.xlu0 %v8466, 20
  %v9343 = vpop.permute.xlu0 %9342
  %9344 = vrot.lane.b32.xlu0 %v8467, 20
  %v9345 = vpop.permute.xlu0 %9344
  %9346 = vrot.lane.b32.xlu0 %v8468, 20
  %v9347 = vpop.permute.xlu0 %9346
  %9348 = vrot.lane.b32.xlu0 %v8469, 20
  %v9349 = vpop.permute.xlu0 %9348
  %9350 = vrot.lane.b32.xlu0 %v8470, 20
  %v9351 = vpop.permute.xlu0 %9350
  %9352 = vrot.lane.b32.xlu0 %v8471, 20
  %v9353 = vpop.permute.xlu0 %9352
  %9354 = vrot.lane.b32.xlu0 %v8472, 20
  %v9355 = vpop.permute.xlu0 %9354
  %9356 = vrot.lane.b32.xlu0 %v8473, 20
  %v9357 = vpop.permute.xlu0 %9356
  %9358 = vrot.lane.b32.xlu0 %v8474, 20
  %v9359 = vpop.permute.xlu0 %9358
  %9360 = vrot.lane.b32.xlu0 %v8475, 20
  %v9361 = vpop.permute.xlu0 %9360
  %9362 = vrot.lane.b32.xlu0 %v8476, 20
  %v9363 = vpop.permute.xlu0 %9362
  %9364 = vrot.lane.b32.xlu0 %v8477, 20
  %v9365 = vpop.permute.xlu0 %9364
  %9366 = vrot.lane.b32.xlu0 %v8478, 20
  %v9367 = vpop.permute.xlu0 %9366
  %9368 = vrot.lane.b32.xlu0 %v8479, 20
  %v9369 = vpop.permute.xlu0 %9368
  %9370 = vrot.lane.b32.xlu0 %v8480, 20
  %v9371 = vpop.permute.xlu0 %9370
  %9372 = vrot.lane.b32.xlu0 %v8481, 20
  %v9373 = vpop.permute.xlu0 %9372
  %9374 = vrot.lane.b32.xlu0 %v8482, 20
  %v9375 = vpop.permute.xlu0 %9374
  %9376 = vrot.lane.b32.xlu0 %v8483, 20
  %v9377 = vpop.permute.xlu0 %9376
  %9378 = vrot.lane.b32.xlu0 %v8484, 20
  %v9379 = vpop.permute.xlu0 %9378
  %9380 = vrot.lane.b32.xlu0 %v8485, 20
  %v9381 = vpop.permute.xlu0 %9380
  %9382 = vrot.lane.b32.xlu0 %v8486, 20
  %v9383 = vpop.permute.xlu0 %9382
  %9384 = vrot.lane.b32.xlu0 %v8487, 20
  %v9385 = vpop.permute.xlu0 %9384
  %9386 = vrot.lane.b32.xlu0 %v8488, 20
  %v9387 = vpop.permute.xlu0 %9386
  %v9412 = vsel %vm1766, %v8461, %v9123
  %v9413 = vsel %vm1766, %v8462, %v9125
  %v9414 = vsel %vm1766, %v8463, %v9127
  %v9415 = vsel %vm1766, %v8464, %v9129
  %v9416 = vsel %vm1766, %v8465, %v9131
  %v9417 = vsel %vm1766, %v8466, %v9133
  %v9418 = vsel %vm1766, %v8467, %v9135
  %v9419 = vsel %vm1766, %v8468, %v9137
  %v9420 = vsel %vm1766, %v8469, %v9139
  %v9421 = vsel %vm1766, %v8470, %v9141
  %v9422 = vsel %vm1766, %v8471, %v9143
  %v9423 = vsel %vm1766, %v8472, %v9145
  %v9424 = vsel %vm1766, %v8473, %v9147
  %v9425 = vsel %vm1766, %v8474, %v9149
  %v9426 = vsel %vm1766, %v8475, %v9151
  %v9427 = vsel %vm1766, %v8476, %v9153
  %v9428 = vsel %vm1766, %v8477, %v9155
  %v9429 = vsel %vm1766, %v8478, %v9157
  %v9430 = vsel %vm1766, %v8479, %v9159
  %v9431 = vsel %vm1766, %v8480, %v9161
  %v9432 = vsel %vm1766, %v8481, %v9163
  %v9433 = vsel %vm1766, %v8482, %v9165
  %v9434 = vsel %vm1766, %v8483, %v9167
  %v9435 = vsel %vm1766, %v8484, %v9169
  %v9436 = vsel %vm1791, %v9412, %v9195
  %v9437 = vsel %vm1791, %v9413, %v9197
  %v9438 = vsel %vm1791, %v9414, %v9199
  %v9439 = vsel %vm1791, %v9415, %v9201
  %v9440 = vsel %vm1791, %v9416, %v9203
  %v9441 = vsel %vm1791, %v9417, %v9205
  %v9442 = vsel %vm1791, %v9418, %v9207
  %v9443 = vsel %vm1791, %v9419, %v9209
  %v9444 = vsel %vm1791, %v9420, %v9211
  %v9445 = vsel %vm1791, %v9421, %v9213
  %v9446 = vsel %vm1791, %v9422, %v9215
  %v9447 = vsel %vm1791, %v9423, %v9217
  %v9448 = vsel %vm1791, %v9424, %v9219
  %v9449 = vsel %vm1791, %v9425, %v9221
  %v9450 = vsel %vm1791, %v9426, %v9223
  %v9451 = vsel %vm1791, %v9427, %v9225
  %v9452 = vsel %vm1791, %v9428, %v9227
  %v9453 = vsel %vm1791, %v9429, %v9229
  %v9454 = vsel %vm1791, %v9430, %v9231
  %v9455 = vsel %vm1791, %v9431, %v9233
  %v9456 = vsel %vm1791, %v9432, %v9235
  %v9457 = vsel %vm1791, %v9433, %v9237
  %v9458 = vsel %vm1791, %v9434, %v9239
  %v9459 = vsel %vm1791, %v9435, %v9241
  %v9460 = vsel %vm1816, %v9436, %v9267
  %v9461 = vsel %vm1816, %v9437, %v9269
  %v9462 = vsel %vm1816, %v9438, %v9271
  %v9463 = vsel %vm1816, %v9439, %v9273
  %v9464 = vsel %vm1816, %v9440, %v9275
  %v9465 = vsel %vm1816, %v9441, %v9277
  %v9466 = vsel %vm1816, %v9442, %v9279
  %v9467 = vsel %vm1816, %v9443, %v9281
  %v9468 = vsel %vm1816, %v9444, %v9283
  %v9469 = vsel %vm1816, %v9445, %v9285
  %v9470 = vsel %vm1816, %v9446, %v9287
  %v9471 = vsel %vm1816, %v9447, %v9289
  %v9472 = vsel %vm1816, %v9448, %v9291
  %v9473 = vsel %vm1816, %v9449, %v9293
  %v9474 = vsel %vm1816, %v9450, %v9295
  %v9475 = vsel %vm1816, %v9451, %v9297
  %v9476 = vsel %vm1816, %v9452, %v9299
  %v9477 = vsel %vm1816, %v9453, %v9301
  %v9478 = vsel %vm1816, %v9454, %v9303
  %v9479 = vsel %vm1816, %v9455, %v9305
  %v9480 = vsel %vm1816, %v9456, %v9307
  %v9481 = vsel %vm1816, %v9457, %v9309
  %v9482 = vsel %vm1816, %v9458, %v9311
  %v9483 = vsel %vm1816, %v9459, %v9313
  %v9484 = vsel %vm1841, %v9460, %v9341
  %v9485 = vsel %vm1841, %v9461, %v9343
  %v9486 = vsel %vm1841, %v9462, %v9345
  %v9487 = vsel %vm1841, %v9463, %v9347
  %v9488 = vsel %vm1841, %v9464, %v9349
  %v9489 = vsel %vm1841, %v9465, %v9351
  %v9490 = vsel %vm1841, %v9466, %v9353
  %v9491 = vsel %vm1841, %v9467, %v9355
  %v9492 = vsel %vm1841, %v9468, %v9357
  %v9493 = vsel %vm1841, %v9469, %v9359
  %v9494 = vsel %vm1841, %v9470, %v9361
  %v9495 = vsel %vm1841, %v9471, %v9363
  %v9496 = vsel %vm1841, %v9472, %v9365
  %v9497 = vsel %vm1841, %v9473, %v9367
  %v9498 = vsel %vm1841, %v9474, %v9369
  %v9499 = vsel %vm1841, %v9475, %v9371
  %v9500 = vsel %vm1841, %v9476, %v9373
  %v9501 = vsel %vm1841, %v9477, %v9375
  %v9502 = vsel %vm1841, %v9478, %v9377
  %v9503 = vsel %vm1841, %v9479, %v9379
  %v9504 = vsel %vm1841, %v9480, %v9381
  %v9505 = vsel %vm1841, %v9481, %v9383
  %v9506 = vsel %vm1841, %v9482, %v9385
  %v9507 = vsel %vm1841, %v9483, %v9387
  %v9510 = vrot.slane %v9486, 4
  %v9511 = vrot.slane %v9487, 4
  %v9512 = vsel %vm1868, %v9510, %v9511
  %v9516 = vrot.slane %v9490, 4
  %v9517 = vrot.slane %v9491, 4
  %v9518 = vsel %vm1868, %v9516, %v9517
  %v9522 = vrot.slane %v9494, 4
  %v9523 = vrot.slane %v9495, 4
  %v9524 = vsel %vm1868, %v9522, %v9523
  %v9528 = vrot.slane %v9498, 4
  %v9529 = vrot.slane %v9499, 4
  %v9530 = vsel %vm1868, %v9528, %v9529
  %v9534 = vrot.slane %v9502, 4
  %v9535 = vrot.slane %v9503, 4
  %v9536 = vsel %vm1868, %v9534, %v9535
  %v9540 = vrot.slane %v9506, 4
  %v9541 = vrot.slane %v9507, 4
  %v9542 = vsel %vm1868, %v9540, %v9541
  %v9544 = vsel %vm1868, %v9485, %v9510
  %v9545 = vsel %vm1868, %v9489, %v9516
  %v9546 = vsel %vm1868, %v9493, %v9522
  %v9547 = vsel %vm1868, %v9497, %v9528
  %v9548 = vsel %vm1868, %v9501, %v9534
  %v9549 = vsel %vm1868, %v9505, %v9540
  %v9551 = vsel %vm1912, %v9484, 0
  %v9554 = vsel %vm1912, %v9544, 0
  %v9556 = vsel %vm1912, %v9512, 0
  %v9559 = vsel %vm1912, %v9488, 0
  %v9562 = vsel %vm1912, %v9545, 0
  %v9564 = vsel %vm1912, %v9518, 0
  %v9567 = vsel %vm1912, %v9492, 0
  %v9570 = vsel %vm1912, %v9546, 0
  %v9572 = vsel %vm1912, %v9524, 0
  %v9575 = vsel %vm1912, %v9496, 0
  %v9578 = vsel %vm1912, %v9547, 0
  %v9580 = vsel %vm1912, %v9530, 0
  %v9583 = vsel %vm1912, %v9500, 0
  %v9586 = vsel %vm1912, %v9548, 0
  %v9588 = vsel %vm1912, %v9536, 0
  %v9591 = vsel %vm1912, %v9504, 0
  %v9594 = vsel %vm1912, %v9549, 0
  %v9596 = vsel %vm1912, %v9542, 0
  %9598 = vmatpush.msra.mxu0 0.0
  %9599 = vmatpush.msra.mxu0 0.0
  %9600 = vmatpush.msra.mxu0 0.0
  %9601 = vmatpush.msra.mxu0 0.0
  %9602 = vmatpush.msra.mxu0 0.0
  %9603 = vmatpush.msra.mxu0 0.0
  %9604 = vmatpush.msra.mxu0 0.0
  %9605 = vmatpush.msra.mxu0 0.0
  %9606 = vmatpush.msra.mxu0 0.0
  %9607 = vmatpush.msra.mxu0 0.0
  %9608 = vmatpush.msra.mxu0 0.0
  %9609 = vmatpush.msra.mxu0 0.0
  %9610 = vmatpush.msra.mxu0 %v1963
  %9611 = vmatpush.msra.mxu0 %v16
  %9612 = vmatpush.msra.mxu0 %v15
  %9613 = vmatpush.msra.mxu0 %v14
  %9614 = vmatmul.f32.gmra.mxu0 %v9551
  %v9615 = vpop.f32.mrf.mxu0
  %v9616 = vadd.f32 %v1910, %v9615
  %9617 = vmatmul.f32.gmra.mxu0 %v9554
  %v9618 = vpop.f32.mrf.mxu0
  %v9619 = vadd.f32 %v1910, %v9618
  %9620 = vmatmul.f32.gmra.mxu0 %v9556
  %v9621 = vpop.f32.mrf.mxu0
  %v9622 = vadd.f32 %v1910, %v9621
  %9623 = vmatmul.f32.gmra.mxu0 %v9559
  %v9624 = vpop.f32.mrf.mxu0
  %v9625 = vadd.f32 %v1910, %v9624
  %9626 = vmatmul.f32.gmra.mxu0 %v9562
  %v9627 = vpop.f32.mrf.mxu0
  %v9628 = vadd.f32 %v1910, %v9627
  %9629 = vmatmul.f32.gmra.mxu0 %v9564
  %v9630 = vpop.f32.mrf.mxu0
  %v9631 = vadd.f32 %v1910, %v9630
  %9632 = vmatmul.f32.gmra.mxu0 %v9567
  %v9633 = vpop.f32.mrf.mxu0
  %v9634 = vadd.f32 %v1910, %v9633
  %9635 = vmatmul.f32.gmra.mxu0 %v9570
  %v9636 = vpop.f32.mrf.mxu0
  %v9637 = vadd.f32 %v1910, %v9636
  %9638 = vmatmul.f32.gmra.mxu0 %v9572
  %v9639 = vpop.f32.mrf.mxu0
  %v9640 = vadd.f32 %v1910, %v9639
  %9641 = vmatmul.f32.gmra.mxu0 %v9575
  %v9642 = vpop.f32.mrf.mxu0
  %v9643 = vadd.f32 %v1910, %v9642
  %9644 = vmatmul.f32.gmra.mxu0 %v9578
  %v9645 = vpop.f32.mrf.mxu0
  %v9646 = vadd.f32 %v1910, %v9645
  %9647 = vmatmul.f32.gmra.mxu0 %v9580
  %v9648 = vpop.f32.mrf.mxu0
  %v9649 = vadd.f32 %v1910, %v9648
  %9650 = vmatmul.f32.gmra.mxu0 %v9583
  %v9651 = vpop.f32.mrf.mxu0
  %v9652 = vadd.f32 %v1910, %v9651
  %9653 = vmatmul.f32.gmra.mxu0 %v9586
  %v9654 = vpop.f32.mrf.mxu0
  %v9655 = vadd.f32 %v1910, %v9654
  %9656 = vmatmul.f32.gmra.mxu0 %v9588
  %v9657 = vpop.f32.mrf.mxu0
  %v9658 = vadd.f32 %v1910, %v9657
  %9659 = vmatmul.f32.gmra.mxu0 %v9591
  %v9660 = vpop.f32.mrf.mxu0
  %v9661 = vadd.f32 %v1910, %v9660
  %9662 = vmatmul.f32.gmra.mxu0 %v9594
  %v9663 = vpop.f32.mrf.mxu0
  %v9664 = vadd.f32 %v1910, %v9663
  %9665 = vmatmul.f32.gmra.mxu0 %v9596
  %v9666 = vpop.f32.mrf.mxu0
  %v9667 = vadd.f32 %v1910, %v9666
  %9668 = vdwg.mxu0
  %v9669 = vmax.f32 %v9616, 0.0
  %v9670 = vmax.f32 %v9619, 0.0
  %v9671 = vmax.f32 %v9622, 0.0
  %v9672 = vmax.f32 %v9625, 0.0
  %v9673 = vmax.f32 %v9628, 0.0
  %v9674 = vmax.f32 %v9631, 0.0
  %v9675 = vmax.f32 %v9634, 0.0
  %v9676 = vmax.f32 %v9637, 0.0
  %v9677 = vmax.f32 %v9640, 0.0
  %v9678 = vmax.f32 %v9643, 0.0
  %v9679 = vmax.f32 %v9646, 0.0
  %v9680 = vmax.f32 %v9649, 0.0
  %v9681 = vmax.f32 %v9652, 0.0
  %v9682 = vmax.f32 %v9655, 0.0
  %v9683 = vmax.f32 %v9658, 0.0
  %v9684 = vmax.f32 %v9661, 0.0
  %v9685 = vmax.f32 %v9664, 0.0
  %v9686 = vmax.f32 %v9667, 0.0
  %v9687 = vmax.f32 %v9104, %v9669
  %v9688 = vmax.f32 %v9105, %v9670
  %v9689 = vmax.f32 %v9106, %v9671
  %v9690 = vmax.f32 %v9107, %v9672
  %v9691 = vmax.f32 %v9108, %v9673
  %v9692 = vmax.f32 %v9109, %v9674
  %v9693 = vmax.f32 %v9110, %v9675
  %v9694 = vmax.f32 %v9111, %v9676
  %v9695 = vmax.f32 %v9112, %v9677
  %v9696 = vmax.f32 %v9113, %v9678
  %v9697 = vmax.f32 %v9114, %v9679
  %v9698 = vmax.f32 %v9115, %v9680
  %v9699 = vmax.f32 %v9116, %v9681
  %v9700 = vmax.f32 %v9117, %v9682
  %v9701 = vmax.f32 %v9118, %v9683
  %v9702 = vmax.f32 %v9119, %v9684
  %v9703 = vmax.f32 %v9120, %v9685
  %v9704 = vmax.f32 %v9121, %v9686
  %s9705 = scalar_lea.vmem %s3, 144
  %9706 = vst.msk [vmem:[%s9705] sm:$0xff] %vm1791, %v9687
  %9707 = vst.msk [vmem:[%s9705 + $0x8] sm:$0xff] %vm1791, %v9688
  %9708 = vst.msk [vmem:[%s9705 + $0x10] sm:$0xff] %vm1791, %v9689
  %9709 = vst.msk [vmem:[%s9705 + $0x18] sm:$0xff] %vm1791, %v9690
  %9710 = vst.msk [vmem:[%s9705 + $0x20] sm:$0xff] %vm1791, %v9691
  %9711 = vst.msk [vmem:[%s9705 + $0x28] sm:$0xff] %vm1791, %v9692
  %9712 = vst.msk [vmem:[%s9705 + $0x30] sm:$0xff] %vm1791, %v9693
  %9713 = vst.msk [vmem:[%s9705 + $0x38] sm:$0xff] %vm1791, %v9694
  %9714 = vst.msk [vmem:[%s9705 + $0x40] sm:$0xff] %vm1791, %v9695
  %9715 = vst.msk [vmem:[%s9705 + $0x48] sm:$0xff] %vm1791, %v9696
  %9716 = vst.msk [vmem:[%s9705 + $0x50] sm:$0xff] %vm1791, %v9697
  %9717 = vst.msk [vmem:[%s9705 + $0x58] sm:$0xff] %vm1791, %v9698
  %9718 = vst.msk [vmem:[%s9705 + $0x60] sm:$0xff] %vm1791, %v9699
  %9719 = vst.msk [vmem:[%s9705 + $0x68] sm:$0xff] %vm1791, %v9700
  %9720 = vst.msk [vmem:[%s9705 + $0x70] sm:$0xff] %vm1791, %v9701
  %9721 = vst.msk [vmem:[%s9705 + $0x78] sm:$0xff] %vm1791, %v9702
  %9722 = vst.msk [vmem:[%s9705 + $0x80] sm:$0xff] %vm1791, %v9703
  %9723 = vst.msk [vmem:[%s9705 + $0x88] sm:$0xff] %vm1791, %v9704
  // Predicated region
  $region14: #{net_forward.3} parent=0 // pred_check
    _
  $region15: #{net_forward.3} parent=0 // pred_check_branch
    %9725 = sbr.rel (0) target = $region17
  $region16: #{net_forward.3} parent=0 // pred_region
    _
  $region17: #{net_forward.3} parent=0 // pred_fallthru
    _
  // Predicated region
  $region18: #{net_forward.3} parent=0 // pred_check
    _
  $region19: #{net_forward.3} parent=0 // pred_check_branch
    %9727 = sbr.rel (0) target = $region21
  $region20: #{net_forward.3} parent=0 // pred_region
    _
  $region21: #{net_forward.3} parent=0 // pred_fallthru
    _

</llo_original>
